<compile_context>
chip_gen: v5e
topology: v5e:2x2
jax: 0.10.0
libtpu: 0.0.40
codegen_flags: <defaults>
</compile_context>

<pallas_src>
import jax
import jax.numpy as jnp
from jax.experimental import pallas as pl
from jax.experimental.pallas import tpu as pltpu

# ---------------- configuration -------------------------------------------
LATENT_SIZE = 16
NUM_DIMS = 2
DIMS = [64, 64]            # fnet hidden dims
SUBNET_DIMS = [32, 32]     # gnet hidden dims
LEAKY_SLOPE = 0.01         # nn.LeakyReLU default negative_slope

FNET_DIMS = [LATENT_SIZE + NUM_DIMS] + DIMS + [1]        # [18, 64, 64, 1]
GNET_DIMS = [LATENT_SIZE] + SUBNET_DIMS + [LATENT_SIZE]  # [16, 32, 32, 16]


# ---------------- Pallas kernel --------------------------------------------
def _leaky(v):
    return jnp.where(v > 0, v, LEAKY_SLOPE * v)


def decoder_kernel(x_ref,
                   gw0, gb0, gw1, gb1, gw2, gb2,
                   fw0_lat, fw0_pts, fb0, fw1, fb1, fw2, fb2,
                   bx_ref, rx_ref):
    x = x_ref[...]                                   # (TB, latent+num_dims)
    tb = x.shape[0]
    lat = x[:, :LATENT_SIZE]                         # (TB, latent)
    pts = x[:, LATENT_SIZE:]                         # (TB, num_dims)

    def lin(v, w_ref, b_ref):
        return jnp.dot(v, w_ref[...],
                       preferred_element_type=jnp.float32) + b_ref[...]

    # ---- gnet (LeakyReLU after every layer, matching the reference) ----
    h = _leaky(lin(lat, gw0, gb0))
    h = _leaky(lin(h, gw1, gb1))
    r_code = _leaky(lin(h, gw2, gb2))                # (TB, latent)

    # ---- fnet, fused: one row-stacked pass for both the r_x and b_x paths.
    # layer 0 = [r_code | lat] @ fw0_lat  +  pts @ fw0_pts (shared)  + fb0
    pts_part = jnp.dot(pts, fw0_pts[...],
                       preferred_element_type=jnp.float32)          # (TB, 64)
    stacked = jnp.concatenate([r_code, lat], axis=0)                 # (2TB, 16)
    h0 = jnp.dot(stacked, fw0_lat[...],
                 preferred_element_type=jnp.float32)
    h0 = _leaky(h0 + jnp.tile(pts_part, (2, 1)) + fb0[...])          # (2TB, 64)
    h1 = _leaky(lin(h0, fw1, fb1))                                   # (2TB, 64)
    out = lin(h1, fw2, fb2)                                          # (2TB, 1)

    # ---- lane-dense stores: (TB,1) column -> (TB/128, 128) tile ----
    rx_ref[...] = out[:tb].reshape(tb // 128, 128)
    bx_ref[...] = out[tb:].reshape(tb // 128, 128)


# ---------------- wrapper ---------------------------------------------------
def decoder_forward(net_input, params, *, tile_b=1024):
    (gw0, gb0, gw1, gb1, gw2, gb2,
     fw0, fb0, fw1, fb1, fw2, fb2) = params
    # Split fnet layer-0 weight so the kernel never does a lane-axis concat.
    fw0_lat = fw0[:LATENT_SIZE]      # (16, 64)
    fw0_pts = fw0[LATENT_SIZE:]      # (2, 64)

    N, F = net_input.shape
    assert F == LATENT_SIZE + NUM_DIMS

    # Tile sizing: clamp to the (128-rounded) problem size, pad N up to a multiple.
    tile_b = max(128, min(tile_b, ((N + 127) // 128) * 128))
    tile_b = (tile_b // 128) * 128
    n_pad = ((N + tile_b - 1) // tile_b) * tile_b
    x = net_input
    if n_pad != N:
        x = jnp.pad(net_input, ((0, n_pad - N), (0, 0)))

    lanes = tile_b // 128
    n_lane_rows = n_pad // 128

    flat_params = (gw0, gb0, gw1, gb1, gw2, gb2,
                   fw0_lat, fw0_pts, fb0, fw1, fb1, fw2, fb2)

    def full_spec(arr):
        shp = arr.shape
        return pl.BlockSpec(shp, lambda i, _s=shp: tuple(0 for _ in _s))

    in_specs = [pl.BlockSpec((tile_b, F), lambda i: (i, 0))]
    in_specs += [full_spec(p) for p in flat_params]

    out_specs = [
        pl.BlockSpec((lanes, 128), lambda i: (i, 0)),   # b_x (lane-dense)
        pl.BlockSpec((lanes, 128), lambda i: (i, 0)),   # r_x (lane-dense)
    ]
    out_shape = [
        jax.ShapeDtypeStruct((n_lane_rows, 128), jnp.float32),
        jax.ShapeDtypeStruct((n_lane_rows, 128), jnp.float32),
    ]

    b_x2d, r_x2d = pl.pallas_call(
        decoder_kernel,
        grid=(n_pad // tile_b,),
        in_specs=in_specs,
        out_specs=out_specs,
        out_shape=out_shape,
        compiler_params=pltpu.CompilerParams(
            dimension_semantics=("parallel",)),
    )(x, *flat_params)

    # Undo the lane-dense packing; drop padded rows.
    b_x = b_x2d.reshape(n_pad, 1)[:N]
    r_x = r_x2d.reshape(n_pad, 1)[:N]

    # matches Decoder.forward(net_input, use_net=None) with
    # do_code_regularization=False -> (None, b_x, r_x)
    return None, b_x, r_x


# ---------------- deterministic parameter init ------------------------------
def init_linear(key, in_dim, out_dim):
    kw, kb = jax.random.split(key)
    bound = 1.0 / (in_dim ** 0.5)
    w = jax.random.uniform(kw, (in_dim, out_dim), jnp.float32, -bound, bound)
    b = jax.random.uniform(kb, (1, out_dim), jnp.float32, -bound, bound)
    return w, b


def make_params(key):
    params = []
    # gnet linears
    for layer in range(len(GNET_DIMS) - 1):
        key, sub = jax.random.split(key)
        w, b = init_linear(sub, GNET_DIMS[layer], GNET_DIMS[layer + 1])
        params += [w, b]
    # fnet linears
    for layer in range(len(FNET_DIMS) - 1):
        key, sub = jax.random.split(key)
        w, b = init_linear(sub, FNET_DIMS[layer], FNET_DIMS[layer + 1])
        params += [w, b]
    return tuple(params)


# ---------------- pure-JAX reference (for correctness check) ----------------
def decoder_reference(net_input, params):
    (gw0, gb0, gw1, gb1, gw2, gb2,
     fw0, fb0, fw1, fb1, fw2, fb2) = params
    leaky = lambda v: jnp.where(v > 0, v, LEAKY_SLOPE * v)
    pts = net_input[:, -NUM_DIMS:]
    lat = net_input[:, :-NUM_DIMS]
    h = leaky(lat @ gw0 + gb0)
    h = leaky(h @ gw1 + gb1)
    r_code = leaky(h @ gw2 + gb2)

    def fnet(inp):
        y = leaky(inp @ fw0 + fb0)
        y = leaky(y @ fw1 + fb1)
        return y @ fw2 + fb2

    r_x = fnet(jnp.concatenate([r_code, pts], axis=1))
    b_x = fnet(net_input)
    return None, b_x, r_x


# ---------------- main -------------------------------------------------------
if __name__ == "__main__":
    key = jax.random.PRNGKey(0)
    key_p, key_x = jax.random.split(key)

    params = make_params(key_p)

    N = 2000  # number of query points (not a multiple of tile_b -> exercises padding)
    net_input = jax.random.normal(
        key_x, (N, LATENT_SIZE + NUM_DIMS), dtype=jnp.float32)

    _, b_x, r_x = decoder_forward(net_input, params, tile_b=1024)
    b_x = jax.block_until_ready(b_x)
    r_x = jax.block_until_ready(r_x)

    _, b_ref, r_ref = decoder_reference(net_input, params)
    assert b_x.shape == (N, 1) and r_x.shape == (N, 1)
    assert jnp.allclose(b_x, b_ref, atol=1e-4, rtol=1e-4), "b_x mismatch"
    assert jnp.allclose(r_x, r_ref, atol=1e-4, rtol=1e-4), "r_x mismatch"

    print("KERNEL_OK")
</pallas_src>

<mosaic_0001>
module attributes {stable_mosaic.version = 11 : i64} {
  func.func @decoder_kernel(%arg0: i32, %arg1: memref<1024x18xf32, #tpu.memory_space<vmem>>, %arg2: memref<16x32xf32, #tpu.memory_space<vmem>>, %arg3: memref<1x32xf32, #tpu.memory_space<vmem>>, %arg4: memref<32x32xf32, #tpu.memory_space<vmem>>, %arg5: memref<1x32xf32, #tpu.memory_space<vmem>>, %arg6: memref<32x16xf32, #tpu.memory_space<vmem>>, %arg7: memref<1x16xf32, #tpu.memory_space<vmem>>, %arg8: memref<16x64xf32, #tpu.memory_space<vmem>>, %arg9: memref<2x64xf32, #tpu.memory_space<vmem>>, %arg10: memref<1x64xf32, #tpu.memory_space<vmem>>, %arg11: memref<64x64xf32, #tpu.memory_space<vmem>>, %arg12: memref<1x64xf32, #tpu.memory_space<vmem>>, %arg13: memref<64x1xf32, #tpu.memory_space<vmem>>, %arg14: memref<1x1xf32, #tpu.memory_space<vmem>>, %arg15: memref<8x128xf32, #tpu.memory_space<vmem>>, %arg16: memref<8x128xf32, #tpu.memory_space<vmem>>) attributes {dimension_semantics = [#tpu.dimension_semantics<parallel>], iteration_bounds = array<i64: 2>, scalar_prefetch = 0 : i64, scratch_operands = 0 : i64, tpu.core_type = #tpu.core_type<tc>, window_params = [{transform_indices = @transform_0, window_bounds = array<i64: 1024, 18>}, {pipeline_mode = #tpu.pipeline_mode<synchronous>, transform_indices = @transform_1, window_bounds = array<i64: 16, 32>}, {pipeline_mode = #tpu.pipeline_mode<synchronous>, transform_indices = @transform_2, window_bounds = array<i64: 1, 32>}, {pipeline_mode = #tpu.pipeline_mode<synchronous>, transform_indices = @transform_3, window_bounds = array<i64: 32, 32>}, {pipeline_mode = #tpu.pipeline_mode<synchronous>, transform_indices = @transform_4, window_bounds = array<i64: 1, 32>}, {pipeline_mode = #tpu.pipeline_mode<synchronous>, transform_indices = @transform_5, window_bounds = array<i64: 32, 16>}, {pipeline_mode = #tpu.pipeline_mode<synchronous>, transform_indices = @transform_6, window_bounds = array<i64: 1, 16>}, {pipeline_mode = #tpu.pipeline_mode<synchronous>, transform_indices = @transform_7, window_bounds = array<i64: 16, 64>}, {pipeline_mode = #tpu.pipeline_mode<synchronous>, transform_indices = @transform_8, window_bounds = array<i64: 2, 64>}, {pipeline_mode = #tpu.pipeline_mode<synchronous>, transform_indices = @transform_9, window_bounds = array<i64: 1, 64>}, {pipeline_mode = #tpu.pipeline_mode<synchronous>, transform_indices = @transform_10, window_bounds = array<i64: 64, 64>}, {pipeline_mode = #tpu.pipeline_mode<synchronous>, transform_indices = @transform_11, window_bounds = array<i64: 1, 64>}, {pipeline_mode = #tpu.pipeline_mode<synchronous>, transform_indices = @transform_12, window_bounds = array<i64: 64, 1>}, {pipeline_mode = #tpu.pipeline_mode<synchronous>, transform_indices = @transform_13, window_bounds = array<i64: 1, 1>}, {transform_indices = @transform_14, window_bounds = array<i64: 8, 128>}, {transform_indices = @transform_15, window_bounds = array<i64: 8, 128>}]} {
    %c0 = arith.constant 0 : index
    %c0_0 = arith.constant 0 : index
    %0 = vector.load %arg1[%c0, %c0_0] : memref<1024x18xf32, #tpu.memory_space<vmem>>, vector<1024x18xf32>
    %1 = vector.extract_strided_slice %0 {offsets = [0, 0], sizes = [1024, 16], strides = [1, 1]} : vector<1024x18xf32> to vector<1024x16xf32>
    %2 = vector.extract_strided_slice %0 {offsets = [0, 16], sizes = [1024, 2], strides = [1, 1]} : vector<1024x18xf32> to vector<1024x2xf32>
    %c0_1 = arith.constant 0 : index
    %c0_2 = arith.constant 0 : index
    %3 = vector.load %arg2[%c0_1, %c0_2] : memref<16x32xf32, #tpu.memory_space<vmem>>, vector<16x32xf32>
    %cst = arith.constant dense<0.000000e+00> : vector<1024x32xf32>
    %4 = tpu.matmul %1, %3, %cst {dimension_numbers = #tpu.dot_dimension_numbers<[1], [0], [0], [1], [0, 0, 1, 1], [], []>} : vector<1024x16xf32>, vector<16x32xf32>, vector<1024x32xf32> -> vector<1024x32xf32>
    %c0_3 = arith.constant 0 : index
    %c0_4 = arith.constant 0 : index
    %5 = vector.load %arg3[%c0_3, %c0_4] : memref<1x32xf32, #tpu.memory_space<vmem>>, vector<1x32xf32>
    %6 = vector.broadcast %5 : vector<1x32xf32> to vector<1024x32xf32>
    %7 = arith.addf %4, %6 : vector<1024x32xf32>
    %cst_5 = arith.constant 0.000000e+00 : f32
    %8 = vector.broadcast %cst_5 : f32 to vector<1024x32xf32>
    %9 = arith.cmpf ogt, %7, %8 : vector<1024x32xf32>
    %cst_6 = arith.constant 0.00999999977 : f32
    %10 = vector.broadcast %cst_6 : f32 to vector<1024x32xf32>
    %11 = arith.mulf %10, %7 : vector<1024x32xf32>
    %12 = arith.select %9, %7, %11 : vector<1024x32xi1>, vector<1024x32xf32>
    %c0_7 = arith.constant 0 : index
    %c0_8 = arith.constant 0 : index
    %13 = vector.load %arg4[%c0_7, %c0_8] : memref<32x32xf32, #tpu.memory_space<vmem>>, vector<32x32xf32>
    %cst_9 = arith.constant dense<0.000000e+00> : vector<1024x32xf32>
    %14 = tpu.matmul %12, %13, %cst_9 {dimension_numbers = #tpu.dot_dimension_numbers<[1], [0], [0], [1], [0, 0, 1, 1], [], []>} : vector<1024x32xf32>, vector<32x32xf32>, vector<1024x32xf32> -> vector<1024x32xf32>
    %c0_10 = arith.constant 0 : index
    %c0_11 = arith.constant 0 : index
    %15 = vector.load %arg5[%c0_10, %c0_11] : memref<1x32xf32, #tpu.memory_space<vmem>>, vector<1x32xf32>
    %16 = vector.broadcast %15 : vector<1x32xf32> to vector<1024x32xf32>
    %17 = arith.addf %14, %16 : vector<1024x32xf32>
    %cst_12 = arith.constant 0.000000e+00 : f32
    %18 = vector.broadcast %cst_12 : f32 to vector<1024x32xf32>
    %19 = arith.cmpf ogt, %17, %18 : vector<1024x32xf32>
    %cst_13 = arith.constant 0.00999999977 : f32
    %20 = vector.broadcast %cst_13 : f32 to vector<1024x32xf32>
    %21 = arith.mulf %20, %17 : vector<1024x32xf32>
    %22 = arith.select %19, %17, %21 : vector<1024x32xi1>, vector<1024x32xf32>
    %c0_14 = arith.constant 0 : index
    %c0_15 = arith.constant 0 : index
    %23 = vector.load %arg6[%c0_14, %c0_15] : memref<32x16xf32, #tpu.memory_space<vmem>>, vector<32x16xf32>
    %cst_16 = arith.constant dense<0.000000e+00> : vector<1024x16xf32>
    %24 = tpu.matmul %22, %23, %cst_16 {dimension_numbers = #tpu.dot_dimension_numbers<[1], [0], [0], [1], [0, 0, 1, 1], [], []>} : vector<1024x32xf32>, vector<32x16xf32>, vector<1024x16xf32> -> vector<1024x16xf32>
    %c0_17 = arith.constant 0 : index
    %c0_18 = arith.constant 0 : index
    %25 = vector.load %arg7[%c0_17, %c0_18] : memref<1x16xf32, #tpu.memory_space<vmem>>, vector<1x16xf32>
    %26 = vector.broadcast %25 : vector<1x16xf32> to vector<1024x16xf32>
    %27 = arith.addf %24, %26 : vector<1024x16xf32>
    %cst_19 = arith.constant 0.000000e+00 : f32
    %28 = vector.broadcast %cst_19 : f32 to vector<1024x16xf32>
    %29 = arith.cmpf ogt, %27, %28 : vector<1024x16xf32>
    %cst_20 = arith.constant 0.00999999977 : f32
    %30 = vector.broadcast %cst_20 : f32 to vector<1024x16xf32>
    %31 = arith.mulf %30, %27 : vector<1024x16xf32>
    %32 = arith.select %29, %27, %31 : vector<1024x16xi1>, vector<1024x16xf32>
    %c0_21 = arith.constant 0 : index
    %c0_22 = arith.constant 0 : index
    %33 = vector.load %arg9[%c0_21, %c0_22] : memref<2x64xf32, #tpu.memory_space<vmem>>, vector<2x64xf32>
    %cst_23 = arith.constant dense<0.000000e+00> : vector<1024x64xf32>
    %34 = tpu.matmul %2, %33, %cst_23 {dimension_numbers = #tpu.dot_dimension_numbers<[1], [0], [0], [1], [0, 0, 1, 1], [], []>} : vector<1024x2xf32>, vector<2x64xf32>, vector<1024x64xf32> -> vector<1024x64xf32>
    %35 = tpu.concatenate %32, %1 in 0 : vector<1024x16xf32>, vector<1024x16xf32> -> vector<2048x16xf32>
    %c0_24 = arith.constant 0 : index
    %c0_25 = arith.constant 0 : index
    %36 = vector.load %arg8[%c0_24, %c0_25] : memref<16x64xf32, #tpu.memory_space<vmem>>, vector<16x64xf32>
    %cst_26 = arith.constant dense<0.000000e+00> : vector<2048x64xf32>
    %37 = tpu.matmul %35, %36, %cst_26 {dimension_numbers = #tpu.dot_dimension_numbers<[1], [0], [0], [1], [0, 0, 1, 1], [], []>} : vector<2048x16xf32>, vector<16x64xf32>, vector<2048x64xf32> -> vector<2048x64xf32>
    %38 = tpu.concatenate %34, %34 in 0 : vector<1024x64xf32>, vector<1024x64xf32> -> vector<2048x64xf32>
    %39 = arith.addf %37, %38 : vector<2048x64xf32>
    %c0_27 = arith.constant 0 : index
    %c0_28 = arith.constant 0 : index
    %40 = vector.load %arg10[%c0_27, %c0_28] : memref<1x64xf32, #tpu.memory_space<vmem>>, vector<1x64xf32>
    %41 = vector.broadcast %40 : vector<1x64xf32> to vector<2048x64xf32>
    %42 = arith.addf %39, %41 : vector<2048x64xf32>
    %cst_29 = arith.constant 0.000000e+00 : f32
    %43 = vector.broadcast %cst_29 : f32 to vector<2048x64xf32>
    %44 = arith.cmpf ogt, %42, %43 : vector<2048x64xf32>
    %cst_30 = arith.constant 0.00999999977 : f32
    %45 = vector.broadcast %cst_30 : f32 to vector<2048x64xf32>
    %46 = arith.mulf %45, %42 : vector<2048x64xf32>
    %47 = arith.select %44, %42, %46 : vector<2048x64xi1>, vector<2048x64xf32>
    %c0_31 = arith.constant 0 : index
    %c0_32 = arith.constant 0 : index
    %48 = vector.load %arg11[%c0_31, %c0_32] : memref<64x64xf32, #tpu.memory_space<vmem>>, vector<64x64xf32>
    %cst_33 = arith.constant dense<0.000000e+00> : vector<2048x64xf32>
    %49 = tpu.matmul %47, %48, %cst_33 {dimension_numbers = #tpu.dot_dimension_numbers<[1], [0], [0], [1], [0, 0, 1, 1], [], []>} : vector<2048x64xf32>, vector<64x64xf32>, vector<2048x64xf32> -> vector<2048x64xf32>
    %c0_34 = arith.constant 0 : index
    %c0_35 = arith.constant 0 : index
    %50 = vector.load %arg12[%c0_34, %c0_35] : memref<1x64xf32, #tpu.memory_space<vmem>>, vector<1x64xf32>
    %51 = vector.broadcast %50 : vector<1x64xf32> to vector<2048x64xf32>
    %52 = arith.addf %49, %51 : vector<2048x64xf32>
    %cst_36 = arith.constant 0.000000e+00 : f32
    %53 = vector.broadcast %cst_36 : f32 to vector<2048x64xf32>
    %54 = arith.cmpf ogt, %52, %53 : vector<2048x64xf32>
    %cst_37 = arith.constant 0.00999999977 : f32
    %55 = vector.broadcast %cst_37 : f32 to vector<2048x64xf32>
    %56 = arith.mulf %55, %52 : vector<2048x64xf32>
    %57 = arith.select %54, %52, %56 : vector<2048x64xi1>, vector<2048x64xf32>
    %c0_38 = arith.constant 0 : index
    %c0_39 = arith.constant 0 : index
    %58 = vector.load %arg13[%c0_38, %c0_39] : memref<64x1xf32, #tpu.memory_space<vmem>>, vector<64x1xf32>
    %cst_40 = arith.constant dense<0.000000e+00> : vector<2048x1xf32>
    %59 = tpu.matmul %57, %58, %cst_40 {dimension_numbers = #tpu.dot_dimension_numbers<[1], [0], [0], [1], [0, 0, 1, 1], [], []>} : vector<2048x64xf32>, vector<64x1xf32>, vector<2048x1xf32> -> vector<2048x1xf32>
    %c0_41 = arith.constant 0 : index
    %c0_42 = arith.constant 0 : index
    %60 = vector.load %arg14[%c0_41, %c0_42] : memref<1x1xf32, #tpu.memory_space<vmem>>, vector<1x1xf32>
    %61 = vector.broadcast %60 : vector<1x1xf32> to vector<2048x1xf32>
    %62 = arith.addf %59, %61 : vector<2048x1xf32>
    %63 = vector.extract_strided_slice %62 {offsets = [0, 0], sizes = [1024, 1], strides = [1, 1]} : vector<2048x1xf32> to vector<1024x1xf32>
    %64 = vector.shape_cast %63 : vector<1024x1xf32> to vector<8x128xf32>
    %c0_43 = arith.constant 0 : index
    %c0_44 = arith.constant 0 : index
    %65 = vector.load %arg16[%c0_43, %c0_44] : memref<8x128xf32, #tpu.memory_space<vmem>>, vector<8x128xf32>
    tpu.vector_store %arg16[%c0_43, %c0_44], %64 {strides = array<i32>} : memref<8x128xf32, #tpu.memory_space<vmem>>, vector<8x128xf32>,
    %66 = vector.extract_strided_slice %62 {offsets = [1024, 0], sizes = [1024, 1], strides = [1, 1]} : vector<2048x1xf32> to vector<1024x1xf32>
    %67 = vector.shape_cast %66 : vector<1024x1xf32> to vector<8x128xf32>
    %c0_45 = arith.constant 0 : index
    %c0_46 = arith.constant 0 : index
    %68 = vector.load %arg15[%c0_45, %c0_46] : memref<8x128xf32, #tpu.memory_space<vmem>>, vector<8x128xf32>
    tpu.vector_store %arg15[%c0_45, %c0_46], %67 {strides = array<i32>} : memref<8x128xf32, #tpu.memory_space<vmem>>, vector<8x128xf32>,
    return
  }
  func.func @transform_0(%arg0: i32) -> (i32, i32) {
    %c0_i32 = arith.constant 0 : i32
    %c0_i32_0 = arith.constant 0 : i32
    return %arg0, %c0_i32 : i32, i32
  }
  func.func @transform_1(%arg0: i32) -> (i32, i32) {
    %c0_i32 = arith.constant 0 : i32
    %c0_i32_0 = arith.constant 0 : i32
    %c0_i32_1 = arith.constant 0 : i32
    return %c0_i32, %c0_i32_0 : i32, i32
  }
  func.func @transform_2(%arg0: i32) -> (i32, i32) {
    %c0_i32 = arith.constant 0 : i32
    %c0_i32_0 = arith.constant 0 : i32
    %c0_i32_1 = arith.constant 0 : i32
    return %c0_i32, %c0_i32_0 : i32, i32
  }
  func.func @transform_3(%arg0: i32) -> (i32, i32) {
    %c0_i32 = arith.constant 0 : i32
    %c0_i32_0 = arith.constant 0 : i32
    %c0_i32_1 = arith.constant 0 : i32
    return %c0_i32, %c0_i32_0 : i32, i32
  }
  func.func @transform_4(%arg0: i32) -> (i32, i32) {
    %c0_i32 = arith.constant 0 : i32
    %c0_i32_0 = arith.constant 0 : i32
    %c0_i32_1 = arith.constant 0 : i32
    return %c0_i32, %c0_i32_0 : i32, i32
  }
  func.func @transform_5(%arg0: i32) -> (i32, i32) {
    %c0_i32 = arith.constant 0 : i32
    %c0_i32_0 = arith.constant 0 : i32
    %c0_i32_1 = arith.constant 0 : i32
    return %c0_i32, %c0_i32_0 : i32, i32
  }
  func.func @transform_6(%arg0: i32) -> (i32, i32) {
    %c0_i32 = arith.constant 0 : i32
    %c0_i32_0 = arith.constant 0 : i32
    %c0_i32_1 = arith.constant 0 : i32
    return %c0_i32, %c0_i32_0 : i32, i32
  }
  func.func @transform_7(%arg0: i32) -> (i32, i32) {
    %c0_i32 = arith.constant 0 : i32
    %c0_i32_0 = arith.constant 0 : i32
    %c0_i32_1 = arith.constant 0 : i32
    return %c0_i32, %c0_i32_0 : i32, i32
  }
  func.func @transform_8(%arg0: i32) -> (i32, i32) {
    %c0_i32 = arith.constant 0 : i32
    %c0_i32_0 = arith.constant 0 : i32
    %c0_i32_1 = arith.constant 0 : i32
    return %c0_i32, %c0_i32_0 : i32, i32
  }
  func.func @transform_9(%arg0: i32) -> (i32, i32) {
    %c0_i32 = arith.constant 0 : i32
    %c0_i32_0 = arith.constant 0 : i32
    %c0_i32_1 = arith.constant 0 : i32
    return %c0_i32, %c0_i32_0 : i32, i32
  }
  func.func @transform_10(%arg0: i32) -> (i32, i32) {
    %c0_i32 = arith.constant 0 : i32
    %c0_i32_0 = arith.constant 0 : i32
    %c0_i32_1 = arith.constant 0 : i32
    return %c0_i32, %c0_i32_0 : i32, i32
  }
  func.func @transform_11(%arg0: i32) -> (i32, i32) {
    %c0_i32 = arith.constant 0 : i32
    %c0_i32_0 = arith.constant 0 : i32
    %c0_i32_1 = arith.constant 0 : i32
    return %c0_i32, %c0_i32_0 : i32, i32
  }
  func.func @transform_12(%arg0: i32) -> (i32, i32) {
    %c0_i32 = arith.constant 0 : i32
    %c0_i32_0 = arith.constant 0 : i32
    %c0_i32_1 = arith.constant 0 : i32
    return %c0_i32, %c0_i32_0 : i32, i32
  }
  func.func @transform_13(%arg0: i32) -> (i32, i32) {
    %c0_i32 = arith.constant 0 : i32
    %c0_i32_0 = arith.constant 0 : i32
    %c0_i32_1 = arith.constant 0 : i32
    return %c0_i32, %c0_i32_0 : i32, i32
  }
  func.func @transform_14(%arg0: i32) -> (i32, i32) {
    %c0_i32 = arith.constant 0 : i32
    %c0_i32_0 = arith.constant 0 : i32
    return %arg0, %c0_i32 : i32, i32
  }
  func.func @transform_15(%arg0: i32) -> (i32, i32) {
    %c0_i32 = arith.constant 0 : i32
    %c0_i32_0 = arith.constant 0 : i32
    return %arg0, %c0_i32 : i32, i32
  }
}

</mosaic_0001>

<llo_original>
// kernel: tpu_custom_call.1
$region0: #{tpu_custom_call.1}
  #allocation0 [shape = 'u32[]', space=smem, size = 0x4, offset = 0x4, fixed_abs, tag = 'smem constant byte address 0x4 - core index']
  #allocation1 [shape = 'u32[72,128]{1,0:T(1,128)}', space=vmem, size = 0x9000, scoped, tag = 'internal scratch']
  #allocation2 [shape = 'f32[1,1]{1,0:T(1,128)S(1)}', space=vmem, size = 0x200, scoped, tag = 'scoped memory for tpu_custom_call.1']
  %s0 = inlined_call_operand.vmem [shape: f32[2048,18], index: 0, kind: input, shape index: {}]
  %s1 = inlined_call_operand.vmem [shape: f32[16,32], index: 1, kind: input, shape index: {}]
  %s2 = inlined_call_operand.vmem [shape: f32[1,32], index: 2, kind: input, shape index: {}]
  %s3 = inlined_call_operand.vmem [shape: f32[32,32], index: 3, kind: input, shape index: {}]
  %s4 = inlined_call_operand.vmem [shape: f32[1,32], index: 4, kind: input, shape index: {}]
  %s5 = inlined_call_operand.vmem [shape: f32[32,16], index: 5, kind: input, shape index: {}]
  %s6 = inlined_call_operand.vmem [shape: f32[1,16], index: 6, kind: input, shape index: {}]
  %s7 = inlined_call_operand.vmem [shape: f32[16,64], index: 7, kind: input, shape index: {}]
  %s8 = inlined_call_operand.vmem [shape: f32[2,64], index: 8, kind: input, shape index: {}]
  %s9 = inlined_call_operand.vmem [shape: f32[1,64], index: 9, kind: input, shape index: {}]
  %s10 = inlined_call_operand.vmem [shape: f32[64,64], index: 10, kind: input, shape index: {}]
  %s11 = inlined_call_operand.vmem [shape: f32[1,64], index: 11, kind: input, shape index: {}]
  %s12 = inlined_call_operand.vmem [shape: f32[64,1], index: 12, kind: input, shape index: {}]
  %s13 = inlined_call_operand.<no memory space> [shape: f32[1,1], index: 13, kind: input, shape index: {}]
  %s14 = inlined_call_operand.hbm [shape: f32[16,128], index: 14, kind: output, shape index: {0}]
  %s15 = inlined_call_operand.hbm [shape: f32[16,128], index: 15, kind: output, shape index: {1}]
  %16 = xla_tuple %s14, %s15
  %s17 = sld [smem:[#allocation0]]
  $region97: #{tpu_custom_call.1} parent=0
    _
  %s19 = ssub.s32 1, %s17
  %s20 = scalar_select 0, %s19, %s17
  %v21 = vstv %s13
  %22 = vst [vmem:[#allocation2] sm:$0x1] %v21
  $region1: #{tpu_custom_call.1} parent=0
    #allocation3 [shape = 'u8[8192]{0}', space=vmem, size = 0x2000, scoped, tag = 'output window, operand 0']
    #allocation4 [shape = 's32[2]{0}', space=sflag, size = 0x8, scoped, tag = 'scoped memory for tpu_custom_call.1']
    #allocation5 [shape = 'u8[8192]{0}', space=vmem, size = 0x2000, scoped, tag = 'output window, operand 1']
    #allocation6 [shape = 's32[2]{0}', space=sflag, size = 0x8, scoped, tag = 'scoped memory for tpu_custom_call.1']
    %23 = vsyncpa [#allocation4], 0
    %s24 = scalar_lea.sflag [#allocation4], 1
    %25 = vsyncpa %s24, 0
    %26 = vsyncpa [#allocation6], 0
    %s27 = scalar_lea.sflag [#allocation6], 1
    %28 = vsyncpa %s27, 0
    loop: start=0, step=1, limit=4
    $region2: #{tpu_custom_call.1} parent=1 // loop_pre_header
      _
    $region3: #{tpu_custom_call.1} parent=1 // loop_header
      %s30 = sphi 0, %s34
      %p31 = scmp.ge.s32.totalorder %s30, 4
      %s40 = sphi 0, %s42
      %s43 = sphi 0, %s40
      %s44 = sphi 0, %s43
      %s60 = sphi 0, %s44
      %s64 = sphi 0, %s64
      %s66 = sphi 0, %s64
      %s67 = sphi 0, %s66
      %s81 = sphi 0, %s67
      %s85 = sphi 0, %s85
      %s87 = sphi 0, %s85
      %s88 = sphi 0, %s87
      %s102 = sphi 0, %s88
      %s106 = sphi 0, %s106
      %s108 = sphi 0, %s106
      %s109 = sphi 0, %s108
      %s123 = sphi 0, %s109
      %s127 = sphi 0, %s127
      %s129 = sphi 0, %s127
      %s130 = sphi 0, %s129
      %s144 = sphi 0, %s130
      %s148 = sphi 0, %s148
      %s150 = sphi 0, %s148
      %s151 = sphi 0, %s150
      %s165 = sphi 0, %s151
      %s169 = sphi 0, %s169
      %s171 = sphi 0, %s169
      %s172 = sphi 0, %s171
      %s186 = sphi 0, %s172
      %s190 = sphi 0, %s190
      %s192 = sphi 0, %s190
      %s193 = sphi 0, %s192
      %s207 = sphi 0, %s193
      %s211 = sphi 0, %s211
      %s213 = sphi 0, %s211
      %s214 = sphi 0, %s213
      %s228 = sphi 0, %s214
      %s232 = sphi 0, %s232
      %s234 = sphi 0, %s232
      %s235 = sphi 0, %s234
      %s249 = sphi 0, %s235
      %s253 = sphi 0, %s253
      %s255 = sphi 0, %s253
      %s256 = sphi 0, %s255
      %s270 = sphi 0, %s256
      %s274 = sphi 0, %s274
      %s276 = sphi 0, %s274
      %s277 = sphi 0, %s276
      %s291 = sphi 0, %s277
      %s295 = sphi 0, %s295
      %s297 = sphi 0, %s295
      %s298 = sphi 0, %s297
      %s312 = sphi 0, %s298
      %s316 = sphi 0, %s316
      %s318 = sphi 0, %s316
      %s319 = sphi 0, %s318
      %s333 = sphi 0, %s319
      %s339 = sphi 0, %s341
      %s342 = sphi 0, %s339
      %s343 = sphi 0, %s342
      %s359 = sphi 0, %s343
      %s365 = sphi 0, %s367
      %s368 = sphi 0, %s365
      %s369 = sphi 0, %s368
      %s385 = sphi 0, %s369
    $region4: #{tpu_custom_call.1} parent=1 // loop_header_branch
      %33 = sbr.rel (%p31) target = $region8
    $region5: #{tpu_custom_call.1} parent=1 // loop_body
      %s35 = ssub.s32 %s30, 1
      %s36 = ssub.s32 %s30, 2
      %s37 = sadd.s32 %s30, 1
      %s38 = ssub.s32 %s30, %s37
      %p39 = scmp.eq.s32.totalorder %s38, 0
      %s41 = sadd.s32 %s40, 1
      %s42 = scalar_select %p39, %s40, %s41
      %p45 = pneg %p39
      %p46 = scmp.eq.s32.totalorder %s30, 1
      %p47 = por %p45, %p46
      %p48 = scmp.ne.s32.totalorder %s40, %s43
      %p49 = scmp.eq.s32.totalorder %s30, 0
      %p50 = por %p48, %p49
      %p51 = scmp.ne.s32.totalorder %s40, %s43
      %p52 = scmp.eq.s32.totalorder %s35, 1
      %p53 = por %p51, %p52
      %p54 = scmp.ne.s32.totalorder %s43, %s44
      %p55 = scmp.eq.s32.totalorder %s35, 0
      %p56 = por %p54, %p55
      %p57 = scmp.ne.s32.totalorder %s43, %s44
      %p58 = scmp.eq.s32.totalorder %s36, 1
      %p59 = por %p57, %p58
      %p61 = scmp.ne.s32.totalorder %s44, %s60
      %p62 = scmp.eq.s32.totalorder %s36, 0
      %p63 = por %p61, %p62
      %s65 = sadd.s32 %s64, 1
      %p68 = scmp.eq.s32.totalorder %s30, 1
      %p69 = scmp.ne.s32.totalorder %s64, %s66
      %p70 = scmp.eq.s32.totalorder %s30, 0
      %p71 = por %p69, %p70
      %p72 = scmp.ne.s32.totalorder %s64, %s66
      %p73 = scmp.eq.s32.totalorder %s35, 1
      %p74 = por %p72, %p73
      %p75 = scmp.ne.s32.totalorder %s66, %s67
      %p76 = scmp.eq.s32.totalorder %s35, 0
      %p77 = por %p75, %p76
      %p78 = scmp.ne.s32.totalorder %s66, %s67
      %p79 = scmp.eq.s32.totalorder %s36, 1
      %p80 = por %p78, %p79
      %p82 = scmp.ne.s32.totalorder %s67, %s81
      %p83 = scmp.eq.s32.totalorder %s36, 0
      %p84 = por %p82, %p83
      %s86 = sadd.s32 %s85, 1
      %p89 = scmp.eq.s32.totalorder %s30, 1
      %p90 = scmp.ne.s32.totalorder %s85, %s87
      %p91 = scmp.eq.s32.totalorder %s30, 0
      %p92 = por %p90, %p91
      %p93 = scmp.ne.s32.totalorder %s85, %s87
      %p94 = scmp.eq.s32.totalorder %s35, 1
      %p95 = por %p93, %p94
      %p96 = scmp.ne.s32.totalorder %s87, %s88
      %p97 = scmp.eq.s32.totalorder %s35, 0
      %p98 = por %p96, %p97
      %p99 = scmp.ne.s32.totalorder %s87, %s88
      %p100 = scmp.eq.s32.totalorder %s36, 1
      %p101 = por %p99, %p100
      %p103 = scmp.ne.s32.totalorder %s88, %s102
      %p104 = scmp.eq.s32.totalorder %s36, 0
      %p105 = por %p103, %p104
      %s107 = sadd.s32 %s106, 1
      %p110 = scmp.eq.s32.totalorder %s30, 1
      %p111 = scmp.ne.s32.totalorder %s106, %s108
      %p112 = scmp.eq.s32.totalorder %s30, 0
      %p113 = por %p111, %p112
      %p114 = scmp.ne.s32.totalorder %s106, %s108
      %p115 = scmp.eq.s32.totalorder %s35, 1
      %p116 = por %p114, %p115
      %p117 = scmp.ne.s32.totalorder %s108, %s109
      %p118 = scmp.eq.s32.totalorder %s35, 0
      %p119 = por %p117, %p118
      %p120 = scmp.ne.s32.totalorder %s108, %s109
      %p121 = scmp.eq.s32.totalorder %s36, 1
      %p122 = por %p120, %p121
      %p124 = scmp.ne.s32.totalorder %s109, %s123
      %p125 = scmp.eq.s32.totalorder %s36, 0
      %p126 = por %p124, %p125
      %s128 = sadd.s32 %s127, 1
      %p131 = scmp.eq.s32.totalorder %s30, 1
      %p132 = scmp.ne.s32.totalorder %s127, %s129
      %p133 = scmp.eq.s32.totalorder %s30, 0
      %p134 = por %p132, %p133
      %p135 = scmp.ne.s32.totalorder %s127, %s129
      %p136 = scmp.eq.s32.totalorder %s35, 1
      %p137 = por %p135, %p136
      %p138 = scmp.ne.s32.totalorder %s129, %s130
      %p139 = scmp.eq.s32.totalorder %s35, 0
      %p140 = por %p138, %p139
      %p141 = scmp.ne.s32.totalorder %s129, %s130
      %p142 = scmp.eq.s32.totalorder %s36, 1
      %p143 = por %p141, %p142
      %p145 = scmp.ne.s32.totalorder %s130, %s144
      %p146 = scmp.eq.s32.totalorder %s36, 0
      %p147 = por %p145, %p146
      %s149 = sadd.s32 %s148, 1
      %p152 = scmp.eq.s32.totalorder %s30, 1
      %p153 = scmp.ne.s32.totalorder %s148, %s150
      %p154 = scmp.eq.s32.totalorder %s30, 0
      %p155 = por %p153, %p154
      %p156 = scmp.ne.s32.totalorder %s148, %s150
      %p157 = scmp.eq.s32.totalorder %s35, 1
      %p158 = por %p156, %p157
      %p159 = scmp.ne.s32.totalorder %s150, %s151
      %p160 = scmp.eq.s32.totalorder %s35, 0
      %p161 = por %p159, %p160
      %p162 = scmp.ne.s32.totalorder %s150, %s151
      %p163 = scmp.eq.s32.totalorder %s36, 1
      %p164 = por %p162, %p163
      %p166 = scmp.ne.s32.totalorder %s151, %s165
      %p167 = scmp.eq.s32.totalorder %s36, 0
      %p168 = por %p166, %p167
      %s170 = sadd.s32 %s169, 1
      %p173 = scmp.eq.s32.totalorder %s30, 1
      %p174 = scmp.ne.s32.totalorder %s169, %s171
      %p175 = scmp.eq.s32.totalorder %s30, 0
      %p176 = por %p174, %p175
      %p177 = scmp.ne.s32.totalorder %s169, %s171
      %p178 = scmp.eq.s32.totalorder %s35, 1
      %p179 = por %p177, %p178
      %p180 = scmp.ne.s32.totalorder %s171, %s172
      %p181 = scmp.eq.s32.totalorder %s35, 0
      %p182 = por %p180, %p181
      %p183 = scmp.ne.s32.totalorder %s171, %s172
      %p184 = scmp.eq.s32.totalorder %s36, 1
      %p185 = por %p183, %p184
      %p187 = scmp.ne.s32.totalorder %s172, %s186
      %p188 = scmp.eq.s32.totalorder %s36, 0
      %p189 = por %p187, %p188
      %s191 = sadd.s32 %s190, 1
      %p194 = scmp.eq.s32.totalorder %s30, 1
      %p195 = scmp.ne.s32.totalorder %s190, %s192
      %p196 = scmp.eq.s32.totalorder %s30, 0
      %p197 = por %p195, %p196
      %p198 = scmp.ne.s32.totalorder %s190, %s192
      %p199 = scmp.eq.s32.totalorder %s35, 1
      %p200 = por %p198, %p199
      %p201 = scmp.ne.s32.totalorder %s192, %s193
      %p202 = scmp.eq.s32.totalorder %s35, 0
      %p203 = por %p201, %p202
      %p204 = scmp.ne.s32.totalorder %s192, %s193
      %p205 = scmp.eq.s32.totalorder %s36, 1
      %p206 = por %p204, %p205
      %p208 = scmp.ne.s32.totalorder %s193, %s207
      %p209 = scmp.eq.s32.totalorder %s36, 0
      %p210 = por %p208, %p209
      %s212 = sadd.s32 %s211, 1
      %p215 = scmp.eq.s32.totalorder %s30, 1
      %p216 = scmp.ne.s32.totalorder %s211, %s213
      %p217 = scmp.eq.s32.totalorder %s30, 0
      %p218 = por %p216, %p217
      %p219 = scmp.ne.s32.totalorder %s211, %s213
      %p220 = scmp.eq.s32.totalorder %s35, 1
      %p221 = por %p219, %p220
      %p222 = scmp.ne.s32.totalorder %s213, %s214
      %p223 = scmp.eq.s32.totalorder %s35, 0
      %p224 = por %p222, %p223
      %p225 = scmp.ne.s32.totalorder %s213, %s214
      %p226 = scmp.eq.s32.totalorder %s36, 1
      %p227 = por %p225, %p226
      %p229 = scmp.ne.s32.totalorder %s214, %s228
      %p230 = scmp.eq.s32.totalorder %s36, 0
      %p231 = por %p229, %p230
      %s233 = sadd.s32 %s232, 1
      %p236 = scmp.eq.s32.totalorder %s30, 1
      %p237 = scmp.ne.s32.totalorder %s232, %s234
      %p238 = scmp.eq.s32.totalorder %s30, 0
      %p239 = por %p237, %p238
      %p240 = scmp.ne.s32.totalorder %s232, %s234
      %p241 = scmp.eq.s32.totalorder %s35, 1
      %p242 = por %p240, %p241
      %p243 = scmp.ne.s32.totalorder %s234, %s235
      %p244 = scmp.eq.s32.totalorder %s35, 0
      %p245 = por %p243, %p244
      %p246 = scmp.ne.s32.totalorder %s234, %s235
      %p247 = scmp.eq.s32.totalorder %s36, 1
      %p248 = por %p246, %p247
      %p250 = scmp.ne.s32.totalorder %s235, %s249
      %p251 = scmp.eq.s32.totalorder %s36, 0
      %p252 = por %p250, %p251
      %s254 = sadd.s32 %s253, 1
      %p257 = scmp.eq.s32.totalorder %s30, 1
      %p258 = scmp.ne.s32.totalorder %s253, %s255
      %p259 = scmp.eq.s32.totalorder %s30, 0
      %p260 = por %p258, %p259
      %p261 = scmp.ne.s32.totalorder %s253, %s255
      %p262 = scmp.eq.s32.totalorder %s35, 1
      %p263 = por %p261, %p262
      %p264 = scmp.ne.s32.totalorder %s255, %s256
      %p265 = scmp.eq.s32.totalorder %s35, 0
      %p266 = por %p264, %p265
      %p267 = scmp.ne.s32.totalorder %s255, %s256
      %p268 = scmp.eq.s32.totalorder %s36, 1
      %p269 = por %p267, %p268
      %p271 = scmp.ne.s32.totalorder %s256, %s270
      %p272 = scmp.eq.s32.totalorder %s36, 0
      %p273 = por %p271, %p272
      %s275 = sadd.s32 %s274, 1
      %p278 = scmp.eq.s32.totalorder %s30, 1
      %p279 = scmp.ne.s32.totalorder %s274, %s276
      %p280 = scmp.eq.s32.totalorder %s30, 0
      %p281 = por %p279, %p280
      %p282 = scmp.ne.s32.totalorder %s274, %s276
      %p283 = scmp.eq.s32.totalorder %s35, 1
      %p284 = por %p282, %p283
      %p285 = scmp.ne.s32.totalorder %s276, %s277
      %p286 = scmp.eq.s32.totalorder %s35, 0
      %p287 = por %p285, %p286
      %p288 = scmp.ne.s32.totalorder %s276, %s277
      %p289 = scmp.eq.s32.totalorder %s36, 1
      %p290 = por %p288, %p289
      %p292 = scmp.ne.s32.totalorder %s277, %s291
      %p293 = scmp.eq.s32.totalorder %s36, 0
      %p294 = por %p292, %p293
      %s296 = sadd.s32 %s295, 1
      %p299 = scmp.eq.s32.totalorder %s30, 1
      %p300 = scmp.ne.s32.totalorder %s295, %s297
      %p301 = scmp.eq.s32.totalorder %s30, 0
      %p302 = por %p300, %p301
      %p303 = scmp.ne.s32.totalorder %s295, %s297
      %p304 = scmp.eq.s32.totalorder %s35, 1
      %p305 = por %p303, %p304
      %p306 = scmp.ne.s32.totalorder %s297, %s298
      %p307 = scmp.eq.s32.totalorder %s35, 0
      %p308 = por %p306, %p307
      %p309 = scmp.ne.s32.totalorder %s297, %s298
      %p310 = scmp.eq.s32.totalorder %s36, 1
      %p311 = por %p309, %p310
      %p313 = scmp.ne.s32.totalorder %s298, %s312
      %p314 = scmp.eq.s32.totalorder %s36, 0
      %p315 = por %p313, %p314
      %s317 = sadd.s32 %s316, 1
      %p320 = scmp.eq.s32.totalorder %s30, 1
      %p321 = scmp.ne.s32.totalorder %s316, %s318
      %p322 = scmp.eq.s32.totalorder %s30, 0
      %p323 = por %p321, %p322
      %p324 = scmp.ne.s32.totalorder %s316, %s318
      %p325 = scmp.eq.s32.totalorder %s35, 1
      %p326 = por %p324, %p325
      %p327 = scmp.ne.s32.totalorder %s318, %s319
      %p328 = scmp.eq.s32.totalorder %s35, 0
      %p329 = por %p327, %p328
      %p330 = scmp.ne.s32.totalorder %s318, %s319
      %p331 = scmp.eq.s32.totalorder %s36, 1
      %p332 = por %p330, %p331
      %p334 = scmp.ne.s32.totalorder %s319, %s333
      %p335 = scmp.eq.s32.totalorder %s36, 0
      %p336 = por %p334, %p335
      %s337 = ssub.s32 %s30, %s37
      %p338 = scmp.eq.s32.totalorder %s337, 0
      %s340 = sadd.s32 %s339, 1
      %s341 = scalar_select %p338, %s339, %s340
      %p344 = pneg %p338
      %p345 = scmp.eq.s32.totalorder %s30, 1
      %p346 = por %p344, %p345
      %p347 = scmp.ne.s32.totalorder %s339, %s342
      %p348 = scmp.eq.s32.totalorder %s30, 0
      %p349 = por %p347, %p348
      %p350 = scmp.ne.s32.totalorder %s339, %s342
      %p351 = scmp.eq.s32.totalorder %s35, 1
      %p352 = por %p350, %p351
      %p353 = scmp.ne.s32.totalorder %s342, %s343
      %p354 = scmp.eq.s32.totalorder %s35, 0
      %p355 = por %p353, %p354
      %p356 = scmp.ne.s32.totalorder %s342, %s343
      %p357 = scmp.eq.s32.totalorder %s36, 1
      %p358 = por %p356, %p357
      %p360 = scmp.ne.s32.totalorder %s343, %s359
      %p361 = scmp.eq.s32.totalorder %s36, 0
      %p362 = por %p360, %p361
      %s363 = ssub.s32 %s30, %s37
      %p364 = scmp.eq.s32.totalorder %s363, 0
      %s366 = sadd.s32 %s365, 1
      %s367 = scalar_select %p364, %s365, %s366
      %p370 = pneg %p364
      %p371 = scmp.eq.s32.totalorder %s30, 1
      %p372 = por %p370, %p371
      %p373 = scmp.ne.s32.totalorder %s365, %s368
      %p374 = scmp.eq.s32.totalorder %s30, 0
      %p375 = por %p373, %p374
      %p376 = scmp.ne.s32.totalorder %s365, %s368
      %p377 = scmp.eq.s32.totalorder %s35, 1
      %p378 = por %p376, %p377
      %p379 = scmp.ne.s32.totalorder %s368, %s369
      %p380 = scmp.eq.s32.totalorder %s35, 0
      %p381 = por %p379, %p380
      %p382 = scmp.ne.s32.totalorder %s368, %s369
      %p383 = scmp.eq.s32.totalorder %s36, 1
      %p384 = por %p382, %p383
      %p386 = scmp.ne.s32.totalorder %s369, %s385
      %p387 = scmp.eq.s32.totalorder %s36, 0
      %p388 = por %p386, %p387
      %p389 = scmp.le.s32.totalorder 1, %s30
      %p390 = scmp.lt.s32.totalorder %s30, 3
      %p391 = pnand %p389, %p390
      %p392 = pneg %p391
      // Predicated region
      $region9: #{tpu_custom_call.1} parent=5 // pred_check
        _
      $region10: #{tpu_custom_call.1} parent=5 // pred_check_branch
        %394 = sbr.rel (%p391) target = $region12
      $region11: #{tpu_custom_call.1} parent=5 // pred_region
        %s395 = ssub.s32 %s30, 1
        // Predicated region
        $region13: #{tpu_custom_call.1} parent=11 // pred_check
          %p396 = pneg %p77
        $region14: #{tpu_custom_call.1} parent=11 // pred_check_branch
          %398 = sbr.rel (%p396) target = $region16
        $region15: #{tpu_custom_call.1} parent=11 // pred_region
          _
        $region16: #{tpu_custom_call.1} parent=11 // pred_fallthru
          _
        // Predicated region
        $region17: #{tpu_custom_call.1} parent=11 // pred_check
          %p399 = pneg %p98
        $region18: #{tpu_custom_call.1} parent=11 // pred_check_branch
          %401 = sbr.rel (%p399) target = $region20
        $region19: #{tpu_custom_call.1} parent=11 // pred_region
          _
        $region20: #{tpu_custom_call.1} parent=11 // pred_fallthru
          _
        // Predicated region
        $region21: #{tpu_custom_call.1} parent=11 // pred_check
          %p402 = pneg %p119
        $region22: #{tpu_custom_call.1} parent=11 // pred_check_branch
          %404 = sbr.rel (%p402) target = $region24
        $region23: #{tpu_custom_call.1} parent=11 // pred_region
          _
        $region24: #{tpu_custom_call.1} parent=11 // pred_fallthru
          _
        // Predicated region
        $region25: #{tpu_custom_call.1} parent=11 // pred_check
          %p405 = pneg %p140
        $region26: #{tpu_custom_call.1} parent=11 // pred_check_branch
          %407 = sbr.rel (%p405) target = $region28
        $region27: #{tpu_custom_call.1} parent=11 // pred_region
          _
        $region28: #{tpu_custom_call.1} parent=11 // pred_fallthru
          _
        // Predicated region
        $region29: #{tpu_custom_call.1} parent=11 // pred_check
          %p408 = pneg %p161
        $region30: #{tpu_custom_call.1} parent=11 // pred_check_branch
          %410 = sbr.rel (%p408) target = $region32
        $region31: #{tpu_custom_call.1} parent=11 // pred_region
          _
        $region32: #{tpu_custom_call.1} parent=11 // pred_fallthru
          _
        // Predicated region
        $region33: #{tpu_custom_call.1} parent=11 // pred_check
          %p411 = pneg %p182
        $region34: #{tpu_custom_call.1} parent=11 // pred_check_branch
          %413 = sbr.rel (%p411) target = $region36
        $region35: #{tpu_custom_call.1} parent=11 // pred_region
          _
        $region36: #{tpu_custom_call.1} parent=11 // pred_fallthru
          _
        // Predicated region
        $region37: #{tpu_custom_call.1} parent=11 // pred_check
          %p414 = pneg %p203
        $region38: #{tpu_custom_call.1} parent=11 // pred_check_branch
          %416 = sbr.rel (%p414) target = $region40
        $region39: #{tpu_custom_call.1} parent=11 // pred_region
          _
        $region40: #{tpu_custom_call.1} parent=11 // pred_fallthru
          _
        // Predicated region
        $region41: #{tpu_custom_call.1} parent=11 // pred_check
          %p417 = pneg %p224
        $region42: #{tpu_custom_call.1} parent=11 // pred_check_branch
          %419 = sbr.rel (%p417) target = $region44
        $region43: #{tpu_custom_call.1} parent=11 // pred_region
          _
        $region44: #{tpu_custom_call.1} parent=11 // pred_fallthru
          _
        // Predicated region
        $region45: #{tpu_custom_call.1} parent=11 // pred_check
          %p420 = pneg %p245
        $region46: #{tpu_custom_call.1} parent=11 // pred_check_branch
          %422 = sbr.rel (%p420) target = $region48
        $region47: #{tpu_custom_call.1} parent=11 // pred_region
          _
        $region48: #{tpu_custom_call.1} parent=11 // pred_fallthru
          _
        // Predicated region
        $region49: #{tpu_custom_call.1} parent=11 // pred_check
          %p423 = pneg %p266
        $region50: #{tpu_custom_call.1} parent=11 // pred_check_branch
          %425 = sbr.rel (%p423) target = $region52
        $region51: #{tpu_custom_call.1} parent=11 // pred_region
          _
        $region52: #{tpu_custom_call.1} parent=11 // pred_fallthru
          _
        // Predicated region
        $region53: #{tpu_custom_call.1} parent=11 // pred_check
          %p426 = pneg %p287
        $region54: #{tpu_custom_call.1} parent=11 // pred_check_branch
          %428 = sbr.rel (%p426) target = $region56
        $region55: #{tpu_custom_call.1} parent=11 // pred_region
          _
        $region56: #{tpu_custom_call.1} parent=11 // pred_fallthru
          _
        // Predicated region
        $region57: #{tpu_custom_call.1} parent=11 // pred_check
          %p429 = pneg %p308
        $region58: #{tpu_custom_call.1} parent=11 // pred_check_branch
          %431 = sbr.rel (%p429) target = $region60
        $region59: #{tpu_custom_call.1} parent=11 // pred_region
          _
        $region60: #{tpu_custom_call.1} parent=11 // pred_fallthru
          _
        // Predicated region
        $region61: #{tpu_custom_call.1} parent=11 // pred_check
          %p432 = pneg %p329
        $region62: #{tpu_custom_call.1} parent=11 // pred_check_branch
          %434 = sbr.rel (%p432) target = $region64
        $region63: #{tpu_custom_call.1} parent=11 // pred_region
          _
        $region64: #{tpu_custom_call.1} parent=11 // pred_fallthru
          _
      $region12: #{tpu_custom_call.1} parent=5 // pred_fallthru
        _
      %p435 = scmp.lt.s32.totalorder %s30, 2
      // Predicated region
      $region65: #{tpu_custom_call.1} parent=5 // pred_check
        %p436 = pneg %p435
      $region66: #{tpu_custom_call.1} parent=5 // pred_check_branch
        %438 = sbr.rel (%p436) target = $region68
      $region67: #{tpu_custom_call.1} parent=5 // pred_region
        // Predicated region
        $region69: #{tpu_custom_call.1} parent=67 // pred_check
          %p439 = pneg %p50
        $region70: #{tpu_custom_call.1} parent=67 // pred_check_branch
          %441 = sbr.rel (%p439) target = $region72
        $region71: #{tpu_custom_call.1} parent=67 // pred_region
          %s442 = smul.u32 128, %s30
          %p443 = scmp.lt.s32.totalorder %s442, 255
          %s444 = scalar_select %p443, %s442, 255
          %s445 = smul.addr %s444, 8
          %s446 = scalar_lea.vmem %s0, %s445
          %s447 = smul.u32 128, %s30
        $region72: #{tpu_custom_call.1} parent=67 // pred_fallthru
          _
      $region68: #{tpu_custom_call.1} parent=5 // pred_fallthru
        _
      %p448 = scmp.le.s32.totalorder 1, %s30
      %p449 = scmp.lt.s32.totalorder %s30, 3
      %p450 = pnand %p448, %p449
      %p451 = pneg %p450
      // Predicated region
      $region73: #{tpu_custom_call.1} parent=5 // pred_check
        _
      $region74: #{tpu_custom_call.1} parent=5 // pred_check_branch
        %453 = sbr.rel (%p450) target = $region76
      $region75: #{tpu_custom_call.1} parent=5 // pred_region
        %s454 = ssub.s32 %s30, 1
        %s455 = smul.u32 128, %s35
        %p456 = scmp.lt.s32.totalorder %s455, 255
        %s457 = scalar_select %p456, %s455, 255
        %s458 = smul.addr %s457, 8
        %s459 = scalar_lea.vmem %s0, %s458
        %p460 = pneg %p56
        %p461 = pneg %p53
        %p462 = pneg %p77
        %p463 = pneg %p74
        %p464 = pneg %p98
        %p465 = pneg %p95
        %p466 = pneg %p119
        %p467 = pneg %p116
        %p468 = pneg %p140
        %p469 = pneg %p137
        %p470 = pneg %p161
        %p471 = pneg %p158
        %p472 = pneg %p182
        %p473 = pneg %p179
        %p474 = pneg %p203
        %p475 = pneg %p200
        %p476 = pneg %p224
        %p477 = pneg %p221
        %p478 = pneg %p245
        %p479 = pneg %p242
        %p480 = pneg %p266
        %p481 = pneg %p263
        %p482 = pneg %p287
        %p483 = pneg %p284
        %p484 = pneg %p308
        %p485 = pneg %p305
        %p486 = pneg %p329
        %p487 = pneg %p326
        %p488 = pneg %p355
        %p489 = pneg %p352
        %s490 = sand.u32 %s342, 1
        %s491 = scalar_lea.sflag [#allocation4], %s490
        %s492 = sand.u32 %s342, 1
        %s493 = smul.addr %s492, 8
        %s494 = scalar_lea.vmem [#allocation3], %s493
        %p495 = pneg %p381
        %p496 = pneg %p378
        %s497 = sand.u32 %s368, 1
        %s498 = scalar_lea.sflag [#allocation6], %s497
        %s499 = sand.u32 %s368, 1
        %s500 = smul.addr %s499, 8
        %s501 = scalar_lea.vmem [#allocation5], %s500
        %s502 = smul.u32 128, %s35
        %p503 = scmp.lt.s32.totalorder %s502, 255
        %s504 = scalar_select %p503, %s502, 255
        %s505 = smul.addr %s504, 8
        %s506 = scalar_lea.vmem %s0, %s505
        %s507 = smul.u32 128, %s35
        %v508 = vld [vmem:[%s506] sm:$0xff]
        %v509 = vld [vmem:[%s506 + $0x8] sm:$0xff]
        %v510 = vld [vmem:[%s506 + $0x10] sm:$0xff]
        %v511 = vld [vmem:[%s506 + $0x18] sm:$0xff]
        %v512 = vld [vmem:[%s506 + $0x20] sm:$0xff]
        %v513 = vld [vmem:[%s506 + $0x28] sm:$0xff]
        %v514 = vld [vmem:[%s506 + $0x30] sm:$0xff]
        %v515 = vld [vmem:[%s506 + $0x38] sm:$0xff]
        %v516 = vld [vmem:[%s506 + $0x40] sm:$0xff]
        %v517 = vld [vmem:[%s506 + $0x48] sm:$0xff]
        %v518 = vld [vmem:[%s506 + $0x50] sm:$0xff]
        %v519 = vld [vmem:[%s506 + $0x58] sm:$0xff]
        %v520 = vld [vmem:[%s506 + $0x60] sm:$0xff]
        %v521 = vld [vmem:[%s506 + $0x68] sm:$0xff]
        %v522 = vld [vmem:[%s506 + $0x70] sm:$0xff]
        %v523 = vld [vmem:[%s506 + $0x78] sm:$0xff]
        %v524 = vld [vmem:[%s506 + $0x80] sm:$0xff]
        %v525 = vld [vmem:[%s506 + $0x88] sm:$0xff]
        %v526 = vld [vmem:[%s506 + $0x90] sm:$0xff]
        %v527 = vld [vmem:[%s506 + $0x98] sm:$0xff]
        %v528 = vld [vmem:[%s506 + $0xa0] sm:$0xff]
        %v529 = vld [vmem:[%s506 + $0xa8] sm:$0xff]
        %v530 = vld [vmem:[%s506 + $0xb0] sm:$0xff]
        %v531 = vld [vmem:[%s506 + $0xb8] sm:$0xff]
        %v532 = vld [vmem:[%s506 + $0xc0] sm:$0xff]
        %v533 = vld [vmem:[%s506 + $0xc8] sm:$0xff]
        %v534 = vld [vmem:[%s506 + $0xd0] sm:$0xff]
        %v535 = vld [vmem:[%s506 + $0xd8] sm:$0xff]
        %v536 = vld [vmem:[%s506 + $0xe0] sm:$0xff]
        %v537 = vld [vmem:[%s506 + $0xe8] sm:$0xff]
        %v538 = vld [vmem:[%s506 + $0xf0] sm:$0xff]
        %v539 = vld [vmem:[%s506 + $0xf8] sm:$0xff]
        %v540 = vld [vmem:[%s506 + $0x100] sm:$0xff]
        %v541 = vld [vmem:[%s506 + $0x108] sm:$0xff]
        %v542 = vld [vmem:[%s506 + $0x110] sm:$0xff]
        %v543 = vld [vmem:[%s506 + $0x118] sm:$0xff]
        %v544 = vld [vmem:[%s506 + $0x120] sm:$0xff]
        %v545 = vld [vmem:[%s506 + $0x128] sm:$0xff]
        %v546 = vld [vmem:[%s506 + $0x130] sm:$0xff]
        %v547 = vld [vmem:[%s506 + $0x138] sm:$0xff]
        %v548 = vld [vmem:[%s506 + $0x140] sm:$0xff]
        %v549 = vld [vmem:[%s506 + $0x148] sm:$0xff]
        %v550 = vld [vmem:[%s506 + $0x150] sm:$0xff]
        %v551 = vld [vmem:[%s506 + $0x158] sm:$0xff]
        %v552 = vld [vmem:[%s506 + $0x160] sm:$0xff]
        %v553 = vld [vmem:[%s506 + $0x168] sm:$0xff]
        %v554 = vld [vmem:[%s506 + $0x170] sm:$0xff]
        %v555 = vld [vmem:[%s506 + $0x178] sm:$0xff]
        %v556 = vld [vmem:[%s506 + $0x180] sm:$0xff]
        %v557 = vld [vmem:[%s506 + $0x188] sm:$0xff]
        %v558 = vld [vmem:[%s506 + $0x190] sm:$0xff]
        %v559 = vld [vmem:[%s506 + $0x198] sm:$0xff]
        %v560 = vld [vmem:[%s506 + $0x1a0] sm:$0xff]
        %v561 = vld [vmem:[%s506 + $0x1a8] sm:$0xff]
        %v562 = vld [vmem:[%s506 + $0x1b0] sm:$0xff]
        %v563 = vld [vmem:[%s506 + $0x1b8] sm:$0xff]
        %v564 = vld [vmem:[%s506 + $0x1c0] sm:$0xff]
        %v565 = vld [vmem:[%s506 + $0x1c8] sm:$0xff]
        %v566 = vld [vmem:[%s506 + $0x1d0] sm:$0xff]
        %v567 = vld [vmem:[%s506 + $0x1d8] sm:$0xff]
        %v568 = vld [vmem:[%s506 + $0x1e0] sm:$0xff]
        %v569 = vld [vmem:[%s506 + $0x1e8] sm:$0xff]
        %v570 = vld [vmem:[%s506 + $0x1f0] sm:$0xff]
        %v571 = vld [vmem:[%s506 + $0x1f8] sm:$0xff]
        %v572 = vld [vmem:[%s506 + $0x200] sm:$0xff]
        %v573 = vld [vmem:[%s506 + $0x208] sm:$0xff]
        %v574 = vld [vmem:[%s506 + $0x210] sm:$0xff]
        %v575 = vld [vmem:[%s506 + $0x218] sm:$0xff]
        %v576 = vld [vmem:[%s506 + $0x220] sm:$0xff]
        %v577 = vld [vmem:[%s506 + $0x228] sm:$0xff]
        %v578 = vld [vmem:[%s506 + $0x230] sm:$0xff]
        %v579 = vld [vmem:[%s506 + $0x238] sm:$0xff]
        %v580 = vld [vmem:[%s506 + $0x240] sm:$0xff]
        %v581 = vld [vmem:[%s506 + $0x248] sm:$0xff]
        %v582 = vld [vmem:[%s506 + $0x250] sm:$0xff]
        %v583 = vld [vmem:[%s506 + $0x258] sm:$0xff]
        %v584 = vld [vmem:[%s506 + $0x260] sm:$0xff]
        %v585 = vld [vmem:[%s506 + $0x268] sm:$0xff]
        %v586 = vld [vmem:[%s506 + $0x270] sm:$0xff]
        %v587 = vld [vmem:[%s506 + $0x278] sm:$0xff]
        %v588 = vld [vmem:[%s506 + $0x280] sm:$0xff]
        %v589 = vld [vmem:[%s506 + $0x288] sm:$0xff]
        %v590 = vld [vmem:[%s506 + $0x290] sm:$0xff]
        %v591 = vld [vmem:[%s506 + $0x298] sm:$0xff]
        %v592 = vld [vmem:[%s506 + $0x2a0] sm:$0xff]
        %v593 = vld [vmem:[%s506 + $0x2a8] sm:$0xff]
        %v594 = vld [vmem:[%s506 + $0x2b0] sm:$0xff]
        %v595 = vld [vmem:[%s506 + $0x2b8] sm:$0xff]
        %v596 = vld [vmem:[%s506 + $0x2c0] sm:$0xff]
        %v597 = vld [vmem:[%s506 + $0x2c8] sm:$0xff]
        %v598 = vld [vmem:[%s506 + $0x2d0] sm:$0xff]
        %v599 = vld [vmem:[%s506 + $0x2d8] sm:$0xff]
        %v600 = vld [vmem:[%s506 + $0x2e0] sm:$0xff]
        %v601 = vld [vmem:[%s506 + $0x2e8] sm:$0xff]
        %v602 = vld [vmem:[%s506 + $0x2f0] sm:$0xff]
        %v603 = vld [vmem:[%s506 + $0x2f8] sm:$0xff]
        %v604 = vld [vmem:[%s506 + $0x300] sm:$0xff]
        %v605 = vld [vmem:[%s506 + $0x308] sm:$0xff]
        %v606 = vld [vmem:[%s506 + $0x310] sm:$0xff]
        %v607 = vld [vmem:[%s506 + $0x318] sm:$0xff]
        %v608 = vld [vmem:[%s506 + $0x320] sm:$0xff]
        %v609 = vld [vmem:[%s506 + $0x328] sm:$0xff]
        %v610 = vld [vmem:[%s506 + $0x330] sm:$0xff]
        %v611 = vld [vmem:[%s506 + $0x338] sm:$0xff]
        %v612 = vld [vmem:[%s506 + $0x340] sm:$0xff]
        %v613 = vld [vmem:[%s506 + $0x348] sm:$0xff]
        %v614 = vld [vmem:[%s506 + $0x350] sm:$0xff]
        %v615 = vld [vmem:[%s506 + $0x358] sm:$0xff]
        %v616 = vld [vmem:[%s506 + $0x360] sm:$0xff]
        %v617 = vld [vmem:[%s506 + $0x368] sm:$0xff]
        %v618 = vld [vmem:[%s506 + $0x370] sm:$0xff]
        %v619 = vld [vmem:[%s506 + $0x378] sm:$0xff]
        %v620 = vld [vmem:[%s506 + $0x380] sm:$0xff]
        %v621 = vld [vmem:[%s506 + $0x388] sm:$0xff]
        %v622 = vld [vmem:[%s506 + $0x390] sm:$0xff]
        %v623 = vld [vmem:[%s506 + $0x398] sm:$0xff]
        %v624 = vld [vmem:[%s506 + $0x3a0] sm:$0xff]
        %v625 = vld [vmem:[%s506 + $0x3a8] sm:$0xff]
        %v626 = vld [vmem:[%s506 + $0x3b0] sm:$0xff]
        %v627 = vld [vmem:[%s506 + $0x3b8] sm:$0xff]
        %v628 = vld [vmem:[%s506 + $0x3c0] sm:$0xff]
        %v629 = vld [vmem:[%s506 + $0x3c8] sm:$0xff]
        %v630 = vld [vmem:[%s506 + $0x3d0] sm:$0xff]
        %v631 = vld [vmem:[%s506 + $0x3d8] sm:$0xff]
        %v632 = vld [vmem:[%s506 + $0x3e0] sm:$0xff]
        %v633 = vld [vmem:[%s506 + $0x3e8] sm:$0xff]
        %v634 = vld [vmem:[%s506 + $0x3f0] sm:$0xff]
        %v635 = vld [vmem:[%s506 + $0x3f8] sm:$0xff]
        %v636 = vld [vmem:[%s1] sm:$0xff]
        %v637 = vld [vmem:[%s1 + $0x8] sm:$0xff]
        %v638 = vld [vmem:[%s2] sm:$0x1]
        %v640 = vperm.slane %v638, 0
        %vm642 = vcmask 130048
        %v644 = vsel %vm642, %v508, 0
        %v647 = vsel %vm642, %v509, 0
        %v650 = vsel %vm642, %v510, 0
        %v653 = vsel %vm642, %v511, 0
        %v656 = vsel %vm642, %v512, 0
        %v659 = vsel %vm642, %v513, 0
        %v662 = vsel %vm642, %v514, 0
        %v665 = vsel %vm642, %v515, 0
        %v668 = vsel %vm642, %v516, 0
        %v671 = vsel %vm642, %v517, 0
        %v674 = vsel %vm642, %v518, 0
        %v677 = vsel %vm642, %v519, 0
        %v680 = vsel %vm642, %v520, 0
        %v683 = vsel %vm642, %v521, 0
        %v686 = vsel %vm642, %v522, 0
        %v689 = vsel %vm642, %v523, 0
        %v692 = vsel %vm642, %v524, 0
        %v695 = vsel %vm642, %v525, 0
        %v698 = vsel %vm642, %v526, 0
        %v701 = vsel %vm642, %v527, 0
        %v704 = vsel %vm642, %v528, 0
        %v707 = vsel %vm642, %v529, 0
        %v710 = vsel %vm642, %v530, 0
        %v713 = vsel %vm642, %v531, 0
        %v716 = vsel %vm642, %v532, 0
        %v719 = vsel %vm642, %v533, 0
        %v722 = vsel %vm642, %v534, 0
        %v725 = vsel %vm642, %v535, 0
        %v728 = vsel %vm642, %v536, 0
        %v731 = vsel %vm642, %v537, 0
        %v734 = vsel %vm642, %v538, 0
        %v737 = vsel %vm642, %v539, 0
        %v740 = vsel %vm642, %v540, 0
        %v743 = vsel %vm642, %v541, 0
        %v746 = vsel %vm642, %v542, 0
        %v749 = vsel %vm642, %v543, 0
        %v752 = vsel %vm642, %v544, 0
        %v755 = vsel %vm642, %v545, 0
        %v758 = vsel %vm642, %v546, 0
        %v761 = vsel %vm642, %v547, 0
        %v764 = vsel %vm642, %v548, 0
        %v767 = vsel %vm642, %v549, 0
        %v770 = vsel %vm642, %v550, 0
        %v773 = vsel %vm642, %v551, 0
        %v776 = vsel %vm642, %v552, 0
        %v779 = vsel %vm642, %v553, 0
        %v782 = vsel %vm642, %v554, 0
        %v785 = vsel %vm642, %v555, 0
        %v788 = vsel %vm642, %v556, 0
        %v791 = vsel %vm642, %v557, 0
        %v794 = vsel %vm642, %v558, 0
        %v797 = vsel %vm642, %v559, 0
        %v800 = vsel %vm642, %v560, 0
        %v803 = vsel %vm642, %v561, 0
        %v806 = vsel %vm642, %v562, 0
        %v809 = vsel %vm642, %v563, 0
        %v812 = vsel %vm642, %v564, 0
        %v815 = vsel %vm642, %v565, 0
        %v818 = vsel %vm642, %v566, 0
        %v821 = vsel %vm642, %v567, 0
        %v824 = vsel %vm642, %v568, 0
        %v827 = vsel %vm642, %v569, 0
        %v830 = vsel %vm642, %v570, 0
        %v833 = vsel %vm642, %v571, 0
        %v836 = vsel %vm642, %v572, 0
        %v839 = vsel %vm642, %v573, 0
        %v842 = vsel %vm642, %v574, 0
        %v845 = vsel %vm642, %v575, 0
        %v848 = vsel %vm642, %v576, 0
        %v851 = vsel %vm642, %v577, 0
        %v854 = vsel %vm642, %v578, 0
        %v857 = vsel %vm642, %v579, 0
        %v860 = vsel %vm642, %v580, 0
        %v863 = vsel %vm642, %v581, 0
        %v866 = vsel %vm642, %v582, 0
        %v869 = vsel %vm642, %v583, 0
        %v872 = vsel %vm642, %v584, 0
        %v875 = vsel %vm642, %v585, 0
        %v878 = vsel %vm642, %v586, 0
        %v881 = vsel %vm642, %v587, 0
        %v884 = vsel %vm642, %v588, 0
        %v887 = vsel %vm642, %v589, 0
        %v890 = vsel %vm642, %v590, 0
        %v893 = vsel %vm642, %v591, 0
        %v896 = vsel %vm642, %v592, 0
        %v899 = vsel %vm642, %v593, 0
        %v902 = vsel %vm642, %v594, 0
        %v905 = vsel %vm642, %v595, 0
        %v908 = vsel %vm642, %v596, 0
        %v911 = vsel %vm642, %v597, 0
        %v914 = vsel %vm642, %v598, 0
        %v917 = vsel %vm642, %v599, 0
        %v920 = vsel %vm642, %v600, 0
        %v923 = vsel %vm642, %v601, 0
        %v926 = vsel %vm642, %v602, 0
        %v929 = vsel %vm642, %v603, 0
        %v932 = vsel %vm642, %v604, 0
        %v935 = vsel %vm642, %v605, 0
        %v938 = vsel %vm642, %v606, 0
        %v941 = vsel %vm642, %v607, 0
        %v944 = vsel %vm642, %v608, 0
        %v947 = vsel %vm642, %v609, 0
        %v950 = vsel %vm642, %v610, 0
        %v953 = vsel %vm642, %v611, 0
        %v956 = vsel %vm642, %v612, 0
        %v959 = vsel %vm642, %v613, 0
        %v962 = vsel %vm642, %v614, 0
        %v965 = vsel %vm642, %v615, 0
        %v968 = vsel %vm642, %v616, 0
        %v971 = vsel %vm642, %v617, 0
        %v974 = vsel %vm642, %v618, 0
        %v977 = vsel %vm642, %v619, 0
        %v980 = vsel %vm642, %v620, 0
        %v983 = vsel %vm642, %v621, 0
        %v986 = vsel %vm642, %v622, 0
        %v989 = vsel %vm642, %v623, 0
        %v992 = vsel %vm642, %v624, 0
        %v995 = vsel %vm642, %v625, 0
        %v998 = vsel %vm642, %v626, 0
        %v1001 = vsel %vm642, %v627, 0
        %v1004 = vsel %vm642, %v628, 0
        %v1007 = vsel %vm642, %v629, 0
        %v1010 = vsel %vm642, %v630, 0
        %v1013 = vsel %vm642, %v631, 0
        %v1016 = vsel %vm642, %v632, 0
        %v1019 = vsel %vm642, %v633, 0
        %v1022 = vsel %vm642, %v634, 0
        %v1025 = vsel %vm642, %v635, 0
        %1027 = vmatpush.msra.mxu0 0.0
        %1028 = vmatpush.msra.mxu0 0.0
        %1029 = vmatpush.msra.mxu0 0.0
        %1030 = vmatpush.msra.mxu0 0.0
        %1031 = vmatpush.msra.mxu0 0.0
        %1032 = vmatpush.msra.mxu0 0.0
        %1033 = vmatpush.msra.mxu0 0.0
        %1034 = vmatpush.msra.mxu0 0.0
        %1035 = vmatpush.msra.mxu0 0.0
        %1036 = vmatpush.msra.mxu0 0.0
        %1037 = vmatpush.msra.mxu0 0.0
        %1038 = vmatpush.msra.mxu0 0.0
        %1039 = vmatpush.msra.mxu0 0.0
        %1040 = vmatpush.msra.mxu0 0.0
        %1041 = vmatpush.msra.mxu0 %v637
        %1042 = vmatpush.msra.mxu0 %v636
        %1043 = vmatmul.f32.gmra.mxu0 %v644
        %v1044 = vpop.f32.mrf.mxu0
        %v1045 = vadd.f32 %v640, %v1044
        %1046 = vmatmul.f32.gmra.mxu0 %v647
        %v1047 = vpop.f32.mrf.mxu0
        %v1048 = vadd.f32 %v640, %v1047
        %1049 = vmatmul.f32.gmra.mxu0 %v650
        %v1050 = vpop.f32.mrf.mxu0
        %v1051 = vadd.f32 %v640, %v1050
        %1052 = vmatmul.f32.gmra.mxu0 %v653
        %v1053 = vpop.f32.mrf.mxu0
        %v1054 = vadd.f32 %v640, %v1053
        %1055 = vmatmul.f32.gmra.mxu0 %v656
        %v1056 = vpop.f32.mrf.mxu0
        %v1057 = vadd.f32 %v640, %v1056
        %1058 = vmatmul.f32.gmra.mxu0 %v659
        %v1059 = vpop.f32.mrf.mxu0
        %v1060 = vadd.f32 %v640, %v1059
        %1061 = vmatmul.f32.gmra.mxu0 %v662
        %v1062 = vpop.f32.mrf.mxu0
        %v1063 = vadd.f32 %v640, %v1062
        %1064 = vmatmul.f32.gmra.mxu0 %v665
        %v1065 = vpop.f32.mrf.mxu0
        %v1066 = vadd.f32 %v640, %v1065
        %1067 = vmatmul.f32.gmra.mxu0 %v668
        %v1068 = vpop.f32.mrf.mxu0
        %v1069 = vadd.f32 %v640, %v1068
        %1070 = vmatmul.f32.gmra.mxu0 %v671
        %v1071 = vpop.f32.mrf.mxu0
        %v1072 = vadd.f32 %v640, %v1071
        %1073 = vmatmul.f32.gmra.mxu0 %v674
        %v1074 = vpop.f32.mrf.mxu0
        %v1075 = vadd.f32 %v640, %v1074
        %1076 = vmatmul.f32.gmra.mxu0 %v677
        %v1077 = vpop.f32.mrf.mxu0
        %v1078 = vadd.f32 %v640, %v1077
        %1079 = vmatmul.f32.gmra.mxu0 %v680
        %v1080 = vpop.f32.mrf.mxu0
        %v1081 = vadd.f32 %v640, %v1080
        %1082 = vmatmul.f32.gmra.mxu0 %v683
        %v1083 = vpop.f32.mrf.mxu0
        %v1084 = vadd.f32 %v640, %v1083
        %1085 = vmatmul.f32.gmra.mxu0 %v686
        %v1086 = vpop.f32.mrf.mxu0
        %v1087 = vadd.f32 %v640, %v1086
        %1088 = vmatmul.f32.gmra.mxu0 %v689
        %v1089 = vpop.f32.mrf.mxu0
        %v1090 = vadd.f32 %v640, %v1089
        %1091 = vmatmul.f32.gmra.mxu0 %v692
        %v1092 = vpop.f32.mrf.mxu0
        %v1093 = vadd.f32 %v640, %v1092
        %1094 = vmatmul.f32.gmra.mxu0 %v695
        %v1095 = vpop.f32.mrf.mxu0
        %v1096 = vadd.f32 %v640, %v1095
        %1097 = vmatmul.f32.gmra.mxu0 %v698
        %v1098 = vpop.f32.mrf.mxu0
        %v1099 = vadd.f32 %v640, %v1098
        %1100 = vmatmul.f32.gmra.mxu0 %v701
        %v1101 = vpop.f32.mrf.mxu0
        %v1102 = vadd.f32 %v640, %v1101
        %1103 = vmatmul.f32.gmra.mxu0 %v704
        %v1104 = vpop.f32.mrf.mxu0
        %v1105 = vadd.f32 %v640, %v1104
        %1106 = vmatmul.f32.gmra.mxu0 %v707
        %v1107 = vpop.f32.mrf.mxu0
        %v1108 = vadd.f32 %v640, %v1107
        %1109 = vmatmul.f32.gmra.mxu0 %v710
        %v1110 = vpop.f32.mrf.mxu0
        %v1111 = vadd.f32 %v640, %v1110
        %1112 = vmatmul.f32.gmra.mxu0 %v713
        %v1113 = vpop.f32.mrf.mxu0
        %v1114 = vadd.f32 %v640, %v1113
        %1115 = vmatmul.f32.gmra.mxu0 %v716
        %v1116 = vpop.f32.mrf.mxu0
        %v1117 = vadd.f32 %v640, %v1116
        %1118 = vmatmul.f32.gmra.mxu0 %v719
        %v1119 = vpop.f32.mrf.mxu0
        %v1120 = vadd.f32 %v640, %v1119
        %1121 = vmatmul.f32.gmra.mxu0 %v722
        %v1122 = vpop.f32.mrf.mxu0
        %v1123 = vadd.f32 %v640, %v1122
        %1124 = vmatmul.f32.gmra.mxu0 %v725
        %v1125 = vpop.f32.mrf.mxu0
        %v1126 = vadd.f32 %v640, %v1125
        %1127 = vmatmul.f32.gmra.mxu0 %v728
        %v1128 = vpop.f32.mrf.mxu0
        %v1129 = vadd.f32 %v640, %v1128
        %1130 = vmatmul.f32.gmra.mxu0 %v731
        %v1131 = vpop.f32.mrf.mxu0
        %v1132 = vadd.f32 %v640, %v1131
        %1133 = vmatmul.f32.gmra.mxu0 %v734
        %v1134 = vpop.f32.mrf.mxu0
        %v1135 = vadd.f32 %v640, %v1134
        %1136 = vmatmul.f32.gmra.mxu0 %v737
        %v1137 = vpop.f32.mrf.mxu0
        %v1138 = vadd.f32 %v640, %v1137
        %1139 = vmatmul.f32.gmra.mxu0 %v740
        %v1140 = vpop.f32.mrf.mxu0
        %v1141 = vadd.f32 %v640, %v1140
        %1142 = vmatmul.f32.gmra.mxu0 %v743
        %v1143 = vpop.f32.mrf.mxu0
        %v1144 = vadd.f32 %v640, %v1143
        %1145 = vmatmul.f32.gmra.mxu0 %v746
        %v1146 = vpop.f32.mrf.mxu0
        %v1147 = vadd.f32 %v640, %v1146
        %1148 = vmatmul.f32.gmra.mxu0 %v749
        %v1149 = vpop.f32.mrf.mxu0
        %v1150 = vadd.f32 %v640, %v1149
        %1151 = vmatmul.f32.gmra.mxu0 %v752
        %v1152 = vpop.f32.mrf.mxu0
        %v1153 = vadd.f32 %v640, %v1152
        %1154 = vmatmul.f32.gmra.mxu0 %v755
        %v1155 = vpop.f32.mrf.mxu0
        %v1156 = vadd.f32 %v640, %v1155
        %1157 = vmatmul.f32.gmra.mxu0 %v758
        %v1158 = vpop.f32.mrf.mxu0
        %v1159 = vadd.f32 %v640, %v1158
        %1160 = vmatmul.f32.gmra.mxu0 %v761
        %v1161 = vpop.f32.mrf.mxu0
        %v1162 = vadd.f32 %v640, %v1161
        %1163 = vmatmul.f32.gmra.mxu0 %v764
        %v1164 = vpop.f32.mrf.mxu0
        %v1165 = vadd.f32 %v640, %v1164
        %1166 = vmatmul.f32.gmra.mxu0 %v767
        %v1167 = vpop.f32.mrf.mxu0
        %v1168 = vadd.f32 %v640, %v1167
        %1169 = vmatmul.f32.gmra.mxu0 %v770
        %v1170 = vpop.f32.mrf.mxu0
        %v1171 = vadd.f32 %v640, %v1170
        %1172 = vmatmul.f32.gmra.mxu0 %v773
        %v1173 = vpop.f32.mrf.mxu0
        %v1174 = vadd.f32 %v640, %v1173
        %1175 = vmatmul.f32.gmra.mxu0 %v776
        %v1176 = vpop.f32.mrf.mxu0
        %v1177 = vadd.f32 %v640, %v1176
        %1178 = vmatmul.f32.gmra.mxu0 %v779
        %v1179 = vpop.f32.mrf.mxu0
        %v1180 = vadd.f32 %v640, %v1179
        %1181 = vmatmul.f32.gmra.mxu0 %v782
        %v1182 = vpop.f32.mrf.mxu0
        %v1183 = vadd.f32 %v640, %v1182
        %1184 = vmatmul.f32.gmra.mxu0 %v785
        %v1185 = vpop.f32.mrf.mxu0
        %v1186 = vadd.f32 %v640, %v1185
        %1187 = vmatmul.f32.gmra.mxu0 %v788
        %v1188 = vpop.f32.mrf.mxu0
        %v1189 = vadd.f32 %v640, %v1188
        %1190 = vmatmul.f32.gmra.mxu0 %v791
        %v1191 = vpop.f32.mrf.mxu0
        %v1192 = vadd.f32 %v640, %v1191
        %1193 = vmatmul.f32.gmra.mxu0 %v794
        %v1194 = vpop.f32.mrf.mxu0
        %v1195 = vadd.f32 %v640, %v1194
        %1196 = vmatmul.f32.gmra.mxu0 %v797
        %v1197 = vpop.f32.mrf.mxu0
        %v1198 = vadd.f32 %v640, %v1197
        %1199 = vmatmul.f32.gmra.mxu0 %v800
        %v1200 = vpop.f32.mrf.mxu0
        %v1201 = vadd.f32 %v640, %v1200
        %1202 = vmatmul.f32.gmra.mxu0 %v803
        %v1203 = vpop.f32.mrf.mxu0
        %v1204 = vadd.f32 %v640, %v1203
        %1205 = vmatmul.f32.gmra.mxu0 %v806
        %v1206 = vpop.f32.mrf.mxu0
        %v1207 = vadd.f32 %v640, %v1206
        %1208 = vmatmul.f32.gmra.mxu0 %v809
        %v1209 = vpop.f32.mrf.mxu0
        %v1210 = vadd.f32 %v640, %v1209
        %1211 = vmatmul.f32.gmra.mxu0 %v812
        %v1212 = vpop.f32.mrf.mxu0
        %v1213 = vadd.f32 %v640, %v1212
        %1214 = vmatmul.f32.gmra.mxu0 %v815
        %v1215 = vpop.f32.mrf.mxu0
        %v1216 = vadd.f32 %v640, %v1215
        %1217 = vmatmul.f32.gmra.mxu0 %v818
        %v1218 = vpop.f32.mrf.mxu0
        %v1219 = vadd.f32 %v640, %v1218
        %1220 = vmatmul.f32.gmra.mxu0 %v821
        %v1221 = vpop.f32.mrf.mxu0
        %v1222 = vadd.f32 %v640, %v1221
        %1223 = vmatmul.f32.gmra.mxu0 %v824
        %v1224 = vpop.f32.mrf.mxu0
        %v1225 = vadd.f32 %v640, %v1224
        %1226 = vmatmul.f32.gmra.mxu0 %v827
        %v1227 = vpop.f32.mrf.mxu0
        %v1228 = vadd.f32 %v640, %v1227
        %1229 = vmatmul.f32.gmra.mxu0 %v830
        %v1230 = vpop.f32.mrf.mxu0
        %v1231 = vadd.f32 %v640, %v1230
        %1232 = vmatmul.f32.gmra.mxu0 %v833
        %v1233 = vpop.f32.mrf.mxu0
        %v1234 = vadd.f32 %v640, %v1233
        %1235 = vmatmul.f32.gmra.mxu0 %v836
        %v1236 = vpop.f32.mrf.mxu0
        %v1237 = vadd.f32 %v640, %v1236
        %1238 = vmatmul.f32.gmra.mxu0 %v839
        %v1239 = vpop.f32.mrf.mxu0
        %v1240 = vadd.f32 %v640, %v1239
        %1241 = vmatmul.f32.gmra.mxu0 %v842
        %v1242 = vpop.f32.mrf.mxu0
        %v1243 = vadd.f32 %v640, %v1242
        %1244 = vmatmul.f32.gmra.mxu0 %v845
        %v1245 = vpop.f32.mrf.mxu0
        %v1246 = vadd.f32 %v640, %v1245
        %1247 = vmatmul.f32.gmra.mxu0 %v848
        %v1248 = vpop.f32.mrf.mxu0
        %v1249 = vadd.f32 %v640, %v1248
        %1250 = vmatmul.f32.gmra.mxu0 %v851
        %v1251 = vpop.f32.mrf.mxu0
        %v1252 = vadd.f32 %v640, %v1251
        %1253 = vmatmul.f32.gmra.mxu0 %v854
        %v1254 = vpop.f32.mrf.mxu0
        %v1255 = vadd.f32 %v640, %v1254
        %1256 = vmatmul.f32.gmra.mxu0 %v857
        %v1257 = vpop.f32.mrf.mxu0
        %v1258 = vadd.f32 %v640, %v1257
        %1259 = vmatmul.f32.gmra.mxu0 %v860
        %v1260 = vpop.f32.mrf.mxu0
        %v1261 = vadd.f32 %v640, %v1260
        %1262 = vmatmul.f32.gmra.mxu0 %v863
        %v1263 = vpop.f32.mrf.mxu0
        %v1264 = vadd.f32 %v640, %v1263
        %1265 = vmatmul.f32.gmra.mxu0 %v866
        %v1266 = vpop.f32.mrf.mxu0
        %v1267 = vadd.f32 %v640, %v1266
        %1268 = vmatmul.f32.gmra.mxu0 %v869
        %v1269 = vpop.f32.mrf.mxu0
        %v1270 = vadd.f32 %v640, %v1269
        %1271 = vmatmul.f32.gmra.mxu0 %v872
        %v1272 = vpop.f32.mrf.mxu0
        %v1273 = vadd.f32 %v640, %v1272
        %1274 = vmatmul.f32.gmra.mxu0 %v875
        %v1275 = vpop.f32.mrf.mxu0
        %v1276 = vadd.f32 %v640, %v1275
        %1277 = vmatmul.f32.gmra.mxu0 %v878
        %v1278 = vpop.f32.mrf.mxu0
        %v1279 = vadd.f32 %v640, %v1278
        %1280 = vmatmul.f32.gmra.mxu0 %v881
        %v1281 = vpop.f32.mrf.mxu0
        %v1282 = vadd.f32 %v640, %v1281
        %1283 = vmatmul.f32.gmra.mxu0 %v884
        %v1284 = vpop.f32.mrf.mxu0
        %v1285 = vadd.f32 %v640, %v1284
        %1286 = vmatmul.f32.gmra.mxu0 %v887
        %v1287 = vpop.f32.mrf.mxu0
        %v1288 = vadd.f32 %v640, %v1287
        %1289 = vmatmul.f32.gmra.mxu0 %v890
        %v1290 = vpop.f32.mrf.mxu0
        %v1291 = vadd.f32 %v640, %v1290
        %1292 = vmatmul.f32.gmra.mxu0 %v893
        %v1293 = vpop.f32.mrf.mxu0
        %v1294 = vadd.f32 %v640, %v1293
        %1295 = vmatmul.f32.gmra.mxu0 %v896
        %v1296 = vpop.f32.mrf.mxu0
        %v1297 = vadd.f32 %v640, %v1296
        %1298 = vmatmul.f32.gmra.mxu0 %v899
        %v1299 = vpop.f32.mrf.mxu0
        %v1300 = vadd.f32 %v640, %v1299
        %1301 = vmatmul.f32.gmra.mxu0 %v902
        %v1302 = vpop.f32.mrf.mxu0
        %v1303 = vadd.f32 %v640, %v1302
        %1304 = vmatmul.f32.gmra.mxu0 %v905
        %v1305 = vpop.f32.mrf.mxu0
        %v1306 = vadd.f32 %v640, %v1305
        %1307 = vmatmul.f32.gmra.mxu0 %v908
        %v1308 = vpop.f32.mrf.mxu0
        %v1309 = vadd.f32 %v640, %v1308
        %1310 = vmatmul.f32.gmra.mxu0 %v911
        %v1311 = vpop.f32.mrf.mxu0
        %v1312 = vadd.f32 %v640, %v1311
        %1313 = vmatmul.f32.gmra.mxu0 %v914
        %v1314 = vpop.f32.mrf.mxu0
        %v1315 = vadd.f32 %v640, %v1314
        %1316 = vmatmul.f32.gmra.mxu0 %v917
        %v1317 = vpop.f32.mrf.mxu0
        %v1318 = vadd.f32 %v640, %v1317
        %1319 = vmatmul.f32.gmra.mxu0 %v920
        %v1320 = vpop.f32.mrf.mxu0
        %v1321 = vadd.f32 %v640, %v1320
        %1322 = vmatmul.f32.gmra.mxu0 %v923
        %v1323 = vpop.f32.mrf.mxu0
        %v1324 = vadd.f32 %v640, %v1323
        %1325 = vmatmul.f32.gmra.mxu0 %v926
        %v1326 = vpop.f32.mrf.mxu0
        %v1327 = vadd.f32 %v640, %v1326
        %1328 = vmatmul.f32.gmra.mxu0 %v929
        %v1329 = vpop.f32.mrf.mxu0
        %v1330 = vadd.f32 %v640, %v1329
        %1331 = vmatmul.f32.gmra.mxu0 %v932
        %v1332 = vpop.f32.mrf.mxu0
        %v1333 = vadd.f32 %v640, %v1332
        %1334 = vmatmul.f32.gmra.mxu0 %v935
        %v1335 = vpop.f32.mrf.mxu0
        %v1336 = vadd.f32 %v640, %v1335
        %1337 = vmatmul.f32.gmra.mxu0 %v938
        %v1338 = vpop.f32.mrf.mxu0
        %v1339 = vadd.f32 %v640, %v1338
        %1340 = vmatmul.f32.gmra.mxu0 %v941
        %v1341 = vpop.f32.mrf.mxu0
        %v1342 = vadd.f32 %v640, %v1341
        %1343 = vmatmul.f32.gmra.mxu0 %v944
        %v1344 = vpop.f32.mrf.mxu0
        %v1345 = vadd.f32 %v640, %v1344
        %1346 = vmatmul.f32.gmra.mxu0 %v947
        %v1347 = vpop.f32.mrf.mxu0
        %v1348 = vadd.f32 %v640, %v1347
        %1349 = vmatmul.f32.gmra.mxu0 %v950
        %v1350 = vpop.f32.mrf.mxu0
        %v1351 = vadd.f32 %v640, %v1350
        %1352 = vmatmul.f32.gmra.mxu0 %v953
        %v1353 = vpop.f32.mrf.mxu0
        %v1354 = vadd.f32 %v640, %v1353
        %1355 = vmatmul.f32.gmra.mxu0 %v956
        %v1356 = vpop.f32.mrf.mxu0
        %v1357 = vadd.f32 %v640, %v1356
        %1358 = vmatmul.f32.gmra.mxu0 %v959
        %v1359 = vpop.f32.mrf.mxu0
        %v1360 = vadd.f32 %v640, %v1359
        %1361 = vmatmul.f32.gmra.mxu0 %v962
        %v1362 = vpop.f32.mrf.mxu0
        %v1363 = vadd.f32 %v640, %v1362
        %1364 = vmatmul.f32.gmra.mxu0 %v965
        %v1365 = vpop.f32.mrf.mxu0
        %v1366 = vadd.f32 %v640, %v1365
        %1367 = vmatmul.f32.gmra.mxu0 %v968
        %v1368 = vpop.f32.mrf.mxu0
        %v1369 = vadd.f32 %v640, %v1368
        %1370 = vmatmul.f32.gmra.mxu0 %v971
        %v1371 = vpop.f32.mrf.mxu0
        %v1372 = vadd.f32 %v640, %v1371
        %1373 = vmatmul.f32.gmra.mxu0 %v974
        %v1374 = vpop.f32.mrf.mxu0
        %v1375 = vadd.f32 %v640, %v1374
        %1376 = vmatmul.f32.gmra.mxu0 %v977
        %v1377 = vpop.f32.mrf.mxu0
        %v1378 = vadd.f32 %v640, %v1377
        %1379 = vmatmul.f32.gmra.mxu0 %v980
        %v1380 = vpop.f32.mrf.mxu0
        %v1381 = vadd.f32 %v640, %v1380
        %1382 = vmatmul.f32.gmra.mxu0 %v983
        %v1383 = vpop.f32.mrf.mxu0
        %v1384 = vadd.f32 %v640, %v1383
        %1385 = vmatmul.f32.gmra.mxu0 %v986
        %v1386 = vpop.f32.mrf.mxu0
        %v1387 = vadd.f32 %v640, %v1386
        %1388 = vmatmul.f32.gmra.mxu0 %v989
        %v1389 = vpop.f32.mrf.mxu0
        %v1390 = vadd.f32 %v640, %v1389
        %1391 = vmatmul.f32.gmra.mxu0 %v992
        %v1392 = vpop.f32.mrf.mxu0
        %v1393 = vadd.f32 %v640, %v1392
        %1394 = vmatmul.f32.gmra.mxu0 %v995
        %v1395 = vpop.f32.mrf.mxu0
        %v1396 = vadd.f32 %v640, %v1395
        %1397 = vmatmul.f32.gmra.mxu0 %v998
        %v1398 = vpop.f32.mrf.mxu0
        %v1399 = vadd.f32 %v640, %v1398
        %1400 = vmatmul.f32.gmra.mxu0 %v1001
        %v1401 = vpop.f32.mrf.mxu0
        %v1402 = vadd.f32 %v640, %v1401
        %1403 = vmatmul.f32.gmra.mxu0 %v1004
        %v1404 = vpop.f32.mrf.mxu0
        %v1405 = vadd.f32 %v640, %v1404
        %1406 = vmatmul.f32.gmra.mxu0 %v1007
        %v1407 = vpop.f32.mrf.mxu0
        %v1408 = vadd.f32 %v640, %v1407
        %1409 = vmatmul.f32.gmra.mxu0 %v1010
        %v1410 = vpop.f32.mrf.mxu0
        %v1411 = vadd.f32 %v640, %v1410
        %1412 = vmatmul.f32.gmra.mxu0 %v1013
        %v1413 = vpop.f32.mrf.mxu0
        %v1414 = vadd.f32 %v640, %v1413
        %1415 = vmatmul.f32.gmra.mxu0 %v1016
        %v1416 = vpop.f32.mrf.mxu0
        %v1417 = vadd.f32 %v640, %v1416
        %1418 = vmatmul.f32.gmra.mxu0 %v1019
        %v1419 = vpop.f32.mrf.mxu0
        %v1420 = vadd.f32 %v640, %v1419
        %1421 = vmatmul.f32.gmra.mxu0 %v1022
        %v1422 = vpop.f32.mrf.mxu0
        %v1423 = vadd.f32 %v640, %v1422
        %1424 = vmatmul.f32.gmra.mxu0 %v1025
        %v1425 = vpop.f32.mrf.mxu0
        %v1426 = vadd.f32 %v640, %v1425
        %1427 = vdwg.mxu0
        %vm1428 = vcmp.gt.f32.partialorder %v1045, 0.0
        %vm1429 = vcmp.gt.f32.partialorder %v1048, 0.0
        %vm1430 = vcmp.gt.f32.partialorder %v1051, 0.0
        %vm1431 = vcmp.gt.f32.partialorder %v1054, 0.0
        %vm1432 = vcmp.gt.f32.partialorder %v1057, 0.0
        %vm1433 = vcmp.gt.f32.partialorder %v1060, 0.0
        %vm1434 = vcmp.gt.f32.partialorder %v1063, 0.0
        %vm1435 = vcmp.gt.f32.partialorder %v1066, 0.0
        %vm1436 = vcmp.gt.f32.partialorder %v1069, 0.0
        %vm1437 = vcmp.gt.f32.partialorder %v1072, 0.0
        %vm1438 = vcmp.gt.f32.partialorder %v1075, 0.0
        %vm1439 = vcmp.gt.f32.partialorder %v1078, 0.0
        %vm1440 = vcmp.gt.f32.partialorder %v1081, 0.0
        %vm1441 = vcmp.gt.f32.partialorder %v1084, 0.0
        %vm1442 = vcmp.gt.f32.partialorder %v1087, 0.0
        %vm1443 = vcmp.gt.f32.partialorder %v1090, 0.0
        %vm1444 = vcmp.gt.f32.partialorder %v1093, 0.0
        %vm1445 = vcmp.gt.f32.partialorder %v1096, 0.0
        %vm1446 = vcmp.gt.f32.partialorder %v1099, 0.0
        %vm1447 = vcmp.gt.f32.partialorder %v1102, 0.0
        %vm1448 = vcmp.gt.f32.partialorder %v1105, 0.0
        %vm1449 = vcmp.gt.f32.partialorder %v1108, 0.0
        %vm1450 = vcmp.gt.f32.partialorder %v1111, 0.0
        %vm1451 = vcmp.gt.f32.partialorder %v1114, 0.0
        %vm1452 = vcmp.gt.f32.partialorder %v1117, 0.0
        %vm1453 = vcmp.gt.f32.partialorder %v1120, 0.0
        %vm1454 = vcmp.gt.f32.partialorder %v1123, 0.0
        %vm1455 = vcmp.gt.f32.partialorder %v1126, 0.0
        %vm1456 = vcmp.gt.f32.partialorder %v1129, 0.0
        %vm1457 = vcmp.gt.f32.partialorder %v1132, 0.0
        %vm1458 = vcmp.gt.f32.partialorder %v1135, 0.0
        %vm1459 = vcmp.gt.f32.partialorder %v1138, 0.0
        %vm1460 = vcmp.gt.f32.partialorder %v1141, 0.0
        %vm1461 = vcmp.gt.f32.partialorder %v1144, 0.0
        %vm1462 = vcmp.gt.f32.partialorder %v1147, 0.0
        %vm1463 = vcmp.gt.f32.partialorder %v1150, 0.0
        %vm1464 = vcmp.gt.f32.partialorder %v1153, 0.0
        %vm1465 = vcmp.gt.f32.partialorder %v1156, 0.0
        %vm1466 = vcmp.gt.f32.partialorder %v1159, 0.0
        %vm1467 = vcmp.gt.f32.partialorder %v1162, 0.0
        %vm1468 = vcmp.gt.f32.partialorder %v1165, 0.0
        %vm1469 = vcmp.gt.f32.partialorder %v1168, 0.0
        %vm1470 = vcmp.gt.f32.partialorder %v1171, 0.0
        %vm1471 = vcmp.gt.f32.partialorder %v1174, 0.0
        %vm1472 = vcmp.gt.f32.partialorder %v1177, 0.0
        %vm1473 = vcmp.gt.f32.partialorder %v1180, 0.0
        %vm1474 = vcmp.gt.f32.partialorder %v1183, 0.0
        %vm1475 = vcmp.gt.f32.partialorder %v1186, 0.0
        %vm1476 = vcmp.gt.f32.partialorder %v1189, 0.0
        %vm1477 = vcmp.gt.f32.partialorder %v1192, 0.0
        %vm1478 = vcmp.gt.f32.partialorder %v1195, 0.0
        %vm1479 = vcmp.gt.f32.partialorder %v1198, 0.0
        %vm1480 = vcmp.gt.f32.partialorder %v1201, 0.0
        %vm1481 = vcmp.gt.f32.partialorder %v1204, 0.0
        %vm1482 = vcmp.gt.f32.partialorder %v1207, 0.0
        %vm1483 = vcmp.gt.f32.partialorder %v1210, 0.0
        %vm1484 = vcmp.gt.f32.partialorder %v1213, 0.0
        %vm1485 = vcmp.gt.f32.partialorder %v1216, 0.0
        %vm1486 = vcmp.gt.f32.partialorder %v1219, 0.0
        %vm1487 = vcmp.gt.f32.partialorder %v1222, 0.0
        %vm1488 = vcmp.gt.f32.partialorder %v1225, 0.0
        %vm1489 = vcmp.gt.f32.partialorder %v1228, 0.0
        %vm1490 = vcmp.gt.f32.partialorder %v1231, 0.0
        %vm1491 = vcmp.gt.f32.partialorder %v1234, 0.0
        %vm1492 = vcmp.gt.f32.partialorder %v1237, 0.0
        %vm1493 = vcmp.gt.f32.partialorder %v1240, 0.0
        %vm1494 = vcmp.gt.f32.partialorder %v1243, 0.0
        %vm1495 = vcmp.gt.f32.partialorder %v1246, 0.0
        %vm1496 = vcmp.gt.f32.partialorder %v1249, 0.0
        %vm1497 = vcmp.gt.f32.partialorder %v1252, 0.0
        %vm1498 = vcmp.gt.f32.partialorder %v1255, 0.0
        %vm1499 = vcmp.gt.f32.partialorder %v1258, 0.0
        %vm1500 = vcmp.gt.f32.partialorder %v1261, 0.0
        %vm1501 = vcmp.gt.f32.partialorder %v1264, 0.0
        %vm1502 = vcmp.gt.f32.partialorder %v1267, 0.0
        %vm1503 = vcmp.gt.f32.partialorder %v1270, 0.0
        %vm1504 = vcmp.gt.f32.partialorder %v1273, 0.0
        %vm1505 = vcmp.gt.f32.partialorder %v1276, 0.0
        %vm1506 = vcmp.gt.f32.partialorder %v1279, 0.0
        %vm1507 = vcmp.gt.f32.partialorder %v1282, 0.0
        %vm1508 = vcmp.gt.f32.partialorder %v1285, 0.0
        %vm1509 = vcmp.gt.f32.partialorder %v1288, 0.0
        %vm1510 = vcmp.gt.f32.partialorder %v1291, 0.0
        %vm1511 = vcmp.gt.f32.partialorder %v1294, 0.0
        %vm1512 = vcmp.gt.f32.partialorder %v1297, 0.0
        %vm1513 = vcmp.gt.f32.partialorder %v1300, 0.0
        %vm1514 = vcmp.gt.f32.partialorder %v1303, 0.0
        %vm1515 = vcmp.gt.f32.partialorder %v1306, 0.0
        %vm1516 = vcmp.gt.f32.partialorder %v1309, 0.0
        %vm1517 = vcmp.gt.f32.partialorder %v1312, 0.0
        %vm1518 = vcmp.gt.f32.partialorder %v1315, 0.0
        %vm1519 = vcmp.gt.f32.partialorder %v1318, 0.0
        %vm1520 = vcmp.gt.f32.partialorder %v1321, 0.0
        %vm1521 = vcmp.gt.f32.partialorder %v1324, 0.0
        %vm1522 = vcmp.gt.f32.partialorder %v1327, 0.0
        %vm1523 = vcmp.gt.f32.partialorder %v1330, 0.0
        %vm1524 = vcmp.gt.f32.partialorder %v1333, 0.0
        %vm1525 = vcmp.gt.f32.partialorder %v1336, 0.0
        %vm1526 = vcmp.gt.f32.partialorder %v1339, 0.0
        %vm1527 = vcmp.gt.f32.partialorder %v1342, 0.0
        %vm1528 = vcmp.gt.f32.partialorder %v1345, 0.0
        %vm1529 = vcmp.gt.f32.partialorder %v1348, 0.0
        %vm1530 = vcmp.gt.f32.partialorder %v1351, 0.0
        %vm1531 = vcmp.gt.f32.partialorder %v1354, 0.0
        %vm1532 = vcmp.gt.f32.partialorder %v1357, 0.0
        %vm1533 = vcmp.gt.f32.partialorder %v1360, 0.0
        %vm1534 = vcmp.gt.f32.partialorder %v1363, 0.0
        %vm1535 = vcmp.gt.f32.partialorder %v1366, 0.0
        %vm1536 = vcmp.gt.f32.partialorder %v1369, 0.0
        %vm1537 = vcmp.gt.f32.partialorder %v1372, 0.0
        %vm1538 = vcmp.gt.f32.partialorder %v1375, 0.0
        %vm1539 = vcmp.gt.f32.partialorder %v1378, 0.0
        %vm1540 = vcmp.gt.f32.partialorder %v1381, 0.0
        %vm1541 = vcmp.gt.f32.partialorder %v1384, 0.0
        %vm1542 = vcmp.gt.f32.partialorder %v1387, 0.0
        %vm1543 = vcmp.gt.f32.partialorder %v1390, 0.0
        %vm1544 = vcmp.gt.f32.partialorder %v1393, 0.0
        %vm1545 = vcmp.gt.f32.partialorder %v1396, 0.0
        %vm1546 = vcmp.gt.f32.partialorder %v1399, 0.0
        %vm1547 = vcmp.gt.f32.partialorder %v1402, 0.0
        %vm1548 = vcmp.gt.f32.partialorder %v1405, 0.0
        %vm1549 = vcmp.gt.f32.partialorder %v1408, 0.0
        %vm1550 = vcmp.gt.f32.partialorder %v1411, 0.0
        %vm1551 = vcmp.gt.f32.partialorder %v1414, 0.0
        %vm1552 = vcmp.gt.f32.partialorder %v1417, 0.0
        %vm1553 = vcmp.gt.f32.partialorder %v1420, 0.0
        %vm1554 = vcmp.gt.f32.partialorder %v1423, 0.0
        %vm1555 = vcmp.gt.f32.partialorder %v1426, 0.0
        %v1556 = vmul.f32 %v1045, 0.01
        %v1557 = vmul.f32 %v1048, 0.01
        %v1558 = vmul.f32 %v1051, 0.01
        %v1559 = vmul.f32 %v1054, 0.01
        %v1560 = vmul.f32 %v1057, 0.01
        %v1561 = vmul.f32 %v1060, 0.01
        %v1562 = vmul.f32 %v1063, 0.01
        %v1563 = vmul.f32 %v1066, 0.01
        %v1564 = vmul.f32 %v1069, 0.01
        %v1565 = vmul.f32 %v1072, 0.01
        %v1566 = vmul.f32 %v1075, 0.01
        %v1567 = vmul.f32 %v1078, 0.01
        %v1568 = vmul.f32 %v1081, 0.01
        %v1569 = vmul.f32 %v1084, 0.01
        %v1570 = vmul.f32 %v1087, 0.01
        %v1571 = vmul.f32 %v1090, 0.01
        %v1572 = vmul.f32 %v1093, 0.01
        %v1573 = vmul.f32 %v1096, 0.01
        %v1574 = vmul.f32 %v1099, 0.01
        %v1575 = vmul.f32 %v1102, 0.01
        %v1576 = vmul.f32 %v1105, 0.01
        %v1577 = vmul.f32 %v1108, 0.01
        %v1578 = vmul.f32 %v1111, 0.01
        %v1579 = vmul.f32 %v1114, 0.01
        %v1580 = vmul.f32 %v1117, 0.01
        %v1581 = vmul.f32 %v1120, 0.01
        %v1582 = vmul.f32 %v1123, 0.01
        %v1583 = vmul.f32 %v1126, 0.01
        %v1584 = vmul.f32 %v1129, 0.01
        %v1585 = vmul.f32 %v1132, 0.01
        %v1586 = vmul.f32 %v1135, 0.01
        %v1587 = vmul.f32 %v1138, 0.01
        %v1588 = vmul.f32 %v1141, 0.01
        %v1589 = vmul.f32 %v1144, 0.01
        %v1590 = vmul.f32 %v1147, 0.01
        %v1591 = vmul.f32 %v1150, 0.01
        %v1592 = vmul.f32 %v1153, 0.01
        %v1593 = vmul.f32 %v1156, 0.01
        %v1594 = vmul.f32 %v1159, 0.01
        %v1595 = vmul.f32 %v1162, 0.01
        %v1596 = vmul.f32 %v1165, 0.01
        %v1597 = vmul.f32 %v1168, 0.01
        %v1598 = vmul.f32 %v1171, 0.01
        %v1599 = vmul.f32 %v1174, 0.01
        %v1600 = vmul.f32 %v1177, 0.01
        %v1601 = vmul.f32 %v1180, 0.01
        %v1602 = vmul.f32 %v1183, 0.01
        %v1603 = vmul.f32 %v1186, 0.01
        %v1604 = vmul.f32 %v1189, 0.01
        %v1605 = vmul.f32 %v1192, 0.01
        %v1606 = vmul.f32 %v1195, 0.01
        %v1607 = vmul.f32 %v1198, 0.01
        %v1608 = vmul.f32 %v1201, 0.01
        %v1609 = vmul.f32 %v1204, 0.01
        %v1610 = vmul.f32 %v1207, 0.01
        %v1611 = vmul.f32 %v1210, 0.01
        %v1612 = vmul.f32 %v1213, 0.01
        %v1613 = vmul.f32 %v1216, 0.01
        %v1614 = vmul.f32 %v1219, 0.01
        %v1615 = vmul.f32 %v1222, 0.01
        %v1616 = vmul.f32 %v1225, 0.01
        %v1617 = vmul.f32 %v1228, 0.01
        %v1618 = vmul.f32 %v1231, 0.01
        %v1619 = vmul.f32 %v1234, 0.01
        %v1620 = vmul.f32 %v1237, 0.01
        %v1621 = vmul.f32 %v1240, 0.01
        %v1622 = vmul.f32 %v1243, 0.01
        %v1623 = vmul.f32 %v1246, 0.01
        %v1624 = vmul.f32 %v1249, 0.01
        %v1625 = vmul.f32 %v1252, 0.01
        %v1626 = vmul.f32 %v1255, 0.01
        %v1627 = vmul.f32 %v1258, 0.01
        %v1628 = vmul.f32 %v1261, 0.01
        %v1629 = vmul.f32 %v1264, 0.01
        %v1630 = vmul.f32 %v1267, 0.01
        %v1631 = vmul.f32 %v1270, 0.01
        %v1632 = vmul.f32 %v1273, 0.01
        %v1633 = vmul.f32 %v1276, 0.01
        %v1634 = vmul.f32 %v1279, 0.01
        %v1635 = vmul.f32 %v1282, 0.01
        %v1636 = vmul.f32 %v1285, 0.01
        %v1637 = vmul.f32 %v1288, 0.01
        %v1638 = vmul.f32 %v1291, 0.01
        %v1639 = vmul.f32 %v1294, 0.01
        %v1640 = vmul.f32 %v1297, 0.01
        %v1641 = vmul.f32 %v1300, 0.01
        %v1642 = vmul.f32 %v1303, 0.01
        %v1643 = vmul.f32 %v1306, 0.01
        %v1644 = vmul.f32 %v1309, 0.01
        %v1645 = vmul.f32 %v1312, 0.01
        %v1646 = vmul.f32 %v1315, 0.01
        %v1647 = vmul.f32 %v1318, 0.01
        %v1648 = vmul.f32 %v1321, 0.01
        %v1649 = vmul.f32 %v1324, 0.01
        %v1650 = vmul.f32 %v1327, 0.01
        %v1651 = vmul.f32 %v1330, 0.01
        %v1652 = vmul.f32 %v1333, 0.01
        %v1653 = vmul.f32 %v1336, 0.01
        %v1654 = vmul.f32 %v1339, 0.01
        %v1655 = vmul.f32 %v1342, 0.01
        %v1656 = vmul.f32 %v1345, 0.01
        %v1657 = vmul.f32 %v1348, 0.01
        %v1658 = vmul.f32 %v1351, 0.01
        %v1659 = vmul.f32 %v1354, 0.01
        %v1660 = vmul.f32 %v1357, 0.01
        %v1661 = vmul.f32 %v1360, 0.01
        %v1662 = vmul.f32 %v1363, 0.01
        %v1663 = vmul.f32 %v1366, 0.01
        %v1664 = vmul.f32 %v1369, 0.01
        %v1665 = vmul.f32 %v1372, 0.01
        %v1666 = vmul.f32 %v1375, 0.01
        %v1667 = vmul.f32 %v1378, 0.01
        %v1668 = vmul.f32 %v1381, 0.01
        %v1669 = vmul.f32 %v1384, 0.01
        %v1670 = vmul.f32 %v1387, 0.01
        %v1671 = vmul.f32 %v1390, 0.01
        %v1672 = vmul.f32 %v1393, 0.01
        %v1673 = vmul.f32 %v1396, 0.01
        %v1674 = vmul.f32 %v1399, 0.01
        %v1675 = vmul.f32 %v1402, 0.01
        %v1676 = vmul.f32 %v1405, 0.01
        %v1677 = vmul.f32 %v1408, 0.01
        %v1678 = vmul.f32 %v1411, 0.01
        %v1679 = vmul.f32 %v1414, 0.01
        %v1680 = vmul.f32 %v1417, 0.01
        %v1681 = vmul.f32 %v1420, 0.01
        %v1682 = vmul.f32 %v1423, 0.01
        %v1683 = vmul.f32 %v1426, 0.01
        %v1684 = vsel %vm1428, %v1045, %v1556
        %v1685 = vsel %vm1429, %v1048, %v1557
        %v1686 = vsel %vm1430, %v1051, %v1558
        %v1687 = vsel %vm1431, %v1054, %v1559
        %v1688 = vsel %vm1432, %v1057, %v1560
        %v1689 = vsel %vm1433, %v1060, %v1561
        %v1690 = vsel %vm1434, %v1063, %v1562
        %v1691 = vsel %vm1435, %v1066, %v1563
        %v1692 = vsel %vm1436, %v1069, %v1564
        %v1693 = vsel %vm1437, %v1072, %v1565
        %v1694 = vsel %vm1438, %v1075, %v1566
        %v1695 = vsel %vm1439, %v1078, %v1567
        %v1696 = vsel %vm1440, %v1081, %v1568
        %v1697 = vsel %vm1441, %v1084, %v1569
        %v1698 = vsel %vm1442, %v1087, %v1570
        %v1699 = vsel %vm1443, %v1090, %v1571
        %v1700 = vsel %vm1444, %v1093, %v1572
        %v1701 = vsel %vm1445, %v1096, %v1573
        %v1702 = vsel %vm1446, %v1099, %v1574
        %v1703 = vsel %vm1447, %v1102, %v1575
        %v1704 = vsel %vm1448, %v1105, %v1576
        %v1705 = vsel %vm1449, %v1108, %v1577
        %v1706 = vsel %vm1450, %v1111, %v1578
        %v1707 = vsel %vm1451, %v1114, %v1579
        %v1708 = vsel %vm1452, %v1117, %v1580
        %v1709 = vsel %vm1453, %v1120, %v1581
        %v1710 = vsel %vm1454, %v1123, %v1582
        %v1711 = vsel %vm1455, %v1126, %v1583
        %v1712 = vsel %vm1456, %v1129, %v1584
        %v1713 = vsel %vm1457, %v1132, %v1585
        %v1714 = vsel %vm1458, %v1135, %v1586
        %v1715 = vsel %vm1459, %v1138, %v1587
        %v1716 = vsel %vm1460, %v1141, %v1588
        %v1717 = vsel %vm1461, %v1144, %v1589
        %v1718 = vsel %vm1462, %v1147, %v1590
        %v1719 = vsel %vm1463, %v1150, %v1591
        %v1720 = vsel %vm1464, %v1153, %v1592
        %v1721 = vsel %vm1465, %v1156, %v1593
        %v1722 = vsel %vm1466, %v1159, %v1594
        %v1723 = vsel %vm1467, %v1162, %v1595
        %v1724 = vsel %vm1468, %v1165, %v1596
        %v1725 = vsel %vm1469, %v1168, %v1597
        %v1726 = vsel %vm1470, %v1171, %v1598
        %v1727 = vsel %vm1471, %v1174, %v1599
        %v1728 = vsel %vm1472, %v1177, %v1600
        %v1729 = vsel %vm1473, %v1180, %v1601
        %v1730 = vsel %vm1474, %v1183, %v1602
        %v1731 = vsel %vm1475, %v1186, %v1603
        %v1732 = vsel %vm1476, %v1189, %v1604
        %v1733 = vsel %vm1477, %v1192, %v1605
        %v1734 = vsel %vm1478, %v1195, %v1606
        %v1735 = vsel %vm1479, %v1198, %v1607
        %v1736 = vsel %vm1480, %v1201, %v1608
        %v1737 = vsel %vm1481, %v1204, %v1609
        %v1738 = vsel %vm1482, %v1207, %v1610
        %v1739 = vsel %vm1483, %v1210, %v1611
        %v1740 = vsel %vm1484, %v1213, %v1612
        %v1741 = vsel %vm1485, %v1216, %v1613
        %v1742 = vsel %vm1486, %v1219, %v1614
        %v1743 = vsel %vm1487, %v1222, %v1615
        %v1744 = vsel %vm1488, %v1225, %v1616
        %v1745 = vsel %vm1489, %v1228, %v1617
        %v1746 = vsel %vm1490, %v1231, %v1618
        %v1747 = vsel %vm1491, %v1234, %v1619
        %v1748 = vsel %vm1492, %v1237, %v1620
        %v1749 = vsel %vm1493, %v1240, %v1621
        %v1750 = vsel %vm1494, %v1243, %v1622
        %v1751 = vsel %vm1495, %v1246, %v1623
        %v1752 = vsel %vm1496, %v1249, %v1624
        %v1753 = vsel %vm1497, %v1252, %v1625
        %v1754 = vsel %vm1498, %v1255, %v1626
        %v1755 = vsel %vm1499, %v1258, %v1627
        %v1756 = vsel %vm1500, %v1261, %v1628
        %v1757 = vsel %vm1501, %v1264, %v1629
        %v1758 = vsel %vm1502, %v1267, %v1630
        %v1759 = vsel %vm1503, %v1270, %v1631
        %v1760 = vsel %vm1504, %v1273, %v1632
        %v1761 = vsel %vm1505, %v1276, %v1633
        %v1762 = vsel %vm1506, %v1279, %v1634
        %v1763 = vsel %vm1507, %v1282, %v1635
        %v1764 = vsel %vm1508, %v1285, %v1636
        %v1765 = vsel %vm1509, %v1288, %v1637
        %v1766 = vsel %vm1510, %v1291, %v1638
        %v1767 = vsel %vm1511, %v1294, %v1639
        %v1768 = vsel %vm1512, %v1297, %v1640
        %v1769 = vsel %vm1513, %v1300, %v1641
        %v1770 = vsel %vm1514, %v1303, %v1642
        %v1771 = vsel %vm1515, %v1306, %v1643
        %v1772 = vsel %vm1516, %v1309, %v1644
        %v1773 = vsel %vm1517, %v1312, %v1645
        %v1774 = vsel %vm1518, %v1315, %v1646
        %v1775 = vsel %vm1519, %v1318, %v1647
        %v1776 = vsel %vm1520, %v1321, %v1648
        %v1777 = vsel %vm1521, %v1324, %v1649
        %v1778 = vsel %vm1522, %v1327, %v1650
        %v1779 = vsel %vm1523, %v1330, %v1651
        %v1780 = vsel %vm1524, %v1333, %v1652
        %v1781 = vsel %vm1525, %v1336, %v1653
        %v1782 = vsel %vm1526, %v1339, %v1654
        %v1783 = vsel %vm1527, %v1342, %v1655
        %v1784 = vsel %vm1528, %v1345, %v1656
        %v1785 = vsel %vm1529, %v1348, %v1657
        %v1786 = vsel %vm1530, %v1351, %v1658
        %v1787 = vsel %vm1531, %v1354, %v1659
        %v1788 = vsel %vm1532, %v1357, %v1660
        %v1789 = vsel %vm1533, %v1360, %v1661
        %v1790 = vsel %vm1534, %v1363, %v1662
        %v1791 = vsel %vm1535, %v1366, %v1663
        %v1792 = vsel %vm1536, %v1369, %v1664
        %v1793 = vsel %vm1537, %v1372, %v1665
        %v1794 = vsel %vm1538, %v1375, %v1666
        %v1795 = vsel %vm1539, %v1378, %v1667
        %v1796 = vsel %vm1540, %v1381, %v1668
        %v1797 = vsel %vm1541, %v1384, %v1669
        %v1798 = vsel %vm1542, %v1387, %v1670
        %v1799 = vsel %vm1543, %v1390, %v1671
        %v1800 = vsel %vm1544, %v1393, %v1672
        %v1801 = vsel %vm1545, %v1396, %v1673
        %v1802 = vsel %vm1546, %v1399, %v1674
        %v1803 = vsel %vm1547, %v1402, %v1675
        %v1804 = vsel %vm1548, %v1405, %v1676
        %v1805 = vsel %vm1549, %v1408, %v1677
        %v1806 = vsel %vm1550, %v1411, %v1678
        %v1807 = vsel %vm1551, %v1414, %v1679
        %v1808 = vsel %vm1552, %v1417, %v1680
        %v1809 = vsel %vm1553, %v1420, %v1681
        %v1810 = vsel %vm1554, %v1423, %v1682
        %v1811 = vsel %vm1555, %v1426, %v1683
        %v1812 = vld [vmem:[%s3] sm:$0xff]
        %v1813 = vld [vmem:[%s3 + $0x8] sm:$0xff]
        %v1814 = vld [vmem:[%s3 + $0x10] sm:$0xff]
        %v1815 = vld [vmem:[%s3 + $0x18] sm:$0xff]
        %v1816 = vld [vmem:[%s4] sm:$0x1]
        %v1818 = vperm.slane %v1816, 0
        %vm1820 = vcmask 261120
        %v1822 = vsel %vm1820, %v1684, 0
        %v1825 = vsel %vm1820, %v1685, 0
        %v1828 = vsel %vm1820, %v1686, 0
        %v1831 = vsel %vm1820, %v1687, 0
        %v1834 = vsel %vm1820, %v1688, 0
        %v1837 = vsel %vm1820, %v1689, 0
        %v1840 = vsel %vm1820, %v1690, 0
        %v1843 = vsel %vm1820, %v1691, 0
        %v1846 = vsel %vm1820, %v1692, 0
        %v1849 = vsel %vm1820, %v1693, 0
        %v1852 = vsel %vm1820, %v1694, 0
        %v1855 = vsel %vm1820, %v1695, 0
        %v1858 = vsel %vm1820, %v1696, 0
        %v1861 = vsel %vm1820, %v1697, 0
        %v1864 = vsel %vm1820, %v1698, 0
        %v1867 = vsel %vm1820, %v1699, 0
        %v1870 = vsel %vm1820, %v1700, 0
        %v1873 = vsel %vm1820, %v1701, 0
        %v1876 = vsel %vm1820, %v1702, 0
        %v1879 = vsel %vm1820, %v1703, 0
        %v1882 = vsel %vm1820, %v1704, 0
        %v1885 = vsel %vm1820, %v1705, 0
        %v1888 = vsel %vm1820, %v1706, 0
        %v1891 = vsel %vm1820, %v1707, 0
        %v1894 = vsel %vm1820, %v1708, 0
        %v1897 = vsel %vm1820, %v1709, 0
        %v1900 = vsel %vm1820, %v1710, 0
        %v1903 = vsel %vm1820, %v1711, 0
        %v1906 = vsel %vm1820, %v1712, 0
        %v1909 = vsel %vm1820, %v1713, 0
        %v1912 = vsel %vm1820, %v1714, 0
        %v1915 = vsel %vm1820, %v1715, 0
        %v1918 = vsel %vm1820, %v1716, 0
        %v1921 = vsel %vm1820, %v1717, 0
        %v1924 = vsel %vm1820, %v1718, 0
        %v1927 = vsel %vm1820, %v1719, 0
        %v1930 = vsel %vm1820, %v1720, 0
        %v1933 = vsel %vm1820, %v1721, 0
        %v1936 = vsel %vm1820, %v1722, 0
        %v1939 = vsel %vm1820, %v1723, 0
        %v1942 = vsel %vm1820, %v1724, 0
        %v1945 = vsel %vm1820, %v1725, 0
        %v1948 = vsel %vm1820, %v1726, 0
        %v1951 = vsel %vm1820, %v1727, 0
        %v1954 = vsel %vm1820, %v1728, 0
        %v1957 = vsel %vm1820, %v1729, 0
        %v1960 = vsel %vm1820, %v1730, 0
        %v1963 = vsel %vm1820, %v1731, 0
        %v1966 = vsel %vm1820, %v1732, 0
        %v1969 = vsel %vm1820, %v1733, 0
        %v1972 = vsel %vm1820, %v1734, 0
        %v1975 = vsel %vm1820, %v1735, 0
        %v1978 = vsel %vm1820, %v1736, 0
        %v1981 = vsel %vm1820, %v1737, 0
        %v1984 = vsel %vm1820, %v1738, 0
        %v1987 = vsel %vm1820, %v1739, 0
        %v1990 = vsel %vm1820, %v1740, 0
        %v1993 = vsel %vm1820, %v1741, 0
        %v1996 = vsel %vm1820, %v1742, 0
        %v1999 = vsel %vm1820, %v1743, 0
        %v2002 = vsel %vm1820, %v1744, 0
        %v2005 = vsel %vm1820, %v1745, 0
        %v2008 = vsel %vm1820, %v1746, 0
        %v2011 = vsel %vm1820, %v1747, 0
        %v2014 = vsel %vm1820, %v1748, 0
        %v2017 = vsel %vm1820, %v1749, 0
        %v2020 = vsel %vm1820, %v1750, 0
        %v2023 = vsel %vm1820, %v1751, 0
        %v2026 = vsel %vm1820, %v1752, 0
        %v2029 = vsel %vm1820, %v1753, 0
        %v2032 = vsel %vm1820, %v1754, 0
        %v2035 = vsel %vm1820, %v1755, 0
        %v2038 = vsel %vm1820, %v1756, 0
        %v2041 = vsel %vm1820, %v1757, 0
        %v2044 = vsel %vm1820, %v1758, 0
        %v2047 = vsel %vm1820, %v1759, 0
        %v2050 = vsel %vm1820, %v1760, 0
        %v2053 = vsel %vm1820, %v1761, 0
        %v2056 = vsel %vm1820, %v1762, 0
        %v2059 = vsel %vm1820, %v1763, 0
        %v2062 = vsel %vm1820, %v1764, 0
        %v2065 = vsel %vm1820, %v1765, 0
        %v2068 = vsel %vm1820, %v1766, 0
        %v2071 = vsel %vm1820, %v1767, 0
        %v2074 = vsel %vm1820, %v1768, 0
        %v2077 = vsel %vm1820, %v1769, 0
        %v2080 = vsel %vm1820, %v1770, 0
        %v2083 = vsel %vm1820, %v1771, 0
        %v2086 = vsel %vm1820, %v1772, 0
        %v2089 = vsel %vm1820, %v1773, 0
        %v2092 = vsel %vm1820, %v1774, 0
        %v2095 = vsel %vm1820, %v1775, 0
        %v2098 = vsel %vm1820, %v1776, 0
        %v2101 = vsel %vm1820, %v1777, 0
        %v2104 = vsel %vm1820, %v1778, 0
        %v2107 = vsel %vm1820, %v1779, 0
        %v2110 = vsel %vm1820, %v1780, 0
        %v2113 = vsel %vm1820, %v1781, 0
        %v2116 = vsel %vm1820, %v1782, 0
        %v2119 = vsel %vm1820, %v1783, 0
        %v2122 = vsel %vm1820, %v1784, 0
        %v2125 = vsel %vm1820, %v1785, 0
        %v2128 = vsel %vm1820, %v1786, 0
        %v2131 = vsel %vm1820, %v1787, 0
        %v2134 = vsel %vm1820, %v1788, 0
        %v2137 = vsel %vm1820, %v1789, 0
        %v2140 = vsel %vm1820, %v1790, 0
        %v2143 = vsel %vm1820, %v1791, 0
        %v2146 = vsel %vm1820, %v1792, 0
        %v2149 = vsel %vm1820, %v1793, 0
        %v2152 = vsel %vm1820, %v1794, 0
        %v2155 = vsel %vm1820, %v1795, 0
        %v2158 = vsel %vm1820, %v1796, 0
        %v2161 = vsel %vm1820, %v1797, 0
        %v2164 = vsel %vm1820, %v1798, 0
        %v2167 = vsel %vm1820, %v1799, 0
        %v2170 = vsel %vm1820, %v1800, 0
        %v2173 = vsel %vm1820, %v1801, 0
        %v2176 = vsel %vm1820, %v1802, 0
        %v2179 = vsel %vm1820, %v1803, 0
        %v2182 = vsel %vm1820, %v1804, 0
        %v2185 = vsel %vm1820, %v1805, 0
        %v2188 = vsel %vm1820, %v1806, 0
        %v2191 = vsel %vm1820, %v1807, 0
        %v2194 = vsel %vm1820, %v1808, 0
        %v2197 = vsel %vm1820, %v1809, 0
        %v2200 = vsel %vm1820, %v1810, 0
        %v2203 = vsel %vm1820, %v1811, 0
        %2205 = vmatpush.msra.mxu0 0.0
        %2206 = vmatpush.msra.mxu0 0.0
        %2207 = vmatpush.msra.mxu0 0.0
        %2208 = vmatpush.msra.mxu0 0.0
        %2209 = vmatpush.msra.mxu0 0.0
        %2210 = vmatpush.msra.mxu0 0.0
        %2211 = vmatpush.msra.mxu0 0.0
        %2212 = vmatpush.msra.mxu0 0.0
        %2213 = vmatpush.msra.mxu0 0.0
        %2214 = vmatpush.msra.mxu0 0.0
        %2215 = vmatpush.msra.mxu0 0.0
        %2216 = vmatpush.msra.mxu0 0.0
        %2217 = vmatpush.msra.mxu0 %v1815
        %2218 = vmatpush.msra.mxu0 %v1814
        %2219 = vmatpush.msra.mxu0 %v1813
        %2220 = vmatpush.msra.mxu0 %v1812
        %2221 = vmatmul.f32.gmra.mxu0 %v1822
        %v2222 = vpop.f32.mrf.mxu0
        %v2223 = vadd.f32 %v1818, %v2222
        %2224 = vmatmul.f32.gmra.mxu0 %v1825
        %v2225 = vpop.f32.mrf.mxu0
        %v2226 = vadd.f32 %v1818, %v2225
        %2227 = vmatmul.f32.gmra.mxu0 %v1828
        %v2228 = vpop.f32.mrf.mxu0
        %v2229 = vadd.f32 %v1818, %v2228
        %2230 = vmatmul.f32.gmra.mxu0 %v1831
        %v2231 = vpop.f32.mrf.mxu0
        %v2232 = vadd.f32 %v1818, %v2231
        %2233 = vmatmul.f32.gmra.mxu0 %v1834
        %v2234 = vpop.f32.mrf.mxu0
        %v2235 = vadd.f32 %v1818, %v2234
        %2236 = vmatmul.f32.gmra.mxu0 %v1837
        %v2237 = vpop.f32.mrf.mxu0
        %v2238 = vadd.f32 %v1818, %v2237
        %2239 = vmatmul.f32.gmra.mxu0 %v1840
        %v2240 = vpop.f32.mrf.mxu0
        %v2241 = vadd.f32 %v1818, %v2240
        %2242 = vmatmul.f32.gmra.mxu0 %v1843
        %v2243 = vpop.f32.mrf.mxu0
        %v2244 = vadd.f32 %v1818, %v2243
        %2245 = vmatmul.f32.gmra.mxu0 %v1846
        %v2246 = vpop.f32.mrf.mxu0
        %v2247 = vadd.f32 %v1818, %v2246
        %2248 = vmatmul.f32.gmra.mxu0 %v1849
        %v2249 = vpop.f32.mrf.mxu0
        %v2250 = vadd.f32 %v1818, %v2249
        %2251 = vmatmul.f32.gmra.mxu0 %v1852
        %v2252 = vpop.f32.mrf.mxu0
        %v2253 = vadd.f32 %v1818, %v2252
        %2254 = vmatmul.f32.gmra.mxu0 %v1855
        %v2255 = vpop.f32.mrf.mxu0
        %v2256 = vadd.f32 %v1818, %v2255
        %2257 = vmatmul.f32.gmra.mxu0 %v1858
        %v2258 = vpop.f32.mrf.mxu0
        %v2259 = vadd.f32 %v1818, %v2258
        %2260 = vmatmul.f32.gmra.mxu0 %v1861
        %v2261 = vpop.f32.mrf.mxu0
        %v2262 = vadd.f32 %v1818, %v2261
        %2263 = vmatmul.f32.gmra.mxu0 %v1864
        %v2264 = vpop.f32.mrf.mxu0
        %v2265 = vadd.f32 %v1818, %v2264
        %2266 = vmatmul.f32.gmra.mxu0 %v1867
        %v2267 = vpop.f32.mrf.mxu0
        %v2268 = vadd.f32 %v1818, %v2267
        %2269 = vmatmul.f32.gmra.mxu0 %v1870
        %v2270 = vpop.f32.mrf.mxu0
        %v2271 = vadd.f32 %v1818, %v2270
        %2272 = vmatmul.f32.gmra.mxu0 %v1873
        %v2273 = vpop.f32.mrf.mxu0
        %v2274 = vadd.f32 %v1818, %v2273
        %2275 = vmatmul.f32.gmra.mxu0 %v1876
        %v2276 = vpop.f32.mrf.mxu0
        %v2277 = vadd.f32 %v1818, %v2276
        %2278 = vmatmul.f32.gmra.mxu0 %v1879
        %v2279 = vpop.f32.mrf.mxu0
        %v2280 = vadd.f32 %v1818, %v2279
        %2281 = vmatmul.f32.gmra.mxu0 %v1882
        %v2282 = vpop.f32.mrf.mxu0
        %v2283 = vadd.f32 %v1818, %v2282
        %2284 = vmatmul.f32.gmra.mxu0 %v1885
        %v2285 = vpop.f32.mrf.mxu0
        %v2286 = vadd.f32 %v1818, %v2285
        %2287 = vmatmul.f32.gmra.mxu0 %v1888
        %v2288 = vpop.f32.mrf.mxu0
        %v2289 = vadd.f32 %v1818, %v2288
        %2290 = vmatmul.f32.gmra.mxu0 %v1891
        %v2291 = vpop.f32.mrf.mxu0
        %v2292 = vadd.f32 %v1818, %v2291
        %2293 = vmatmul.f32.gmra.mxu0 %v1894
        %v2294 = vpop.f32.mrf.mxu0
        %v2295 = vadd.f32 %v1818, %v2294
        %2296 = vmatmul.f32.gmra.mxu0 %v1897
        %v2297 = vpop.f32.mrf.mxu0
        %v2298 = vadd.f32 %v1818, %v2297
        %2299 = vmatmul.f32.gmra.mxu0 %v1900
        %v2300 = vpop.f32.mrf.mxu0
        %v2301 = vadd.f32 %v1818, %v2300
        %2302 = vmatmul.f32.gmra.mxu0 %v1903
        %v2303 = vpop.f32.mrf.mxu0
        %v2304 = vadd.f32 %v1818, %v2303
        %2305 = vmatmul.f32.gmra.mxu0 %v1906
        %v2306 = vpop.f32.mrf.mxu0
        %v2307 = vadd.f32 %v1818, %v2306
        %2308 = vmatmul.f32.gmra.mxu0 %v1909
        %v2309 = vpop.f32.mrf.mxu0
        %v2310 = vadd.f32 %v1818, %v2309
        %2311 = vmatmul.f32.gmra.mxu0 %v1912
        %v2312 = vpop.f32.mrf.mxu0
        %v2313 = vadd.f32 %v1818, %v2312
        %2314 = vmatmul.f32.gmra.mxu0 %v1915
        %v2315 = vpop.f32.mrf.mxu0
        %v2316 = vadd.f32 %v1818, %v2315
        %2317 = vmatmul.f32.gmra.mxu0 %v1918
        %v2318 = vpop.f32.mrf.mxu0
        %v2319 = vadd.f32 %v1818, %v2318
        %2320 = vmatmul.f32.gmra.mxu0 %v1921
        %v2321 = vpop.f32.mrf.mxu0
        %v2322 = vadd.f32 %v1818, %v2321
        %2323 = vmatmul.f32.gmra.mxu0 %v1924
        %v2324 = vpop.f32.mrf.mxu0
        %v2325 = vadd.f32 %v1818, %v2324
        %2326 = vmatmul.f32.gmra.mxu0 %v1927
        %v2327 = vpop.f32.mrf.mxu0
        %v2328 = vadd.f32 %v1818, %v2327
        %2329 = vmatmul.f32.gmra.mxu0 %v1930
        %v2330 = vpop.f32.mrf.mxu0
        %v2331 = vadd.f32 %v1818, %v2330
        %2332 = vmatmul.f32.gmra.mxu0 %v1933
        %v2333 = vpop.f32.mrf.mxu0
        %v2334 = vadd.f32 %v1818, %v2333
        %2335 = vmatmul.f32.gmra.mxu0 %v1936
        %v2336 = vpop.f32.mrf.mxu0
        %v2337 = vadd.f32 %v1818, %v2336
        %2338 = vmatmul.f32.gmra.mxu0 %v1939
        %v2339 = vpop.f32.mrf.mxu0
        %v2340 = vadd.f32 %v1818, %v2339
        %2341 = vmatmul.f32.gmra.mxu0 %v1942
        %v2342 = vpop.f32.mrf.mxu0
        %v2343 = vadd.f32 %v1818, %v2342
        %2344 = vmatmul.f32.gmra.mxu0 %v1945
        %v2345 = vpop.f32.mrf.mxu0
        %v2346 = vadd.f32 %v1818, %v2345
        %2347 = vmatmul.f32.gmra.mxu0 %v1948
        %v2348 = vpop.f32.mrf.mxu0
        %v2349 = vadd.f32 %v1818, %v2348
        %2350 = vmatmul.f32.gmra.mxu0 %v1951
        %v2351 = vpop.f32.mrf.mxu0
        %v2352 = vadd.f32 %v1818, %v2351
        %2353 = vmatmul.f32.gmra.mxu0 %v1954
        %v2354 = vpop.f32.mrf.mxu0
        %v2355 = vadd.f32 %v1818, %v2354
        %2356 = vmatmul.f32.gmra.mxu0 %v1957
        %v2357 = vpop.f32.mrf.mxu0
        %v2358 = vadd.f32 %v1818, %v2357
        %2359 = vmatmul.f32.gmra.mxu0 %v1960
        %v2360 = vpop.f32.mrf.mxu0
        %v2361 = vadd.f32 %v1818, %v2360
        %2362 = vmatmul.f32.gmra.mxu0 %v1963
        %v2363 = vpop.f32.mrf.mxu0
        %v2364 = vadd.f32 %v1818, %v2363
        %2365 = vmatmul.f32.gmra.mxu0 %v1966
        %v2366 = vpop.f32.mrf.mxu0
        %v2367 = vadd.f32 %v1818, %v2366
        %2368 = vmatmul.f32.gmra.mxu0 %v1969
        %v2369 = vpop.f32.mrf.mxu0
        %v2370 = vadd.f32 %v1818, %v2369
        %2371 = vmatmul.f32.gmra.mxu0 %v1972
        %v2372 = vpop.f32.mrf.mxu0
        %v2373 = vadd.f32 %v1818, %v2372
        %2374 = vmatmul.f32.gmra.mxu0 %v1975
        %v2375 = vpop.f32.mrf.mxu0
        %v2376 = vadd.f32 %v1818, %v2375
        %2377 = vmatmul.f32.gmra.mxu0 %v1978
        %v2378 = vpop.f32.mrf.mxu0
        %v2379 = vadd.f32 %v1818, %v2378
        %2380 = vmatmul.f32.gmra.mxu0 %v1981
        %v2381 = vpop.f32.mrf.mxu0
        %v2382 = vadd.f32 %v1818, %v2381
        %2383 = vmatmul.f32.gmra.mxu0 %v1984
        %v2384 = vpop.f32.mrf.mxu0
        %v2385 = vadd.f32 %v1818, %v2384
        %2386 = vmatmul.f32.gmra.mxu0 %v1987
        %v2387 = vpop.f32.mrf.mxu0
        %v2388 = vadd.f32 %v1818, %v2387
        %2389 = vmatmul.f32.gmra.mxu0 %v1990
        %v2390 = vpop.f32.mrf.mxu0
        %v2391 = vadd.f32 %v1818, %v2390
        %2392 = vmatmul.f32.gmra.mxu0 %v1993
        %v2393 = vpop.f32.mrf.mxu0
        %v2394 = vadd.f32 %v1818, %v2393
        %2395 = vmatmul.f32.gmra.mxu0 %v1996
        %v2396 = vpop.f32.mrf.mxu0
        %v2397 = vadd.f32 %v1818, %v2396
        %2398 = vmatmul.f32.gmra.mxu0 %v1999
        %v2399 = vpop.f32.mrf.mxu0
        %v2400 = vadd.f32 %v1818, %v2399
        %2401 = vmatmul.f32.gmra.mxu0 %v2002
        %v2402 = vpop.f32.mrf.mxu0
        %v2403 = vadd.f32 %v1818, %v2402
        %2404 = vmatmul.f32.gmra.mxu0 %v2005
        %v2405 = vpop.f32.mrf.mxu0
        %v2406 = vadd.f32 %v1818, %v2405
        %2407 = vmatmul.f32.gmra.mxu0 %v2008
        %v2408 = vpop.f32.mrf.mxu0
        %v2409 = vadd.f32 %v1818, %v2408
        %2410 = vmatmul.f32.gmra.mxu0 %v2011
        %v2411 = vpop.f32.mrf.mxu0
        %v2412 = vadd.f32 %v1818, %v2411
        %2413 = vmatmul.f32.gmra.mxu0 %v2014
        %v2414 = vpop.f32.mrf.mxu0
        %v2415 = vadd.f32 %v1818, %v2414
        %2416 = vmatmul.f32.gmra.mxu0 %v2017
        %v2417 = vpop.f32.mrf.mxu0
        %v2418 = vadd.f32 %v1818, %v2417
        %2419 = vmatmul.f32.gmra.mxu0 %v2020
        %v2420 = vpop.f32.mrf.mxu0
        %v2421 = vadd.f32 %v1818, %v2420
        %2422 = vmatmul.f32.gmra.mxu0 %v2023
        %v2423 = vpop.f32.mrf.mxu0
        %v2424 = vadd.f32 %v1818, %v2423
        %2425 = vmatmul.f32.gmra.mxu0 %v2026
        %v2426 = vpop.f32.mrf.mxu0
        %v2427 = vadd.f32 %v1818, %v2426
        %2428 = vmatmul.f32.gmra.mxu0 %v2029
        %v2429 = vpop.f32.mrf.mxu0
        %v2430 = vadd.f32 %v1818, %v2429
        %2431 = vmatmul.f32.gmra.mxu0 %v2032
        %v2432 = vpop.f32.mrf.mxu0
        %v2433 = vadd.f32 %v1818, %v2432
        %2434 = vmatmul.f32.gmra.mxu0 %v2035
        %v2435 = vpop.f32.mrf.mxu0
        %v2436 = vadd.f32 %v1818, %v2435
        %2437 = vmatmul.f32.gmra.mxu0 %v2038
        %v2438 = vpop.f32.mrf.mxu0
        %v2439 = vadd.f32 %v1818, %v2438
        %2440 = vmatmul.f32.gmra.mxu0 %v2041
        %v2441 = vpop.f32.mrf.mxu0
        %v2442 = vadd.f32 %v1818, %v2441
        %2443 = vmatmul.f32.gmra.mxu0 %v2044
        %v2444 = vpop.f32.mrf.mxu0
        %v2445 = vadd.f32 %v1818, %v2444
        %2446 = vmatmul.f32.gmra.mxu0 %v2047
        %v2447 = vpop.f32.mrf.mxu0
        %v2448 = vadd.f32 %v1818, %v2447
        %2449 = vmatmul.f32.gmra.mxu0 %v2050
        %v2450 = vpop.f32.mrf.mxu0
        %v2451 = vadd.f32 %v1818, %v2450
        %2452 = vmatmul.f32.gmra.mxu0 %v2053
        %v2453 = vpop.f32.mrf.mxu0
        %v2454 = vadd.f32 %v1818, %v2453
        %2455 = vmatmul.f32.gmra.mxu0 %v2056
        %v2456 = vpop.f32.mrf.mxu0
        %v2457 = vadd.f32 %v1818, %v2456
        %2458 = vmatmul.f32.gmra.mxu0 %v2059
        %v2459 = vpop.f32.mrf.mxu0
        %v2460 = vadd.f32 %v1818, %v2459
        %2461 = vmatmul.f32.gmra.mxu0 %v2062
        %v2462 = vpop.f32.mrf.mxu0
        %v2463 = vadd.f32 %v1818, %v2462
        %2464 = vmatmul.f32.gmra.mxu0 %v2065
        %v2465 = vpop.f32.mrf.mxu0
        %v2466 = vadd.f32 %v1818, %v2465
        %2467 = vmatmul.f32.gmra.mxu0 %v2068
        %v2468 = vpop.f32.mrf.mxu0
        %v2469 = vadd.f32 %v1818, %v2468
        %2470 = vmatmul.f32.gmra.mxu0 %v2071
        %v2471 = vpop.f32.mrf.mxu0
        %v2472 = vadd.f32 %v1818, %v2471
        %2473 = vmatmul.f32.gmra.mxu0 %v2074
        %v2474 = vpop.f32.mrf.mxu0
        %v2475 = vadd.f32 %v1818, %v2474
        %2476 = vmatmul.f32.gmra.mxu0 %v2077
        %v2477 = vpop.f32.mrf.mxu0
        %v2478 = vadd.f32 %v1818, %v2477
        %2479 = vmatmul.f32.gmra.mxu0 %v2080
        %v2480 = vpop.f32.mrf.mxu0
        %v2481 = vadd.f32 %v1818, %v2480
        %2482 = vmatmul.f32.gmra.mxu0 %v2083
        %v2483 = vpop.f32.mrf.mxu0
        %v2484 = vadd.f32 %v1818, %v2483
        %2485 = vmatmul.f32.gmra.mxu0 %v2086
        %v2486 = vpop.f32.mrf.mxu0
        %v2487 = vadd.f32 %v1818, %v2486
        %2488 = vmatmul.f32.gmra.mxu0 %v2089
        %v2489 = vpop.f32.mrf.mxu0
        %v2490 = vadd.f32 %v1818, %v2489
        %2491 = vmatmul.f32.gmra.mxu0 %v2092
        %v2492 = vpop.f32.mrf.mxu0
        %v2493 = vadd.f32 %v1818, %v2492
        %2494 = vmatmul.f32.gmra.mxu0 %v2095
        %v2495 = vpop.f32.mrf.mxu0
        %v2496 = vadd.f32 %v1818, %v2495
        %2497 = vmatmul.f32.gmra.mxu0 %v2098
        %v2498 = vpop.f32.mrf.mxu0
        %v2499 = vadd.f32 %v1818, %v2498
        %2500 = vmatmul.f32.gmra.mxu0 %v2101
        %v2501 = vpop.f32.mrf.mxu0
        %v2502 = vadd.f32 %v1818, %v2501
        %2503 = vmatmul.f32.gmra.mxu0 %v2104
        %v2504 = vpop.f32.mrf.mxu0
        %v2505 = vadd.f32 %v1818, %v2504
        %2506 = vmatmul.f32.gmra.mxu0 %v2107
        %v2507 = vpop.f32.mrf.mxu0
        %v2508 = vadd.f32 %v1818, %v2507
        %2509 = vmatmul.f32.gmra.mxu0 %v2110
        %v2510 = vpop.f32.mrf.mxu0
        %v2511 = vadd.f32 %v1818, %v2510
        %2512 = vmatmul.f32.gmra.mxu0 %v2113
        %v2513 = vpop.f32.mrf.mxu0
        %v2514 = vadd.f32 %v1818, %v2513
        %2515 = vmatmul.f32.gmra.mxu0 %v2116
        %v2516 = vpop.f32.mrf.mxu0
        %v2517 = vadd.f32 %v1818, %v2516
        %2518 = vmatmul.f32.gmra.mxu0 %v2119
        %v2519 = vpop.f32.mrf.mxu0
        %v2520 = vadd.f32 %v1818, %v2519
        %2521 = vmatmul.f32.gmra.mxu0 %v2122
        %v2522 = vpop.f32.mrf.mxu0
        %v2523 = vadd.f32 %v1818, %v2522
        %2524 = vmatmul.f32.gmra.mxu0 %v2125
        %v2525 = vpop.f32.mrf.mxu0
        %v2526 = vadd.f32 %v1818, %v2525
        %2527 = vmatmul.f32.gmra.mxu0 %v2128
        %v2528 = vpop.f32.mrf.mxu0
        %v2529 = vadd.f32 %v1818, %v2528
        %2530 = vmatmul.f32.gmra.mxu0 %v2131
        %v2531 = vpop.f32.mrf.mxu0
        %v2532 = vadd.f32 %v1818, %v2531
        %2533 = vmatmul.f32.gmra.mxu0 %v2134
        %v2534 = vpop.f32.mrf.mxu0
        %v2535 = vadd.f32 %v1818, %v2534
        %2536 = vmatmul.f32.gmra.mxu0 %v2137
        %v2537 = vpop.f32.mrf.mxu0
        %v2538 = vadd.f32 %v1818, %v2537
        %2539 = vmatmul.f32.gmra.mxu0 %v2140
        %v2540 = vpop.f32.mrf.mxu0
        %v2541 = vadd.f32 %v1818, %v2540
        %2542 = vmatmul.f32.gmra.mxu0 %v2143
        %v2543 = vpop.f32.mrf.mxu0
        %v2544 = vadd.f32 %v1818, %v2543
        %2545 = vmatmul.f32.gmra.mxu0 %v2146
        %v2546 = vpop.f32.mrf.mxu0
        %v2547 = vadd.f32 %v1818, %v2546
        %2548 = vmatmul.f32.gmra.mxu0 %v2149
        %v2549 = vpop.f32.mrf.mxu0
        %v2550 = vadd.f32 %v1818, %v2549
        %2551 = vmatmul.f32.gmra.mxu0 %v2152
        %v2552 = vpop.f32.mrf.mxu0
        %v2553 = vadd.f32 %v1818, %v2552
        %2554 = vmatmul.f32.gmra.mxu0 %v2155
        %v2555 = vpop.f32.mrf.mxu0
        %v2556 = vadd.f32 %v1818, %v2555
        %2557 = vmatmul.f32.gmra.mxu0 %v2158
        %v2558 = vpop.f32.mrf.mxu0
        %v2559 = vadd.f32 %v1818, %v2558
        %2560 = vmatmul.f32.gmra.mxu0 %v2161
        %v2561 = vpop.f32.mrf.mxu0
        %v2562 = vadd.f32 %v1818, %v2561
        %2563 = vmatmul.f32.gmra.mxu0 %v2164
        %v2564 = vpop.f32.mrf.mxu0
        %v2565 = vadd.f32 %v1818, %v2564
        %2566 = vmatmul.f32.gmra.mxu0 %v2167
        %v2567 = vpop.f32.mrf.mxu0
        %v2568 = vadd.f32 %v1818, %v2567
        %2569 = vmatmul.f32.gmra.mxu0 %v2170
        %v2570 = vpop.f32.mrf.mxu0
        %v2571 = vadd.f32 %v1818, %v2570
        %2572 = vmatmul.f32.gmra.mxu0 %v2173
        %v2573 = vpop.f32.mrf.mxu0
        %v2574 = vadd.f32 %v1818, %v2573
        %2575 = vmatmul.f32.gmra.mxu0 %v2176
        %v2576 = vpop.f32.mrf.mxu0
        %v2577 = vadd.f32 %v1818, %v2576
        %2578 = vmatmul.f32.gmra.mxu0 %v2179
        %v2579 = vpop.f32.mrf.mxu0
        %v2580 = vadd.f32 %v1818, %v2579
        %2581 = vmatmul.f32.gmra.mxu0 %v2182
        %v2582 = vpop.f32.mrf.mxu0
        %v2583 = vadd.f32 %v1818, %v2582
        %2584 = vmatmul.f32.gmra.mxu0 %v2185
        %v2585 = vpop.f32.mrf.mxu0
        %v2586 = vadd.f32 %v1818, %v2585
        %2587 = vmatmul.f32.gmra.mxu0 %v2188
        %v2588 = vpop.f32.mrf.mxu0
        %v2589 = vadd.f32 %v1818, %v2588
        %2590 = vmatmul.f32.gmra.mxu0 %v2191
        %v2591 = vpop.f32.mrf.mxu0
        %v2592 = vadd.f32 %v1818, %v2591
        %2593 = vmatmul.f32.gmra.mxu0 %v2194
        %v2594 = vpop.f32.mrf.mxu0
        %v2595 = vadd.f32 %v1818, %v2594
        %2596 = vmatmul.f32.gmra.mxu0 %v2197
        %v2597 = vpop.f32.mrf.mxu0
        %v2598 = vadd.f32 %v1818, %v2597
        %2599 = vmatmul.f32.gmra.mxu0 %v2200
        %v2600 = vpop.f32.mrf.mxu0
        %v2601 = vadd.f32 %v1818, %v2600
        %2602 = vmatmul.f32.gmra.mxu0 %v2203
        %v2603 = vpop.f32.mrf.mxu0
        %v2604 = vadd.f32 %v1818, %v2603
        %2605 = vdwg.mxu0
        %vm2606 = vcmp.gt.f32.partialorder %v2223, 0.0
        %vm2607 = vcmp.gt.f32.partialorder %v2226, 0.0
        %vm2608 = vcmp.gt.f32.partialorder %v2229, 0.0
        %vm2609 = vcmp.gt.f32.partialorder %v2232, 0.0
        %vm2610 = vcmp.gt.f32.partialorder %v2235, 0.0
        %vm2611 = vcmp.gt.f32.partialorder %v2238, 0.0
        %vm2612 = vcmp.gt.f32.partialorder %v2241, 0.0
        %vm2613 = vcmp.gt.f32.partialorder %v2244, 0.0
        %vm2614 = vcmp.gt.f32.partialorder %v2247, 0.0
        %vm2615 = vcmp.gt.f32.partialorder %v2250, 0.0
        %vm2616 = vcmp.gt.f32.partialorder %v2253, 0.0
        %vm2617 = vcmp.gt.f32.partialorder %v2256, 0.0
        %vm2618 = vcmp.gt.f32.partialorder %v2259, 0.0
        %vm2619 = vcmp.gt.f32.partialorder %v2262, 0.0
        %vm2620 = vcmp.gt.f32.partialorder %v2265, 0.0
        %vm2621 = vcmp.gt.f32.partialorder %v2268, 0.0
        %vm2622 = vcmp.gt.f32.partialorder %v2271, 0.0
        %vm2623 = vcmp.gt.f32.partialorder %v2274, 0.0
        %vm2624 = vcmp.gt.f32.partialorder %v2277, 0.0
        %vm2625 = vcmp.gt.f32.partialorder %v2280, 0.0
        %vm2626 = vcmp.gt.f32.partialorder %v2283, 0.0
        %vm2627 = vcmp.gt.f32.partialorder %v2286, 0.0
        %vm2628 = vcmp.gt.f32.partialorder %v2289, 0.0
        %vm2629 = vcmp.gt.f32.partialorder %v2292, 0.0
        %vm2630 = vcmp.gt.f32.partialorder %v2295, 0.0
        %vm2631 = vcmp.gt.f32.partialorder %v2298, 0.0
        %vm2632 = vcmp.gt.f32.partialorder %v2301, 0.0
        %vm2633 = vcmp.gt.f32.partialorder %v2304, 0.0
        %vm2634 = vcmp.gt.f32.partialorder %v2307, 0.0
        %vm2635 = vcmp.gt.f32.partialorder %v2310, 0.0
        %vm2636 = vcmp.gt.f32.partialorder %v2313, 0.0
        %vm2637 = vcmp.gt.f32.partialorder %v2316, 0.0
        %vm2638 = vcmp.gt.f32.partialorder %v2319, 0.0
        %vm2639 = vcmp.gt.f32.partialorder %v2322, 0.0
        %vm2640 = vcmp.gt.f32.partialorder %v2325, 0.0
        %vm2641 = vcmp.gt.f32.partialorder %v2328, 0.0
        %vm2642 = vcmp.gt.f32.partialorder %v2331, 0.0
        %vm2643 = vcmp.gt.f32.partialorder %v2334, 0.0
        %vm2644 = vcmp.gt.f32.partialorder %v2337, 0.0
        %vm2645 = vcmp.gt.f32.partialorder %v2340, 0.0
        %vm2646 = vcmp.gt.f32.partialorder %v2343, 0.0
        %vm2647 = vcmp.gt.f32.partialorder %v2346, 0.0
        %vm2648 = vcmp.gt.f32.partialorder %v2349, 0.0
        %vm2649 = vcmp.gt.f32.partialorder %v2352, 0.0
        %vm2650 = vcmp.gt.f32.partialorder %v2355, 0.0
        %vm2651 = vcmp.gt.f32.partialorder %v2358, 0.0
        %vm2652 = vcmp.gt.f32.partialorder %v2361, 0.0
        %vm2653 = vcmp.gt.f32.partialorder %v2364, 0.0
        %vm2654 = vcmp.gt.f32.partialorder %v2367, 0.0
        %vm2655 = vcmp.gt.f32.partialorder %v2370, 0.0
        %vm2656 = vcmp.gt.f32.partialorder %v2373, 0.0
        %vm2657 = vcmp.gt.f32.partialorder %v2376, 0.0
        %vm2658 = vcmp.gt.f32.partialorder %v2379, 0.0
        %vm2659 = vcmp.gt.f32.partialorder %v2382, 0.0
        %vm2660 = vcmp.gt.f32.partialorder %v2385, 0.0
        %vm2661 = vcmp.gt.f32.partialorder %v2388, 0.0
        %vm2662 = vcmp.gt.f32.partialorder %v2391, 0.0
        %vm2663 = vcmp.gt.f32.partialorder %v2394, 0.0
        %vm2664 = vcmp.gt.f32.partialorder %v2397, 0.0
        %vm2665 = vcmp.gt.f32.partialorder %v2400, 0.0
        %vm2666 = vcmp.gt.f32.partialorder %v2403, 0.0
        %vm2667 = vcmp.gt.f32.partialorder %v2406, 0.0
        %vm2668 = vcmp.gt.f32.partialorder %v2409, 0.0
        %vm2669 = vcmp.gt.f32.partialorder %v2412, 0.0
        %vm2670 = vcmp.gt.f32.partialorder %v2415, 0.0
        %vm2671 = vcmp.gt.f32.partialorder %v2418, 0.0
        %vm2672 = vcmp.gt.f32.partialorder %v2421, 0.0
        %vm2673 = vcmp.gt.f32.partialorder %v2424, 0.0
        %vm2674 = vcmp.gt.f32.partialorder %v2427, 0.0
        %vm2675 = vcmp.gt.f32.partialorder %v2430, 0.0
        %vm2676 = vcmp.gt.f32.partialorder %v2433, 0.0
        %vm2677 = vcmp.gt.f32.partialorder %v2436, 0.0
        %vm2678 = vcmp.gt.f32.partialorder %v2439, 0.0
        %vm2679 = vcmp.gt.f32.partialorder %v2442, 0.0
        %vm2680 = vcmp.gt.f32.partialorder %v2445, 0.0
        %vm2681 = vcmp.gt.f32.partialorder %v2448, 0.0
        %vm2682 = vcmp.gt.f32.partialorder %v2451, 0.0
        %vm2683 = vcmp.gt.f32.partialorder %v2454, 0.0
        %vm2684 = vcmp.gt.f32.partialorder %v2457, 0.0
        %vm2685 = vcmp.gt.f32.partialorder %v2460, 0.0
        %vm2686 = vcmp.gt.f32.partialorder %v2463, 0.0
        %vm2687 = vcmp.gt.f32.partialorder %v2466, 0.0
        %vm2688 = vcmp.gt.f32.partialorder %v2469, 0.0
        %vm2689 = vcmp.gt.f32.partialorder %v2472, 0.0
        %vm2690 = vcmp.gt.f32.partialorder %v2475, 0.0
        %vm2691 = vcmp.gt.f32.partialorder %v2478, 0.0
        %vm2692 = vcmp.gt.f32.partialorder %v2481, 0.0
        %vm2693 = vcmp.gt.f32.partialorder %v2484, 0.0
        %vm2694 = vcmp.gt.f32.partialorder %v2487, 0.0
        %vm2695 = vcmp.gt.f32.partialorder %v2490, 0.0
        %vm2696 = vcmp.gt.f32.partialorder %v2493, 0.0
        %vm2697 = vcmp.gt.f32.partialorder %v2496, 0.0
        %vm2698 = vcmp.gt.f32.partialorder %v2499, 0.0
        %vm2699 = vcmp.gt.f32.partialorder %v2502, 0.0
        %vm2700 = vcmp.gt.f32.partialorder %v2505, 0.0
        %vm2701 = vcmp.gt.f32.partialorder %v2508, 0.0
        %vm2702 = vcmp.gt.f32.partialorder %v2511, 0.0
        %vm2703 = vcmp.gt.f32.partialorder %v2514, 0.0
        %vm2704 = vcmp.gt.f32.partialorder %v2517, 0.0
        %vm2705 = vcmp.gt.f32.partialorder %v2520, 0.0
        %vm2706 = vcmp.gt.f32.partialorder %v2523, 0.0
        %vm2707 = vcmp.gt.f32.partialorder %v2526, 0.0
        %vm2708 = vcmp.gt.f32.partialorder %v2529, 0.0
        %vm2709 = vcmp.gt.f32.partialorder %v2532, 0.0
        %vm2710 = vcmp.gt.f32.partialorder %v2535, 0.0
        %vm2711 = vcmp.gt.f32.partialorder %v2538, 0.0
        %vm2712 = vcmp.gt.f32.partialorder %v2541, 0.0
        %vm2713 = vcmp.gt.f32.partialorder %v2544, 0.0
        %vm2714 = vcmp.gt.f32.partialorder %v2547, 0.0
        %vm2715 = vcmp.gt.f32.partialorder %v2550, 0.0
        %vm2716 = vcmp.gt.f32.partialorder %v2553, 0.0
        %vm2717 = vcmp.gt.f32.partialorder %v2556, 0.0
        %vm2718 = vcmp.gt.f32.partialorder %v2559, 0.0
        %vm2719 = vcmp.gt.f32.partialorder %v2562, 0.0
        %vm2720 = vcmp.gt.f32.partialorder %v2565, 0.0
        %vm2721 = vcmp.gt.f32.partialorder %v2568, 0.0
        %vm2722 = vcmp.gt.f32.partialorder %v2571, 0.0
        %vm2723 = vcmp.gt.f32.partialorder %v2574, 0.0
        %vm2724 = vcmp.gt.f32.partialorder %v2577, 0.0
        %vm2725 = vcmp.gt.f32.partialorder %v2580, 0.0
        %vm2726 = vcmp.gt.f32.partialorder %v2583, 0.0
        %vm2727 = vcmp.gt.f32.partialorder %v2586, 0.0
        %vm2728 = vcmp.gt.f32.partialorder %v2589, 0.0
        %vm2729 = vcmp.gt.f32.partialorder %v2592, 0.0
        %vm2730 = vcmp.gt.f32.partialorder %v2595, 0.0
        %vm2731 = vcmp.gt.f32.partialorder %v2598, 0.0
        %vm2732 = vcmp.gt.f32.partialorder %v2601, 0.0
        %vm2733 = vcmp.gt.f32.partialorder %v2604, 0.0
        %v2734 = vmul.f32 %v2223, 0.01
        %v2735 = vmul.f32 %v2226, 0.01
        %v2736 = vmul.f32 %v2229, 0.01
        %v2737 = vmul.f32 %v2232, 0.01
        %v2738 = vmul.f32 %v2235, 0.01
        %v2739 = vmul.f32 %v2238, 0.01
        %v2740 = vmul.f32 %v2241, 0.01
        %v2741 = vmul.f32 %v2244, 0.01
        %v2742 = vmul.f32 %v2247, 0.01
        %v2743 = vmul.f32 %v2250, 0.01
        %v2744 = vmul.f32 %v2253, 0.01
        %v2745 = vmul.f32 %v2256, 0.01
        %v2746 = vmul.f32 %v2259, 0.01
        %v2747 = vmul.f32 %v2262, 0.01
        %v2748 = vmul.f32 %v2265, 0.01
        %v2749 = vmul.f32 %v2268, 0.01
        %v2750 = vmul.f32 %v2271, 0.01
        %v2751 = vmul.f32 %v2274, 0.01
        %v2752 = vmul.f32 %v2277, 0.01
        %v2753 = vmul.f32 %v2280, 0.01
        %v2754 = vmul.f32 %v2283, 0.01
        %v2755 = vmul.f32 %v2286, 0.01
        %v2756 = vmul.f32 %v2289, 0.01
        %v2757 = vmul.f32 %v2292, 0.01
        %v2758 = vmul.f32 %v2295, 0.01
        %v2759 = vmul.f32 %v2298, 0.01
        %v2760 = vmul.f32 %v2301, 0.01
        %v2761 = vmul.f32 %v2304, 0.01
        %v2762 = vmul.f32 %v2307, 0.01
        %v2763 = vmul.f32 %v2310, 0.01
        %v2764 = vmul.f32 %v2313, 0.01
        %v2765 = vmul.f32 %v2316, 0.01
        %v2766 = vmul.f32 %v2319, 0.01
        %v2767 = vmul.f32 %v2322, 0.01
        %v2768 = vmul.f32 %v2325, 0.01
        %v2769 = vmul.f32 %v2328, 0.01
        %v2770 = vmul.f32 %v2331, 0.01
        %v2771 = vmul.f32 %v2334, 0.01
        %v2772 = vmul.f32 %v2337, 0.01
        %v2773 = vmul.f32 %v2340, 0.01
        %v2774 = vmul.f32 %v2343, 0.01
        %v2775 = vmul.f32 %v2346, 0.01
        %v2776 = vmul.f32 %v2349, 0.01
        %v2777 = vmul.f32 %v2352, 0.01
        %v2778 = vmul.f32 %v2355, 0.01
        %v2779 = vmul.f32 %v2358, 0.01
        %v2780 = vmul.f32 %v2361, 0.01
        %v2781 = vmul.f32 %v2364, 0.01
        %v2782 = vmul.f32 %v2367, 0.01
        %v2783 = vmul.f32 %v2370, 0.01
        %v2784 = vmul.f32 %v2373, 0.01
        %v2785 = vmul.f32 %v2376, 0.01
        %v2786 = vmul.f32 %v2379, 0.01
        %v2787 = vmul.f32 %v2382, 0.01
        %v2788 = vmul.f32 %v2385, 0.01
        %v2789 = vmul.f32 %v2388, 0.01
        %v2790 = vmul.f32 %v2391, 0.01
        %v2791 = vmul.f32 %v2394, 0.01
        %v2792 = vmul.f32 %v2397, 0.01
        %v2793 = vmul.f32 %v2400, 0.01
        %v2794 = vmul.f32 %v2403, 0.01
        %v2795 = vmul.f32 %v2406, 0.01
        %v2796 = vmul.f32 %v2409, 0.01
        %v2797 = vmul.f32 %v2412, 0.01
        %v2798 = vmul.f32 %v2415, 0.01
        %v2799 = vmul.f32 %v2418, 0.01
        %v2800 = vmul.f32 %v2421, 0.01
        %v2801 = vmul.f32 %v2424, 0.01
        %v2802 = vmul.f32 %v2427, 0.01
        %v2803 = vmul.f32 %v2430, 0.01
        %v2804 = vmul.f32 %v2433, 0.01
        %v2805 = vmul.f32 %v2436, 0.01
        %v2806 = vmul.f32 %v2439, 0.01
        %v2807 = vmul.f32 %v2442, 0.01
        %v2808 = vmul.f32 %v2445, 0.01
        %v2809 = vmul.f32 %v2448, 0.01
        %v2810 = vmul.f32 %v2451, 0.01
        %v2811 = vmul.f32 %v2454, 0.01
        %v2812 = vmul.f32 %v2457, 0.01
        %v2813 = vmul.f32 %v2460, 0.01
        %v2814 = vmul.f32 %v2463, 0.01
        %v2815 = vmul.f32 %v2466, 0.01
        %v2816 = vmul.f32 %v2469, 0.01
        %v2817 = vmul.f32 %v2472, 0.01
        %v2818 = vmul.f32 %v2475, 0.01
        %v2819 = vmul.f32 %v2478, 0.01
        %v2820 = vmul.f32 %v2481, 0.01
        %v2821 = vmul.f32 %v2484, 0.01
        %v2822 = vmul.f32 %v2487, 0.01
        %v2823 = vmul.f32 %v2490, 0.01
        %v2824 = vmul.f32 %v2493, 0.01
        %v2825 = vmul.f32 %v2496, 0.01
        %v2826 = vmul.f32 %v2499, 0.01
        %v2827 = vmul.f32 %v2502, 0.01
        %v2828 = vmul.f32 %v2505, 0.01
        %v2829 = vmul.f32 %v2508, 0.01
        %v2830 = vmul.f32 %v2511, 0.01
        %v2831 = vmul.f32 %v2514, 0.01
        %v2832 = vmul.f32 %v2517, 0.01
        %v2833 = vmul.f32 %v2520, 0.01
        %v2834 = vmul.f32 %v2523, 0.01
        %v2835 = vmul.f32 %v2526, 0.01
        %v2836 = vmul.f32 %v2529, 0.01
        %v2837 = vmul.f32 %v2532, 0.01
        %v2838 = vmul.f32 %v2535, 0.01
        %v2839 = vmul.f32 %v2538, 0.01
        %v2840 = vmul.f32 %v2541, 0.01
        %v2841 = vmul.f32 %v2544, 0.01
        %v2842 = vmul.f32 %v2547, 0.01
        %v2843 = vmul.f32 %v2550, 0.01
        %v2844 = vmul.f32 %v2553, 0.01
        %v2845 = vmul.f32 %v2556, 0.01
        %v2846 = vmul.f32 %v2559, 0.01
        %v2847 = vmul.f32 %v2562, 0.01
        %v2848 = vmul.f32 %v2565, 0.01
        %v2849 = vmul.f32 %v2568, 0.01
        %v2850 = vmul.f32 %v2571, 0.01
        %v2851 = vmul.f32 %v2574, 0.01
        %v2852 = vmul.f32 %v2577, 0.01
        %v2853 = vmul.f32 %v2580, 0.01
        %v2854 = vmul.f32 %v2583, 0.01
        %v2855 = vmul.f32 %v2586, 0.01
        %v2856 = vmul.f32 %v2589, 0.01
        %v2857 = vmul.f32 %v2592, 0.01
        %v2858 = vmul.f32 %v2595, 0.01
        %v2859 = vmul.f32 %v2598, 0.01
        %v2860 = vmul.f32 %v2601, 0.01
        %v2861 = vmul.f32 %v2604, 0.01
        %v2862 = vsel %vm2606, %v2223, %v2734
        %v2863 = vsel %vm2607, %v2226, %v2735
        %v2864 = vsel %vm2608, %v2229, %v2736
        %v2865 = vsel %vm2609, %v2232, %v2737
        %v2866 = vsel %vm2610, %v2235, %v2738
        %v2867 = vsel %vm2611, %v2238, %v2739
        %v2868 = vsel %vm2612, %v2241, %v2740
        %v2869 = vsel %vm2613, %v2244, %v2741
        %v2870 = vsel %vm2614, %v2247, %v2742
        %v2871 = vsel %vm2615, %v2250, %v2743
        %v2872 = vsel %vm2616, %v2253, %v2744
        %v2873 = vsel %vm2617, %v2256, %v2745
        %v2874 = vsel %vm2618, %v2259, %v2746
        %v2875 = vsel %vm2619, %v2262, %v2747
        %v2876 = vsel %vm2620, %v2265, %v2748
        %v2877 = vsel %vm2621, %v2268, %v2749
        %v2878 = vsel %vm2622, %v2271, %v2750
        %v2879 = vsel %vm2623, %v2274, %v2751
        %v2880 = vsel %vm2624, %v2277, %v2752
        %v2881 = vsel %vm2625, %v2280, %v2753
        %v2882 = vsel %vm2626, %v2283, %v2754
        %v2883 = vsel %vm2627, %v2286, %v2755
        %v2884 = vsel %vm2628, %v2289, %v2756
        %v2885 = vsel %vm2629, %v2292, %v2757
        %v2886 = vsel %vm2630, %v2295, %v2758
        %v2887 = vsel %vm2631, %v2298, %v2759
        %v2888 = vsel %vm2632, %v2301, %v2760
        %v2889 = vsel %vm2633, %v2304, %v2761
        %v2890 = vsel %vm2634, %v2307, %v2762
        %v2891 = vsel %vm2635, %v2310, %v2763
        %v2892 = vsel %vm2636, %v2313, %v2764
        %v2893 = vsel %vm2637, %v2316, %v2765
        %v2894 = vsel %vm2638, %v2319, %v2766
        %v2895 = vsel %vm2639, %v2322, %v2767
        %v2896 = vsel %vm2640, %v2325, %v2768
        %v2897 = vsel %vm2641, %v2328, %v2769
        %v2898 = vsel %vm2642, %v2331, %v2770
        %v2899 = vsel %vm2643, %v2334, %v2771
        %v2900 = vsel %vm2644, %v2337, %v2772
        %v2901 = vsel %vm2645, %v2340, %v2773
        %v2902 = vsel %vm2646, %v2343, %v2774
        %v2903 = vsel %vm2647, %v2346, %v2775
        %v2904 = vsel %vm2648, %v2349, %v2776
        %v2905 = vsel %vm2649, %v2352, %v2777
        %v2906 = vsel %vm2650, %v2355, %v2778
        %v2907 = vsel %vm2651, %v2358, %v2779
        %v2908 = vsel %vm2652, %v2361, %v2780
        %v2909 = vsel %vm2653, %v2364, %v2781
        %v2910 = vsel %vm2654, %v2367, %v2782
        %v2911 = vsel %vm2655, %v2370, %v2783
        %v2912 = vsel %vm2656, %v2373, %v2784
        %v2913 = vsel %vm2657, %v2376, %v2785
        %v2914 = vsel %vm2658, %v2379, %v2786
        %v2915 = vsel %vm2659, %v2382, %v2787
        %v2916 = vsel %vm2660, %v2385, %v2788
        %v2917 = vsel %vm2661, %v2388, %v2789
        %v2918 = vsel %vm2662, %v2391, %v2790
        %v2919 = vsel %vm2663, %v2394, %v2791
        %v2920 = vsel %vm2664, %v2397, %v2792
        %v2921 = vsel %vm2665, %v2400, %v2793
        %v2922 = vsel %vm2666, %v2403, %v2794
        %v2923 = vsel %vm2667, %v2406, %v2795
        %v2924 = vsel %vm2668, %v2409, %v2796
        %v2925 = vsel %vm2669, %v2412, %v2797
        %v2926 = vsel %vm2670, %v2415, %v2798
        %v2927 = vsel %vm2671, %v2418, %v2799
        %v2928 = vsel %vm2672, %v2421, %v2800
        %v2929 = vsel %vm2673, %v2424, %v2801
        %v2930 = vsel %vm2674, %v2427, %v2802
        %v2931 = vsel %vm2675, %v2430, %v2803
        %v2932 = vsel %vm2676, %v2433, %v2804
        %v2933 = vsel %vm2677, %v2436, %v2805
        %v2934 = vsel %vm2678, %v2439, %v2806
        %v2935 = vsel %vm2679, %v2442, %v2807
        %v2936 = vsel %vm2680, %v2445, %v2808
        %v2937 = vsel %vm2681, %v2448, %v2809
        %v2938 = vsel %vm2682, %v2451, %v2810
        %v2939 = vsel %vm2683, %v2454, %v2811
        %v2940 = vsel %vm2684, %v2457, %v2812
        %v2941 = vsel %vm2685, %v2460, %v2813
        %v2942 = vsel %vm2686, %v2463, %v2814
        %v2943 = vsel %vm2687, %v2466, %v2815
        %v2944 = vsel %vm2688, %v2469, %v2816
        %v2945 = vsel %vm2689, %v2472, %v2817
        %v2946 = vsel %vm2690, %v2475, %v2818
        %v2947 = vsel %vm2691, %v2478, %v2819
        %v2948 = vsel %vm2692, %v2481, %v2820
        %v2949 = vsel %vm2693, %v2484, %v2821
        %v2950 = vsel %vm2694, %v2487, %v2822
        %v2951 = vsel %vm2695, %v2490, %v2823
        %v2952 = vsel %vm2696, %v2493, %v2824
        %v2953 = vsel %vm2697, %v2496, %v2825
        %v2954 = vsel %vm2698, %v2499, %v2826
        %v2955 = vsel %vm2699, %v2502, %v2827
        %v2956 = vsel %vm2700, %v2505, %v2828
        %v2957 = vsel %vm2701, %v2508, %v2829
        %v2958 = vsel %vm2702, %v2511, %v2830
        %v2959 = vsel %vm2703, %v2514, %v2831
        %v2960 = vsel %vm2704, %v2517, %v2832
        %v2961 = vsel %vm2705, %v2520, %v2833
        %v2962 = vsel %vm2706, %v2523, %v2834
        %v2963 = vsel %vm2707, %v2526, %v2835
        %v2964 = vsel %vm2708, %v2529, %v2836
        %v2965 = vsel %vm2709, %v2532, %v2837
        %v2966 = vsel %vm2710, %v2535, %v2838
        %v2967 = vsel %vm2711, %v2538, %v2839
        %v2968 = vsel %vm2712, %v2541, %v2840
        %v2969 = vsel %vm2713, %v2544, %v2841
        %v2970 = vsel %vm2714, %v2547, %v2842
        %v2971 = vsel %vm2715, %v2550, %v2843
        %v2972 = vsel %vm2716, %v2553, %v2844
        %v2973 = vsel %vm2717, %v2556, %v2845
        %v2974 = vsel %vm2718, %v2559, %v2846
        %v2975 = vsel %vm2719, %v2562, %v2847
        %v2976 = vsel %vm2720, %v2565, %v2848
        %v2977 = vsel %vm2721, %v2568, %v2849
        %v2978 = vsel %vm2722, %v2571, %v2850
        %v2979 = vsel %vm2723, %v2574, %v2851
        %v2980 = vsel %vm2724, %v2577, %v2852
        %v2981 = vsel %vm2725, %v2580, %v2853
        %v2982 = vsel %vm2726, %v2583, %v2854
        %v2983 = vsel %vm2727, %v2586, %v2855
        %v2984 = vsel %vm2728, %v2589, %v2856
        %v2985 = vsel %vm2729, %v2592, %v2857
        %v2986 = vsel %vm2730, %v2595, %v2858
        %v2987 = vsel %vm2731, %v2598, %v2859
        %v2988 = vsel %vm2732, %v2601, %v2860
        %v2989 = vsel %vm2733, %v2604, %v2861
        %v2990 = vld [vmem:[%s5] sm:$0xff]
        %v2991 = vld [vmem:[%s5 + $0x8] sm:$0xff]
        %v2992 = vld [vmem:[%s5 + $0x10] sm:$0xff]
        %v2993 = vld [vmem:[%s5 + $0x18] sm:$0xff]
        %v2994 = vld [vmem:[%s6] sm:$0x1]
        %v2996 = vperm.slane %v2994, 0
        %v2999 = vsel %vm1820, %v2862, 0
        %v3002 = vsel %vm1820, %v2863, 0
        %v3005 = vsel %vm1820, %v2864, 0
        %v3008 = vsel %vm1820, %v2865, 0
        %v3011 = vsel %vm1820, %v2866, 0
        %v3014 = vsel %vm1820, %v2867, 0
        %v3017 = vsel %vm1820, %v2868, 0
        %v3020 = vsel %vm1820, %v2869, 0
        %v3023 = vsel %vm1820, %v2870, 0
        %v3026 = vsel %vm1820, %v2871, 0
        %v3029 = vsel %vm1820, %v2872, 0
        %v3032 = vsel %vm1820, %v2873, 0
        %v3035 = vsel %vm1820, %v2874, 0
        %v3038 = vsel %vm1820, %v2875, 0
        %v3041 = vsel %vm1820, %v2876, 0
        %v3044 = vsel %vm1820, %v2877, 0
        %v3047 = vsel %vm1820, %v2878, 0
        %v3050 = vsel %vm1820, %v2879, 0
        %v3053 = vsel %vm1820, %v2880, 0
        %v3056 = vsel %vm1820, %v2881, 0
        %v3059 = vsel %vm1820, %v2882, 0
        %v3062 = vsel %vm1820, %v2883, 0
        %v3065 = vsel %vm1820, %v2884, 0
        %v3068 = vsel %vm1820, %v2885, 0
        %v3071 = vsel %vm1820, %v2886, 0
        %v3074 = vsel %vm1820, %v2887, 0
        %v3077 = vsel %vm1820, %v2888, 0
        %v3080 = vsel %vm1820, %v2889, 0
        %v3083 = vsel %vm1820, %v2890, 0
        %v3086 = vsel %vm1820, %v2891, 0
        %v3089 = vsel %vm1820, %v2892, 0
        %v3092 = vsel %vm1820, %v2893, 0
        %v3095 = vsel %vm1820, %v2894, 0
        %v3098 = vsel %vm1820, %v2895, 0
        %v3101 = vsel %vm1820, %v2896, 0
        %v3104 = vsel %vm1820, %v2897, 0
        %v3107 = vsel %vm1820, %v2898, 0
        %v3110 = vsel %vm1820, %v2899, 0
        %v3113 = vsel %vm1820, %v2900, 0
        %v3116 = vsel %vm1820, %v2901, 0
        %v3119 = vsel %vm1820, %v2902, 0
        %v3122 = vsel %vm1820, %v2903, 0
        %v3125 = vsel %vm1820, %v2904, 0
        %v3128 = vsel %vm1820, %v2905, 0
        %v3131 = vsel %vm1820, %v2906, 0
        %v3134 = vsel %vm1820, %v2907, 0
        %v3137 = vsel %vm1820, %v2908, 0
        %v3140 = vsel %vm1820, %v2909, 0
        %v3143 = vsel %vm1820, %v2910, 0
        %v3146 = vsel %vm1820, %v2911, 0
        %v3149 = vsel %vm1820, %v2912, 0
        %v3152 = vsel %vm1820, %v2913, 0
        %v3155 = vsel %vm1820, %v2914, 0
        %v3158 = vsel %vm1820, %v2915, 0
        %v3161 = vsel %vm1820, %v2916, 0
        %v3164 = vsel %vm1820, %v2917, 0
        %v3167 = vsel %vm1820, %v2918, 0
        %v3170 = vsel %vm1820, %v2919, 0
        %v3173 = vsel %vm1820, %v2920, 0
        %v3176 = vsel %vm1820, %v2921, 0
        %v3179 = vsel %vm1820, %v2922, 0
        %v3182 = vsel %vm1820, %v2923, 0
        %v3185 = vsel %vm1820, %v2924, 0
        %v3188 = vsel %vm1820, %v2925, 0
        %v3191 = vsel %vm1820, %v2926, 0
        %v3194 = vsel %vm1820, %v2927, 0
        %v3197 = vsel %vm1820, %v2928, 0
        %v3200 = vsel %vm1820, %v2929, 0
        %v3203 = vsel %vm1820, %v2930, 0
        %v3206 = vsel %vm1820, %v2931, 0
        %v3209 = vsel %vm1820, %v2932, 0
        %v3212 = vsel %vm1820, %v2933, 0
        %v3215 = vsel %vm1820, %v2934, 0
        %v3218 = vsel %vm1820, %v2935, 0
        %v3221 = vsel %vm1820, %v2936, 0
        %v3224 = vsel %vm1820, %v2937, 0
        %v3227 = vsel %vm1820, %v2938, 0
        %v3230 = vsel %vm1820, %v2939, 0
        %v3233 = vsel %vm1820, %v2940, 0
        %v3236 = vsel %vm1820, %v2941, 0
        %v3239 = vsel %vm1820, %v2942, 0
        %v3242 = vsel %vm1820, %v2943, 0
        %v3245 = vsel %vm1820, %v2944, 0
        %v3248 = vsel %vm1820, %v2945, 0
        %v3251 = vsel %vm1820, %v2946, 0
        %v3254 = vsel %vm1820, %v2947, 0
        %v3257 = vsel %vm1820, %v2948, 0
        %v3260 = vsel %vm1820, %v2949, 0
        %v3263 = vsel %vm1820, %v2950, 0
        %v3266 = vsel %vm1820, %v2951, 0
        %v3269 = vsel %vm1820, %v2952, 0
        %v3272 = vsel %vm1820, %v2953, 0
        %v3275 = vsel %vm1820, %v2954, 0
        %v3278 = vsel %vm1820, %v2955, 0
        %v3281 = vsel %vm1820, %v2956, 0
        %v3284 = vsel %vm1820, %v2957, 0
        %v3287 = vsel %vm1820, %v2958, 0
        %v3290 = vsel %vm1820, %v2959, 0
        %v3293 = vsel %vm1820, %v2960, 0
        %v3296 = vsel %vm1820, %v2961, 0
        %v3299 = vsel %vm1820, %v2962, 0
        %v3302 = vsel %vm1820, %v2963, 0
        %v3305 = vsel %vm1820, %v2964, 0
        %v3308 = vsel %vm1820, %v2965, 0
        %v3311 = vsel %vm1820, %v2966, 0
        %v3314 = vsel %vm1820, %v2967, 0
        %v3317 = vsel %vm1820, %v2968, 0
        %v3320 = vsel %vm1820, %v2969, 0
        %v3323 = vsel %vm1820, %v2970, 0
        %v3326 = vsel %vm1820, %v2971, 0
        %v3329 = vsel %vm1820, %v2972, 0
        %v3332 = vsel %vm1820, %v2973, 0
        %v3335 = vsel %vm1820, %v2974, 0
        %v3338 = vsel %vm1820, %v2975, 0
        %v3341 = vsel %vm1820, %v2976, 0
        %v3344 = vsel %vm1820, %v2977, 0
        %v3347 = vsel %vm1820, %v2978, 0
        %v3350 = vsel %vm1820, %v2979, 0
        %v3353 = vsel %vm1820, %v2980, 0
        %v3356 = vsel %vm1820, %v2981, 0
        %v3359 = vsel %vm1820, %v2982, 0
        %v3362 = vsel %vm1820, %v2983, 0
        %v3365 = vsel %vm1820, %v2984, 0
        %v3368 = vsel %vm1820, %v2985, 0
        %v3371 = vsel %vm1820, %v2986, 0
        %v3374 = vsel %vm1820, %v2987, 0
        %v3377 = vsel %vm1820, %v2988, 0
        %v3380 = vsel %vm1820, %v2989, 0
        %3382 = vmatpush.msra.mxu0 0.0
        %3383 = vmatpush.msra.mxu0 0.0
        %3384 = vmatpush.msra.mxu0 0.0
        %3385 = vmatpush.msra.mxu0 0.0
        %3386 = vmatpush.msra.mxu0 0.0
        %3387 = vmatpush.msra.mxu0 0.0
        %3388 = vmatpush.msra.mxu0 0.0
        %3389 = vmatpush.msra.mxu0 0.0
        %3390 = vmatpush.msra.mxu0 0.0
        %3391 = vmatpush.msra.mxu0 0.0
        %3392 = vmatpush.msra.mxu0 0.0
        %3393 = vmatpush.msra.mxu0 0.0
        %3394 = vmatpush.msra.mxu0 %v2993
        %3395 = vmatpush.msra.mxu0 %v2992
        %3396 = vmatpush.msra.mxu0 %v2991
        %3397 = vmatpush.msra.mxu0 %v2990
        %3398 = vmatmul.f32.gmra.mxu0 %v2999
        %v3399 = vpop.f32.mrf.mxu0
        %v3400 = vadd.f32 %v2996, %v3399
        %3401 = vmatmul.f32.gmra.mxu0 %v3002
        %v3402 = vpop.f32.mrf.mxu0
        %v3403 = vadd.f32 %v2996, %v3402
        %3404 = vmatmul.f32.gmra.mxu0 %v3005
        %v3405 = vpop.f32.mrf.mxu0
        %v3406 = vadd.f32 %v2996, %v3405
        %3407 = vmatmul.f32.gmra.mxu0 %v3008
        %v3408 = vpop.f32.mrf.mxu0
        %v3409 = vadd.f32 %v2996, %v3408
        %3410 = vmatmul.f32.gmra.mxu0 %v3011
        %v3411 = vpop.f32.mrf.mxu0
        %v3412 = vadd.f32 %v2996, %v3411
        %3413 = vmatmul.f32.gmra.mxu0 %v3014
        %v3414 = vpop.f32.mrf.mxu0
        %v3415 = vadd.f32 %v2996, %v3414
        %3416 = vmatmul.f32.gmra.mxu0 %v3017
        %v3417 = vpop.f32.mrf.mxu0
        %v3418 = vadd.f32 %v2996, %v3417
        %3419 = vmatmul.f32.gmra.mxu0 %v3020
        %v3420 = vpop.f32.mrf.mxu0
        %v3421 = vadd.f32 %v2996, %v3420
        %3422 = vmatmul.f32.gmra.mxu0 %v3023
        %v3423 = vpop.f32.mrf.mxu0
        %v3424 = vadd.f32 %v2996, %v3423
        %3425 = vmatmul.f32.gmra.mxu0 %v3026
        %v3426 = vpop.f32.mrf.mxu0
        %v3427 = vadd.f32 %v2996, %v3426
        %3428 = vmatmul.f32.gmra.mxu0 %v3029
        %v3429 = vpop.f32.mrf.mxu0
        %v3430 = vadd.f32 %v2996, %v3429
        %3431 = vmatmul.f32.gmra.mxu0 %v3032
        %v3432 = vpop.f32.mrf.mxu0
        %v3433 = vadd.f32 %v2996, %v3432
        %3434 = vmatmul.f32.gmra.mxu0 %v3035
        %v3435 = vpop.f32.mrf.mxu0
        %v3436 = vadd.f32 %v2996, %v3435
        %3437 = vmatmul.f32.gmra.mxu0 %v3038
        %v3438 = vpop.f32.mrf.mxu0
        %v3439 = vadd.f32 %v2996, %v3438
        %3440 = vmatmul.f32.gmra.mxu0 %v3041
        %v3441 = vpop.f32.mrf.mxu0
        %v3442 = vadd.f32 %v2996, %v3441
        %3443 = vmatmul.f32.gmra.mxu0 %v3044
        %v3444 = vpop.f32.mrf.mxu0
        %v3445 = vadd.f32 %v2996, %v3444
        %3446 = vmatmul.f32.gmra.mxu0 %v3047
        %v3447 = vpop.f32.mrf.mxu0
        %v3448 = vadd.f32 %v2996, %v3447
        %3449 = vmatmul.f32.gmra.mxu0 %v3050
        %v3450 = vpop.f32.mrf.mxu0
        %v3451 = vadd.f32 %v2996, %v3450
        %3452 = vmatmul.f32.gmra.mxu0 %v3053
        %v3453 = vpop.f32.mrf.mxu0
        %v3454 = vadd.f32 %v2996, %v3453
        %3455 = vmatmul.f32.gmra.mxu0 %v3056
        %v3456 = vpop.f32.mrf.mxu0
        %v3457 = vadd.f32 %v2996, %v3456
        %3458 = vmatmul.f32.gmra.mxu0 %v3059
        %v3459 = vpop.f32.mrf.mxu0
        %v3460 = vadd.f32 %v2996, %v3459
        %3461 = vmatmul.f32.gmra.mxu0 %v3062
        %v3462 = vpop.f32.mrf.mxu0
        %v3463 = vadd.f32 %v2996, %v3462
        %3464 = vmatmul.f32.gmra.mxu0 %v3065
        %v3465 = vpop.f32.mrf.mxu0
        %v3466 = vadd.f32 %v2996, %v3465
        %3467 = vmatmul.f32.gmra.mxu0 %v3068
        %v3468 = vpop.f32.mrf.mxu0
        %v3469 = vadd.f32 %v2996, %v3468
        %3470 = vmatmul.f32.gmra.mxu0 %v3071
        %v3471 = vpop.f32.mrf.mxu0
        %v3472 = vadd.f32 %v2996, %v3471
        %3473 = vmatmul.f32.gmra.mxu0 %v3074
        %v3474 = vpop.f32.mrf.mxu0
        %v3475 = vadd.f32 %v2996, %v3474
        %3476 = vmatmul.f32.gmra.mxu0 %v3077
        %v3477 = vpop.f32.mrf.mxu0
        %v3478 = vadd.f32 %v2996, %v3477
        %3479 = vmatmul.f32.gmra.mxu0 %v3080
        %v3480 = vpop.f32.mrf.mxu0
        %v3481 = vadd.f32 %v2996, %v3480
        %3482 = vmatmul.f32.gmra.mxu0 %v3083
        %v3483 = vpop.f32.mrf.mxu0
        %v3484 = vadd.f32 %v2996, %v3483
        %3485 = vmatmul.f32.gmra.mxu0 %v3086
        %v3486 = vpop.f32.mrf.mxu0
        %v3487 = vadd.f32 %v2996, %v3486
        %3488 = vmatmul.f32.gmra.mxu0 %v3089
        %v3489 = vpop.f32.mrf.mxu0
        %v3490 = vadd.f32 %v2996, %v3489
        %3491 = vmatmul.f32.gmra.mxu0 %v3092
        %v3492 = vpop.f32.mrf.mxu0
        %v3493 = vadd.f32 %v2996, %v3492
        %3494 = vmatmul.f32.gmra.mxu0 %v3095
        %v3495 = vpop.f32.mrf.mxu0
        %v3496 = vadd.f32 %v2996, %v3495
        %3497 = vmatmul.f32.gmra.mxu0 %v3098
        %v3498 = vpop.f32.mrf.mxu0
        %v3499 = vadd.f32 %v2996, %v3498
        %3500 = vmatmul.f32.gmra.mxu0 %v3101
        %v3501 = vpop.f32.mrf.mxu0
        %v3502 = vadd.f32 %v2996, %v3501
        %3503 = vmatmul.f32.gmra.mxu0 %v3104
        %v3504 = vpop.f32.mrf.mxu0
        %v3505 = vadd.f32 %v2996, %v3504
        %3506 = vmatmul.f32.gmra.mxu0 %v3107
        %v3507 = vpop.f32.mrf.mxu0
        %v3508 = vadd.f32 %v2996, %v3507
        %3509 = vmatmul.f32.gmra.mxu0 %v3110
        %v3510 = vpop.f32.mrf.mxu0
        %v3511 = vadd.f32 %v2996, %v3510
        %3512 = vmatmul.f32.gmra.mxu0 %v3113
        %v3513 = vpop.f32.mrf.mxu0
        %v3514 = vadd.f32 %v2996, %v3513
        %3515 = vmatmul.f32.gmra.mxu0 %v3116
        %v3516 = vpop.f32.mrf.mxu0
        %v3517 = vadd.f32 %v2996, %v3516
        %3518 = vmatmul.f32.gmra.mxu0 %v3119
        %v3519 = vpop.f32.mrf.mxu0
        %v3520 = vadd.f32 %v2996, %v3519
        %3521 = vmatmul.f32.gmra.mxu0 %v3122
        %v3522 = vpop.f32.mrf.mxu0
        %v3523 = vadd.f32 %v2996, %v3522
        %3524 = vmatmul.f32.gmra.mxu0 %v3125
        %v3525 = vpop.f32.mrf.mxu0
        %v3526 = vadd.f32 %v2996, %v3525
        %3527 = vmatmul.f32.gmra.mxu0 %v3128
        %v3528 = vpop.f32.mrf.mxu0
        %v3529 = vadd.f32 %v2996, %v3528
        %3530 = vmatmul.f32.gmra.mxu0 %v3131
        %v3531 = vpop.f32.mrf.mxu0
        %v3532 = vadd.f32 %v2996, %v3531
        %3533 = vmatmul.f32.gmra.mxu0 %v3134
        %v3534 = vpop.f32.mrf.mxu0
        %v3535 = vadd.f32 %v2996, %v3534
        %3536 = vmatmul.f32.gmra.mxu0 %v3137
        %v3537 = vpop.f32.mrf.mxu0
        %v3538 = vadd.f32 %v2996, %v3537
        %3539 = vmatmul.f32.gmra.mxu0 %v3140
        %v3540 = vpop.f32.mrf.mxu0
        %v3541 = vadd.f32 %v2996, %v3540
        %3542 = vmatmul.f32.gmra.mxu0 %v3143
        %v3543 = vpop.f32.mrf.mxu0
        %v3544 = vadd.f32 %v2996, %v3543
        %3545 = vmatmul.f32.gmra.mxu0 %v3146
        %v3546 = vpop.f32.mrf.mxu0
        %v3547 = vadd.f32 %v2996, %v3546
        %3548 = vmatmul.f32.gmra.mxu0 %v3149
        %v3549 = vpop.f32.mrf.mxu0
        %v3550 = vadd.f32 %v2996, %v3549
        %3551 = vmatmul.f32.gmra.mxu0 %v3152
        %v3552 = vpop.f32.mrf.mxu0
        %v3553 = vadd.f32 %v2996, %v3552
        %3554 = vmatmul.f32.gmra.mxu0 %v3155
        %v3555 = vpop.f32.mrf.mxu0
        %v3556 = vadd.f32 %v2996, %v3555
        %3557 = vmatmul.f32.gmra.mxu0 %v3158
        %v3558 = vpop.f32.mrf.mxu0
        %v3559 = vadd.f32 %v2996, %v3558
        %3560 = vmatmul.f32.gmra.mxu0 %v3161
        %v3561 = vpop.f32.mrf.mxu0
        %v3562 = vadd.f32 %v2996, %v3561
        %3563 = vmatmul.f32.gmra.mxu0 %v3164
        %v3564 = vpop.f32.mrf.mxu0
        %v3565 = vadd.f32 %v2996, %v3564
        %3566 = vmatmul.f32.gmra.mxu0 %v3167
        %v3567 = vpop.f32.mrf.mxu0
        %v3568 = vadd.f32 %v2996, %v3567
        %3569 = vmatmul.f32.gmra.mxu0 %v3170
        %v3570 = vpop.f32.mrf.mxu0
        %v3571 = vadd.f32 %v2996, %v3570
        %3572 = vmatmul.f32.gmra.mxu0 %v3173
        %v3573 = vpop.f32.mrf.mxu0
        %v3574 = vadd.f32 %v2996, %v3573
        %3575 = vmatmul.f32.gmra.mxu0 %v3176
        %v3576 = vpop.f32.mrf.mxu0
        %v3577 = vadd.f32 %v2996, %v3576
        %3578 = vmatmul.f32.gmra.mxu0 %v3179
        %v3579 = vpop.f32.mrf.mxu0
        %v3580 = vadd.f32 %v2996, %v3579
        %3581 = vmatmul.f32.gmra.mxu0 %v3182
        %v3582 = vpop.f32.mrf.mxu0
        %v3583 = vadd.f32 %v2996, %v3582
        %3584 = vmatmul.f32.gmra.mxu0 %v3185
        %v3585 = vpop.f32.mrf.mxu0
        %v3586 = vadd.f32 %v2996, %v3585
        %3587 = vmatmul.f32.gmra.mxu0 %v3188
        %v3588 = vpop.f32.mrf.mxu0
        %v3589 = vadd.f32 %v2996, %v3588
        %3590 = vmatmul.f32.gmra.mxu0 %v3191
        %v3591 = vpop.f32.mrf.mxu0
        %v3592 = vadd.f32 %v2996, %v3591
        %3593 = vmatmul.f32.gmra.mxu0 %v3194
        %v3594 = vpop.f32.mrf.mxu0
        %v3595 = vadd.f32 %v2996, %v3594
        %3596 = vmatmul.f32.gmra.mxu0 %v3197
        %v3597 = vpop.f32.mrf.mxu0
        %v3598 = vadd.f32 %v2996, %v3597
        %3599 = vmatmul.f32.gmra.mxu0 %v3200
        %v3600 = vpop.f32.mrf.mxu0
        %v3601 = vadd.f32 %v2996, %v3600
        %3602 = vmatmul.f32.gmra.mxu0 %v3203
        %v3603 = vpop.f32.mrf.mxu0
        %v3604 = vadd.f32 %v2996, %v3603
        %3605 = vmatmul.f32.gmra.mxu0 %v3206
        %v3606 = vpop.f32.mrf.mxu0
        %v3607 = vadd.f32 %v2996, %v3606
        %3608 = vmatmul.f32.gmra.mxu0 %v3209
        %v3609 = vpop.f32.mrf.mxu0
        %v3610 = vadd.f32 %v2996, %v3609
        %3611 = vmatmul.f32.gmra.mxu0 %v3212
        %v3612 = vpop.f32.mrf.mxu0
        %v3613 = vadd.f32 %v2996, %v3612
        %3614 = vmatmul.f32.gmra.mxu0 %v3215
        %v3615 = vpop.f32.mrf.mxu0
        %v3616 = vadd.f32 %v2996, %v3615
        %3617 = vmatmul.f32.gmra.mxu0 %v3218
        %v3618 = vpop.f32.mrf.mxu0
        %v3619 = vadd.f32 %v2996, %v3618
        %3620 = vmatmul.f32.gmra.mxu0 %v3221
        %v3621 = vpop.f32.mrf.mxu0
        %v3622 = vadd.f32 %v2996, %v3621
        %3623 = vmatmul.f32.gmra.mxu0 %v3224
        %v3624 = vpop.f32.mrf.mxu0
        %v3625 = vadd.f32 %v2996, %v3624
        %3626 = vmatmul.f32.gmra.mxu0 %v3227
        %v3627 = vpop.f32.mrf.mxu0
        %v3628 = vadd.f32 %v2996, %v3627
        %3629 = vmatmul.f32.gmra.mxu0 %v3230
        %v3630 = vpop.f32.mrf.mxu0
        %v3631 = vadd.f32 %v2996, %v3630
        %3632 = vmatmul.f32.gmra.mxu0 %v3233
        %v3633 = vpop.f32.mrf.mxu0
        %v3634 = vadd.f32 %v2996, %v3633
        %3635 = vmatmul.f32.gmra.mxu0 %v3236
        %v3636 = vpop.f32.mrf.mxu0
        %v3637 = vadd.f32 %v2996, %v3636
        %3638 = vmatmul.f32.gmra.mxu0 %v3239
        %v3639 = vpop.f32.mrf.mxu0
        %v3640 = vadd.f32 %v2996, %v3639
        %3641 = vmatmul.f32.gmra.mxu0 %v3242
        %v3642 = vpop.f32.mrf.mxu0
        %v3643 = vadd.f32 %v2996, %v3642
        %3644 = vmatmul.f32.gmra.mxu0 %v3245
        %v3645 = vpop.f32.mrf.mxu0
        %v3646 = vadd.f32 %v2996, %v3645
        %3647 = vmatmul.f32.gmra.mxu0 %v3248
        %v3648 = vpop.f32.mrf.mxu0
        %v3649 = vadd.f32 %v2996, %v3648
        %3650 = vmatmul.f32.gmra.mxu0 %v3251
        %v3651 = vpop.f32.mrf.mxu0
        %v3652 = vadd.f32 %v2996, %v3651
        %3653 = vmatmul.f32.gmra.mxu0 %v3254
        %v3654 = vpop.f32.mrf.mxu0
        %v3655 = vadd.f32 %v2996, %v3654
        %3656 = vmatmul.f32.gmra.mxu0 %v3257
        %v3657 = vpop.f32.mrf.mxu0
        %v3658 = vadd.f32 %v2996, %v3657
        %3659 = vmatmul.f32.gmra.mxu0 %v3260
        %v3660 = vpop.f32.mrf.mxu0
        %v3661 = vadd.f32 %v2996, %v3660
        %3662 = vmatmul.f32.gmra.mxu0 %v3263
        %v3663 = vpop.f32.mrf.mxu0
        %v3664 = vadd.f32 %v2996, %v3663
        %3665 = vmatmul.f32.gmra.mxu0 %v3266
        %v3666 = vpop.f32.mrf.mxu0
        %v3667 = vadd.f32 %v2996, %v3666
        %3668 = vmatmul.f32.gmra.mxu0 %v3269
        %v3669 = vpop.f32.mrf.mxu0
        %v3670 = vadd.f32 %v2996, %v3669
        %3671 = vmatmul.f32.gmra.mxu0 %v3272
        %v3672 = vpop.f32.mrf.mxu0
        %v3673 = vadd.f32 %v2996, %v3672
        %3674 = vmatmul.f32.gmra.mxu0 %v3275
        %v3675 = vpop.f32.mrf.mxu0
        %v3676 = vadd.f32 %v2996, %v3675
        %3677 = vmatmul.f32.gmra.mxu0 %v3278
        %v3678 = vpop.f32.mrf.mxu0
        %v3679 = vadd.f32 %v2996, %v3678
        %3680 = vmatmul.f32.gmra.mxu0 %v3281
        %v3681 = vpop.f32.mrf.mxu0
        %v3682 = vadd.f32 %v2996, %v3681
        %3683 = vmatmul.f32.gmra.mxu0 %v3284
        %v3684 = vpop.f32.mrf.mxu0
        %v3685 = vadd.f32 %v2996, %v3684
        %3686 = vmatmul.f32.gmra.mxu0 %v3287
        %v3687 = vpop.f32.mrf.mxu0
        %v3688 = vadd.f32 %v2996, %v3687
        %3689 = vmatmul.f32.gmra.mxu0 %v3290
        %v3690 = vpop.f32.mrf.mxu0
        %v3691 = vadd.f32 %v2996, %v3690
        %3692 = vmatmul.f32.gmra.mxu0 %v3293
        %v3693 = vpop.f32.mrf.mxu0
        %v3694 = vadd.f32 %v2996, %v3693
        %3695 = vmatmul.f32.gmra.mxu0 %v3296
        %v3696 = vpop.f32.mrf.mxu0
        %v3697 = vadd.f32 %v2996, %v3696
        %3698 = vmatmul.f32.gmra.mxu0 %v3299
        %v3699 = vpop.f32.mrf.mxu0
        %v3700 = vadd.f32 %v2996, %v3699
        %3701 = vmatmul.f32.gmra.mxu0 %v3302
        %v3702 = vpop.f32.mrf.mxu0
        %v3703 = vadd.f32 %v2996, %v3702
        %3704 = vmatmul.f32.gmra.mxu0 %v3305
        %v3705 = vpop.f32.mrf.mxu0
        %v3706 = vadd.f32 %v2996, %v3705
        %3707 = vmatmul.f32.gmra.mxu0 %v3308
        %v3708 = vpop.f32.mrf.mxu0
        %v3709 = vadd.f32 %v2996, %v3708
        %3710 = vmatmul.f32.gmra.mxu0 %v3311
        %v3711 = vpop.f32.mrf.mxu0
        %v3712 = vadd.f32 %v2996, %v3711
        %3713 = vmatmul.f32.gmra.mxu0 %v3314
        %v3714 = vpop.f32.mrf.mxu0
        %v3715 = vadd.f32 %v2996, %v3714
        %3716 = vmatmul.f32.gmra.mxu0 %v3317
        %v3717 = vpop.f32.mrf.mxu0
        %v3718 = vadd.f32 %v2996, %v3717
        %3719 = vmatmul.f32.gmra.mxu0 %v3320
        %v3720 = vpop.f32.mrf.mxu0
        %v3721 = vadd.f32 %v2996, %v3720
        %3722 = vmatmul.f32.gmra.mxu0 %v3323
        %v3723 = vpop.f32.mrf.mxu0
        %v3724 = vadd.f32 %v2996, %v3723
        %3725 = vmatmul.f32.gmra.mxu0 %v3326
        %v3726 = vpop.f32.mrf.mxu0
        %v3727 = vadd.f32 %v2996, %v3726
        %3728 = vmatmul.f32.gmra.mxu0 %v3329
        %v3729 = vpop.f32.mrf.mxu0
        %v3730 = vadd.f32 %v2996, %v3729
        %3731 = vmatmul.f32.gmra.mxu0 %v3332
        %v3732 = vpop.f32.mrf.mxu0
        %v3733 = vadd.f32 %v2996, %v3732
        %3734 = vmatmul.f32.gmra.mxu0 %v3335
        %v3735 = vpop.f32.mrf.mxu0
        %v3736 = vadd.f32 %v2996, %v3735
        %3737 = vmatmul.f32.gmra.mxu0 %v3338
        %v3738 = vpop.f32.mrf.mxu0
        %v3739 = vadd.f32 %v2996, %v3738
        %3740 = vmatmul.f32.gmra.mxu0 %v3341
        %v3741 = vpop.f32.mrf.mxu0
        %v3742 = vadd.f32 %v2996, %v3741
        %3743 = vmatmul.f32.gmra.mxu0 %v3344
        %v3744 = vpop.f32.mrf.mxu0
        %v3745 = vadd.f32 %v2996, %v3744
        %3746 = vmatmul.f32.gmra.mxu0 %v3347
        %v3747 = vpop.f32.mrf.mxu0
        %v3748 = vadd.f32 %v2996, %v3747
        %3749 = vmatmul.f32.gmra.mxu0 %v3350
        %v3750 = vpop.f32.mrf.mxu0
        %v3751 = vadd.f32 %v2996, %v3750
        %3752 = vmatmul.f32.gmra.mxu0 %v3353
        %v3753 = vpop.f32.mrf.mxu0
        %v3754 = vadd.f32 %v2996, %v3753
        %3755 = vmatmul.f32.gmra.mxu0 %v3356
        %v3756 = vpop.f32.mrf.mxu0
        %v3757 = vadd.f32 %v2996, %v3756
        %3758 = vmatmul.f32.gmra.mxu0 %v3359
        %v3759 = vpop.f32.mrf.mxu0
        %v3760 = vadd.f32 %v2996, %v3759
        %3761 = vmatmul.f32.gmra.mxu0 %v3362
        %v3762 = vpop.f32.mrf.mxu0
        %v3763 = vadd.f32 %v2996, %v3762
        %3764 = vmatmul.f32.gmra.mxu0 %v3365
        %v3765 = vpop.f32.mrf.mxu0
        %v3766 = vadd.f32 %v2996, %v3765
        %3767 = vmatmul.f32.gmra.mxu0 %v3368
        %v3768 = vpop.f32.mrf.mxu0
        %v3769 = vadd.f32 %v2996, %v3768
        %3770 = vmatmul.f32.gmra.mxu0 %v3371
        %v3771 = vpop.f32.mrf.mxu0
        %v3772 = vadd.f32 %v2996, %v3771
        %3773 = vmatmul.f32.gmra.mxu0 %v3374
        %v3774 = vpop.f32.mrf.mxu0
        %v3775 = vadd.f32 %v2996, %v3774
        %3776 = vmatmul.f32.gmra.mxu0 %v3377
        %v3777 = vpop.f32.mrf.mxu0
        %v3778 = vadd.f32 %v2996, %v3777
        %3779 = vmatmul.f32.gmra.mxu0 %v3380
        %v3780 = vpop.f32.mrf.mxu0
        %v3781 = vadd.f32 %v2996, %v3780
        %3782 = vdwg.mxu0
        %vm3783 = vcmp.gt.f32.partialorder %v3400, 0.0
        %vm3784 = vcmp.gt.f32.partialorder %v3403, 0.0
        %vm3785 = vcmp.gt.f32.partialorder %v3406, 0.0
        %vm3786 = vcmp.gt.f32.partialorder %v3409, 0.0
        %vm3787 = vcmp.gt.f32.partialorder %v3412, 0.0
        %vm3788 = vcmp.gt.f32.partialorder %v3415, 0.0
        %vm3789 = vcmp.gt.f32.partialorder %v3418, 0.0
        %vm3790 = vcmp.gt.f32.partialorder %v3421, 0.0
        %vm3791 = vcmp.gt.f32.partialorder %v3424, 0.0
        %vm3792 = vcmp.gt.f32.partialorder %v3427, 0.0
        %vm3793 = vcmp.gt.f32.partialorder %v3430, 0.0
        %vm3794 = vcmp.gt.f32.partialorder %v3433, 0.0
        %vm3795 = vcmp.gt.f32.partialorder %v3436, 0.0
        %vm3796 = vcmp.gt.f32.partialorder %v3439, 0.0
        %vm3797 = vcmp.gt.f32.partialorder %v3442, 0.0
        %vm3798 = vcmp.gt.f32.partialorder %v3445, 0.0
        %vm3799 = vcmp.gt.f32.partialorder %v3448, 0.0
        %vm3800 = vcmp.gt.f32.partialorder %v3451, 0.0
        %vm3801 = vcmp.gt.f32.partialorder %v3454, 0.0
        %vm3802 = vcmp.gt.f32.partialorder %v3457, 0.0
        %vm3803 = vcmp.gt.f32.partialorder %v3460, 0.0
        %vm3804 = vcmp.gt.f32.partialorder %v3463, 0.0
        %vm3805 = vcmp.gt.f32.partialorder %v3466, 0.0
        %vm3806 = vcmp.gt.f32.partialorder %v3469, 0.0
        %vm3807 = vcmp.gt.f32.partialorder %v3472, 0.0
        %vm3808 = vcmp.gt.f32.partialorder %v3475, 0.0
        %vm3809 = vcmp.gt.f32.partialorder %v3478, 0.0
        %vm3810 = vcmp.gt.f32.partialorder %v3481, 0.0
        %vm3811 = vcmp.gt.f32.partialorder %v3484, 0.0
        %vm3812 = vcmp.gt.f32.partialorder %v3487, 0.0
        %vm3813 = vcmp.gt.f32.partialorder %v3490, 0.0
        %vm3814 = vcmp.gt.f32.partialorder %v3493, 0.0
        %vm3815 = vcmp.gt.f32.partialorder %v3496, 0.0
        %vm3816 = vcmp.gt.f32.partialorder %v3499, 0.0
        %vm3817 = vcmp.gt.f32.partialorder %v3502, 0.0
        %vm3818 = vcmp.gt.f32.partialorder %v3505, 0.0
        %vm3819 = vcmp.gt.f32.partialorder %v3508, 0.0
        %vm3820 = vcmp.gt.f32.partialorder %v3511, 0.0
        %vm3821 = vcmp.gt.f32.partialorder %v3514, 0.0
        %vm3822 = vcmp.gt.f32.partialorder %v3517, 0.0
        %vm3823 = vcmp.gt.f32.partialorder %v3520, 0.0
        %vm3824 = vcmp.gt.f32.partialorder %v3523, 0.0
        %vm3825 = vcmp.gt.f32.partialorder %v3526, 0.0
        %vm3826 = vcmp.gt.f32.partialorder %v3529, 0.0
        %vm3827 = vcmp.gt.f32.partialorder %v3532, 0.0
        %vm3828 = vcmp.gt.f32.partialorder %v3535, 0.0
        %vm3829 = vcmp.gt.f32.partialorder %v3538, 0.0
        %vm3830 = vcmp.gt.f32.partialorder %v3541, 0.0
        %vm3831 = vcmp.gt.f32.partialorder %v3544, 0.0
        %vm3832 = vcmp.gt.f32.partialorder %v3547, 0.0
        %vm3833 = vcmp.gt.f32.partialorder %v3550, 0.0
        %vm3834 = vcmp.gt.f32.partialorder %v3553, 0.0
        %vm3835 = vcmp.gt.f32.partialorder %v3556, 0.0
        %vm3836 = vcmp.gt.f32.partialorder %v3559, 0.0
        %vm3837 = vcmp.gt.f32.partialorder %v3562, 0.0
        %vm3838 = vcmp.gt.f32.partialorder %v3565, 0.0
        %vm3839 = vcmp.gt.f32.partialorder %v3568, 0.0
        %vm3840 = vcmp.gt.f32.partialorder %v3571, 0.0
        %vm3841 = vcmp.gt.f32.partialorder %v3574, 0.0
        %vm3842 = vcmp.gt.f32.partialorder %v3577, 0.0
        %vm3843 = vcmp.gt.f32.partialorder %v3580, 0.0
        %vm3844 = vcmp.gt.f32.partialorder %v3583, 0.0
        %vm3845 = vcmp.gt.f32.partialorder %v3586, 0.0
        %vm3846 = vcmp.gt.f32.partialorder %v3589, 0.0
        %vm3847 = vcmp.gt.f32.partialorder %v3592, 0.0
        %vm3848 = vcmp.gt.f32.partialorder %v3595, 0.0
        %vm3849 = vcmp.gt.f32.partialorder %v3598, 0.0
        %vm3850 = vcmp.gt.f32.partialorder %v3601, 0.0
        %vm3851 = vcmp.gt.f32.partialorder %v3604, 0.0
        %vm3852 = vcmp.gt.f32.partialorder %v3607, 0.0
        %vm3853 = vcmp.gt.f32.partialorder %v3610, 0.0
        %vm3854 = vcmp.gt.f32.partialorder %v3613, 0.0
        %vm3855 = vcmp.gt.f32.partialorder %v3616, 0.0
        %vm3856 = vcmp.gt.f32.partialorder %v3619, 0.0
        %vm3857 = vcmp.gt.f32.partialorder %v3622, 0.0
        %vm3858 = vcmp.gt.f32.partialorder %v3625, 0.0
        %vm3859 = vcmp.gt.f32.partialorder %v3628, 0.0
        %vm3860 = vcmp.gt.f32.partialorder %v3631, 0.0
        %vm3861 = vcmp.gt.f32.partialorder %v3634, 0.0
        %vm3862 = vcmp.gt.f32.partialorder %v3637, 0.0
        %vm3863 = vcmp.gt.f32.partialorder %v3640, 0.0
        %vm3864 = vcmp.gt.f32.partialorder %v3643, 0.0
        %vm3865 = vcmp.gt.f32.partialorder %v3646, 0.0
        %vm3866 = vcmp.gt.f32.partialorder %v3649, 0.0
        %vm3867 = vcmp.gt.f32.partialorder %v3652, 0.0
        %vm3868 = vcmp.gt.f32.partialorder %v3655, 0.0
        %vm3869 = vcmp.gt.f32.partialorder %v3658, 0.0
        %vm3870 = vcmp.gt.f32.partialorder %v3661, 0.0
        %vm3871 = vcmp.gt.f32.partialorder %v3664, 0.0
        %vm3872 = vcmp.gt.f32.partialorder %v3667, 0.0
        %vm3873 = vcmp.gt.f32.partialorder %v3670, 0.0
        %vm3874 = vcmp.gt.f32.partialorder %v3673, 0.0
        %vm3875 = vcmp.gt.f32.partialorder %v3676, 0.0
        %vm3876 = vcmp.gt.f32.partialorder %v3679, 0.0
        %vm3877 = vcmp.gt.f32.partialorder %v3682, 0.0
        %vm3878 = vcmp.gt.f32.partialorder %v3685, 0.0
        %vm3879 = vcmp.gt.f32.partialorder %v3688, 0.0
        %vm3880 = vcmp.gt.f32.partialorder %v3691, 0.0
        %vm3881 = vcmp.gt.f32.partialorder %v3694, 0.0
        %vm3882 = vcmp.gt.f32.partialorder %v3697, 0.0
        %vm3883 = vcmp.gt.f32.partialorder %v3700, 0.0
        %vm3884 = vcmp.gt.f32.partialorder %v3703, 0.0
        %vm3885 = vcmp.gt.f32.partialorder %v3706, 0.0
        %vm3886 = vcmp.gt.f32.partialorder %v3709, 0.0
        %vm3887 = vcmp.gt.f32.partialorder %v3712, 0.0
        %vm3888 = vcmp.gt.f32.partialorder %v3715, 0.0
        %vm3889 = vcmp.gt.f32.partialorder %v3718, 0.0
        %vm3890 = vcmp.gt.f32.partialorder %v3721, 0.0
        %vm3891 = vcmp.gt.f32.partialorder %v3724, 0.0
        %vm3892 = vcmp.gt.f32.partialorder %v3727, 0.0
        %vm3893 = vcmp.gt.f32.partialorder %v3730, 0.0
        %vm3894 = vcmp.gt.f32.partialorder %v3733, 0.0
        %vm3895 = vcmp.gt.f32.partialorder %v3736, 0.0
        %vm3896 = vcmp.gt.f32.partialorder %v3739, 0.0
        %vm3897 = vcmp.gt.f32.partialorder %v3742, 0.0
        %vm3898 = vcmp.gt.f32.partialorder %v3745, 0.0
        %vm3899 = vcmp.gt.f32.partialorder %v3748, 0.0
        %vm3900 = vcmp.gt.f32.partialorder %v3751, 0.0
        %vm3901 = vcmp.gt.f32.partialorder %v3754, 0.0
        %vm3902 = vcmp.gt.f32.partialorder %v3757, 0.0
        %vm3903 = vcmp.gt.f32.partialorder %v3760, 0.0
        %vm3904 = vcmp.gt.f32.partialorder %v3763, 0.0
        %vm3905 = vcmp.gt.f32.partialorder %v3766, 0.0
        %vm3906 = vcmp.gt.f32.partialorder %v3769, 0.0
        %vm3907 = vcmp.gt.f32.partialorder %v3772, 0.0
        %vm3908 = vcmp.gt.f32.partialorder %v3775, 0.0
        %vm3909 = vcmp.gt.f32.partialorder %v3778, 0.0
        %vm3910 = vcmp.gt.f32.partialorder %v3781, 0.0
        %v3911 = vmul.f32 %v3400, 0.01
        %v3912 = vmul.f32 %v3403, 0.01
        %v3913 = vmul.f32 %v3406, 0.01
        %v3914 = vmul.f32 %v3409, 0.01
        %v3915 = vmul.f32 %v3412, 0.01
        %v3916 = vmul.f32 %v3415, 0.01
        %v3917 = vmul.f32 %v3418, 0.01
        %v3918 = vmul.f32 %v3421, 0.01
        %v3919 = vmul.f32 %v3424, 0.01
        %v3920 = vmul.f32 %v3427, 0.01
        %v3921 = vmul.f32 %v3430, 0.01
        %v3922 = vmul.f32 %v3433, 0.01
        %v3923 = vmul.f32 %v3436, 0.01
        %v3924 = vmul.f32 %v3439, 0.01
        %v3925 = vmul.f32 %v3442, 0.01
        %v3926 = vmul.f32 %v3445, 0.01
        %v3927 = vmul.f32 %v3448, 0.01
        %v3928 = vmul.f32 %v3451, 0.01
        %v3929 = vmul.f32 %v3454, 0.01
        %v3930 = vmul.f32 %v3457, 0.01
        %v3931 = vmul.f32 %v3460, 0.01
        %v3932 = vmul.f32 %v3463, 0.01
        %v3933 = vmul.f32 %v3466, 0.01
        %v3934 = vmul.f32 %v3469, 0.01
        %v3935 = vmul.f32 %v3472, 0.01
        %v3936 = vmul.f32 %v3475, 0.01
        %v3937 = vmul.f32 %v3478, 0.01
        %v3938 = vmul.f32 %v3481, 0.01
        %v3939 = vmul.f32 %v3484, 0.01
        %v3940 = vmul.f32 %v3487, 0.01
        %v3941 = vmul.f32 %v3490, 0.01
        %v3942 = vmul.f32 %v3493, 0.01
        %v3943 = vmul.f32 %v3496, 0.01
        %v3944 = vmul.f32 %v3499, 0.01
        %v3945 = vmul.f32 %v3502, 0.01
        %v3946 = vmul.f32 %v3505, 0.01
        %v3947 = vmul.f32 %v3508, 0.01
        %v3948 = vmul.f32 %v3511, 0.01
        %v3949 = vmul.f32 %v3514, 0.01
        %v3950 = vmul.f32 %v3517, 0.01
        %v3951 = vmul.f32 %v3520, 0.01
        %v3952 = vmul.f32 %v3523, 0.01
        %v3953 = vmul.f32 %v3526, 0.01
        %v3954 = vmul.f32 %v3529, 0.01
        %v3955 = vmul.f32 %v3532, 0.01
        %v3956 = vmul.f32 %v3535, 0.01
        %v3957 = vmul.f32 %v3538, 0.01
        %v3958 = vmul.f32 %v3541, 0.01
        %v3959 = vmul.f32 %v3544, 0.01
        %v3960 = vmul.f32 %v3547, 0.01
        %v3961 = vmul.f32 %v3550, 0.01
        %v3962 = vmul.f32 %v3553, 0.01
        %v3963 = vmul.f32 %v3556, 0.01
        %v3964 = vmul.f32 %v3559, 0.01
        %v3965 = vmul.f32 %v3562, 0.01
        %v3966 = vmul.f32 %v3565, 0.01
        %v3967 = vmul.f32 %v3568, 0.01
        %v3968 = vmul.f32 %v3571, 0.01
        %v3969 = vmul.f32 %v3574, 0.01
        %v3970 = vmul.f32 %v3577, 0.01
        %v3971 = vmul.f32 %v3580, 0.01
        %v3972 = vmul.f32 %v3583, 0.01
        %v3973 = vmul.f32 %v3586, 0.01
        %v3974 = vmul.f32 %v3589, 0.01
        %v3975 = vmul.f32 %v3592, 0.01
        %v3976 = vmul.f32 %v3595, 0.01
        %v3977 = vmul.f32 %v3598, 0.01
        %v3978 = vmul.f32 %v3601, 0.01
        %v3979 = vmul.f32 %v3604, 0.01
        %v3980 = vmul.f32 %v3607, 0.01
        %v3981 = vmul.f32 %v3610, 0.01
        %v3982 = vmul.f32 %v3613, 0.01
        %v3983 = vmul.f32 %v3616, 0.01
        %v3984 = vmul.f32 %v3619, 0.01
        %v3985 = vmul.f32 %v3622, 0.01
        %v3986 = vmul.f32 %v3625, 0.01
        %v3987 = vmul.f32 %v3628, 0.01
        %v3988 = vmul.f32 %v3631, 0.01
        %v3989 = vmul.f32 %v3634, 0.01
        %v3990 = vmul.f32 %v3637, 0.01
        %v3991 = vmul.f32 %v3640, 0.01
        %v3992 = vmul.f32 %v3643, 0.01
        %v3993 = vmul.f32 %v3646, 0.01
        %v3994 = vmul.f32 %v3649, 0.01
        %v3995 = vmul.f32 %v3652, 0.01
        %v3996 = vmul.f32 %v3655, 0.01
        %v3997 = vmul.f32 %v3658, 0.01
        %v3998 = vmul.f32 %v3661, 0.01
        %v3999 = vmul.f32 %v3664, 0.01
        %v4000 = vmul.f32 %v3667, 0.01
        %v4001 = vmul.f32 %v3670, 0.01
        %v4002 = vmul.f32 %v3673, 0.01
        %v4003 = vmul.f32 %v3676, 0.01
        %v4004 = vmul.f32 %v3679, 0.01
        %v4005 = vmul.f32 %v3682, 0.01
        %v4006 = vmul.f32 %v3685, 0.01
        %v4007 = vmul.f32 %v3688, 0.01
        %v4008 = vmul.f32 %v3691, 0.01
        %v4009 = vmul.f32 %v3694, 0.01
        %v4010 = vmul.f32 %v3697, 0.01
        %v4011 = vmul.f32 %v3700, 0.01
        %v4012 = vmul.f32 %v3703, 0.01
        %v4013 = vmul.f32 %v3706, 0.01
        %v4014 = vmul.f32 %v3709, 0.01
        %v4015 = vmul.f32 %v3712, 0.01
        %v4016 = vmul.f32 %v3715, 0.01
        %v4017 = vmul.f32 %v3718, 0.01
        %v4018 = vmul.f32 %v3721, 0.01
        %v4019 = vmul.f32 %v3724, 0.01
        %v4020 = vmul.f32 %v3727, 0.01
        %v4021 = vmul.f32 %v3730, 0.01
        %v4022 = vmul.f32 %v3733, 0.01
        %v4023 = vmul.f32 %v3736, 0.01
        %v4024 = vmul.f32 %v3739, 0.01
        %v4025 = vmul.f32 %v3742, 0.01
        %v4026 = vmul.f32 %v3745, 0.01
        %v4027 = vmul.f32 %v3748, 0.01
        %v4028 = vmul.f32 %v3751, 0.01
        %v4029 = vmul.f32 %v3754, 0.01
        %v4030 = vmul.f32 %v3757, 0.01
        %v4031 = vmul.f32 %v3760, 0.01
        %v4032 = vmul.f32 %v3763, 0.01
        %v4033 = vmul.f32 %v3766, 0.01
        %v4034 = vmul.f32 %v3769, 0.01
        %v4035 = vmul.f32 %v3772, 0.01
        %v4036 = vmul.f32 %v3775, 0.01
        %v4037 = vmul.f32 %v3778, 0.01
        %v4038 = vmul.f32 %v3781, 0.01
        %v4039 = vsel %vm3783, %v3400, %v3911
        %v4040 = vsel %vm3784, %v3403, %v3912
        %v4041 = vsel %vm3785, %v3406, %v3913
        %v4042 = vsel %vm3786, %v3409, %v3914
        %v4043 = vsel %vm3787, %v3412, %v3915
        %v4044 = vsel %vm3788, %v3415, %v3916
        %v4045 = vsel %vm3789, %v3418, %v3917
        %v4046 = vsel %vm3790, %v3421, %v3918
        %v4047 = vsel %vm3791, %v3424, %v3919
        %v4048 = vsel %vm3792, %v3427, %v3920
        %v4049 = vsel %vm3793, %v3430, %v3921
        %v4050 = vsel %vm3794, %v3433, %v3922
        %v4051 = vsel %vm3795, %v3436, %v3923
        %v4052 = vsel %vm3796, %v3439, %v3924
        %v4053 = vsel %vm3797, %v3442, %v3925
        %v4054 = vsel %vm3798, %v3445, %v3926
        %v4055 = vsel %vm3799, %v3448, %v3927
        %v4056 = vsel %vm3800, %v3451, %v3928
        %v4057 = vsel %vm3801, %v3454, %v3929
        %v4058 = vsel %vm3802, %v3457, %v3930
        %v4059 = vsel %vm3803, %v3460, %v3931
        %v4060 = vsel %vm3804, %v3463, %v3932
        %v4061 = vsel %vm3805, %v3466, %v3933
        %v4062 = vsel %vm3806, %v3469, %v3934
        %v4063 = vsel %vm3807, %v3472, %v3935
        %v4064 = vsel %vm3808, %v3475, %v3936
        %v4065 = vsel %vm3809, %v3478, %v3937
        %v4066 = vsel %vm3810, %v3481, %v3938
        %v4067 = vsel %vm3811, %v3484, %v3939
        %v4068 = vsel %vm3812, %v3487, %v3940
        %v4069 = vsel %vm3813, %v3490, %v3941
        %v4070 = vsel %vm3814, %v3493, %v3942
        %v4071 = vsel %vm3815, %v3496, %v3943
        %v4072 = vsel %vm3816, %v3499, %v3944
        %v4073 = vsel %vm3817, %v3502, %v3945
        %v4074 = vsel %vm3818, %v3505, %v3946
        %v4075 = vsel %vm3819, %v3508, %v3947
        %v4076 = vsel %vm3820, %v3511, %v3948
        %v4077 = vsel %vm3821, %v3514, %v3949
        %v4078 = vsel %vm3822, %v3517, %v3950
        %v4079 = vsel %vm3823, %v3520, %v3951
        %v4080 = vsel %vm3824, %v3523, %v3952
        %v4081 = vsel %vm3825, %v3526, %v3953
        %v4082 = vsel %vm3826, %v3529, %v3954
        %v4083 = vsel %vm3827, %v3532, %v3955
        %v4084 = vsel %vm3828, %v3535, %v3956
        %v4085 = vsel %vm3829, %v3538, %v3957
        %v4086 = vsel %vm3830, %v3541, %v3958
        %v4087 = vsel %vm3831, %v3544, %v3959
        %v4088 = vsel %vm3832, %v3547, %v3960
        %v4089 = vsel %vm3833, %v3550, %v3961
        %v4090 = vsel %vm3834, %v3553, %v3962
        %v4091 = vsel %vm3835, %v3556, %v3963
        %v4092 = vsel %vm3836, %v3559, %v3964
        %v4093 = vsel %vm3837, %v3562, %v3965
        %v4094 = vsel %vm3838, %v3565, %v3966
        %v4095 = vsel %vm3839, %v3568, %v3967
        %v4096 = vsel %vm3840, %v3571, %v3968
        %v4097 = vsel %vm3841, %v3574, %v3969
        %v4098 = vsel %vm3842, %v3577, %v3970
        %v4099 = vsel %vm3843, %v3580, %v3971
        %v4100 = vsel %vm3844, %v3583, %v3972
        %v4101 = vsel %vm3845, %v3586, %v3973
        %v4102 = vsel %vm3846, %v3589, %v3974
        %v4103 = vsel %vm3847, %v3592, %v3975
        %v4104 = vsel %vm3848, %v3595, %v3976
        %v4105 = vsel %vm3849, %v3598, %v3977
        %v4106 = vsel %vm3850, %v3601, %v3978
        %v4107 = vsel %vm3851, %v3604, %v3979
        %v4108 = vsel %vm3852, %v3607, %v3980
        %v4109 = vsel %vm3853, %v3610, %v3981
        %v4110 = vsel %vm3854, %v3613, %v3982
        %v4111 = vsel %vm3855, %v3616, %v3983
        %v4112 = vsel %vm3856, %v3619, %v3984
        %v4113 = vsel %vm3857, %v3622, %v3985
        %v4114 = vsel %vm3858, %v3625, %v3986
        %v4115 = vsel %vm3859, %v3628, %v3987
        %v4116 = vsel %vm3860, %v3631, %v3988
        %v4117 = vsel %vm3861, %v3634, %v3989
        %v4118 = vsel %vm3862, %v3637, %v3990
        %v4119 = vsel %vm3863, %v3640, %v3991
        %v4120 = vsel %vm3864, %v3643, %v3992
        %v4121 = vsel %vm3865, %v3646, %v3993
        %v4122 = vsel %vm3866, %v3649, %v3994
        %v4123 = vsel %vm3867, %v3652, %v3995
        %v4124 = vsel %vm3868, %v3655, %v3996
        %v4125 = vsel %vm3869, %v3658, %v3997
        %v4126 = vsel %vm3870, %v3661, %v3998
        %v4127 = vsel %vm3871, %v3664, %v3999
        %v4128 = vsel %vm3872, %v3667, %v4000
        %v4129 = vsel %vm3873, %v3670, %v4001
        %v4130 = vsel %vm3874, %v3673, %v4002
        %v4131 = vsel %vm3875, %v3676, %v4003
        %v4132 = vsel %vm3876, %v3679, %v4004
        %v4133 = vsel %vm3877, %v3682, %v4005
        %v4134 = vsel %vm3878, %v3685, %v4006
        %v4135 = vsel %vm3879, %v3688, %v4007
        %v4136 = vsel %vm3880, %v3691, %v4008
        %v4137 = vsel %vm3881, %v3694, %v4009
        %v4138 = vsel %vm3882, %v3697, %v4010
        %v4139 = vsel %vm3883, %v3700, %v4011
        %v4140 = vsel %vm3884, %v3703, %v4012
        %v4141 = vsel %vm3885, %v3706, %v4013
        %v4142 = vsel %vm3886, %v3709, %v4014
        %v4143 = vsel %vm3887, %v3712, %v4015
        %v4144 = vsel %vm3888, %v3715, %v4016
        %v4145 = vsel %vm3889, %v3718, %v4017
        %v4146 = vsel %vm3890, %v3721, %v4018
        %v4147 = vsel %vm3891, %v3724, %v4019
        %v4148 = vsel %vm3892, %v3727, %v4020
        %v4149 = vsel %vm3893, %v3730, %v4021
        %v4150 = vsel %vm3894, %v3733, %v4022
        %v4151 = vsel %vm3895, %v3736, %v4023
        %v4152 = vsel %vm3896, %v3739, %v4024
        %v4153 = vsel %vm3897, %v3742, %v4025
        %v4154 = vsel %vm3898, %v3745, %v4026
        %v4155 = vsel %vm3899, %v3748, %v4027
        %v4156 = vsel %vm3900, %v3751, %v4028
        %v4157 = vsel %vm3901, %v3754, %v4029
        %v4158 = vsel %vm3902, %v3757, %v4030
        %v4159 = vsel %vm3903, %v3760, %v4031
        %v4160 = vsel %vm3904, %v3763, %v4032
        %v4161 = vsel %vm3905, %v3766, %v4033
        %v4162 = vsel %vm3906, %v3769, %v4034
        %v4163 = vsel %vm3907, %v3772, %v4035
        %v4164 = vsel %vm3908, %v3775, %v4036
        %v4165 = vsel %vm3909, %v3778, %v4037
        %v4166 = vsel %vm3910, %v3781, %v4038
        %v4167 = vld [vmem:[%s8] sm:$0x3]
        %4168 = vrot.lane.b32.xlu0 %v508, 112
        %v4169 = vpop.permute.xlu0 %4168
        %4170 = vrot.lane.b32.xlu0 %v509, 112
        %v4171 = vpop.permute.xlu0 %4170
        %4172 = vrot.lane.b32.xlu0 %v510, 112
        %v4173 = vpop.permute.xlu0 %4172
        %4174 = vrot.lane.b32.xlu0 %v511, 112
        %v4175 = vpop.permute.xlu0 %4174
        %4176 = vrot.lane.b32.xlu0 %v512, 112
        %v4177 = vpop.permute.xlu0 %4176
        %4178 = vrot.lane.b32.xlu0 %v513, 112
        %v4179 = vpop.permute.xlu0 %4178
        %4180 = vrot.lane.b32.xlu0 %v514, 112
        %v4181 = vpop.permute.xlu0 %4180
        %4182 = vrot.lane.b32.xlu0 %v515, 112
        %v4183 = vpop.permute.xlu0 %4182
        %4184 = vrot.lane.b32.xlu0 %v516, 112
        %v4185 = vpop.permute.xlu0 %4184
        %4186 = vrot.lane.b32.xlu0 %v517, 112
        %v4187 = vpop.permute.xlu0 %4186
        %4188 = vrot.lane.b32.xlu0 %v518, 112
        %v4189 = vpop.permute.xlu0 %4188
        %4190 = vrot.lane.b32.xlu0 %v519, 112
        %v4191 = vpop.permute.xlu0 %4190
        %4192 = vrot.lane.b32.xlu0 %v520, 112
        %v4193 = vpop.permute.xlu0 %4192
        %4194 = vrot.lane.b32.xlu0 %v521, 112
        %v4195 = vpop.permute.xlu0 %4194
        %4196 = vrot.lane.b32.xlu0 %v522, 112
        %v4197 = vpop.permute.xlu0 %4196
        %4198 = vrot.lane.b32.xlu0 %v523, 112
        %v4199 = vpop.permute.xlu0 %4198
        %4200 = vrot.lane.b32.xlu0 %v524, 112
        %v4201 = vpop.permute.xlu0 %4200
        %4202 = vrot.lane.b32.xlu0 %v525, 112
        %v4203 = vpop.permute.xlu0 %4202
        %4204 = vrot.lane.b32.xlu0 %v526, 112
        %v4205 = vpop.permute.xlu0 %4204
        %4206 = vrot.lane.b32.xlu0 %v527, 112
        %v4207 = vpop.permute.xlu0 %4206
        %4208 = vrot.lane.b32.xlu0 %v528, 112
        %v4209 = vpop.permute.xlu0 %4208
        %4210 = vrot.lane.b32.xlu0 %v529, 112
        %v4211 = vpop.permute.xlu0 %4210
        %4212 = vrot.lane.b32.xlu0 %v530, 112
        %v4213 = vpop.permute.xlu0 %4212
        %4214 = vrot.lane.b32.xlu0 %v531, 112
        %v4215 = vpop.permute.xlu0 %4214
        %4216 = vrot.lane.b32.xlu0 %v532, 112
        %v4217 = vpop.permute.xlu0 %4216
        %4218 = vrot.lane.b32.xlu0 %v533, 112
        %v4219 = vpop.permute.xlu0 %4218
        %4220 = vrot.lane.b32.xlu0 %v534, 112
        %v4221 = vpop.permute.xlu0 %4220
        %4222 = vrot.lane.b32.xlu0 %v535, 112
        %v4223 = vpop.permute.xlu0 %4222
        %4224 = vrot.lane.b32.xlu0 %v536, 112
        %v4225 = vpop.permute.xlu0 %4224
        %4226 = vrot.lane.b32.xlu0 %v537, 112
        %v4227 = vpop.permute.xlu0 %4226
        %4228 = vrot.lane.b32.xlu0 %v538, 112
        %v4229 = vpop.permute.xlu0 %4228
        %4230 = vrot.lane.b32.xlu0 %v539, 112
        %v4231 = vpop.permute.xlu0 %4230
        %4232 = vrot.lane.b32.xlu0 %v540, 112
        %v4233 = vpop.permute.xlu0 %4232
        %4234 = vrot.lane.b32.xlu0 %v541, 112
        %v4235 = vpop.permute.xlu0 %4234
        %4236 = vrot.lane.b32.xlu0 %v542, 112
        %v4237 = vpop.permute.xlu0 %4236
        %4238 = vrot.lane.b32.xlu0 %v543, 112
        %v4239 = vpop.permute.xlu0 %4238
        %4240 = vrot.lane.b32.xlu0 %v544, 112
        %v4241 = vpop.permute.xlu0 %4240
        %4242 = vrot.lane.b32.xlu0 %v545, 112
        %v4243 = vpop.permute.xlu0 %4242
        %4244 = vrot.lane.b32.xlu0 %v546, 112
        %v4245 = vpop.permute.xlu0 %4244
        %4246 = vrot.lane.b32.xlu0 %v547, 112
        %v4247 = vpop.permute.xlu0 %4246
        %4248 = vrot.lane.b32.xlu0 %v548, 112
        %v4249 = vpop.permute.xlu0 %4248
        %4250 = vrot.lane.b32.xlu0 %v549, 112
        %v4251 = vpop.permute.xlu0 %4250
        %4252 = vrot.lane.b32.xlu0 %v550, 112
        %v4253 = vpop.permute.xlu0 %4252
        %4254 = vrot.lane.b32.xlu0 %v551, 112
        %v4255 = vpop.permute.xlu0 %4254
        %4256 = vrot.lane.b32.xlu0 %v552, 112
        %v4257 = vpop.permute.xlu0 %4256
        %4258 = vrot.lane.b32.xlu0 %v553, 112
        %v4259 = vpop.permute.xlu0 %4258
        %4260 = vrot.lane.b32.xlu0 %v554, 112
        %v4261 = vpop.permute.xlu0 %4260
        %4262 = vrot.lane.b32.xlu0 %v555, 112
        %v4263 = vpop.permute.xlu0 %4262
        %4264 = vrot.lane.b32.xlu0 %v556, 112
        %v4265 = vpop.permute.xlu0 %4264
        %4266 = vrot.lane.b32.xlu0 %v557, 112
        %v4267 = vpop.permute.xlu0 %4266
        %4268 = vrot.lane.b32.xlu0 %v558, 112
        %v4269 = vpop.permute.xlu0 %4268
        %4270 = vrot.lane.b32.xlu0 %v559, 112
        %v4271 = vpop.permute.xlu0 %4270
        %4272 = vrot.lane.b32.xlu0 %v560, 112
        %v4273 = vpop.permute.xlu0 %4272
        %4274 = vrot.lane.b32.xlu0 %v561, 112
        %v4275 = vpop.permute.xlu0 %4274
        %4276 = vrot.lane.b32.xlu0 %v562, 112
        %v4277 = vpop.permute.xlu0 %4276
        %4278 = vrot.lane.b32.xlu0 %v563, 112
        %v4279 = vpop.permute.xlu0 %4278
        %4280 = vrot.lane.b32.xlu0 %v564, 112
        %v4281 = vpop.permute.xlu0 %4280
        %4282 = vrot.lane.b32.xlu0 %v565, 112
        %v4283 = vpop.permute.xlu0 %4282
        %4284 = vrot.lane.b32.xlu0 %v566, 112
        %v4285 = vpop.permute.xlu0 %4284
        %4286 = vrot.lane.b32.xlu0 %v567, 112
        %v4287 = vpop.permute.xlu0 %4286
        %4288 = vrot.lane.b32.xlu0 %v568, 112
        %v4289 = vpop.permute.xlu0 %4288
        %4290 = vrot.lane.b32.xlu0 %v569, 112
        %v4291 = vpop.permute.xlu0 %4290
        %4292 = vrot.lane.b32.xlu0 %v570, 112
        %v4293 = vpop.permute.xlu0 %4292
        %4294 = vrot.lane.b32.xlu0 %v571, 112
        %v4295 = vpop.permute.xlu0 %4294
        %4296 = vrot.lane.b32.xlu0 %v572, 112
        %v4297 = vpop.permute.xlu0 %4296
        %4298 = vrot.lane.b32.xlu0 %v573, 112
        %v4299 = vpop.permute.xlu0 %4298
        %4300 = vrot.lane.b32.xlu0 %v574, 112
        %v4301 = vpop.permute.xlu0 %4300
        %4302 = vrot.lane.b32.xlu0 %v575, 112
        %v4303 = vpop.permute.xlu0 %4302
        %4304 = vrot.lane.b32.xlu0 %v576, 112
        %v4305 = vpop.permute.xlu0 %4304
        %4306 = vrot.lane.b32.xlu0 %v577, 112
        %v4307 = vpop.permute.xlu0 %4306
        %4308 = vrot.lane.b32.xlu0 %v578, 112
        %v4309 = vpop.permute.xlu0 %4308
        %4310 = vrot.lane.b32.xlu0 %v579, 112
        %v4311 = vpop.permute.xlu0 %4310
        %4312 = vrot.lane.b32.xlu0 %v580, 112
        %v4313 = vpop.permute.xlu0 %4312
        %4314 = vrot.lane.b32.xlu0 %v581, 112
        %v4315 = vpop.permute.xlu0 %4314
        %4316 = vrot.lane.b32.xlu0 %v582, 112
        %v4317 = vpop.permute.xlu0 %4316
        %4318 = vrot.lane.b32.xlu0 %v583, 112
        %v4319 = vpop.permute.xlu0 %4318
        %4320 = vrot.lane.b32.xlu0 %v584, 112
        %v4321 = vpop.permute.xlu0 %4320
        %4322 = vrot.lane.b32.xlu0 %v585, 112
        %v4323 = vpop.permute.xlu0 %4322
        %4324 = vrot.lane.b32.xlu0 %v586, 112
        %v4325 = vpop.permute.xlu0 %4324
        %4326 = vrot.lane.b32.xlu0 %v587, 112
        %v4327 = vpop.permute.xlu0 %4326
        %4328 = vrot.lane.b32.xlu0 %v588, 112
        %v4329 = vpop.permute.xlu0 %4328
        %4330 = vrot.lane.b32.xlu0 %v589, 112
        %v4331 = vpop.permute.xlu0 %4330
        %4332 = vrot.lane.b32.xlu0 %v590, 112
        %v4333 = vpop.permute.xlu0 %4332
        %4334 = vrot.lane.b32.xlu0 %v591, 112
        %v4335 = vpop.permute.xlu0 %4334
        %4336 = vrot.lane.b32.xlu0 %v592, 112
        %v4337 = vpop.permute.xlu0 %4336
        %4338 = vrot.lane.b32.xlu0 %v593, 112
        %v4339 = vpop.permute.xlu0 %4338
        %4340 = vrot.lane.b32.xlu0 %v594, 112
        %v4341 = vpop.permute.xlu0 %4340
        %4342 = vrot.lane.b32.xlu0 %v595, 112
        %v4343 = vpop.permute.xlu0 %4342
        %4344 = vrot.lane.b32.xlu0 %v596, 112
        %v4345 = vpop.permute.xlu0 %4344
        %4346 = vrot.lane.b32.xlu0 %v597, 112
        %v4347 = vpop.permute.xlu0 %4346
        %4348 = vrot.lane.b32.xlu0 %v598, 112
        %v4349 = vpop.permute.xlu0 %4348
        %4350 = vrot.lane.b32.xlu0 %v599, 112
        %v4351 = vpop.permute.xlu0 %4350
        %4352 = vrot.lane.b32.xlu0 %v600, 112
        %v4353 = vpop.permute.xlu0 %4352
        %4354 = vrot.lane.b32.xlu0 %v601, 112
        %v4355 = vpop.permute.xlu0 %4354
        %4356 = vrot.lane.b32.xlu0 %v602, 112
        %v4357 = vpop.permute.xlu0 %4356
        %4358 = vrot.lane.b32.xlu0 %v603, 112
        %v4359 = vpop.permute.xlu0 %4358
        %4360 = vrot.lane.b32.xlu0 %v604, 112
        %v4361 = vpop.permute.xlu0 %4360
        %4362 = vrot.lane.b32.xlu0 %v605, 112
        %v4363 = vpop.permute.xlu0 %4362
        %4364 = vrot.lane.b32.xlu0 %v606, 112
        %v4365 = vpop.permute.xlu0 %4364
        %4366 = vrot.lane.b32.xlu0 %v607, 112
        %v4367 = vpop.permute.xlu0 %4366
        %4368 = vrot.lane.b32.xlu0 %v608, 112
        %v4369 = vpop.permute.xlu0 %4368
        %4370 = vrot.lane.b32.xlu0 %v609, 112
        %v4371 = vpop.permute.xlu0 %4370
        %4372 = vrot.lane.b32.xlu0 %v610, 112
        %v4373 = vpop.permute.xlu0 %4372
        %4374 = vrot.lane.b32.xlu0 %v611, 112
        %v4375 = vpop.permute.xlu0 %4374
        %4376 = vrot.lane.b32.xlu0 %v612, 112
        %v4377 = vpop.permute.xlu0 %4376
        %4378 = vrot.lane.b32.xlu0 %v613, 112
        %v4379 = vpop.permute.xlu0 %4378
        %4380 = vrot.lane.b32.xlu0 %v614, 112
        %v4381 = vpop.permute.xlu0 %4380
        %4382 = vrot.lane.b32.xlu0 %v615, 112
        %v4383 = vpop.permute.xlu0 %4382
        %4384 = vrot.lane.b32.xlu0 %v616, 112
        %v4385 = vpop.permute.xlu0 %4384
        %4386 = vrot.lane.b32.xlu0 %v617, 112
        %v4387 = vpop.permute.xlu0 %4386
        %4388 = vrot.lane.b32.xlu0 %v618, 112
        %v4389 = vpop.permute.xlu0 %4388
        %4390 = vrot.lane.b32.xlu0 %v619, 112
        %v4391 = vpop.permute.xlu0 %4390
        %4392 = vrot.lane.b32.xlu0 %v620, 112
        %v4393 = vpop.permute.xlu0 %4392
        %4394 = vrot.lane.b32.xlu0 %v621, 112
        %v4395 = vpop.permute.xlu0 %4394
        %4396 = vrot.lane.b32.xlu0 %v622, 112
        %v4397 = vpop.permute.xlu0 %4396
        %4398 = vrot.lane.b32.xlu0 %v623, 112
        %v4399 = vpop.permute.xlu0 %4398
        %4400 = vrot.lane.b32.xlu0 %v624, 112
        %v4401 = vpop.permute.xlu0 %4400
        %4402 = vrot.lane.b32.xlu0 %v625, 112
        %v4403 = vpop.permute.xlu0 %4402
        %4404 = vrot.lane.b32.xlu0 %v626, 112
        %v4405 = vpop.permute.xlu0 %4404
        %4406 = vrot.lane.b32.xlu0 %v627, 112
        %v4407 = vpop.permute.xlu0 %4406
        %4408 = vrot.lane.b32.xlu0 %v628, 112
        %v4409 = vpop.permute.xlu0 %4408
        %4410 = vrot.lane.b32.xlu0 %v629, 112
        %v4411 = vpop.permute.xlu0 %4410
        %4412 = vrot.lane.b32.xlu0 %v630, 112
        %v4413 = vpop.permute.xlu0 %4412
        %4414 = vrot.lane.b32.xlu0 %v631, 112
        %v4415 = vpop.permute.xlu0 %4414
        %4416 = vrot.lane.b32.xlu0 %v632, 112
        %v4417 = vpop.permute.xlu0 %4416
        %4418 = vrot.lane.b32.xlu0 %v633, 112
        %v4419 = vpop.permute.xlu0 %4418
        %4420 = vrot.lane.b32.xlu0 %v634, 112
        %v4421 = vpop.permute.xlu0 %4420
        %4422 = vrot.lane.b32.xlu0 %v635, 112
        %v4423 = vpop.permute.xlu0 %4422
        %vm4424 = vcmask 15360
        %v4425 = vsel %vm4424, %v4169, 0
        %v4427 = vsel %vm4424, %v4171, 0
        %v4429 = vsel %vm4424, %v4173, 0
        %v4431 = vsel %vm4424, %v4175, 0
        %v4433 = vsel %vm4424, %v4177, 0
        %v4435 = vsel %vm4424, %v4179, 0
        %v4437 = vsel %vm4424, %v4181, 0
        %v4439 = vsel %vm4424, %v4183, 0
        %v4441 = vsel %vm4424, %v4185, 0
        %v4443 = vsel %vm4424, %v4187, 0
        %v4445 = vsel %vm4424, %v4189, 0
        %v4447 = vsel %vm4424, %v4191, 0
        %v4449 = vsel %vm4424, %v4193, 0
        %v4451 = vsel %vm4424, %v4195, 0
        %v4453 = vsel %vm4424, %v4197, 0
        %v4455 = vsel %vm4424, %v4199, 0
        %v4457 = vsel %vm4424, %v4201, 0
        %v4459 = vsel %vm4424, %v4203, 0
        %v4461 = vsel %vm4424, %v4205, 0
        %v4463 = vsel %vm4424, %v4207, 0
        %v4465 = vsel %vm4424, %v4209, 0
        %v4467 = vsel %vm4424, %v4211, 0
        %v4469 = vsel %vm4424, %v4213, 0
        %v4471 = vsel %vm4424, %v4215, 0
        %v4473 = vsel %vm4424, %v4217, 0
        %v4475 = vsel %vm4424, %v4219, 0
        %v4477 = vsel %vm4424, %v4221, 0
        %v4479 = vsel %vm4424, %v4223, 0
        %v4481 = vsel %vm4424, %v4225, 0
        %v4483 = vsel %vm4424, %v4227, 0
        %v4485 = vsel %vm4424, %v4229, 0
        %v4487 = vsel %vm4424, %v4231, 0
        %v4489 = vsel %vm4424, %v4233, 0
        %v4491 = vsel %vm4424, %v4235, 0
        %v4493 = vsel %vm4424, %v4237, 0
        %v4495 = vsel %vm4424, %v4239, 0
        %v4497 = vsel %vm4424, %v4241, 0
        %v4499 = vsel %vm4424, %v4243, 0
        %v4501 = vsel %vm4424, %v4245, 0
        %v4503 = vsel %vm4424, %v4247, 0
        %v4505 = vsel %vm4424, %v4249, 0
        %v4507 = vsel %vm4424, %v4251, 0
        %v4509 = vsel %vm4424, %v4253, 0
        %v4511 = vsel %vm4424, %v4255, 0
        %v4513 = vsel %vm4424, %v4257, 0
        %v4515 = vsel %vm4424, %v4259, 0
        %v4517 = vsel %vm4424, %v4261, 0
        %v4519 = vsel %vm4424, %v4263, 0
        %v4521 = vsel %vm4424, %v4265, 0
        %v4523 = vsel %vm4424, %v4267, 0
        %v4525 = vsel %vm4424, %v4269, 0
        %v4527 = vsel %vm4424, %v4271, 0
        %v4529 = vsel %vm4424, %v4273, 0
        %v4531 = vsel %vm4424, %v4275, 0
        %v4533 = vsel %vm4424, %v4277, 0
        %v4535 = vsel %vm4424, %v4279, 0
        %v4537 = vsel %vm4424, %v4281, 0
        %v4539 = vsel %vm4424, %v4283, 0
        %v4541 = vsel %vm4424, %v4285, 0
        %v4543 = vsel %vm4424, %v4287, 0
        %v4545 = vsel %vm4424, %v4289, 0
        %v4547 = vsel %vm4424, %v4291, 0
        %v4549 = vsel %vm4424, %v4293, 0
        %v4551 = vsel %vm4424, %v4295, 0
        %v4553 = vsel %vm4424, %v4297, 0
        %v4555 = vsel %vm4424, %v4299, 0
        %v4557 = vsel %vm4424, %v4301, 0
        %v4559 = vsel %vm4424, %v4303, 0
        %v4561 = vsel %vm4424, %v4305, 0
        %v4563 = vsel %vm4424, %v4307, 0
        %v4565 = vsel %vm4424, %v4309, 0
        %v4567 = vsel %vm4424, %v4311, 0
        %v4569 = vsel %vm4424, %v4313, 0
        %v4571 = vsel %vm4424, %v4315, 0
        %v4573 = vsel %vm4424, %v4317, 0
        %v4575 = vsel %vm4424, %v4319, 0
        %v4577 = vsel %vm4424, %v4321, 0
        %v4579 = vsel %vm4424, %v4323, 0
        %v4581 = vsel %vm4424, %v4325, 0
        %v4583 = vsel %vm4424, %v4327, 0
        %v4585 = vsel %vm4424, %v4329, 0
        %v4587 = vsel %vm4424, %v4331, 0
        %v4589 = vsel %vm4424, %v4333, 0
        %v4591 = vsel %vm4424, %v4335, 0
        %v4593 = vsel %vm4424, %v4337, 0
        %v4595 = vsel %vm4424, %v4339, 0
        %v4597 = vsel %vm4424, %v4341, 0
        %v4599 = vsel %vm4424, %v4343, 0
        %v4601 = vsel %vm4424, %v4345, 0
        %v4603 = vsel %vm4424, %v4347, 0
        %v4605 = vsel %vm4424, %v4349, 0
        %v4607 = vsel %vm4424, %v4351, 0
        %v4609 = vsel %vm4424, %v4353, 0
        %v4611 = vsel %vm4424, %v4355, 0
        %v4613 = vsel %vm4424, %v4357, 0
        %v4615 = vsel %vm4424, %v4359, 0
        %v4617 = vsel %vm4424, %v4361, 0
        %v4619 = vsel %vm4424, %v4363, 0
        %v4621 = vsel %vm4424, %v4365, 0
        %v4623 = vsel %vm4424, %v4367, 0
        %v4625 = vsel %vm4424, %v4369, 0
        %v4627 = vsel %vm4424, %v4371, 0
        %v4629 = vsel %vm4424, %v4373, 0
        %v4631 = vsel %vm4424, %v4375, 0
        %v4633 = vsel %vm4424, %v4377, 0
        %v4635 = vsel %vm4424, %v4379, 0
        %v4637 = vsel %vm4424, %v4381, 0
        %v4639 = vsel %vm4424, %v4383, 0
        %v4641 = vsel %vm4424, %v4385, 0
        %v4643 = vsel %vm4424, %v4387, 0
        %v4645 = vsel %vm4424, %v4389, 0
        %v4647 = vsel %vm4424, %v4391, 0
        %v4649 = vsel %vm4424, %v4393, 0
        %v4651 = vsel %vm4424, %v4395, 0
        %v4653 = vsel %vm4424, %v4397, 0
        %v4655 = vsel %vm4424, %v4399, 0
        %v4657 = vsel %vm4424, %v4401, 0
        %v4659 = vsel %vm4424, %v4403, 0
        %v4661 = vsel %vm4424, %v4405, 0
        %v4663 = vsel %vm4424, %v4407, 0
        %v4665 = vsel %vm4424, %v4409, 0
        %v4667 = vsel %vm4424, %v4411, 0
        %v4669 = vsel %vm4424, %v4413, 0
        %v4671 = vsel %vm4424, %v4415, 0
        %v4673 = vsel %vm4424, %v4417, 0
        %v4675 = vsel %vm4424, %v4419, 0
        %v4677 = vsel %vm4424, %v4421, 0
        %v4679 = vsel %vm4424, %v4423, 0
        %vm4681 = vcmask 1041408
        %v4683 = vsel %vm4681, %v4167, 0
        %4685 = vmatpush.msra.mxu0 0.0
        %4686 = vmatpush.msra.mxu0 0.0
        %4687 = vmatpush.msra.mxu0 0.0
        %4688 = vmatpush.msra.mxu0 0.0
        %4689 = vmatpush.msra.mxu0 0.0
        %4690 = vmatpush.msra.mxu0 0.0
        %4691 = vmatpush.msra.mxu0 0.0
        %4692 = vmatpush.msra.mxu0 0.0
        %4693 = vmatpush.msra.mxu0 0.0
        %4694 = vmatpush.msra.mxu0 0.0
        %4695 = vmatpush.msra.mxu0 0.0
        %4696 = vmatpush.msra.mxu0 0.0
        %4697 = vmatpush.msra.mxu0 0.0
        %4698 = vmatpush.msra.mxu0 0.0
        %4699 = vmatpush.msra.mxu0 0.0
        %4700 = vmatpush.msra.mxu0 %v4683
        %4701 = vmatmul.f32.gmra.mxu0 %v4425
        %v4702 = vpop.f32.mrf.mxu0
        %v4703 = vadd.f32 0.0, %v4702
        %4704 = vmatmul.f32.gmra.mxu0 %v4427
        %v4705 = vpop.f32.mrf.mxu0
        %v4706 = vadd.f32 0.0, %v4705
        %4707 = vmatmul.f32.gmra.mxu0 %v4429
        %v4708 = vpop.f32.mrf.mxu0
        %v4709 = vadd.f32 0.0, %v4708
        %4710 = vmatmul.f32.gmra.mxu0 %v4431
        %v4711 = vpop.f32.mrf.mxu0
        %v4712 = vadd.f32 0.0, %v4711
        %4713 = vmatmul.f32.gmra.mxu0 %v4433
        %v4714 = vpop.f32.mrf.mxu0
        %v4715 = vadd.f32 0.0, %v4714
        %4716 = vmatmul.f32.gmra.mxu0 %v4435
        %v4717 = vpop.f32.mrf.mxu0
        %v4718 = vadd.f32 0.0, %v4717
        %4719 = vmatmul.f32.gmra.mxu0 %v4437
        %v4720 = vpop.f32.mrf.mxu0
        %v4721 = vadd.f32 0.0, %v4720
        %4722 = vmatmul.f32.gmra.mxu0 %v4439
        %v4723 = vpop.f32.mrf.mxu0
        %v4724 = vadd.f32 0.0, %v4723
        %4725 = vmatmul.f32.gmra.mxu0 %v4441
        %v4726 = vpop.f32.mrf.mxu0
        %v4727 = vadd.f32 0.0, %v4726
        %4728 = vmatmul.f32.gmra.mxu0 %v4443
        %v4729 = vpop.f32.mrf.mxu0
        %v4730 = vadd.f32 0.0, %v4729
        %4731 = vmatmul.f32.gmra.mxu0 %v4445
        %v4732 = vpop.f32.mrf.mxu0
        %v4733 = vadd.f32 0.0, %v4732
        %4734 = vmatmul.f32.gmra.mxu0 %v4447
        %v4735 = vpop.f32.mrf.mxu0
        %v4736 = vadd.f32 0.0, %v4735
        %4737 = vmatmul.f32.gmra.mxu0 %v4449
        %v4738 = vpop.f32.mrf.mxu0
        %v4739 = vadd.f32 0.0, %v4738
        %4740 = vmatmul.f32.gmra.mxu0 %v4451
        %v4741 = vpop.f32.mrf.mxu0
        %v4742 = vadd.f32 0.0, %v4741
        %4743 = vmatmul.f32.gmra.mxu0 %v4453
        %v4744 = vpop.f32.mrf.mxu0
        %v4745 = vadd.f32 0.0, %v4744
        %4746 = vmatmul.f32.gmra.mxu0 %v4455
        %v4747 = vpop.f32.mrf.mxu0
        %v4748 = vadd.f32 0.0, %v4747
        %4749 = vmatmul.f32.gmra.mxu0 %v4457
        %v4750 = vpop.f32.mrf.mxu0
        %v4751 = vadd.f32 0.0, %v4750
        %4752 = vmatmul.f32.gmra.mxu0 %v4459
        %v4753 = vpop.f32.mrf.mxu0
        %v4754 = vadd.f32 0.0, %v4753
        %4755 = vmatmul.f32.gmra.mxu0 %v4461
        %v4756 = vpop.f32.mrf.mxu0
        %v4757 = vadd.f32 0.0, %v4756
        %4758 = vmatmul.f32.gmra.mxu0 %v4463
        %v4759 = vpop.f32.mrf.mxu0
        %v4760 = vadd.f32 0.0, %v4759
        %4761 = vmatmul.f32.gmra.mxu0 %v4465
        %v4762 = vpop.f32.mrf.mxu0
        %v4763 = vadd.f32 0.0, %v4762
        %4764 = vmatmul.f32.gmra.mxu0 %v4467
        %v4765 = vpop.f32.mrf.mxu0
        %v4766 = vadd.f32 0.0, %v4765
        %4767 = vmatmul.f32.gmra.mxu0 %v4469
        %v4768 = vpop.f32.mrf.mxu0
        %v4769 = vadd.f32 0.0, %v4768
        %4770 = vmatmul.f32.gmra.mxu0 %v4471
        %v4771 = vpop.f32.mrf.mxu0
        %v4772 = vadd.f32 0.0, %v4771
        %4773 = vmatmul.f32.gmra.mxu0 %v4473
        %v4774 = vpop.f32.mrf.mxu0
        %v4775 = vadd.f32 0.0, %v4774
        %4776 = vmatmul.f32.gmra.mxu0 %v4475
        %v4777 = vpop.f32.mrf.mxu0
        %v4778 = vadd.f32 0.0, %v4777
        %4779 = vmatmul.f32.gmra.mxu0 %v4477
        %v4780 = vpop.f32.mrf.mxu0
        %v4781 = vadd.f32 0.0, %v4780
        %4782 = vmatmul.f32.gmra.mxu0 %v4479
        %v4783 = vpop.f32.mrf.mxu0
        %v4784 = vadd.f32 0.0, %v4783
        %4785 = vmatmul.f32.gmra.mxu0 %v4481
        %v4786 = vpop.f32.mrf.mxu0
        %v4787 = vadd.f32 0.0, %v4786
        %4788 = vmatmul.f32.gmra.mxu0 %v4483
        %v4789 = vpop.f32.mrf.mxu0
        %v4790 = vadd.f32 0.0, %v4789
        %4791 = vmatmul.f32.gmra.mxu0 %v4485
        %v4792 = vpop.f32.mrf.mxu0
        %v4793 = vadd.f32 0.0, %v4792
        %4794 = vmatmul.f32.gmra.mxu0 %v4487
        %v4795 = vpop.f32.mrf.mxu0
        %v4796 = vadd.f32 0.0, %v4795
        %4797 = vmatmul.f32.gmra.mxu0 %v4489
        %v4798 = vpop.f32.mrf.mxu0
        %v4799 = vadd.f32 0.0, %v4798
        %4800 = vmatmul.f32.gmra.mxu0 %v4491
        %v4801 = vpop.f32.mrf.mxu0
        %v4802 = vadd.f32 0.0, %v4801
        %4803 = vmatmul.f32.gmra.mxu0 %v4493
        %v4804 = vpop.f32.mrf.mxu0
        %v4805 = vadd.f32 0.0, %v4804
        %4806 = vmatmul.f32.gmra.mxu0 %v4495
        %v4807 = vpop.f32.mrf.mxu0
        %v4808 = vadd.f32 0.0, %v4807
        %4809 = vmatmul.f32.gmra.mxu0 %v4497
        %v4810 = vpop.f32.mrf.mxu0
        %v4811 = vadd.f32 0.0, %v4810
        %4812 = vmatmul.f32.gmra.mxu0 %v4499
        %v4813 = vpop.f32.mrf.mxu0
        %v4814 = vadd.f32 0.0, %v4813
        %4815 = vmatmul.f32.gmra.mxu0 %v4501
        %v4816 = vpop.f32.mrf.mxu0
        %v4817 = vadd.f32 0.0, %v4816
        %4818 = vmatmul.f32.gmra.mxu0 %v4503
        %v4819 = vpop.f32.mrf.mxu0
        %v4820 = vadd.f32 0.0, %v4819
        %4821 = vmatmul.f32.gmra.mxu0 %v4505
        %v4822 = vpop.f32.mrf.mxu0
        %v4823 = vadd.f32 0.0, %v4822
        %4824 = vmatmul.f32.gmra.mxu0 %v4507
        %v4825 = vpop.f32.mrf.mxu0
        %v4826 = vadd.f32 0.0, %v4825
        %4827 = vmatmul.f32.gmra.mxu0 %v4509
        %v4828 = vpop.f32.mrf.mxu0
        %v4829 = vadd.f32 0.0, %v4828
        %4830 = vmatmul.f32.gmra.mxu0 %v4511
        %v4831 = vpop.f32.mrf.mxu0
        %v4832 = vadd.f32 0.0, %v4831
        %4833 = vmatmul.f32.gmra.mxu0 %v4513
        %v4834 = vpop.f32.mrf.mxu0
        %v4835 = vadd.f32 0.0, %v4834
        %4836 = vmatmul.f32.gmra.mxu0 %v4515
        %v4837 = vpop.f32.mrf.mxu0
        %v4838 = vadd.f32 0.0, %v4837
        %4839 = vmatmul.f32.gmra.mxu0 %v4517
        %v4840 = vpop.f32.mrf.mxu0
        %v4841 = vadd.f32 0.0, %v4840
        %4842 = vmatmul.f32.gmra.mxu0 %v4519
        %v4843 = vpop.f32.mrf.mxu0
        %v4844 = vadd.f32 0.0, %v4843
        %4845 = vmatmul.f32.gmra.mxu0 %v4521
        %v4846 = vpop.f32.mrf.mxu0
        %v4847 = vadd.f32 0.0, %v4846
        %4848 = vmatmul.f32.gmra.mxu0 %v4523
        %v4849 = vpop.f32.mrf.mxu0
        %v4850 = vadd.f32 0.0, %v4849
        %4851 = vmatmul.f32.gmra.mxu0 %v4525
        %v4852 = vpop.f32.mrf.mxu0
        %v4853 = vadd.f32 0.0, %v4852
        %4854 = vmatmul.f32.gmra.mxu0 %v4527
        %v4855 = vpop.f32.mrf.mxu0
        %v4856 = vadd.f32 0.0, %v4855
        %4857 = vmatmul.f32.gmra.mxu0 %v4529
        %v4858 = vpop.f32.mrf.mxu0
        %v4859 = vadd.f32 0.0, %v4858
        %4860 = vmatmul.f32.gmra.mxu0 %v4531
        %v4861 = vpop.f32.mrf.mxu0
        %v4862 = vadd.f32 0.0, %v4861
        %4863 = vmatmul.f32.gmra.mxu0 %v4533
        %v4864 = vpop.f32.mrf.mxu0
        %v4865 = vadd.f32 0.0, %v4864
        %4866 = vmatmul.f32.gmra.mxu0 %v4535
        %v4867 = vpop.f32.mrf.mxu0
        %v4868 = vadd.f32 0.0, %v4867
        %4869 = vmatmul.f32.gmra.mxu0 %v4537
        %v4870 = vpop.f32.mrf.mxu0
        %v4871 = vadd.f32 0.0, %v4870
        %4872 = vmatmul.f32.gmra.mxu0 %v4539
        %v4873 = vpop.f32.mrf.mxu0
        %v4874 = vadd.f32 0.0, %v4873
        %4875 = vmatmul.f32.gmra.mxu0 %v4541
        %v4876 = vpop.f32.mrf.mxu0
        %v4877 = vadd.f32 0.0, %v4876
        %4878 = vmatmul.f32.gmra.mxu0 %v4543
        %v4879 = vpop.f32.mrf.mxu0
        %v4880 = vadd.f32 0.0, %v4879
        %4881 = vmatmul.f32.gmra.mxu0 %v4545
        %v4882 = vpop.f32.mrf.mxu0
        %v4883 = vadd.f32 0.0, %v4882
        %4884 = vmatmul.f32.gmra.mxu0 %v4547
        %v4885 = vpop.f32.mrf.mxu0
        %v4886 = vadd.f32 0.0, %v4885
        %4887 = vmatmul.f32.gmra.mxu0 %v4549
        %v4888 = vpop.f32.mrf.mxu0
        %v4889 = vadd.f32 0.0, %v4888
        %4890 = vmatmul.f32.gmra.mxu0 %v4551
        %v4891 = vpop.f32.mrf.mxu0
        %v4892 = vadd.f32 0.0, %v4891
        %4893 = vmatmul.f32.gmra.mxu0 %v4553
        %v4894 = vpop.f32.mrf.mxu0
        %v4895 = vadd.f32 0.0, %v4894
        %4896 = vmatmul.f32.gmra.mxu0 %v4555
        %v4897 = vpop.f32.mrf.mxu0
        %v4898 = vadd.f32 0.0, %v4897
        %4899 = vmatmul.f32.gmra.mxu0 %v4557
        %v4900 = vpop.f32.mrf.mxu0
        %v4901 = vadd.f32 0.0, %v4900
        %4902 = vmatmul.f32.gmra.mxu0 %v4559
        %v4903 = vpop.f32.mrf.mxu0
        %v4904 = vadd.f32 0.0, %v4903
        %4905 = vmatmul.f32.gmra.mxu0 %v4561
        %v4906 = vpop.f32.mrf.mxu0
        %v4907 = vadd.f32 0.0, %v4906
        %4908 = vmatmul.f32.gmra.mxu0 %v4563
        %v4909 = vpop.f32.mrf.mxu0
        %v4910 = vadd.f32 0.0, %v4909
        %4911 = vmatmul.f32.gmra.mxu0 %v4565
        %v4912 = vpop.f32.mrf.mxu0
        %v4913 = vadd.f32 0.0, %v4912
        %4914 = vmatmul.f32.gmra.mxu0 %v4567
        %v4915 = vpop.f32.mrf.mxu0
        %v4916 = vadd.f32 0.0, %v4915
        %4917 = vmatmul.f32.gmra.mxu0 %v4569
        %v4918 = vpop.f32.mrf.mxu0
        %v4919 = vadd.f32 0.0, %v4918
        %4920 = vmatmul.f32.gmra.mxu0 %v4571
        %v4921 = vpop.f32.mrf.mxu0
        %v4922 = vadd.f32 0.0, %v4921
        %4923 = vmatmul.f32.gmra.mxu0 %v4573
        %v4924 = vpop.f32.mrf.mxu0
        %v4925 = vadd.f32 0.0, %v4924
        %4926 = vmatmul.f32.gmra.mxu0 %v4575
        %v4927 = vpop.f32.mrf.mxu0
        %v4928 = vadd.f32 0.0, %v4927
        %4929 = vmatmul.f32.gmra.mxu0 %v4577
        %v4930 = vpop.f32.mrf.mxu0
        %v4931 = vadd.f32 0.0, %v4930
        %4932 = vmatmul.f32.gmra.mxu0 %v4579
        %v4933 = vpop.f32.mrf.mxu0
        %v4934 = vadd.f32 0.0, %v4933
        %4935 = vmatmul.f32.gmra.mxu0 %v4581
        %v4936 = vpop.f32.mrf.mxu0
        %v4937 = vadd.f32 0.0, %v4936
        %4938 = vmatmul.f32.gmra.mxu0 %v4583
        %v4939 = vpop.f32.mrf.mxu0
        %v4940 = vadd.f32 0.0, %v4939
        %4941 = vmatmul.f32.gmra.mxu0 %v4585
        %v4942 = vpop.f32.mrf.mxu0
        %v4943 = vadd.f32 0.0, %v4942
        %4944 = vmatmul.f32.gmra.mxu0 %v4587
        %v4945 = vpop.f32.mrf.mxu0
        %v4946 = vadd.f32 0.0, %v4945
        %4947 = vmatmul.f32.gmra.mxu0 %v4589
        %v4948 = vpop.f32.mrf.mxu0
        %v4949 = vadd.f32 0.0, %v4948
        %4950 = vmatmul.f32.gmra.mxu0 %v4591
        %v4951 = vpop.f32.mrf.mxu0
        %v4952 = vadd.f32 0.0, %v4951
        %4953 = vmatmul.f32.gmra.mxu0 %v4593
        %v4954 = vpop.f32.mrf.mxu0
        %v4955 = vadd.f32 0.0, %v4954
        %4956 = vmatmul.f32.gmra.mxu0 %v4595
        %v4957 = vpop.f32.mrf.mxu0
        %v4958 = vadd.f32 0.0, %v4957
        %4959 = vmatmul.f32.gmra.mxu0 %v4597
        %v4960 = vpop.f32.mrf.mxu0
        %v4961 = vadd.f32 0.0, %v4960
        %4962 = vmatmul.f32.gmra.mxu0 %v4599
        %v4963 = vpop.f32.mrf.mxu0
        %v4964 = vadd.f32 0.0, %v4963
        %4965 = vmatmul.f32.gmra.mxu0 %v4601
        %v4966 = vpop.f32.mrf.mxu0
        %v4967 = vadd.f32 0.0, %v4966
        %4968 = vmatmul.f32.gmra.mxu0 %v4603
        %v4969 = vpop.f32.mrf.mxu0
        %v4970 = vadd.f32 0.0, %v4969
        %4971 = vmatmul.f32.gmra.mxu0 %v4605
        %v4972 = vpop.f32.mrf.mxu0
        %v4973 = vadd.f32 0.0, %v4972
        %4974 = vmatmul.f32.gmra.mxu0 %v4607
        %v4975 = vpop.f32.mrf.mxu0
        %v4976 = vadd.f32 0.0, %v4975
        %4977 = vmatmul.f32.gmra.mxu0 %v4609
        %v4978 = vpop.f32.mrf.mxu0
        %v4979 = vadd.f32 0.0, %v4978
        %4980 = vmatmul.f32.gmra.mxu0 %v4611
        %v4981 = vpop.f32.mrf.mxu0
        %v4982 = vadd.f32 0.0, %v4981
        %4983 = vmatmul.f32.gmra.mxu0 %v4613
        %v4984 = vpop.f32.mrf.mxu0
        %v4985 = vadd.f32 0.0, %v4984
        %4986 = vmatmul.f32.gmra.mxu0 %v4615
        %v4987 = vpop.f32.mrf.mxu0
        %v4988 = vadd.f32 0.0, %v4987
        %4989 = vmatmul.f32.gmra.mxu0 %v4617
        %v4990 = vpop.f32.mrf.mxu0
        %v4991 = vadd.f32 0.0, %v4990
        %4992 = vmatmul.f32.gmra.mxu0 %v4619
        %v4993 = vpop.f32.mrf.mxu0
        %v4994 = vadd.f32 0.0, %v4993
        %4995 = vmatmul.f32.gmra.mxu0 %v4621
        %v4996 = vpop.f32.mrf.mxu0
        %v4997 = vadd.f32 0.0, %v4996
        %4998 = vmatmul.f32.gmra.mxu0 %v4623
        %v4999 = vpop.f32.mrf.mxu0
        %v5000 = vadd.f32 0.0, %v4999
        %5001 = vmatmul.f32.gmra.mxu0 %v4625
        %v5002 = vpop.f32.mrf.mxu0
        %v5003 = vadd.f32 0.0, %v5002
        %5004 = vmatmul.f32.gmra.mxu0 %v4627
        %v5005 = vpop.f32.mrf.mxu0
        %v5006 = vadd.f32 0.0, %v5005
        %5007 = vmatmul.f32.gmra.mxu0 %v4629
        %v5008 = vpop.f32.mrf.mxu0
        %v5009 = vadd.f32 0.0, %v5008
        %5010 = vmatmul.f32.gmra.mxu0 %v4631
        %v5011 = vpop.f32.mrf.mxu0
        %v5012 = vadd.f32 0.0, %v5011
        %5013 = vmatmul.f32.gmra.mxu0 %v4633
        %v5014 = vpop.f32.mrf.mxu0
        %v5015 = vadd.f32 0.0, %v5014
        %5016 = vmatmul.f32.gmra.mxu0 %v4635
        %v5017 = vpop.f32.mrf.mxu0
        %v5018 = vadd.f32 0.0, %v5017
        %5019 = vmatmul.f32.gmra.mxu0 %v4637
        %v5020 = vpop.f32.mrf.mxu0
        %v5021 = vadd.f32 0.0, %v5020
        %5022 = vmatmul.f32.gmra.mxu0 %v4639
        %v5023 = vpop.f32.mrf.mxu0
        %v5024 = vadd.f32 0.0, %v5023
        %5025 = vmatmul.f32.gmra.mxu0 %v4641
        %v5026 = vpop.f32.mrf.mxu0
        %v5027 = vadd.f32 0.0, %v5026
        %5028 = vmatmul.f32.gmra.mxu0 %v4643
        %v5029 = vpop.f32.mrf.mxu0
        %v5030 = vadd.f32 0.0, %v5029
        %5031 = vmatmul.f32.gmra.mxu0 %v4645
        %v5032 = vpop.f32.mrf.mxu0
        %v5033 = vadd.f32 0.0, %v5032
        %5034 = vmatmul.f32.gmra.mxu0 %v4647
        %v5035 = vpop.f32.mrf.mxu0
        %v5036 = vadd.f32 0.0, %v5035
        %5037 = vmatmul.f32.gmra.mxu0 %v4649
        %v5038 = vpop.f32.mrf.mxu0
        %v5039 = vadd.f32 0.0, %v5038
        %5040 = vmatmul.f32.gmra.mxu0 %v4651
        %v5041 = vpop.f32.mrf.mxu0
        %v5042 = vadd.f32 0.0, %v5041
        %5043 = vmatmul.f32.gmra.mxu0 %v4653
        %v5044 = vpop.f32.mrf.mxu0
        %v5045 = vadd.f32 0.0, %v5044
        %5046 = vmatmul.f32.gmra.mxu0 %v4655
        %v5047 = vpop.f32.mrf.mxu0
        %v5048 = vadd.f32 0.0, %v5047
        %5049 = vmatmul.f32.gmra.mxu0 %v4657
        %v5050 = vpop.f32.mrf.mxu0
        %v5051 = vadd.f32 0.0, %v5050
        %5052 = vmatmul.f32.gmra.mxu0 %v4659
        %v5053 = vpop.f32.mrf.mxu0
        %v5054 = vadd.f32 0.0, %v5053
        %5055 = vmatmul.f32.gmra.mxu0 %v4661
        %v5056 = vpop.f32.mrf.mxu0
        %v5057 = vadd.f32 0.0, %v5056
        %5058 = vmatmul.f32.gmra.mxu0 %v4663
        %v5059 = vpop.f32.mrf.mxu0
        %v5060 = vadd.f32 0.0, %v5059
        %5061 = vmatmul.f32.gmra.mxu0 %v4665
        %v5062 = vpop.f32.mrf.mxu0
        %v5063 = vadd.f32 0.0, %v5062
        %5064 = vmatmul.f32.gmra.mxu0 %v4667
        %v5065 = vpop.f32.mrf.mxu0
        %v5066 = vadd.f32 0.0, %v5065
        %5067 = vmatmul.f32.gmra.mxu0 %v4669
        %v5068 = vpop.f32.mrf.mxu0
        %v5069 = vadd.f32 0.0, %v5068
        %5070 = vmatmul.f32.gmra.mxu0 %v4671
        %v5071 = vpop.f32.mrf.mxu0
        %v5072 = vadd.f32 0.0, %v5071
        %5073 = vmatmul.f32.gmra.mxu0 %v4673
        %v5074 = vpop.f32.mrf.mxu0
        %v5075 = vadd.f32 0.0, %v5074
        %5076 = vmatmul.f32.gmra.mxu0 %v4675
        %v5077 = vpop.f32.mrf.mxu0
        %v5078 = vadd.f32 0.0, %v5077
        %5079 = vmatmul.f32.gmra.mxu0 %v4677
        %v5080 = vpop.f32.mrf.mxu0
        %v5081 = vadd.f32 0.0, %v5080
        %5082 = vmatmul.f32.gmra.mxu0 %v4679
        %v5083 = vpop.f32.mrf.mxu0
        %v5084 = vadd.f32 0.0, %v5083
        %5085 = vdwg.mxu0
        %v5086 = vld [vmem:[%s7] sm:$0xff]
        %v5087 = vld [vmem:[%s7 + $0x8] sm:$0xff]
        %v5089 = vsel %vm642, %v4039, 0
        %v5092 = vsel %vm642, %v4040, 0
        %v5095 = vsel %vm642, %v4041, 0
        %v5098 = vsel %vm642, %v4042, 0
        %v5101 = vsel %vm642, %v4043, 0
        %v5104 = vsel %vm642, %v4044, 0
        %v5107 = vsel %vm642, %v4045, 0
        %v5110 = vsel %vm642, %v4046, 0
        %v5113 = vsel %vm642, %v4047, 0
        %v5116 = vsel %vm642, %v4048, 0
        %v5119 = vsel %vm642, %v4049, 0
        %v5122 = vsel %vm642, %v4050, 0
        %v5125 = vsel %vm642, %v4051, 0
        %v5128 = vsel %vm642, %v4052, 0
        %v5131 = vsel %vm642, %v4053, 0
        %v5134 = vsel %vm642, %v4054, 0
        %v5137 = vsel %vm642, %v4055, 0
        %v5140 = vsel %vm642, %v4056, 0
        %v5143 = vsel %vm642, %v4057, 0
        %v5146 = vsel %vm642, %v4058, 0
        %v5149 = vsel %vm642, %v4059, 0
        %v5152 = vsel %vm642, %v4060, 0
        %v5155 = vsel %vm642, %v4061, 0
        %v5158 = vsel %vm642, %v4062, 0
        %v5161 = vsel %vm642, %v4063, 0
        %v5164 = vsel %vm642, %v4064, 0
        %v5167 = vsel %vm642, %v4065, 0
        %v5170 = vsel %vm642, %v4066, 0
        %v5173 = vsel %vm642, %v4067, 0
        %v5176 = vsel %vm642, %v4068, 0
        %v5179 = vsel %vm642, %v4069, 0
        %v5182 = vsel %vm642, %v4070, 0
        %v5185 = vsel %vm642, %v4071, 0
        %v5188 = vsel %vm642, %v4072, 0
        %v5191 = vsel %vm642, %v4073, 0
        %v5194 = vsel %vm642, %v4074, 0
        %v5197 = vsel %vm642, %v4075, 0
        %v5200 = vsel %vm642, %v4076, 0
        %v5203 = vsel %vm642, %v4077, 0
        %v5206 = vsel %vm642, %v4078, 0
        %v5209 = vsel %vm642, %v4079, 0
        %v5212 = vsel %vm642, %v4080, 0
        %v5215 = vsel %vm642, %v4081, 0
        %v5218 = vsel %vm642, %v4082, 0
        %v5221 = vsel %vm642, %v4083, 0
        %v5224 = vsel %vm642, %v4084, 0
        %v5227 = vsel %vm642, %v4085, 0
        %v5230 = vsel %vm642, %v4086, 0
        %v5233 = vsel %vm642, %v4087, 0
        %v5236 = vsel %vm642, %v4088, 0
        %v5239 = vsel %vm642, %v4089, 0
        %v5242 = vsel %vm642, %v4090, 0
        %v5245 = vsel %vm642, %v4091, 0
        %v5248 = vsel %vm642, %v4092, 0
        %v5251 = vsel %vm642, %v4093, 0
        %v5254 = vsel %vm642, %v4094, 0
        %v5257 = vsel %vm642, %v4095, 0
        %v5260 = vsel %vm642, %v4096, 0
        %v5263 = vsel %vm642, %v4097, 0
        %v5266 = vsel %vm642, %v4098, 0
        %v5269 = vsel %vm642, %v4099, 0
        %v5272 = vsel %vm642, %v4100, 0
        %v5275 = vsel %vm642, %v4101, 0
        %v5278 = vsel %vm642, %v4102, 0
        %v5281 = vsel %vm642, %v4103, 0
        %v5284 = vsel %vm642, %v4104, 0
        %v5287 = vsel %vm642, %v4105, 0
        %v5290 = vsel %vm642, %v4106, 0
        %v5293 = vsel %vm642, %v4107, 0
        %v5296 = vsel %vm642, %v4108, 0
        %v5299 = vsel %vm642, %v4109, 0
        %v5302 = vsel %vm642, %v4110, 0
        %v5305 = vsel %vm642, %v4111, 0
        %v5308 = vsel %vm642, %v4112, 0
        %v5311 = vsel %vm642, %v4113, 0
        %v5314 = vsel %vm642, %v4114, 0
        %v5317 = vsel %vm642, %v4115, 0
        %v5320 = vsel %vm642, %v4116, 0
        %v5323 = vsel %vm642, %v4117, 0
        %v5326 = vsel %vm642, %v4118, 0
        %v5329 = vsel %vm642, %v4119, 0
        %v5332 = vsel %vm642, %v4120, 0
        %v5335 = vsel %vm642, %v4121, 0
        %v5338 = vsel %vm642, %v4122, 0
        %v5341 = vsel %vm642, %v4123, 0
        %v5344 = vsel %vm642, %v4124, 0
        %v5347 = vsel %vm642, %v4125, 0
        %v5350 = vsel %vm642, %v4126, 0
        %v5353 = vsel %vm642, %v4127, 0
        %v5356 = vsel %vm642, %v4128, 0
        %v5359 = vsel %vm642, %v4129, 0
        %v5362 = vsel %vm642, %v4130, 0
        %v5365 = vsel %vm642, %v4131, 0
        %v5368 = vsel %vm642, %v4132, 0
        %v5371 = vsel %vm642, %v4133, 0
        %v5374 = vsel %vm642, %v4134, 0
        %v5377 = vsel %vm642, %v4135, 0
        %v5380 = vsel %vm642, %v4136, 0
        %v5383 = vsel %vm642, %v4137, 0
        %v5386 = vsel %vm642, %v4138, 0
        %v5389 = vsel %vm642, %v4139, 0
        %v5392 = vsel %vm642, %v4140, 0
        %v5395 = vsel %vm642, %v4141, 0
        %v5398 = vsel %vm642, %v4142, 0
        %v5401 = vsel %vm642, %v4143, 0
        %v5404 = vsel %vm642, %v4144, 0
        %v5407 = vsel %vm642, %v4145, 0
        %v5410 = vsel %vm642, %v4146, 0
        %v5413 = vsel %vm642, %v4147, 0
        %v5416 = vsel %vm642, %v4148, 0
        %v5419 = vsel %vm642, %v4149, 0
        %v5422 = vsel %vm642, %v4150, 0
        %v5425 = vsel %vm642, %v4151, 0
        %v5428 = vsel %vm642, %v4152, 0
        %v5431 = vsel %vm642, %v4153, 0
        %v5434 = vsel %vm642, %v4154, 0
        %v5437 = vsel %vm642, %v4155, 0
        %v5440 = vsel %vm642, %v4156, 0
        %v5443 = vsel %vm642, %v4157, 0
        %v5446 = vsel %vm642, %v4158, 0
        %v5449 = vsel %vm642, %v4159, 0
        %v5452 = vsel %vm642, %v4160, 0
        %v5455 = vsel %vm642, %v4161, 0
        %v5458 = vsel %vm642, %v4162, 0
        %v5461 = vsel %vm642, %v4163, 0
        %v5464 = vsel %vm642, %v4164, 0
        %v5467 = vsel %vm642, %v4165, 0
        %v5470 = vsel %vm642, %v4166, 0
        %5472 = vmatpush.msra.mxu0 0.0
        %5473 = vmatpush.msra.mxu0 0.0
        %5474 = vmatpush.msra.mxu0 0.0
        %5475 = vmatpush.msra.mxu0 0.0
        %5476 = vmatpush.msra.mxu0 0.0
        %5477 = vmatpush.msra.mxu0 0.0
        %5478 = vmatpush.msra.mxu0 0.0
        %5479 = vmatpush.msra.mxu0 0.0
        %5480 = vmatpush.msra.mxu0 0.0
        %5481 = vmatpush.msra.mxu0 0.0
        %5482 = vmatpush.msra.mxu0 0.0
        %5483 = vmatpush.msra.mxu0 0.0
        %5484 = vmatpush.msra.mxu0 0.0
        %5485 = vmatpush.msra.mxu0 0.0
        %5486 = vmatpush.msra.mxu0 %v5087
        %5487 = vmatpush.msra.mxu0 %v5086
        %5488 = vmatmul.f32.gmra.mxu0 %v5089
        %v5489 = vpop.f32.mrf.mxu0
        %v5490 = vadd.f32 %v4703, %v5489
        %5491 = vmatmul.f32.gmra.mxu0 %v5092
        %v5492 = vpop.f32.mrf.mxu0
        %v5493 = vadd.f32 %v4706, %v5492
        %5494 = vmatmul.f32.gmra.mxu0 %v5095
        %v5495 = vpop.f32.mrf.mxu0
        %v5496 = vadd.f32 %v4709, %v5495
        %5497 = vmatmul.f32.gmra.mxu0 %v5098
        %v5498 = vpop.f32.mrf.mxu0
        %v5499 = vadd.f32 %v4712, %v5498
        %5500 = vmatmul.f32.gmra.mxu0 %v5101
        %v5501 = vpop.f32.mrf.mxu0
        %v5502 = vadd.f32 %v4715, %v5501
        %5503 = vmatmul.f32.gmra.mxu0 %v5104
        %v5504 = vpop.f32.mrf.mxu0
        %v5505 = vadd.f32 %v4718, %v5504
        %5506 = vmatmul.f32.gmra.mxu0 %v5107
        %v5507 = vpop.f32.mrf.mxu0
        %v5508 = vadd.f32 %v4721, %v5507
        %5509 = vmatmul.f32.gmra.mxu0 %v5110
        %v5510 = vpop.f32.mrf.mxu0
        %v5511 = vadd.f32 %v4724, %v5510
        %5512 = vmatmul.f32.gmra.mxu0 %v5113
        %v5513 = vpop.f32.mrf.mxu0
        %v5514 = vadd.f32 %v4727, %v5513
        %5515 = vmatmul.f32.gmra.mxu0 %v5116
        %v5516 = vpop.f32.mrf.mxu0
        %v5517 = vadd.f32 %v4730, %v5516
        %5518 = vmatmul.f32.gmra.mxu0 %v5119
        %v5519 = vpop.f32.mrf.mxu0
        %v5520 = vadd.f32 %v4733, %v5519
        %5521 = vmatmul.f32.gmra.mxu0 %v5122
        %v5522 = vpop.f32.mrf.mxu0
        %v5523 = vadd.f32 %v4736, %v5522
        %5524 = vmatmul.f32.gmra.mxu0 %v5125
        %v5525 = vpop.f32.mrf.mxu0
        %v5526 = vadd.f32 %v4739, %v5525
        %5527 = vmatmul.f32.gmra.mxu0 %v5128
        %v5528 = vpop.f32.mrf.mxu0
        %v5529 = vadd.f32 %v4742, %v5528
        %5530 = vmatmul.f32.gmra.mxu0 %v5131
        %v5531 = vpop.f32.mrf.mxu0
        %v5532 = vadd.f32 %v4745, %v5531
        %5533 = vmatmul.f32.gmra.mxu0 %v5134
        %v5534 = vpop.f32.mrf.mxu0
        %v5535 = vadd.f32 %v4748, %v5534
        %5536 = vmatmul.f32.gmra.mxu0 %v5137
        %v5537 = vpop.f32.mrf.mxu0
        %v5538 = vadd.f32 %v4751, %v5537
        %5539 = vmatmul.f32.gmra.mxu0 %v5140
        %v5540 = vpop.f32.mrf.mxu0
        %v5541 = vadd.f32 %v4754, %v5540
        %5542 = vmatmul.f32.gmra.mxu0 %v5143
        %v5543 = vpop.f32.mrf.mxu0
        %v5544 = vadd.f32 %v4757, %v5543
        %5545 = vmatmul.f32.gmra.mxu0 %v5146
        %v5546 = vpop.f32.mrf.mxu0
        %v5547 = vadd.f32 %v4760, %v5546
        %5548 = vmatmul.f32.gmra.mxu0 %v5149
        %v5549 = vpop.f32.mrf.mxu0
        %v5550 = vadd.f32 %v4763, %v5549
        %5551 = vmatmul.f32.gmra.mxu0 %v5152
        %v5552 = vpop.f32.mrf.mxu0
        %v5553 = vadd.f32 %v4766, %v5552
        %5554 = vmatmul.f32.gmra.mxu0 %v5155
        %v5555 = vpop.f32.mrf.mxu0
        %v5556 = vadd.f32 %v4769, %v5555
        %5557 = vmatmul.f32.gmra.mxu0 %v5158
        %v5558 = vpop.f32.mrf.mxu0
        %v5559 = vadd.f32 %v4772, %v5558
        %5560 = vmatmul.f32.gmra.mxu0 %v5161
        %v5561 = vpop.f32.mrf.mxu0
        %v5562 = vadd.f32 %v4775, %v5561
        %5563 = vmatmul.f32.gmra.mxu0 %v5164
        %v5564 = vpop.f32.mrf.mxu0
        %v5565 = vadd.f32 %v4778, %v5564
        %5566 = vmatmul.f32.gmra.mxu0 %v5167
        %v5567 = vpop.f32.mrf.mxu0
        %v5568 = vadd.f32 %v4781, %v5567
        %5569 = vmatmul.f32.gmra.mxu0 %v5170
        %v5570 = vpop.f32.mrf.mxu0
        %v5571 = vadd.f32 %v4784, %v5570
        %5572 = vmatmul.f32.gmra.mxu0 %v5173
        %v5573 = vpop.f32.mrf.mxu0
        %v5574 = vadd.f32 %v4787, %v5573
        %5575 = vmatmul.f32.gmra.mxu0 %v5176
        %v5576 = vpop.f32.mrf.mxu0
        %v5577 = vadd.f32 %v4790, %v5576
        %5578 = vmatmul.f32.gmra.mxu0 %v5179
        %v5579 = vpop.f32.mrf.mxu0
        %v5580 = vadd.f32 %v4793, %v5579
        %5581 = vmatmul.f32.gmra.mxu0 %v5182
        %v5582 = vpop.f32.mrf.mxu0
        %v5583 = vadd.f32 %v4796, %v5582
        %5584 = vmatmul.f32.gmra.mxu0 %v5185
        %v5585 = vpop.f32.mrf.mxu0
        %v5586 = vadd.f32 %v4799, %v5585
        %5587 = vmatmul.f32.gmra.mxu0 %v5188
        %v5588 = vpop.f32.mrf.mxu0
        %v5589 = vadd.f32 %v4802, %v5588
        %5590 = vmatmul.f32.gmra.mxu0 %v5191
        %v5591 = vpop.f32.mrf.mxu0
        %v5592 = vadd.f32 %v4805, %v5591
        %5593 = vmatmul.f32.gmra.mxu0 %v5194
        %v5594 = vpop.f32.mrf.mxu0
        %v5595 = vadd.f32 %v4808, %v5594
        %5596 = vmatmul.f32.gmra.mxu0 %v5197
        %v5597 = vpop.f32.mrf.mxu0
        %v5598 = vadd.f32 %v4811, %v5597
        %5599 = vmatmul.f32.gmra.mxu0 %v5200
        %v5600 = vpop.f32.mrf.mxu0
        %v5601 = vadd.f32 %v4814, %v5600
        %5602 = vmatmul.f32.gmra.mxu0 %v5203
        %v5603 = vpop.f32.mrf.mxu0
        %v5604 = vadd.f32 %v4817, %v5603
        %5605 = vmatmul.f32.gmra.mxu0 %v5206
        %v5606 = vpop.f32.mrf.mxu0
        %v5607 = vadd.f32 %v4820, %v5606
        %5608 = vmatmul.f32.gmra.mxu0 %v5209
        %v5609 = vpop.f32.mrf.mxu0
        %v5610 = vadd.f32 %v4823, %v5609
        %5611 = vmatmul.f32.gmra.mxu0 %v5212
        %v5612 = vpop.f32.mrf.mxu0
        %v5613 = vadd.f32 %v4826, %v5612
        %5614 = vmatmul.f32.gmra.mxu0 %v5215
        %v5615 = vpop.f32.mrf.mxu0
        %v5616 = vadd.f32 %v4829, %v5615
        %5617 = vmatmul.f32.gmra.mxu0 %v5218
        %v5618 = vpop.f32.mrf.mxu0
        %v5619 = vadd.f32 %v4832, %v5618
        %5620 = vmatmul.f32.gmra.mxu0 %v5221
        %v5621 = vpop.f32.mrf.mxu0
        %v5622 = vadd.f32 %v4835, %v5621
        %5623 = vmatmul.f32.gmra.mxu0 %v5224
        %v5624 = vpop.f32.mrf.mxu0
        %v5625 = vadd.f32 %v4838, %v5624
        %5626 = vmatmul.f32.gmra.mxu0 %v5227
        %v5627 = vpop.f32.mrf.mxu0
        %v5628 = vadd.f32 %v4841, %v5627
        %5629 = vmatmul.f32.gmra.mxu0 %v5230
        %v5630 = vpop.f32.mrf.mxu0
        %v5631 = vadd.f32 %v4844, %v5630
        %5632 = vmatmul.f32.gmra.mxu0 %v5233
        %v5633 = vpop.f32.mrf.mxu0
        %v5634 = vadd.f32 %v4847, %v5633
        %5635 = vmatmul.f32.gmra.mxu0 %v5236
        %v5636 = vpop.f32.mrf.mxu0
        %v5637 = vadd.f32 %v4850, %v5636
        %5638 = vmatmul.f32.gmra.mxu0 %v5239
        %v5639 = vpop.f32.mrf.mxu0
        %v5640 = vadd.f32 %v4853, %v5639
        %5641 = vmatmul.f32.gmra.mxu0 %v5242
        %v5642 = vpop.f32.mrf.mxu0
        %v5643 = vadd.f32 %v4856, %v5642
        %5644 = vmatmul.f32.gmra.mxu0 %v5245
        %v5645 = vpop.f32.mrf.mxu0
        %v5646 = vadd.f32 %v4859, %v5645
        %5647 = vmatmul.f32.gmra.mxu0 %v5248
        %v5648 = vpop.f32.mrf.mxu0
        %v5649 = vadd.f32 %v4862, %v5648
        %5650 = vmatmul.f32.gmra.mxu0 %v5251
        %v5651 = vpop.f32.mrf.mxu0
        %v5652 = vadd.f32 %v4865, %v5651
        %5653 = vmatmul.f32.gmra.mxu0 %v5254
        %v5654 = vpop.f32.mrf.mxu0
        %v5655 = vadd.f32 %v4868, %v5654
        %5656 = vmatmul.f32.gmra.mxu0 %v5257
        %v5657 = vpop.f32.mrf.mxu0
        %v5658 = vadd.f32 %v4871, %v5657
        %5659 = vmatmul.f32.gmra.mxu0 %v5260
        %v5660 = vpop.f32.mrf.mxu0
        %v5661 = vadd.f32 %v4874, %v5660
        %5662 = vmatmul.f32.gmra.mxu0 %v5263
        %v5663 = vpop.f32.mrf.mxu0
        %v5664 = vadd.f32 %v4877, %v5663
        %5665 = vmatmul.f32.gmra.mxu0 %v5266
        %v5666 = vpop.f32.mrf.mxu0
        %v5667 = vadd.f32 %v4880, %v5666
        %5668 = vmatmul.f32.gmra.mxu0 %v5269
        %v5669 = vpop.f32.mrf.mxu0
        %v5670 = vadd.f32 %v4883, %v5669
        %5671 = vmatmul.f32.gmra.mxu0 %v5272
        %v5672 = vpop.f32.mrf.mxu0
        %v5673 = vadd.f32 %v4886, %v5672
        %5674 = vmatmul.f32.gmra.mxu0 %v5275
        %v5675 = vpop.f32.mrf.mxu0
        %v5676 = vadd.f32 %v4889, %v5675
        %5677 = vmatmul.f32.gmra.mxu0 %v5278
        %v5678 = vpop.f32.mrf.mxu0
        %v5679 = vadd.f32 %v4892, %v5678
        %5680 = vmatmul.f32.gmra.mxu0 %v5281
        %v5681 = vpop.f32.mrf.mxu0
        %v5682 = vadd.f32 %v4895, %v5681
        %5683 = vmatmul.f32.gmra.mxu0 %v5284
        %v5684 = vpop.f32.mrf.mxu0
        %v5685 = vadd.f32 %v4898, %v5684
        %5686 = vmatmul.f32.gmra.mxu0 %v5287
        %v5687 = vpop.f32.mrf.mxu0
        %v5688 = vadd.f32 %v4901, %v5687
        %5689 = vmatmul.f32.gmra.mxu0 %v5290
        %v5690 = vpop.f32.mrf.mxu0
        %v5691 = vadd.f32 %v4904, %v5690
        %5692 = vmatmul.f32.gmra.mxu0 %v5293
        %v5693 = vpop.f32.mrf.mxu0
        %v5694 = vadd.f32 %v4907, %v5693
        %5695 = vmatmul.f32.gmra.mxu0 %v5296
        %v5696 = vpop.f32.mrf.mxu0
        %v5697 = vadd.f32 %v4910, %v5696
        %5698 = vmatmul.f32.gmra.mxu0 %v5299
        %v5699 = vpop.f32.mrf.mxu0
        %v5700 = vadd.f32 %v4913, %v5699
        %5701 = vmatmul.f32.gmra.mxu0 %v5302
        %v5702 = vpop.f32.mrf.mxu0
        %v5703 = vadd.f32 %v4916, %v5702
        %5704 = vmatmul.f32.gmra.mxu0 %v5305
        %v5705 = vpop.f32.mrf.mxu0
        %v5706 = vadd.f32 %v4919, %v5705
        %5707 = vmatmul.f32.gmra.mxu0 %v5308
        %v5708 = vpop.f32.mrf.mxu0
        %v5709 = vadd.f32 %v4922, %v5708
        %5710 = vmatmul.f32.gmra.mxu0 %v5311
        %v5711 = vpop.f32.mrf.mxu0
        %v5712 = vadd.f32 %v4925, %v5711
        %5713 = vmatmul.f32.gmra.mxu0 %v5314
        %v5714 = vpop.f32.mrf.mxu0
        %v5715 = vadd.f32 %v4928, %v5714
        %5716 = vmatmul.f32.gmra.mxu0 %v5317
        %v5717 = vpop.f32.mrf.mxu0
        %v5718 = vadd.f32 %v4931, %v5717
        %5719 = vmatmul.f32.gmra.mxu0 %v5320
        %v5720 = vpop.f32.mrf.mxu0
        %v5721 = vadd.f32 %v4934, %v5720
        %5722 = vmatmul.f32.gmra.mxu0 %v5323
        %v5723 = vpop.f32.mrf.mxu0
        %v5724 = vadd.f32 %v4937, %v5723
        %5725 = vmatmul.f32.gmra.mxu0 %v5326
        %v5726 = vpop.f32.mrf.mxu0
        %v5727 = vadd.f32 %v4940, %v5726
        %5728 = vmatmul.f32.gmra.mxu0 %v5329
        %v5729 = vpop.f32.mrf.mxu0
        %v5730 = vadd.f32 %v4943, %v5729
        %5731 = vmatmul.f32.gmra.mxu0 %v5332
        %v5732 = vpop.f32.mrf.mxu0
        %v5733 = vadd.f32 %v4946, %v5732
        %5734 = vmatmul.f32.gmra.mxu0 %v5335
        %v5735 = vpop.f32.mrf.mxu0
        %v5736 = vadd.f32 %v4949, %v5735
        %5737 = vmatmul.f32.gmra.mxu0 %v5338
        %v5738 = vpop.f32.mrf.mxu0
        %v5739 = vadd.f32 %v4952, %v5738
        %5740 = vmatmul.f32.gmra.mxu0 %v5341
        %v5741 = vpop.f32.mrf.mxu0
        %v5742 = vadd.f32 %v4955, %v5741
        %5743 = vmatmul.f32.gmra.mxu0 %v5344
        %v5744 = vpop.f32.mrf.mxu0
        %v5745 = vadd.f32 %v4958, %v5744
        %5746 = vmatmul.f32.gmra.mxu0 %v5347
        %v5747 = vpop.f32.mrf.mxu0
        %v5748 = vadd.f32 %v4961, %v5747
        %5749 = vmatmul.f32.gmra.mxu0 %v5350
        %v5750 = vpop.f32.mrf.mxu0
        %v5751 = vadd.f32 %v4964, %v5750
        %5752 = vmatmul.f32.gmra.mxu0 %v5353
        %v5753 = vpop.f32.mrf.mxu0
        %v5754 = vadd.f32 %v4967, %v5753
        %5755 = vmatmul.f32.gmra.mxu0 %v5356
        %v5756 = vpop.f32.mrf.mxu0
        %v5757 = vadd.f32 %v4970, %v5756
        %5758 = vmatmul.f32.gmra.mxu0 %v5359
        %v5759 = vpop.f32.mrf.mxu0
        %v5760 = vadd.f32 %v4973, %v5759
        %5761 = vmatmul.f32.gmra.mxu0 %v5362
        %v5762 = vpop.f32.mrf.mxu0
        %v5763 = vadd.f32 %v4976, %v5762
        %5764 = vmatmul.f32.gmra.mxu0 %v5365
        %v5765 = vpop.f32.mrf.mxu0
        %v5766 = vadd.f32 %v4979, %v5765
        %5767 = vmatmul.f32.gmra.mxu0 %v5368
        %v5768 = vpop.f32.mrf.mxu0
        %v5769 = vadd.f32 %v4982, %v5768
        %5770 = vmatmul.f32.gmra.mxu0 %v5371
        %v5771 = vpop.f32.mrf.mxu0
        %v5772 = vadd.f32 %v4985, %v5771
        %5773 = vmatmul.f32.gmra.mxu0 %v5374
        %v5774 = vpop.f32.mrf.mxu0
        %v5775 = vadd.f32 %v4988, %v5774
        %5776 = vmatmul.f32.gmra.mxu0 %v5377
        %v5777 = vpop.f32.mrf.mxu0
        %v5778 = vadd.f32 %v4991, %v5777
        %5779 = vmatmul.f32.gmra.mxu0 %v5380
        %v5780 = vpop.f32.mrf.mxu0
        %v5781 = vadd.f32 %v4994, %v5780
        %5782 = vmatmul.f32.gmra.mxu0 %v5383
        %v5783 = vpop.f32.mrf.mxu0
        %v5784 = vadd.f32 %v4997, %v5783
        %5785 = vmatmul.f32.gmra.mxu0 %v5386
        %v5786 = vpop.f32.mrf.mxu0
        %v5787 = vadd.f32 %v5000, %v5786
        %5788 = vmatmul.f32.gmra.mxu0 %v5389
        %v5789 = vpop.f32.mrf.mxu0
        %v5790 = vadd.f32 %v5003, %v5789
        %5791 = vmatmul.f32.gmra.mxu0 %v5392
        %v5792 = vpop.f32.mrf.mxu0
        %v5793 = vadd.f32 %v5006, %v5792
        %5794 = vmatmul.f32.gmra.mxu0 %v5395
        %v5795 = vpop.f32.mrf.mxu0
        %v5796 = vadd.f32 %v5009, %v5795
        %5797 = vmatmul.f32.gmra.mxu0 %v5398
        %v5798 = vpop.f32.mrf.mxu0
        %v5799 = vadd.f32 %v5012, %v5798
        %5800 = vmatmul.f32.gmra.mxu0 %v5401
        %v5801 = vpop.f32.mrf.mxu0
        %v5802 = vadd.f32 %v5015, %v5801
        %5803 = vmatmul.f32.gmra.mxu0 %v5404
        %v5804 = vpop.f32.mrf.mxu0
        %v5805 = vadd.f32 %v5018, %v5804
        %5806 = vmatmul.f32.gmra.mxu0 %v5407
        %v5807 = vpop.f32.mrf.mxu0
        %v5808 = vadd.f32 %v5021, %v5807
        %5809 = vmatmul.f32.gmra.mxu0 %v5410
        %v5810 = vpop.f32.mrf.mxu0
        %v5811 = vadd.f32 %v5024, %v5810
        %5812 = vmatmul.f32.gmra.mxu0 %v5413
        %v5813 = vpop.f32.mrf.mxu0
        %v5814 = vadd.f32 %v5027, %v5813
        %5815 = vmatmul.f32.gmra.mxu0 %v5416
        %v5816 = vpop.f32.mrf.mxu0
        %v5817 = vadd.f32 %v5030, %v5816
        %5818 = vmatmul.f32.gmra.mxu0 %v5419
        %v5819 = vpop.f32.mrf.mxu0
        %v5820 = vadd.f32 %v5033, %v5819
        %5821 = vmatmul.f32.gmra.mxu0 %v5422
        %v5822 = vpop.f32.mrf.mxu0
        %v5823 = vadd.f32 %v5036, %v5822
        %5824 = vmatmul.f32.gmra.mxu0 %v5425
        %v5825 = vpop.f32.mrf.mxu0
        %v5826 = vadd.f32 %v5039, %v5825
        %5827 = vmatmul.f32.gmra.mxu0 %v5428
        %v5828 = vpop.f32.mrf.mxu0
        %v5829 = vadd.f32 %v5042, %v5828
        %5830 = vmatmul.f32.gmra.mxu0 %v5431
        %v5831 = vpop.f32.mrf.mxu0
        %v5832 = vadd.f32 %v5045, %v5831
        %5833 = vmatmul.f32.gmra.mxu0 %v5434
        %v5834 = vpop.f32.mrf.mxu0
        %v5835 = vadd.f32 %v5048, %v5834
        %5836 = vmatmul.f32.gmra.mxu0 %v5437
        %v5837 = vpop.f32.mrf.mxu0
        %v5838 = vadd.f32 %v5051, %v5837
        %5839 = vmatmul.f32.gmra.mxu0 %v5440
        %v5840 = vpop.f32.mrf.mxu0
        %v5841 = vadd.f32 %v5054, %v5840
        %5842 = vmatmul.f32.gmra.mxu0 %v5443
        %v5843 = vpop.f32.mrf.mxu0
        %v5844 = vadd.f32 %v5057, %v5843
        %5845 = vmatmul.f32.gmra.mxu0 %v5446
        %v5846 = vpop.f32.mrf.mxu0
        %v5847 = vadd.f32 %v5060, %v5846
        %5848 = vmatmul.f32.gmra.mxu0 %v5449
        %v5849 = vpop.f32.mrf.mxu0
        %v5850 = vadd.f32 %v5063, %v5849
        %5851 = vmatmul.f32.gmra.mxu0 %v5452
        %v5852 = vpop.f32.mrf.mxu0
        %v5853 = vadd.f32 %v5066, %v5852
        %5854 = vmatmul.f32.gmra.mxu0 %v5455
        %v5855 = vpop.f32.mrf.mxu0
        %v5856 = vadd.f32 %v5069, %v5855
        %5857 = vmatmul.f32.gmra.mxu0 %v5458
        %v5858 = vpop.f32.mrf.mxu0
        %v5859 = vadd.f32 %v5072, %v5858
        %5860 = vmatmul.f32.gmra.mxu0 %v5461
        %v5861 = vpop.f32.mrf.mxu0
        %v5862 = vadd.f32 %v5075, %v5861
        %5863 = vmatmul.f32.gmra.mxu0 %v5464
        %v5864 = vpop.f32.mrf.mxu0
        %v5865 = vadd.f32 %v5078, %v5864
        %5866 = vmatmul.f32.gmra.mxu0 %v5467
        %v5867 = vpop.f32.mrf.mxu0
        %v5868 = vadd.f32 %v5081, %v5867
        %5869 = vmatmul.f32.gmra.mxu0 %v5470
        %v5870 = vpop.f32.mrf.mxu0
        %v5871 = vadd.f32 %v5084, %v5870
        %5872 = vmatmul.f32.gmra.mxu0 %v644
        %v5873 = vpop.f32.mrf.mxu0
        %v5874 = vadd.f32 %v4703, %v5873
        %5875 = vmatmul.f32.gmra.mxu0 %v647
        %v5876 = vpop.f32.mrf.mxu0
        %v5877 = vadd.f32 %v4706, %v5876
        %5878 = vmatmul.f32.gmra.mxu0 %v650
        %v5879 = vpop.f32.mrf.mxu0
        %v5880 = vadd.f32 %v4709, %v5879
        %5881 = vmatmul.f32.gmra.mxu0 %v653
        %v5882 = vpop.f32.mrf.mxu0
        %v5883 = vadd.f32 %v4712, %v5882
        %5884 = vmatmul.f32.gmra.mxu0 %v656
        %v5885 = vpop.f32.mrf.mxu0
        %v5886 = vadd.f32 %v4715, %v5885
        %5887 = vmatmul.f32.gmra.mxu0 %v659
        %v5888 = vpop.f32.mrf.mxu0
        %v5889 = vadd.f32 %v4718, %v5888
        %5890 = vmatmul.f32.gmra.mxu0 %v662
        %v5891 = vpop.f32.mrf.mxu0
        %v5892 = vadd.f32 %v4721, %v5891
        %5893 = vmatmul.f32.gmra.mxu0 %v665
        %v5894 = vpop.f32.mrf.mxu0
        %v5895 = vadd.f32 %v4724, %v5894
        %5896 = vmatmul.f32.gmra.mxu0 %v668
        %v5897 = vpop.f32.mrf.mxu0
        %v5898 = vadd.f32 %v4727, %v5897
        %5899 = vmatmul.f32.gmra.mxu0 %v671
        %v5900 = vpop.f32.mrf.mxu0
        %v5901 = vadd.f32 %v4730, %v5900
        %5902 = vmatmul.f32.gmra.mxu0 %v674
        %v5903 = vpop.f32.mrf.mxu0
        %v5904 = vadd.f32 %v4733, %v5903
        %5905 = vmatmul.f32.gmra.mxu0 %v677
        %v5906 = vpop.f32.mrf.mxu0
        %v5907 = vadd.f32 %v4736, %v5906
        %5908 = vmatmul.f32.gmra.mxu0 %v680
        %v5909 = vpop.f32.mrf.mxu0
        %v5910 = vadd.f32 %v4739, %v5909
        %5911 = vmatmul.f32.gmra.mxu0 %v683
        %v5912 = vpop.f32.mrf.mxu0
        %v5913 = vadd.f32 %v4742, %v5912
        %5914 = vmatmul.f32.gmra.mxu0 %v686
        %v5915 = vpop.f32.mrf.mxu0
        %v5916 = vadd.f32 %v4745, %v5915
        %5917 = vmatmul.f32.gmra.mxu0 %v689
        %v5918 = vpop.f32.mrf.mxu0
        %v5919 = vadd.f32 %v4748, %v5918
        %5920 = vmatmul.f32.gmra.mxu0 %v692
        %v5921 = vpop.f32.mrf.mxu0
        %v5922 = vadd.f32 %v4751, %v5921
        %5923 = vmatmul.f32.gmra.mxu0 %v695
        %v5924 = vpop.f32.mrf.mxu0
        %v5925 = vadd.f32 %v4754, %v5924
        %5926 = vmatmul.f32.gmra.mxu0 %v698
        %v5927 = vpop.f32.mrf.mxu0
        %v5928 = vadd.f32 %v4757, %v5927
        %5929 = vmatmul.f32.gmra.mxu0 %v701
        %v5930 = vpop.f32.mrf.mxu0
        %v5931 = vadd.f32 %v4760, %v5930
        %5932 = vmatmul.f32.gmra.mxu0 %v704
        %v5933 = vpop.f32.mrf.mxu0
        %v5934 = vadd.f32 %v4763, %v5933
        %5935 = vmatmul.f32.gmra.mxu0 %v707
        %v5936 = vpop.f32.mrf.mxu0
        %v5937 = vadd.f32 %v4766, %v5936
        %5938 = vmatmul.f32.gmra.mxu0 %v710
        %v5939 = vpop.f32.mrf.mxu0
        %v5940 = vadd.f32 %v4769, %v5939
        %5941 = vmatmul.f32.gmra.mxu0 %v713
        %v5942 = vpop.f32.mrf.mxu0
        %v5943 = vadd.f32 %v4772, %v5942
        %5944 = vmatmul.f32.gmra.mxu0 %v716
        %v5945 = vpop.f32.mrf.mxu0
        %v5946 = vadd.f32 %v4775, %v5945
        %5947 = vmatmul.f32.gmra.mxu0 %v719
        %v5948 = vpop.f32.mrf.mxu0
        %v5949 = vadd.f32 %v4778, %v5948
        %5950 = vmatmul.f32.gmra.mxu0 %v722
        %v5951 = vpop.f32.mrf.mxu0
        %v5952 = vadd.f32 %v4781, %v5951
        %5953 = vmatmul.f32.gmra.mxu0 %v725
        %v5954 = vpop.f32.mrf.mxu0
        %v5955 = vadd.f32 %v4784, %v5954
        %5956 = vmatmul.f32.gmra.mxu0 %v728
        %v5957 = vpop.f32.mrf.mxu0
        %v5958 = vadd.f32 %v4787, %v5957
        %5959 = vmatmul.f32.gmra.mxu0 %v731
        %v5960 = vpop.f32.mrf.mxu0
        %v5961 = vadd.f32 %v4790, %v5960
        %5962 = vmatmul.f32.gmra.mxu0 %v734
        %v5963 = vpop.f32.mrf.mxu0
        %v5964 = vadd.f32 %v4793, %v5963
        %5965 = vmatmul.f32.gmra.mxu0 %v737
        %v5966 = vpop.f32.mrf.mxu0
        %v5967 = vadd.f32 %v4796, %v5966
        %5968 = vmatmul.f32.gmra.mxu0 %v740
        %v5969 = vpop.f32.mrf.mxu0
        %v5970 = vadd.f32 %v4799, %v5969
        %5971 = vmatmul.f32.gmra.mxu0 %v743
        %v5972 = vpop.f32.mrf.mxu0
        %v5973 = vadd.f32 %v4802, %v5972
        %5974 = vmatmul.f32.gmra.mxu0 %v746
        %v5975 = vpop.f32.mrf.mxu0
        %v5976 = vadd.f32 %v4805, %v5975
        %5977 = vmatmul.f32.gmra.mxu0 %v749
        %v5978 = vpop.f32.mrf.mxu0
        %v5979 = vadd.f32 %v4808, %v5978
        %5980 = vmatmul.f32.gmra.mxu0 %v752
        %v5981 = vpop.f32.mrf.mxu0
        %v5982 = vadd.f32 %v4811, %v5981
        %5983 = vmatmul.f32.gmra.mxu0 %v755
        %v5984 = vpop.f32.mrf.mxu0
        %v5985 = vadd.f32 %v4814, %v5984
        %5986 = vmatmul.f32.gmra.mxu0 %v758
        %v5987 = vpop.f32.mrf.mxu0
        %v5988 = vadd.f32 %v4817, %v5987
        %5989 = vmatmul.f32.gmra.mxu0 %v761
        %v5990 = vpop.f32.mrf.mxu0
        %v5991 = vadd.f32 %v4820, %v5990
        %5992 = vmatmul.f32.gmra.mxu0 %v764
        %v5993 = vpop.f32.mrf.mxu0
        %v5994 = vadd.f32 %v4823, %v5993
        %5995 = vmatmul.f32.gmra.mxu0 %v767
        %v5996 = vpop.f32.mrf.mxu0
        %v5997 = vadd.f32 %v4826, %v5996
        %5998 = vmatmul.f32.gmra.mxu0 %v770
        %v5999 = vpop.f32.mrf.mxu0
        %v6000 = vadd.f32 %v4829, %v5999
        %6001 = vmatmul.f32.gmra.mxu0 %v773
        %v6002 = vpop.f32.mrf.mxu0
        %v6003 = vadd.f32 %v4832, %v6002
        %6004 = vmatmul.f32.gmra.mxu0 %v776
        %v6005 = vpop.f32.mrf.mxu0
        %v6006 = vadd.f32 %v4835, %v6005
        %6007 = vmatmul.f32.gmra.mxu0 %v779
        %v6008 = vpop.f32.mrf.mxu0
        %v6009 = vadd.f32 %v4838, %v6008
        %6010 = vmatmul.f32.gmra.mxu0 %v782
        %v6011 = vpop.f32.mrf.mxu0
        %v6012 = vadd.f32 %v4841, %v6011
        %6013 = vmatmul.f32.gmra.mxu0 %v785
        %v6014 = vpop.f32.mrf.mxu0
        %v6015 = vadd.f32 %v4844, %v6014
        %6016 = vmatmul.f32.gmra.mxu0 %v788
        %v6017 = vpop.f32.mrf.mxu0
        %v6018 = vadd.f32 %v4847, %v6017
        %6019 = vmatmul.f32.gmra.mxu0 %v791
        %v6020 = vpop.f32.mrf.mxu0
        %v6021 = vadd.f32 %v4850, %v6020
        %6022 = vmatmul.f32.gmra.mxu0 %v794
        %v6023 = vpop.f32.mrf.mxu0
        %v6024 = vadd.f32 %v4853, %v6023
        %6025 = vmatmul.f32.gmra.mxu0 %v797
        %v6026 = vpop.f32.mrf.mxu0
        %v6027 = vadd.f32 %v4856, %v6026
        %6028 = vmatmul.f32.gmra.mxu0 %v800
        %v6029 = vpop.f32.mrf.mxu0
        %v6030 = vadd.f32 %v4859, %v6029
        %6031 = vmatmul.f32.gmra.mxu0 %v803
        %v6032 = vpop.f32.mrf.mxu0
        %v6033 = vadd.f32 %v4862, %v6032
        %6034 = vmatmul.f32.gmra.mxu0 %v806
        %v6035 = vpop.f32.mrf.mxu0
        %v6036 = vadd.f32 %v4865, %v6035
        %6037 = vmatmul.f32.gmra.mxu0 %v809
        %v6038 = vpop.f32.mrf.mxu0
        %v6039 = vadd.f32 %v4868, %v6038
        %6040 = vmatmul.f32.gmra.mxu0 %v812
        %v6041 = vpop.f32.mrf.mxu0
        %v6042 = vadd.f32 %v4871, %v6041
        %6043 = vmatmul.f32.gmra.mxu0 %v815
        %v6044 = vpop.f32.mrf.mxu0
        %v6045 = vadd.f32 %v4874, %v6044
        %6046 = vmatmul.f32.gmra.mxu0 %v818
        %v6047 = vpop.f32.mrf.mxu0
        %v6048 = vadd.f32 %v4877, %v6047
        %6049 = vmatmul.f32.gmra.mxu0 %v821
        %v6050 = vpop.f32.mrf.mxu0
        %v6051 = vadd.f32 %v4880, %v6050
        %6052 = vmatmul.f32.gmra.mxu0 %v824
        %v6053 = vpop.f32.mrf.mxu0
        %v6054 = vadd.f32 %v4883, %v6053
        %6055 = vmatmul.f32.gmra.mxu0 %v827
        %v6056 = vpop.f32.mrf.mxu0
        %v6057 = vadd.f32 %v4886, %v6056
        %6058 = vmatmul.f32.gmra.mxu0 %v830
        %v6059 = vpop.f32.mrf.mxu0
        %v6060 = vadd.f32 %v4889, %v6059
        %6061 = vmatmul.f32.gmra.mxu0 %v833
        %v6062 = vpop.f32.mrf.mxu0
        %v6063 = vadd.f32 %v4892, %v6062
        %6064 = vmatmul.f32.gmra.mxu0 %v836
        %v6065 = vpop.f32.mrf.mxu0
        %v6066 = vadd.f32 %v4895, %v6065
        %6067 = vmatmul.f32.gmra.mxu0 %v839
        %v6068 = vpop.f32.mrf.mxu0
        %v6069 = vadd.f32 %v4898, %v6068
        %6070 = vmatmul.f32.gmra.mxu0 %v842
        %v6071 = vpop.f32.mrf.mxu0
        %v6072 = vadd.f32 %v4901, %v6071
        %6073 = vmatmul.f32.gmra.mxu0 %v845
        %v6074 = vpop.f32.mrf.mxu0
        %v6075 = vadd.f32 %v4904, %v6074
        %6076 = vmatmul.f32.gmra.mxu0 %v848
        %v6077 = vpop.f32.mrf.mxu0
        %v6078 = vadd.f32 %v4907, %v6077
        %6079 = vmatmul.f32.gmra.mxu0 %v851
        %v6080 = vpop.f32.mrf.mxu0
        %v6081 = vadd.f32 %v4910, %v6080
        %6082 = vmatmul.f32.gmra.mxu0 %v854
        %v6083 = vpop.f32.mrf.mxu0
        %v6084 = vadd.f32 %v4913, %v6083
        %6085 = vmatmul.f32.gmra.mxu0 %v857
        %v6086 = vpop.f32.mrf.mxu0
        %v6087 = vadd.f32 %v4916, %v6086
        %6088 = vmatmul.f32.gmra.mxu0 %v860
        %v6089 = vpop.f32.mrf.mxu0
        %v6090 = vadd.f32 %v4919, %v6089
        %6091 = vmatmul.f32.gmra.mxu0 %v863
        %v6092 = vpop.f32.mrf.mxu0
        %v6093 = vadd.f32 %v4922, %v6092
        %6094 = vmatmul.f32.gmra.mxu0 %v866
        %v6095 = vpop.f32.mrf.mxu0
        %v6096 = vadd.f32 %v4925, %v6095
        %6097 = vmatmul.f32.gmra.mxu0 %v869
        %v6098 = vpop.f32.mrf.mxu0
        %v6099 = vadd.f32 %v4928, %v6098
        %6100 = vmatmul.f32.gmra.mxu0 %v872
        %v6101 = vpop.f32.mrf.mxu0
        %v6102 = vadd.f32 %v4931, %v6101
        %6103 = vmatmul.f32.gmra.mxu0 %v875
        %v6104 = vpop.f32.mrf.mxu0
        %v6105 = vadd.f32 %v4934, %v6104
        %6106 = vmatmul.f32.gmra.mxu0 %v878
        %v6107 = vpop.f32.mrf.mxu0
        %v6108 = vadd.f32 %v4937, %v6107
        %6109 = vmatmul.f32.gmra.mxu0 %v881
        %v6110 = vpop.f32.mrf.mxu0
        %v6111 = vadd.f32 %v4940, %v6110
        %6112 = vmatmul.f32.gmra.mxu0 %v884
        %v6113 = vpop.f32.mrf.mxu0
        %v6114 = vadd.f32 %v4943, %v6113
        %6115 = vmatmul.f32.gmra.mxu0 %v887
        %v6116 = vpop.f32.mrf.mxu0
        %v6117 = vadd.f32 %v4946, %v6116
        %6118 = vmatmul.f32.gmra.mxu0 %v890
        %v6119 = vpop.f32.mrf.mxu0
        %v6120 = vadd.f32 %v4949, %v6119
        %6121 = vmatmul.f32.gmra.mxu0 %v893
        %v6122 = vpop.f32.mrf.mxu0
        %v6123 = vadd.f32 %v4952, %v6122
        %6124 = vmatmul.f32.gmra.mxu0 %v896
        %v6125 = vpop.f32.mrf.mxu0
        %v6126 = vadd.f32 %v4955, %v6125
        %6127 = vmatmul.f32.gmra.mxu0 %v899
        %v6128 = vpop.f32.mrf.mxu0
        %v6129 = vadd.f32 %v4958, %v6128
        %6130 = vmatmul.f32.gmra.mxu0 %v902
        %v6131 = vpop.f32.mrf.mxu0
        %v6132 = vadd.f32 %v4961, %v6131
        %6133 = vmatmul.f32.gmra.mxu0 %v905
        %v6134 = vpop.f32.mrf.mxu0
        %v6135 = vadd.f32 %v4964, %v6134
        %6136 = vmatmul.f32.gmra.mxu0 %v908
        %v6137 = vpop.f32.mrf.mxu0
        %v6138 = vadd.f32 %v4967, %v6137
        %6139 = vmatmul.f32.gmra.mxu0 %v911
        %v6140 = vpop.f32.mrf.mxu0
        %v6141 = vadd.f32 %v4970, %v6140
        %6142 = vmatmul.f32.gmra.mxu0 %v914
        %v6143 = vpop.f32.mrf.mxu0
        %v6144 = vadd.f32 %v4973, %v6143
        %6145 = vmatmul.f32.gmra.mxu0 %v917
        %v6146 = vpop.f32.mrf.mxu0
        %v6147 = vadd.f32 %v4976, %v6146
        %6148 = vmatmul.f32.gmra.mxu0 %v920
        %v6149 = vpop.f32.mrf.mxu0
        %v6150 = vadd.f32 %v4979, %v6149
        %6151 = vmatmul.f32.gmra.mxu0 %v923
        %v6152 = vpop.f32.mrf.mxu0
        %v6153 = vadd.f32 %v4982, %v6152
        %6154 = vmatmul.f32.gmra.mxu0 %v926
        %v6155 = vpop.f32.mrf.mxu0
        %v6156 = vadd.f32 %v4985, %v6155
        %6157 = vmatmul.f32.gmra.mxu0 %v929
        %v6158 = vpop.f32.mrf.mxu0
        %v6159 = vadd.f32 %v4988, %v6158
        %6160 = vmatmul.f32.gmra.mxu0 %v932
        %v6161 = vpop.f32.mrf.mxu0
        %v6162 = vadd.f32 %v4991, %v6161
        %6163 = vmatmul.f32.gmra.mxu0 %v935
        %v6164 = vpop.f32.mrf.mxu0
        %v6165 = vadd.f32 %v4994, %v6164
        %6166 = vmatmul.f32.gmra.mxu0 %v938
        %v6167 = vpop.f32.mrf.mxu0
        %v6168 = vadd.f32 %v4997, %v6167
        %6169 = vmatmul.f32.gmra.mxu0 %v941
        %v6170 = vpop.f32.mrf.mxu0
        %v6171 = vadd.f32 %v5000, %v6170
        %6172 = vmatmul.f32.gmra.mxu0 %v944
        %v6173 = vpop.f32.mrf.mxu0
        %v6174 = vadd.f32 %v5003, %v6173
        %6175 = vmatmul.f32.gmra.mxu0 %v947
        %v6176 = vpop.f32.mrf.mxu0
        %v6177 = vadd.f32 %v5006, %v6176
        %6178 = vmatmul.f32.gmra.mxu0 %v950
        %v6179 = vpop.f32.mrf.mxu0
        %v6180 = vadd.f32 %v5009, %v6179
        %6181 = vmatmul.f32.gmra.mxu0 %v953
        %v6182 = vpop.f32.mrf.mxu0
        %v6183 = vadd.f32 %v5012, %v6182
        %6184 = vmatmul.f32.gmra.mxu0 %v956
        %v6185 = vpop.f32.mrf.mxu0
        %v6186 = vadd.f32 %v5015, %v6185
        %6187 = vmatmul.f32.gmra.mxu0 %v959
        %v6188 = vpop.f32.mrf.mxu0
        %v6189 = vadd.f32 %v5018, %v6188
        %6190 = vmatmul.f32.gmra.mxu0 %v962
        %v6191 = vpop.f32.mrf.mxu0
        %v6192 = vadd.f32 %v5021, %v6191
        %6193 = vmatmul.f32.gmra.mxu0 %v965
        %v6194 = vpop.f32.mrf.mxu0
        %v6195 = vadd.f32 %v5024, %v6194
        %6196 = vmatmul.f32.gmra.mxu0 %v968
        %v6197 = vpop.f32.mrf.mxu0
        %v6198 = vadd.f32 %v5027, %v6197
        %6199 = vmatmul.f32.gmra.mxu0 %v971
        %v6200 = vpop.f32.mrf.mxu0
        %v6201 = vadd.f32 %v5030, %v6200
        %6202 = vmatmul.f32.gmra.mxu0 %v974
        %v6203 = vpop.f32.mrf.mxu0
        %v6204 = vadd.f32 %v5033, %v6203
        %6205 = vmatmul.f32.gmra.mxu0 %v977
        %v6206 = vpop.f32.mrf.mxu0
        %v6207 = vadd.f32 %v5036, %v6206
        %6208 = vmatmul.f32.gmra.mxu0 %v980
        %v6209 = vpop.f32.mrf.mxu0
        %v6210 = vadd.f32 %v5039, %v6209
        %6211 = vmatmul.f32.gmra.mxu0 %v983
        %v6212 = vpop.f32.mrf.mxu0
        %v6213 = vadd.f32 %v5042, %v6212
        %6214 = vmatmul.f32.gmra.mxu0 %v986
        %v6215 = vpop.f32.mrf.mxu0
        %v6216 = vadd.f32 %v5045, %v6215
        %6217 = vmatmul.f32.gmra.mxu0 %v989
        %v6218 = vpop.f32.mrf.mxu0
        %v6219 = vadd.f32 %v5048, %v6218
        %6220 = vmatmul.f32.gmra.mxu0 %v992
        %v6221 = vpop.f32.mrf.mxu0
        %v6222 = vadd.f32 %v5051, %v6221
        %6223 = vmatmul.f32.gmra.mxu0 %v995
        %v6224 = vpop.f32.mrf.mxu0
        %v6225 = vadd.f32 %v5054, %v6224
        %6226 = vmatmul.f32.gmra.mxu0 %v998
        %v6227 = vpop.f32.mrf.mxu0
        %v6228 = vadd.f32 %v5057, %v6227
        %6229 = vmatmul.f32.gmra.mxu0 %v1001
        %v6230 = vpop.f32.mrf.mxu0
        %v6231 = vadd.f32 %v5060, %v6230
        %6232 = vmatmul.f32.gmra.mxu0 %v1004
        %v6233 = vpop.f32.mrf.mxu0
        %v6234 = vadd.f32 %v5063, %v6233
        %6235 = vmatmul.f32.gmra.mxu0 %v1007
        %v6236 = vpop.f32.mrf.mxu0
        %v6237 = vadd.f32 %v5066, %v6236
        %6238 = vmatmul.f32.gmra.mxu0 %v1010
        %v6239 = vpop.f32.mrf.mxu0
        %v6240 = vadd.f32 %v5069, %v6239
        %6241 = vmatmul.f32.gmra.mxu0 %v1013
        %v6242 = vpop.f32.mrf.mxu0
        %v6243 = vadd.f32 %v5072, %v6242
        %6244 = vmatmul.f32.gmra.mxu0 %v1016
        %v6245 = vpop.f32.mrf.mxu0
        %v6246 = vadd.f32 %v5075, %v6245
        %6247 = vmatmul.f32.gmra.mxu0 %v1019
        %v6248 = vpop.f32.mrf.mxu0
        %v6249 = vadd.f32 %v5078, %v6248
        %6250 = vmatmul.f32.gmra.mxu0 %v1022
        %v6251 = vpop.f32.mrf.mxu0
        %v6252 = vadd.f32 %v5081, %v6251
        %6253 = vmatmul.f32.gmra.mxu0 %v1025
        %v6254 = vpop.f32.mrf.mxu0
        %v6255 = vadd.f32 %v5084, %v6254
        %6256 = vdwg.mxu0
        %v6257 = vld [vmem:[%s9] sm:$0x1]
        %v6259 = vperm.slane %v6257, 0
        %v6261 = vadd.f32 %v5490, %v6259
        %v6262 = vadd.f32 %v5493, %v6259
        %v6263 = vadd.f32 %v5496, %v6259
        %v6264 = vadd.f32 %v5499, %v6259
        %v6265 = vadd.f32 %v5502, %v6259
        %v6266 = vadd.f32 %v5505, %v6259
        %v6267 = vadd.f32 %v5508, %v6259
        %v6268 = vadd.f32 %v5511, %v6259
        %v6269 = vadd.f32 %v5514, %v6259
        %v6270 = vadd.f32 %v5517, %v6259
        %v6271 = vadd.f32 %v5520, %v6259
        %v6272 = vadd.f32 %v5523, %v6259
        %v6273 = vadd.f32 %v5526, %v6259
        %v6274 = vadd.f32 %v5529, %v6259
        %v6275 = vadd.f32 %v5532, %v6259
        %v6276 = vadd.f32 %v5535, %v6259
        %v6277 = vadd.f32 %v5538, %v6259
        %v6278 = vadd.f32 %v5541, %v6259
        %v6279 = vadd.f32 %v5544, %v6259
        %v6280 = vadd.f32 %v5547, %v6259
        %v6281 = vadd.f32 %v5550, %v6259
        %v6282 = vadd.f32 %v5553, %v6259
        %v6283 = vadd.f32 %v5556, %v6259
        %v6284 = vadd.f32 %v5559, %v6259
        %v6285 = vadd.f32 %v5562, %v6259
        %v6286 = vadd.f32 %v5565, %v6259
        %v6287 = vadd.f32 %v5568, %v6259
        %v6288 = vadd.f32 %v5571, %v6259
        %v6289 = vadd.f32 %v5574, %v6259
        %v6290 = vadd.f32 %v5577, %v6259
        %v6291 = vadd.f32 %v5580, %v6259
        %v6292 = vadd.f32 %v5583, %v6259
        %v6293 = vadd.f32 %v5586, %v6259
        %v6294 = vadd.f32 %v5589, %v6259
        %v6295 = vadd.f32 %v5592, %v6259
        %v6296 = vadd.f32 %v5595, %v6259
        %v6297 = vadd.f32 %v5598, %v6259
        %v6298 = vadd.f32 %v5601, %v6259
        %v6299 = vadd.f32 %v5604, %v6259
        %v6300 = vadd.f32 %v5607, %v6259
        %v6301 = vadd.f32 %v5610, %v6259
        %v6302 = vadd.f32 %v5613, %v6259
        %v6303 = vadd.f32 %v5616, %v6259
        %v6304 = vadd.f32 %v5619, %v6259
        %v6305 = vadd.f32 %v5622, %v6259
        %v6306 = vadd.f32 %v5625, %v6259
        %v6307 = vadd.f32 %v5628, %v6259
        %v6308 = vadd.f32 %v5631, %v6259
        %v6309 = vadd.f32 %v5634, %v6259
        %v6310 = vadd.f32 %v5637, %v6259
        %v6311 = vadd.f32 %v5640, %v6259
        %v6312 = vadd.f32 %v5643, %v6259
        %v6313 = vadd.f32 %v5646, %v6259
        %v6314 = vadd.f32 %v5649, %v6259
        %v6315 = vadd.f32 %v5652, %v6259
        %v6316 = vadd.f32 %v5655, %v6259
        %v6317 = vadd.f32 %v5658, %v6259
        %v6318 = vadd.f32 %v5661, %v6259
        %v6319 = vadd.f32 %v5664, %v6259
        %v6320 = vadd.f32 %v5667, %v6259
        %v6321 = vadd.f32 %v5670, %v6259
        %v6322 = vadd.f32 %v5673, %v6259
        %v6323 = vadd.f32 %v5676, %v6259
        %v6324 = vadd.f32 %v5679, %v6259
        %v6325 = vadd.f32 %v5682, %v6259
        %v6326 = vadd.f32 %v5685, %v6259
        %v6327 = vadd.f32 %v5688, %v6259
        %v6328 = vadd.f32 %v5691, %v6259
        %v6329 = vadd.f32 %v5694, %v6259
        %v6330 = vadd.f32 %v5697, %v6259
        %v6331 = vadd.f32 %v5700, %v6259
        %v6332 = vadd.f32 %v5703, %v6259
        %v6333 = vadd.f32 %v5706, %v6259
        %v6334 = vadd.f32 %v5709, %v6259
        %v6335 = vadd.f32 %v5712, %v6259
        %v6336 = vadd.f32 %v5715, %v6259
        %v6337 = vadd.f32 %v5718, %v6259
        %v6338 = vadd.f32 %v5721, %v6259
        %v6339 = vadd.f32 %v5724, %v6259
        %v6340 = vadd.f32 %v5727, %v6259
        %v6341 = vadd.f32 %v5730, %v6259
        %v6342 = vadd.f32 %v5733, %v6259
        %v6343 = vadd.f32 %v5736, %v6259
        %v6344 = vadd.f32 %v5739, %v6259
        %v6345 = vadd.f32 %v5742, %v6259
        %v6346 = vadd.f32 %v5745, %v6259
        %v6347 = vadd.f32 %v5748, %v6259
        %v6348 = vadd.f32 %v5751, %v6259
        %v6349 = vadd.f32 %v5754, %v6259
        %v6350 = vadd.f32 %v5757, %v6259
        %v6351 = vadd.f32 %v5760, %v6259
        %v6352 = vadd.f32 %v5763, %v6259
        %v6353 = vadd.f32 %v5766, %v6259
        %v6354 = vadd.f32 %v5769, %v6259
        %v6355 = vadd.f32 %v5772, %v6259
        %v6356 = vadd.f32 %v5775, %v6259
        %v6357 = vadd.f32 %v5778, %v6259
        %v6358 = vadd.f32 %v5781, %v6259
        %v6359 = vadd.f32 %v5784, %v6259
        %v6360 = vadd.f32 %v5787, %v6259
        %v6361 = vadd.f32 %v5790, %v6259
        %v6362 = vadd.f32 %v5793, %v6259
        %v6363 = vadd.f32 %v5796, %v6259
        %v6364 = vadd.f32 %v5799, %v6259
        %v6365 = vadd.f32 %v5802, %v6259
        %v6366 = vadd.f32 %v5805, %v6259
        %v6367 = vadd.f32 %v5808, %v6259
        %v6368 = vadd.f32 %v5811, %v6259
        %v6369 = vadd.f32 %v5814, %v6259
        %v6370 = vadd.f32 %v5817, %v6259
        %v6371 = vadd.f32 %v5820, %v6259
        %v6372 = vadd.f32 %v5823, %v6259
        %v6373 = vadd.f32 %v5826, %v6259
        %v6374 = vadd.f32 %v5829, %v6259
        %v6375 = vadd.f32 %v5832, %v6259
        %v6376 = vadd.f32 %v5835, %v6259
        %v6377 = vadd.f32 %v5838, %v6259
        %v6378 = vadd.f32 %v5841, %v6259
        %v6379 = vadd.f32 %v5844, %v6259
        %v6380 = vadd.f32 %v5847, %v6259
        %v6381 = vadd.f32 %v5850, %v6259
        %v6382 = vadd.f32 %v5853, %v6259
        %v6383 = vadd.f32 %v5856, %v6259
        %v6384 = vadd.f32 %v5859, %v6259
        %v6385 = vadd.f32 %v5862, %v6259
        %v6386 = vadd.f32 %v5865, %v6259
        %v6387 = vadd.f32 %v5868, %v6259
        %v6388 = vadd.f32 %v5871, %v6259
        %v6389 = vadd.f32 %v5874, %v6259
        %v6390 = vadd.f32 %v5877, %v6259
        %v6391 = vadd.f32 %v5880, %v6259
        %v6392 = vadd.f32 %v5883, %v6259
        %v6393 = vadd.f32 %v5886, %v6259
        %v6394 = vadd.f32 %v5889, %v6259
        %v6395 = vadd.f32 %v5892, %v6259
        %v6396 = vadd.f32 %v5895, %v6259
        %v6397 = vadd.f32 %v5898, %v6259
        %v6398 = vadd.f32 %v5901, %v6259
        %v6399 = vadd.f32 %v5904, %v6259
        %v6400 = vadd.f32 %v5907, %v6259
        %v6401 = vadd.f32 %v5910, %v6259
        %v6402 = vadd.f32 %v5913, %v6259
        %v6403 = vadd.f32 %v5916, %v6259
        %v6404 = vadd.f32 %v5919, %v6259
        %v6405 = vadd.f32 %v5922, %v6259
        %v6406 = vadd.f32 %v5925, %v6259
        %v6407 = vadd.f32 %v5928, %v6259
        %v6408 = vadd.f32 %v5931, %v6259
        %v6409 = vadd.f32 %v5934, %v6259
        %v6410 = vadd.f32 %v5937, %v6259
        %v6411 = vadd.f32 %v5940, %v6259
        %v6412 = vadd.f32 %v5943, %v6259
        %v6413 = vadd.f32 %v5946, %v6259
        %v6414 = vadd.f32 %v5949, %v6259
        %v6415 = vadd.f32 %v5952, %v6259
        %v6416 = vadd.f32 %v5955, %v6259
        %v6417 = vadd.f32 %v5958, %v6259
        %v6418 = vadd.f32 %v5961, %v6259
        %v6419 = vadd.f32 %v5964, %v6259
        %v6420 = vadd.f32 %v5967, %v6259
        %v6421 = vadd.f32 %v5970, %v6259
        %v6422 = vadd.f32 %v5973, %v6259
        %v6423 = vadd.f32 %v5976, %v6259
        %v6424 = vadd.f32 %v5979, %v6259
        %v6425 = vadd.f32 %v5982, %v6259
        %v6426 = vadd.f32 %v5985, %v6259
        %v6427 = vadd.f32 %v5988, %v6259
        %v6428 = vadd.f32 %v5991, %v6259
        %v6429 = vadd.f32 %v5994, %v6259
        %v6430 = vadd.f32 %v5997, %v6259
        %v6431 = vadd.f32 %v6000, %v6259
        %v6432 = vadd.f32 %v6003, %v6259
        %v6433 = vadd.f32 %v6006, %v6259
        %v6434 = vadd.f32 %v6009, %v6259
        %v6435 = vadd.f32 %v6012, %v6259
        %v6436 = vadd.f32 %v6015, %v6259
        %v6437 = vadd.f32 %v6018, %v6259
        %v6438 = vadd.f32 %v6021, %v6259
        %v6439 = vadd.f32 %v6024, %v6259
        %v6440 = vadd.f32 %v6027, %v6259
        %v6441 = vadd.f32 %v6030, %v6259
        %v6442 = vadd.f32 %v6033, %v6259
        %v6443 = vadd.f32 %v6036, %v6259
        %v6444 = vadd.f32 %v6039, %v6259
        %v6445 = vadd.f32 %v6042, %v6259
        %v6446 = vadd.f32 %v6045, %v6259
        %v6447 = vadd.f32 %v6048, %v6259
        %v6448 = vadd.f32 %v6051, %v6259
        %v6449 = vadd.f32 %v6054, %v6259
        %v6450 = vadd.f32 %v6057, %v6259
        %v6451 = vadd.f32 %v6060, %v6259
        %v6452 = vadd.f32 %v6063, %v6259
        %v6453 = vadd.f32 %v6066, %v6259
        %v6454 = vadd.f32 %v6069, %v6259
        %v6455 = vadd.f32 %v6072, %v6259
        %v6456 = vadd.f32 %v6075, %v6259
        %v6457 = vadd.f32 %v6078, %v6259
        %v6458 = vadd.f32 %v6081, %v6259
        %v6459 = vadd.f32 %v6084, %v6259
        %v6460 = vadd.f32 %v6087, %v6259
        %v6461 = vadd.f32 %v6090, %v6259
        %v6462 = vadd.f32 %v6093, %v6259
        %v6463 = vadd.f32 %v6096, %v6259
        %v6464 = vadd.f32 %v6099, %v6259
        %v6465 = vadd.f32 %v6102, %v6259
        %v6466 = vadd.f32 %v6105, %v6259
        %v6467 = vadd.f32 %v6108, %v6259
        %v6468 = vadd.f32 %v6111, %v6259
        %v6469 = vadd.f32 %v6114, %v6259
        %v6470 = vadd.f32 %v6117, %v6259
        %v6471 = vadd.f32 %v6120, %v6259
        %v6472 = vadd.f32 %v6123, %v6259
        %v6473 = vadd.f32 %v6126, %v6259
        %v6474 = vadd.f32 %v6129, %v6259
        %v6475 = vadd.f32 %v6132, %v6259
        %v6476 = vadd.f32 %v6135, %v6259
        %v6477 = vadd.f32 %v6138, %v6259
        %v6478 = vadd.f32 %v6141, %v6259
        %v6479 = vadd.f32 %v6144, %v6259
        %v6480 = vadd.f32 %v6147, %v6259
        %v6481 = vadd.f32 %v6150, %v6259
        %v6482 = vadd.f32 %v6153, %v6259
        %v6483 = vadd.f32 %v6156, %v6259
        %v6484 = vadd.f32 %v6159, %v6259
        %v6485 = vadd.f32 %v6162, %v6259
        %v6486 = vadd.f32 %v6165, %v6259
        %v6487 = vadd.f32 %v6168, %v6259
        %v6488 = vadd.f32 %v6171, %v6259
        %v6489 = vadd.f32 %v6174, %v6259
        %v6490 = vadd.f32 %v6177, %v6259
        %v6491 = vadd.f32 %v6180, %v6259
        %v6492 = vadd.f32 %v6183, %v6259
        %v6493 = vadd.f32 %v6186, %v6259
        %v6494 = vadd.f32 %v6189, %v6259
        %v6495 = vadd.f32 %v6192, %v6259
        %v6496 = vadd.f32 %v6195, %v6259
        %v6497 = vadd.f32 %v6198, %v6259
        %v6498 = vadd.f32 %v6201, %v6259
        %v6499 = vadd.f32 %v6204, %v6259
        %v6500 = vadd.f32 %v6207, %v6259
        %v6501 = vadd.f32 %v6210, %v6259
        %v6502 = vadd.f32 %v6213, %v6259
        %v6503 = vadd.f32 %v6216, %v6259
        %v6504 = vadd.f32 %v6219, %v6259
        %v6505 = vadd.f32 %v6222, %v6259
        %v6506 = vadd.f32 %v6225, %v6259
        %v6507 = vadd.f32 %v6228, %v6259
        %v6508 = vadd.f32 %v6231, %v6259
        %v6509 = vadd.f32 %v6234, %v6259
        %v6510 = vadd.f32 %v6237, %v6259
        %v6511 = vadd.f32 %v6240, %v6259
        %v6512 = vadd.f32 %v6243, %v6259
        %v6513 = vadd.f32 %v6246, %v6259
        %v6514 = vadd.f32 %v6249, %v6259
        %v6515 = vadd.f32 %v6252, %v6259
        %v6516 = vadd.f32 %v6255, %v6259
        %vm6517 = vcmp.gt.f32.partialorder %v6261, 0.0
        %vm6518 = vcmp.gt.f32.partialorder %v6262, 0.0
        %vm6519 = vcmp.gt.f32.partialorder %v6263, 0.0
        %vm6520 = vcmp.gt.f32.partialorder %v6264, 0.0
        %vm6521 = vcmp.gt.f32.partialorder %v6265, 0.0
        %vm6522 = vcmp.gt.f32.partialorder %v6266, 0.0
        %vm6523 = vcmp.gt.f32.partialorder %v6267, 0.0
        %vm6524 = vcmp.gt.f32.partialorder %v6268, 0.0
        %vm6525 = vcmp.gt.f32.partialorder %v6269, 0.0
        %vm6526 = vcmp.gt.f32.partialorder %v6270, 0.0
        %vm6527 = vcmp.gt.f32.partialorder %v6271, 0.0
        %vm6528 = vcmp.gt.f32.partialorder %v6272, 0.0
        %vm6529 = vcmp.gt.f32.partialorder %v6273, 0.0
        %vm6530 = vcmp.gt.f32.partialorder %v6274, 0.0
        %vm6531 = vcmp.gt.f32.partialorder %v6275, 0.0
        %vm6532 = vcmp.gt.f32.partialorder %v6276, 0.0
        %vm6533 = vcmp.gt.f32.partialorder %v6277, 0.0
        %vm6534 = vcmp.gt.f32.partialorder %v6278, 0.0
        %vm6535 = vcmp.gt.f32.partialorder %v6279, 0.0
        %vm6536 = vcmp.gt.f32.partialorder %v6280, 0.0
        %vm6537 = vcmp.gt.f32.partialorder %v6281, 0.0
        %vm6538 = vcmp.gt.f32.partialorder %v6282, 0.0
        %vm6539 = vcmp.gt.f32.partialorder %v6283, 0.0
        %vm6540 = vcmp.gt.f32.partialorder %v6284, 0.0
        %vm6541 = vcmp.gt.f32.partialorder %v6285, 0.0
        %vm6542 = vcmp.gt.f32.partialorder %v6286, 0.0
        %vm6543 = vcmp.gt.f32.partialorder %v6287, 0.0
        %vm6544 = vcmp.gt.f32.partialorder %v6288, 0.0
        %vm6545 = vcmp.gt.f32.partialorder %v6289, 0.0
        %vm6546 = vcmp.gt.f32.partialorder %v6290, 0.0
        %vm6547 = vcmp.gt.f32.partialorder %v6291, 0.0
        %vm6548 = vcmp.gt.f32.partialorder %v6292, 0.0
        %vm6549 = vcmp.gt.f32.partialorder %v6293, 0.0
        %vm6550 = vcmp.gt.f32.partialorder %v6294, 0.0
        %vm6551 = vcmp.gt.f32.partialorder %v6295, 0.0
        %vm6552 = vcmp.gt.f32.partialorder %v6296, 0.0
        %vm6553 = vcmp.gt.f32.partialorder %v6297, 0.0
        %vm6554 = vcmp.gt.f32.partialorder %v6298, 0.0
        %vm6555 = vcmp.gt.f32.partialorder %v6299, 0.0
        %vm6556 = vcmp.gt.f32.partialorder %v6300, 0.0
        %vm6557 = vcmp.gt.f32.partialorder %v6301, 0.0
        %vm6558 = vcmp.gt.f32.partialorder %v6302, 0.0
        %vm6559 = vcmp.gt.f32.partialorder %v6303, 0.0
        %vm6560 = vcmp.gt.f32.partialorder %v6304, 0.0
        %vm6561 = vcmp.gt.f32.partialorder %v6305, 0.0
        %vm6562 = vcmp.gt.f32.partialorder %v6306, 0.0
        %vm6563 = vcmp.gt.f32.partialorder %v6307, 0.0
        %vm6564 = vcmp.gt.f32.partialorder %v6308, 0.0
        %vm6565 = vcmp.gt.f32.partialorder %v6309, 0.0
        %vm6566 = vcmp.gt.f32.partialorder %v6310, 0.0
        %vm6567 = vcmp.gt.f32.partialorder %v6311, 0.0
        %vm6568 = vcmp.gt.f32.partialorder %v6312, 0.0
        %vm6569 = vcmp.gt.f32.partialorder %v6313, 0.0
        %vm6570 = vcmp.gt.f32.partialorder %v6314, 0.0
        %vm6571 = vcmp.gt.f32.partialorder %v6315, 0.0
        %vm6572 = vcmp.gt.f32.partialorder %v6316, 0.0
        %vm6573 = vcmp.gt.f32.partialorder %v6317, 0.0
        %vm6574 = vcmp.gt.f32.partialorder %v6318, 0.0
        %vm6575 = vcmp.gt.f32.partialorder %v6319, 0.0
        %vm6576 = vcmp.gt.f32.partialorder %v6320, 0.0
        %vm6577 = vcmp.gt.f32.partialorder %v6321, 0.0
        %vm6578 = vcmp.gt.f32.partialorder %v6322, 0.0
        %vm6579 = vcmp.gt.f32.partialorder %v6323, 0.0
        %vm6580 = vcmp.gt.f32.partialorder %v6324, 0.0
        %vm6581 = vcmp.gt.f32.partialorder %v6325, 0.0
        %vm6582 = vcmp.gt.f32.partialorder %v6326, 0.0
        %vm6583 = vcmp.gt.f32.partialorder %v6327, 0.0
        %vm6584 = vcmp.gt.f32.partialorder %v6328, 0.0
        %vm6585 = vcmp.gt.f32.partialorder %v6329, 0.0
        %vm6586 = vcmp.gt.f32.partialorder %v6330, 0.0
        %vm6587 = vcmp.gt.f32.partialorder %v6331, 0.0
        %vm6588 = vcmp.gt.f32.partialorder %v6332, 0.0
        %vm6589 = vcmp.gt.f32.partialorder %v6333, 0.0
        %vm6590 = vcmp.gt.f32.partialorder %v6334, 0.0
        %vm6591 = vcmp.gt.f32.partialorder %v6335, 0.0
        %vm6592 = vcmp.gt.f32.partialorder %v6336, 0.0
        %vm6593 = vcmp.gt.f32.partialorder %v6337, 0.0
        %vm6594 = vcmp.gt.f32.partialorder %v6338, 0.0
        %vm6595 = vcmp.gt.f32.partialorder %v6339, 0.0
        %vm6596 = vcmp.gt.f32.partialorder %v6340, 0.0
        %vm6597 = vcmp.gt.f32.partialorder %v6341, 0.0
        %vm6598 = vcmp.gt.f32.partialorder %v6342, 0.0
        %vm6599 = vcmp.gt.f32.partialorder %v6343, 0.0
        %vm6600 = vcmp.gt.f32.partialorder %v6344, 0.0
        %vm6601 = vcmp.gt.f32.partialorder %v6345, 0.0
        %vm6602 = vcmp.gt.f32.partialorder %v6346, 0.0
        %vm6603 = vcmp.gt.f32.partialorder %v6347, 0.0
        %vm6604 = vcmp.gt.f32.partialorder %v6348, 0.0
        %vm6605 = vcmp.gt.f32.partialorder %v6349, 0.0
        %vm6606 = vcmp.gt.f32.partialorder %v6350, 0.0
        %vm6607 = vcmp.gt.f32.partialorder %v6351, 0.0
        %vm6608 = vcmp.gt.f32.partialorder %v6352, 0.0
        %vm6609 = vcmp.gt.f32.partialorder %v6353, 0.0
        %vm6610 = vcmp.gt.f32.partialorder %v6354, 0.0
        %vm6611 = vcmp.gt.f32.partialorder %v6355, 0.0
        %vm6612 = vcmp.gt.f32.partialorder %v6356, 0.0
        %vm6613 = vcmp.gt.f32.partialorder %v6357, 0.0
        %vm6614 = vcmp.gt.f32.partialorder %v6358, 0.0
        %vm6615 = vcmp.gt.f32.partialorder %v6359, 0.0
        %vm6616 = vcmp.gt.f32.partialorder %v6360, 0.0
        %vm6617 = vcmp.gt.f32.partialorder %v6361, 0.0
        %vm6618 = vcmp.gt.f32.partialorder %v6362, 0.0
        %vm6619 = vcmp.gt.f32.partialorder %v6363, 0.0
        %vm6620 = vcmp.gt.f32.partialorder %v6364, 0.0
        %vm6621 = vcmp.gt.f32.partialorder %v6365, 0.0
        %vm6622 = vcmp.gt.f32.partialorder %v6366, 0.0
        %vm6623 = vcmp.gt.f32.partialorder %v6367, 0.0
        %vm6624 = vcmp.gt.f32.partialorder %v6368, 0.0
        %vm6625 = vcmp.gt.f32.partialorder %v6369, 0.0
        %vm6626 = vcmp.gt.f32.partialorder %v6370, 0.0
        %vm6627 = vcmp.gt.f32.partialorder %v6371, 0.0
        %vm6628 = vcmp.gt.f32.partialorder %v6372, 0.0
        %vm6629 = vcmp.gt.f32.partialorder %v6373, 0.0
        %vm6630 = vcmp.gt.f32.partialorder %v6374, 0.0
        %vm6631 = vcmp.gt.f32.partialorder %v6375, 0.0
        %vm6632 = vcmp.gt.f32.partialorder %v6376, 0.0
        %vm6633 = vcmp.gt.f32.partialorder %v6377, 0.0
        %vm6634 = vcmp.gt.f32.partialorder %v6378, 0.0
        %vm6635 = vcmp.gt.f32.partialorder %v6379, 0.0
        %vm6636 = vcmp.gt.f32.partialorder %v6380, 0.0
        %vm6637 = vcmp.gt.f32.partialorder %v6381, 0.0
        %vm6638 = vcmp.gt.f32.partialorder %v6382, 0.0
        %vm6639 = vcmp.gt.f32.partialorder %v6383, 0.0
        %vm6640 = vcmp.gt.f32.partialorder %v6384, 0.0
        %vm6641 = vcmp.gt.f32.partialorder %v6385, 0.0
        %vm6642 = vcmp.gt.f32.partialorder %v6386, 0.0
        %vm6643 = vcmp.gt.f32.partialorder %v6387, 0.0
        %vm6644 = vcmp.gt.f32.partialorder %v6388, 0.0
        %vm6645 = vcmp.gt.f32.partialorder %v6389, 0.0
        %vm6646 = vcmp.gt.f32.partialorder %v6390, 0.0
        %vm6647 = vcmp.gt.f32.partialorder %v6391, 0.0
        %vm6648 = vcmp.gt.f32.partialorder %v6392, 0.0
        %vm6649 = vcmp.gt.f32.partialorder %v6393, 0.0
        %vm6650 = vcmp.gt.f32.partialorder %v6394, 0.0
        %vm6651 = vcmp.gt.f32.partialorder %v6395, 0.0
        %vm6652 = vcmp.gt.f32.partialorder %v6396, 0.0
        %vm6653 = vcmp.gt.f32.partialorder %v6397, 0.0
        %vm6654 = vcmp.gt.f32.partialorder %v6398, 0.0
        %vm6655 = vcmp.gt.f32.partialorder %v6399, 0.0
        %vm6656 = vcmp.gt.f32.partialorder %v6400, 0.0
        %vm6657 = vcmp.gt.f32.partialorder %v6401, 0.0
        %vm6658 = vcmp.gt.f32.partialorder %v6402, 0.0
        %vm6659 = vcmp.gt.f32.partialorder %v6403, 0.0
        %vm6660 = vcmp.gt.f32.partialorder %v6404, 0.0
        %vm6661 = vcmp.gt.f32.partialorder %v6405, 0.0
        %vm6662 = vcmp.gt.f32.partialorder %v6406, 0.0
        %vm6663 = vcmp.gt.f32.partialorder %v6407, 0.0
        %vm6664 = vcmp.gt.f32.partialorder %v6408, 0.0
        %vm6665 = vcmp.gt.f32.partialorder %v6409, 0.0
        %vm6666 = vcmp.gt.f32.partialorder %v6410, 0.0
        %vm6667 = vcmp.gt.f32.partialorder %v6411, 0.0
        %vm6668 = vcmp.gt.f32.partialorder %v6412, 0.0
        %vm6669 = vcmp.gt.f32.partialorder %v6413, 0.0
        %vm6670 = vcmp.gt.f32.partialorder %v6414, 0.0
        %vm6671 = vcmp.gt.f32.partialorder %v6415, 0.0
        %vm6672 = vcmp.gt.f32.partialorder %v6416, 0.0
        %vm6673 = vcmp.gt.f32.partialorder %v6417, 0.0
        %vm6674 = vcmp.gt.f32.partialorder %v6418, 0.0
        %vm6675 = vcmp.gt.f32.partialorder %v6419, 0.0
        %vm6676 = vcmp.gt.f32.partialorder %v6420, 0.0
        %vm6677 = vcmp.gt.f32.partialorder %v6421, 0.0
        %vm6678 = vcmp.gt.f32.partialorder %v6422, 0.0
        %vm6679 = vcmp.gt.f32.partialorder %v6423, 0.0
        %vm6680 = vcmp.gt.f32.partialorder %v6424, 0.0
        %vm6681 = vcmp.gt.f32.partialorder %v6425, 0.0
        %vm6682 = vcmp.gt.f32.partialorder %v6426, 0.0
        %vm6683 = vcmp.gt.f32.partialorder %v6427, 0.0
        %vm6684 = vcmp.gt.f32.partialorder %v6428, 0.0
        %vm6685 = vcmp.gt.f32.partialorder %v6429, 0.0
        %vm6686 = vcmp.gt.f32.partialorder %v6430, 0.0
        %vm6687 = vcmp.gt.f32.partialorder %v6431, 0.0
        %vm6688 = vcmp.gt.f32.partialorder %v6432, 0.0
        %vm6689 = vcmp.gt.f32.partialorder %v6433, 0.0
        %vm6690 = vcmp.gt.f32.partialorder %v6434, 0.0
        %vm6691 = vcmp.gt.f32.partialorder %v6435, 0.0
        %vm6692 = vcmp.gt.f32.partialorder %v6436, 0.0
        %vm6693 = vcmp.gt.f32.partialorder %v6437, 0.0
        %vm6694 = vcmp.gt.f32.partialorder %v6438, 0.0
        %vm6695 = vcmp.gt.f32.partialorder %v6439, 0.0
        %vm6696 = vcmp.gt.f32.partialorder %v6440, 0.0
        %vm6697 = vcmp.gt.f32.partialorder %v6441, 0.0
        %vm6698 = vcmp.gt.f32.partialorder %v6442, 0.0
        %vm6699 = vcmp.gt.f32.partialorder %v6443, 0.0
        %vm6700 = vcmp.gt.f32.partialorder %v6444, 0.0
        %vm6701 = vcmp.gt.f32.partialorder %v6445, 0.0
        %vm6702 = vcmp.gt.f32.partialorder %v6446, 0.0
        %vm6703 = vcmp.gt.f32.partialorder %v6447, 0.0
        %vm6704 = vcmp.gt.f32.partialorder %v6448, 0.0
        %vm6705 = vcmp.gt.f32.partialorder %v6449, 0.0
        %vm6706 = vcmp.gt.f32.partialorder %v6450, 0.0
        %vm6707 = vcmp.gt.f32.partialorder %v6451, 0.0
        %vm6708 = vcmp.gt.f32.partialorder %v6452, 0.0
        %vm6709 = vcmp.gt.f32.partialorder %v6453, 0.0
        %vm6710 = vcmp.gt.f32.partialorder %v6454, 0.0
        %vm6711 = vcmp.gt.f32.partialorder %v6455, 0.0
        %vm6712 = vcmp.gt.f32.partialorder %v6456, 0.0
        %vm6713 = vcmp.gt.f32.partialorder %v6457, 0.0
        %vm6714 = vcmp.gt.f32.partialorder %v6458, 0.0
        %vm6715 = vcmp.gt.f32.partialorder %v6459, 0.0
        %vm6716 = vcmp.gt.f32.partialorder %v6460, 0.0
        %vm6717 = vcmp.gt.f32.partialorder %v6461, 0.0
        %vm6718 = vcmp.gt.f32.partialorder %v6462, 0.0
        %vm6719 = vcmp.gt.f32.partialorder %v6463, 0.0
        %vm6720 = vcmp.gt.f32.partialorder %v6464, 0.0
        %vm6721 = vcmp.gt.f32.partialorder %v6465, 0.0
        %vm6722 = vcmp.gt.f32.partialorder %v6466, 0.0
        %vm6723 = vcmp.gt.f32.partialorder %v6467, 0.0
        %vm6724 = vcmp.gt.f32.partialorder %v6468, 0.0
        %vm6725 = vcmp.gt.f32.partialorder %v6469, 0.0
        %vm6726 = vcmp.gt.f32.partialorder %v6470, 0.0
        %vm6727 = vcmp.gt.f32.partialorder %v6471, 0.0
        %vm6728 = vcmp.gt.f32.partialorder %v6472, 0.0
        %vm6729 = vcmp.gt.f32.partialorder %v6473, 0.0
        %vm6730 = vcmp.gt.f32.partialorder %v6474, 0.0
        %vm6731 = vcmp.gt.f32.partialorder %v6475, 0.0
        %vm6732 = vcmp.gt.f32.partialorder %v6476, 0.0
        %vm6733 = vcmp.gt.f32.partialorder %v6477, 0.0
        %vm6734 = vcmp.gt.f32.partialorder %v6478, 0.0
        %vm6735 = vcmp.gt.f32.partialorder %v6479, 0.0
        %vm6736 = vcmp.gt.f32.partialorder %v6480, 0.0
        %vm6737 = vcmp.gt.f32.partialorder %v6481, 0.0
        %vm6738 = vcmp.gt.f32.partialorder %v6482, 0.0
        %vm6739 = vcmp.gt.f32.partialorder %v6483, 0.0
        %vm6740 = vcmp.gt.f32.partialorder %v6484, 0.0
        %vm6741 = vcmp.gt.f32.partialorder %v6485, 0.0
        %vm6742 = vcmp.gt.f32.partialorder %v6486, 0.0
        %vm6743 = vcmp.gt.f32.partialorder %v6487, 0.0
        %vm6744 = vcmp.gt.f32.partialorder %v6488, 0.0
        %vm6745 = vcmp.gt.f32.partialorder %v6489, 0.0
        %vm6746 = vcmp.gt.f32.partialorder %v6490, 0.0
        %vm6747 = vcmp.gt.f32.partialorder %v6491, 0.0
        %vm6748 = vcmp.gt.f32.partialorder %v6492, 0.0
        %vm6749 = vcmp.gt.f32.partialorder %v6493, 0.0
        %vm6750 = vcmp.gt.f32.partialorder %v6494, 0.0
        %vm6751 = vcmp.gt.f32.partialorder %v6495, 0.0
        %vm6752 = vcmp.gt.f32.partialorder %v6496, 0.0
        %vm6753 = vcmp.gt.f32.partialorder %v6497, 0.0
        %vm6754 = vcmp.gt.f32.partialorder %v6498, 0.0
        %vm6755 = vcmp.gt.f32.partialorder %v6499, 0.0
        %vm6756 = vcmp.gt.f32.partialorder %v6500, 0.0
        %vm6757 = vcmp.gt.f32.partialorder %v6501, 0.0
        %vm6758 = vcmp.gt.f32.partialorder %v6502, 0.0
        %vm6759 = vcmp.gt.f32.partialorder %v6503, 0.0
        %vm6760 = vcmp.gt.f32.partialorder %v6504, 0.0
        %vm6761 = vcmp.gt.f32.partialorder %v6505, 0.0
        %vm6762 = vcmp.gt.f32.partialorder %v6506, 0.0
        %vm6763 = vcmp.gt.f32.partialorder %v6507, 0.0
        %vm6764 = vcmp.gt.f32.partialorder %v6508, 0.0
        %vm6765 = vcmp.gt.f32.partialorder %v6509, 0.0
        %vm6766 = vcmp.gt.f32.partialorder %v6510, 0.0
        %vm6767 = vcmp.gt.f32.partialorder %v6511, 0.0
        %vm6768 = vcmp.gt.f32.partialorder %v6512, 0.0
        %vm6769 = vcmp.gt.f32.partialorder %v6513, 0.0
        %vm6770 = vcmp.gt.f32.partialorder %v6514, 0.0
        %vm6771 = vcmp.gt.f32.partialorder %v6515, 0.0
        %vm6772 = vcmp.gt.f32.partialorder %v6516, 0.0
        %v6773 = vmul.f32 %v6261, 0.01
        %v6774 = vmul.f32 %v6262, 0.01
        %v6775 = vmul.f32 %v6263, 0.01
        %v6776 = vmul.f32 %v6264, 0.01
        %v6777 = vmul.f32 %v6265, 0.01
        %v6778 = vmul.f32 %v6266, 0.01
        %v6779 = vmul.f32 %v6267, 0.01
        %v6780 = vmul.f32 %v6268, 0.01
        %v6781 = vmul.f32 %v6269, 0.01
        %v6782 = vmul.f32 %v6270, 0.01
        %v6783 = vmul.f32 %v6271, 0.01
        %v6784 = vmul.f32 %v6272, 0.01
        %v6785 = vmul.f32 %v6273, 0.01
        %v6786 = vmul.f32 %v6274, 0.01
        %v6787 = vmul.f32 %v6275, 0.01
        %v6788 = vmul.f32 %v6276, 0.01
        %v6789 = vmul.f32 %v6277, 0.01
        %v6790 = vmul.f32 %v6278, 0.01
        %v6791 = vmul.f32 %v6279, 0.01
        %v6792 = vmul.f32 %v6280, 0.01
        %v6793 = vmul.f32 %v6281, 0.01
        %v6794 = vmul.f32 %v6282, 0.01
        %v6795 = vmul.f32 %v6283, 0.01
        %v6796 = vmul.f32 %v6284, 0.01
        %v6797 = vmul.f32 %v6285, 0.01
        %v6798 = vmul.f32 %v6286, 0.01
        %v6799 = vmul.f32 %v6287, 0.01
        %v6800 = vmul.f32 %v6288, 0.01
        %v6801 = vmul.f32 %v6289, 0.01
        %v6802 = vmul.f32 %v6290, 0.01
        %v6803 = vmul.f32 %v6291, 0.01
        %v6804 = vmul.f32 %v6292, 0.01
        %v6805 = vmul.f32 %v6293, 0.01
        %v6806 = vmul.f32 %v6294, 0.01
        %v6807 = vmul.f32 %v6295, 0.01
        %v6808 = vmul.f32 %v6296, 0.01
        %v6809 = vmul.f32 %v6297, 0.01
        %v6810 = vmul.f32 %v6298, 0.01
        %v6811 = vmul.f32 %v6299, 0.01
        %v6812 = vmul.f32 %v6300, 0.01
        %v6813 = vmul.f32 %v6301, 0.01
        %v6814 = vmul.f32 %v6302, 0.01
        %v6815 = vmul.f32 %v6303, 0.01
        %v6816 = vmul.f32 %v6304, 0.01
        %v6817 = vmul.f32 %v6305, 0.01
        %v6818 = vmul.f32 %v6306, 0.01
        %v6819 = vmul.f32 %v6307, 0.01
        %v6820 = vmul.f32 %v6308, 0.01
        %v6821 = vmul.f32 %v6309, 0.01
        %v6822 = vmul.f32 %v6310, 0.01
        %v6823 = vmul.f32 %v6311, 0.01
        %v6824 = vmul.f32 %v6312, 0.01
        %v6825 = vmul.f32 %v6313, 0.01
        %v6826 = vmul.f32 %v6314, 0.01
        %v6827 = vmul.f32 %v6315, 0.01
        %v6828 = vmul.f32 %v6316, 0.01
        %v6829 = vmul.f32 %v6317, 0.01
        %v6830 = vmul.f32 %v6318, 0.01
        %v6831 = vmul.f32 %v6319, 0.01
        %v6832 = vmul.f32 %v6320, 0.01
        %v6833 = vmul.f32 %v6321, 0.01
        %v6834 = vmul.f32 %v6322, 0.01
        %v6835 = vmul.f32 %v6323, 0.01
        %v6836 = vmul.f32 %v6324, 0.01
        %v6837 = vmul.f32 %v6325, 0.01
        %v6838 = vmul.f32 %v6326, 0.01
        %v6839 = vmul.f32 %v6327, 0.01
        %v6840 = vmul.f32 %v6328, 0.01
        %v6841 = vmul.f32 %v6329, 0.01
        %v6842 = vmul.f32 %v6330, 0.01
        %v6843 = vmul.f32 %v6331, 0.01
        %v6844 = vmul.f32 %v6332, 0.01
        %v6845 = vmul.f32 %v6333, 0.01
        %v6846 = vmul.f32 %v6334, 0.01
        %v6847 = vmul.f32 %v6335, 0.01
        %v6848 = vmul.f32 %v6336, 0.01
        %v6849 = vmul.f32 %v6337, 0.01
        %v6850 = vmul.f32 %v6338, 0.01
        %v6851 = vmul.f32 %v6339, 0.01
        %v6852 = vmul.f32 %v6340, 0.01
        %v6853 = vmul.f32 %v6341, 0.01
        %v6854 = vmul.f32 %v6342, 0.01
        %v6855 = vmul.f32 %v6343, 0.01
        %v6856 = vmul.f32 %v6344, 0.01
        %v6857 = vmul.f32 %v6345, 0.01
        %v6858 = vmul.f32 %v6346, 0.01
        %v6859 = vmul.f32 %v6347, 0.01
        %v6860 = vmul.f32 %v6348, 0.01
        %v6861 = vmul.f32 %v6349, 0.01
        %v6862 = vmul.f32 %v6350, 0.01
        %v6863 = vmul.f32 %v6351, 0.01
        %v6864 = vmul.f32 %v6352, 0.01
        %v6865 = vmul.f32 %v6353, 0.01
        %v6866 = vmul.f32 %v6354, 0.01
        %v6867 = vmul.f32 %v6355, 0.01
        %v6868 = vmul.f32 %v6356, 0.01
        %v6869 = vmul.f32 %v6357, 0.01
        %v6870 = vmul.f32 %v6358, 0.01
        %v6871 = vmul.f32 %v6359, 0.01
        %v6872 = vmul.f32 %v6360, 0.01
        %v6873 = vmul.f32 %v6361, 0.01
        %v6874 = vmul.f32 %v6362, 0.01
        %v6875 = vmul.f32 %v6363, 0.01
        %v6876 = vmul.f32 %v6364, 0.01
        %v6877 = vmul.f32 %v6365, 0.01
        %v6878 = vmul.f32 %v6366, 0.01
        %v6879 = vmul.f32 %v6367, 0.01
        %v6880 = vmul.f32 %v6368, 0.01
        %v6881 = vmul.f32 %v6369, 0.01
        %v6882 = vmul.f32 %v6370, 0.01
        %v6883 = vmul.f32 %v6371, 0.01
        %v6884 = vmul.f32 %v6372, 0.01
        %v6885 = vmul.f32 %v6373, 0.01
        %v6886 = vmul.f32 %v6374, 0.01
        %v6887 = vmul.f32 %v6375, 0.01
        %v6888 = vmul.f32 %v6376, 0.01
        %v6889 = vmul.f32 %v6377, 0.01
        %v6890 = vmul.f32 %v6378, 0.01
        %v6891 = vmul.f32 %v6379, 0.01
        %v6892 = vmul.f32 %v6380, 0.01
        %v6893 = vmul.f32 %v6381, 0.01
        %v6894 = vmul.f32 %v6382, 0.01
        %v6895 = vmul.f32 %v6383, 0.01
        %v6896 = vmul.f32 %v6384, 0.01
        %v6897 = vmul.f32 %v6385, 0.01
        %v6898 = vmul.f32 %v6386, 0.01
        %v6899 = vmul.f32 %v6387, 0.01
        %v6900 = vmul.f32 %v6388, 0.01
        %v6901 = vmul.f32 %v6389, 0.01
        %v6902 = vmul.f32 %v6390, 0.01
        %v6903 = vmul.f32 %v6391, 0.01
        %v6904 = vmul.f32 %v6392, 0.01
        %v6905 = vmul.f32 %v6393, 0.01
        %v6906 = vmul.f32 %v6394, 0.01
        %v6907 = vmul.f32 %v6395, 0.01
        %v6908 = vmul.f32 %v6396, 0.01
        %v6909 = vmul.f32 %v6397, 0.01
        %v6910 = vmul.f32 %v6398, 0.01
        %v6911 = vmul.f32 %v6399, 0.01
        %v6912 = vmul.f32 %v6400, 0.01
        %v6913 = vmul.f32 %v6401, 0.01
        %v6914 = vmul.f32 %v6402, 0.01
        %v6915 = vmul.f32 %v6403, 0.01
        %v6916 = vmul.f32 %v6404, 0.01
        %v6917 = vmul.f32 %v6405, 0.01
        %v6918 = vmul.f32 %v6406, 0.01
        %v6919 = vmul.f32 %v6407, 0.01
        %v6920 = vmul.f32 %v6408, 0.01
        %v6921 = vmul.f32 %v6409, 0.01
        %v6922 = vmul.f32 %v6410, 0.01
        %v6923 = vmul.f32 %v6411, 0.01
        %v6924 = vmul.f32 %v6412, 0.01
        %v6925 = vmul.f32 %v6413, 0.01
        %v6926 = vmul.f32 %v6414, 0.01
        %v6927 = vmul.f32 %v6415, 0.01
        %v6928 = vmul.f32 %v6416, 0.01
        %v6929 = vmul.f32 %v6417, 0.01
        %v6930 = vmul.f32 %v6418, 0.01
        %v6931 = vmul.f32 %v6419, 0.01
        %v6932 = vmul.f32 %v6420, 0.01
        %v6933 = vmul.f32 %v6421, 0.01
        %v6934 = vmul.f32 %v6422, 0.01
        %v6935 = vmul.f32 %v6423, 0.01
        %v6936 = vmul.f32 %v6424, 0.01
        %v6937 = vmul.f32 %v6425, 0.01
        %v6938 = vmul.f32 %v6426, 0.01
        %v6939 = vmul.f32 %v6427, 0.01
        %v6940 = vmul.f32 %v6428, 0.01
        %v6941 = vmul.f32 %v6429, 0.01
        %v6942 = vmul.f32 %v6430, 0.01
        %v6943 = vmul.f32 %v6431, 0.01
        %v6944 = vmul.f32 %v6432, 0.01
        %v6945 = vmul.f32 %v6433, 0.01
        %v6946 = vmul.f32 %v6434, 0.01
        %v6947 = vmul.f32 %v6435, 0.01
        %v6948 = vmul.f32 %v6436, 0.01
        %v6949 = vmul.f32 %v6437, 0.01
        %v6950 = vmul.f32 %v6438, 0.01
        %v6951 = vmul.f32 %v6439, 0.01
        %v6952 = vmul.f32 %v6440, 0.01
        %v6953 = vmul.f32 %v6441, 0.01
        %v6954 = vmul.f32 %v6442, 0.01
        %v6955 = vmul.f32 %v6443, 0.01
        %v6956 = vmul.f32 %v6444, 0.01
        %v6957 = vmul.f32 %v6445, 0.01
        %v6958 = vmul.f32 %v6446, 0.01
        %v6959 = vmul.f32 %v6447, 0.01
        %v6960 = vmul.f32 %v6448, 0.01
        %v6961 = vmul.f32 %v6449, 0.01
        %v6962 = vmul.f32 %v6450, 0.01
        %v6963 = vmul.f32 %v6451, 0.01
        %v6964 = vmul.f32 %v6452, 0.01
        %v6965 = vmul.f32 %v6453, 0.01
        %v6966 = vmul.f32 %v6454, 0.01
        %v6967 = vmul.f32 %v6455, 0.01
        %v6968 = vmul.f32 %v6456, 0.01
        %v6969 = vmul.f32 %v6457, 0.01
        %v6970 = vmul.f32 %v6458, 0.01
        %v6971 = vmul.f32 %v6459, 0.01
        %v6972 = vmul.f32 %v6460, 0.01
        %v6973 = vmul.f32 %v6461, 0.01
        %v6974 = vmul.f32 %v6462, 0.01
        %v6975 = vmul.f32 %v6463, 0.01
        %v6976 = vmul.f32 %v6464, 0.01
        %v6977 = vmul.f32 %v6465, 0.01
        %v6978 = vmul.f32 %v6466, 0.01
        %v6979 = vmul.f32 %v6467, 0.01
        %v6980 = vmul.f32 %v6468, 0.01
        %v6981 = vmul.f32 %v6469, 0.01
        %v6982 = vmul.f32 %v6470, 0.01
        %v6983 = vmul.f32 %v6471, 0.01
        %v6984 = vmul.f32 %v6472, 0.01
        %v6985 = vmul.f32 %v6473, 0.01
        %v6986 = vmul.f32 %v6474, 0.01
        %v6987 = vmul.f32 %v6475, 0.01
        %v6988 = vmul.f32 %v6476, 0.01
        %v6989 = vmul.f32 %v6477, 0.01
        %v6990 = vmul.f32 %v6478, 0.01
        %v6991 = vmul.f32 %v6479, 0.01
        %v6992 = vmul.f32 %v6480, 0.01
        %v6993 = vmul.f32 %v6481, 0.01
        %v6994 = vmul.f32 %v6482, 0.01
        %v6995 = vmul.f32 %v6483, 0.01
        %v6996 = vmul.f32 %v6484, 0.01
        %v6997 = vmul.f32 %v6485, 0.01
        %v6998 = vmul.f32 %v6486, 0.01
        %v6999 = vmul.f32 %v6487, 0.01
        %v7000 = vmul.f32 %v6488, 0.01
        %v7001 = vmul.f32 %v6489, 0.01
        %v7002 = vmul.f32 %v6490, 0.01
        %v7003 = vmul.f32 %v6491, 0.01
        %v7004 = vmul.f32 %v6492, 0.01
        %v7005 = vmul.f32 %v6493, 0.01
        %v7006 = vmul.f32 %v6494, 0.01
        %v7007 = vmul.f32 %v6495, 0.01
        %v7008 = vmul.f32 %v6496, 0.01
        %v7009 = vmul.f32 %v6497, 0.01
        %v7010 = vmul.f32 %v6498, 0.01
        %v7011 = vmul.f32 %v6499, 0.01
        %v7012 = vmul.f32 %v6500, 0.01
        %v7013 = vmul.f32 %v6501, 0.01
        %v7014 = vmul.f32 %v6502, 0.01
        %v7015 = vmul.f32 %v6503, 0.01
        %v7016 = vmul.f32 %v6504, 0.01
        %v7017 = vmul.f32 %v6505, 0.01
        %v7018 = vmul.f32 %v6506, 0.01
        %v7019 = vmul.f32 %v6507, 0.01
        %v7020 = vmul.f32 %v6508, 0.01
        %v7021 = vmul.f32 %v6509, 0.01
        %v7022 = vmul.f32 %v6510, 0.01
        %v7023 = vmul.f32 %v6511, 0.01
        %v7024 = vmul.f32 %v6512, 0.01
        %v7025 = vmul.f32 %v6513, 0.01
        %v7026 = vmul.f32 %v6514, 0.01
        %v7027 = vmul.f32 %v6515, 0.01
        %v7028 = vmul.f32 %v6516, 0.01
        %v7029 = vsel %vm6517, %v6261, %v6773
        %v7030 = vsel %vm6518, %v6262, %v6774
        %v7031 = vsel %vm6519, %v6263, %v6775
        %v7032 = vsel %vm6520, %v6264, %v6776
        %v7033 = vsel %vm6521, %v6265, %v6777
        %v7034 = vsel %vm6522, %v6266, %v6778
        %v7035 = vsel %vm6523, %v6267, %v6779
        %v7036 = vsel %vm6524, %v6268, %v6780
        %v7037 = vsel %vm6525, %v6269, %v6781
        %v7038 = vsel %vm6526, %v6270, %v6782
        %v7039 = vsel %vm6527, %v6271, %v6783
        %v7040 = vsel %vm6528, %v6272, %v6784
        %v7041 = vsel %vm6529, %v6273, %v6785
        %v7042 = vsel %vm6530, %v6274, %v6786
        %v7043 = vsel %vm6531, %v6275, %v6787
        %v7044 = vsel %vm6532, %v6276, %v6788
        %v7045 = vsel %vm6533, %v6277, %v6789
        %v7046 = vsel %vm6534, %v6278, %v6790
        %v7047 = vsel %vm6535, %v6279, %v6791
        %v7048 = vsel %vm6536, %v6280, %v6792
        %v7049 = vsel %vm6537, %v6281, %v6793
        %v7050 = vsel %vm6538, %v6282, %v6794
        %v7051 = vsel %vm6539, %v6283, %v6795
        %v7052 = vsel %vm6540, %v6284, %v6796
        %v7053 = vsel %vm6541, %v6285, %v6797
        %v7054 = vsel %vm6542, %v6286, %v6798
        %v7055 = vsel %vm6543, %v6287, %v6799
        %v7056 = vsel %vm6544, %v6288, %v6800
        %v7057 = vsel %vm6545, %v6289, %v6801
        %v7058 = vsel %vm6546, %v6290, %v6802
        %v7059 = vsel %vm6547, %v6291, %v6803
        %v7060 = vsel %vm6548, %v6292, %v6804
        %v7061 = vsel %vm6549, %v6293, %v6805
        %v7062 = vsel %vm6550, %v6294, %v6806
        %v7063 = vsel %vm6551, %v6295, %v6807
        %v7064 = vsel %vm6552, %v6296, %v6808
        %v7065 = vsel %vm6553, %v6297, %v6809
        %v7066 = vsel %vm6554, %v6298, %v6810
        %v7067 = vsel %vm6555, %v6299, %v6811
        %v7068 = vsel %vm6556, %v6300, %v6812
        %v7069 = vsel %vm6557, %v6301, %v6813
        %v7070 = vsel %vm6558, %v6302, %v6814
        %v7071 = vsel %vm6559, %v6303, %v6815
        %v7072 = vsel %vm6560, %v6304, %v6816
        %v7073 = vsel %vm6561, %v6305, %v6817
        %v7074 = vsel %vm6562, %v6306, %v6818
        %v7075 = vsel %vm6563, %v6307, %v6819
        %v7076 = vsel %vm6564, %v6308, %v6820
        %v7077 = vsel %vm6565, %v6309, %v6821
        %v7078 = vsel %vm6566, %v6310, %v6822
        %v7079 = vsel %vm6567, %v6311, %v6823
        %v7080 = vsel %vm6568, %v6312, %v6824
        %v7081 = vsel %vm6569, %v6313, %v6825
        %v7082 = vsel %vm6570, %v6314, %v6826
        %v7083 = vsel %vm6571, %v6315, %v6827
        %v7084 = vsel %vm6572, %v6316, %v6828
        %v7085 = vsel %vm6573, %v6317, %v6829
        %v7086 = vsel %vm6574, %v6318, %v6830
        %v7087 = vsel %vm6575, %v6319, %v6831
        %v7088 = vsel %vm6576, %v6320, %v6832
        %v7089 = vsel %vm6577, %v6321, %v6833
        %v7090 = vsel %vm6578, %v6322, %v6834
        %v7091 = vsel %vm6579, %v6323, %v6835
        %v7092 = vsel %vm6580, %v6324, %v6836
        %v7093 = vsel %vm6581, %v6325, %v6837
        %v7094 = vsel %vm6582, %v6326, %v6838
        %v7095 = vsel %vm6583, %v6327, %v6839
        %v7096 = vsel %vm6584, %v6328, %v6840
        %v7097 = vsel %vm6585, %v6329, %v6841
        %v7098 = vsel %vm6586, %v6330, %v6842
        %v7099 = vsel %vm6587, %v6331, %v6843
        %v7100 = vsel %vm6588, %v6332, %v6844
        %v7101 = vsel %vm6589, %v6333, %v6845
        %v7102 = vsel %vm6590, %v6334, %v6846
        %v7103 = vsel %vm6591, %v6335, %v6847
        %v7104 = vsel %vm6592, %v6336, %v6848
        %v7105 = vsel %vm6593, %v6337, %v6849
        %v7106 = vsel %vm6594, %v6338, %v6850
        %v7107 = vsel %vm6595, %v6339, %v6851
        %v7108 = vsel %vm6596, %v6340, %v6852
        %v7109 = vsel %vm6597, %v6341, %v6853
        %v7110 = vsel %vm6598, %v6342, %v6854
        %v7111 = vsel %vm6599, %v6343, %v6855
        %v7112 = vsel %vm6600, %v6344, %v6856
        %v7113 = vsel %vm6601, %v6345, %v6857
        %v7114 = vsel %vm6602, %v6346, %v6858
        %v7115 = vsel %vm6603, %v6347, %v6859
        %v7116 = vsel %vm6604, %v6348, %v6860
        %v7117 = vsel %vm6605, %v6349, %v6861
        %v7118 = vsel %vm6606, %v6350, %v6862
        %v7119 = vsel %vm6607, %v6351, %v6863
        %v7120 = vsel %vm6608, %v6352, %v6864
        %v7121 = vsel %vm6609, %v6353, %v6865
        %v7122 = vsel %vm6610, %v6354, %v6866
        %v7123 = vsel %vm6611, %v6355, %v6867
        %v7124 = vsel %vm6612, %v6356, %v6868
        %v7125 = vsel %vm6613, %v6357, %v6869
        %v7126 = vsel %vm6614, %v6358, %v6870
        %v7127 = vsel %vm6615, %v6359, %v6871
        %v7128 = vsel %vm6616, %v6360, %v6872
        %v7129 = vsel %vm6617, %v6361, %v6873
        %v7130 = vsel %vm6618, %v6362, %v6874
        %v7131 = vsel %vm6619, %v6363, %v6875
        %v7132 = vsel %vm6620, %v6364, %v6876
        %v7133 = vsel %vm6621, %v6365, %v6877
        %v7134 = vsel %vm6622, %v6366, %v6878
        %v7135 = vsel %vm6623, %v6367, %v6879
        %v7136 = vsel %vm6624, %v6368, %v6880
        %v7137 = vsel %vm6625, %v6369, %v6881
        %v7138 = vsel %vm6626, %v6370, %v6882
        %v7139 = vsel %vm6627, %v6371, %v6883
        %v7140 = vsel %vm6628, %v6372, %v6884
        %v7141 = vsel %vm6629, %v6373, %v6885
        %v7142 = vsel %vm6630, %v6374, %v6886
        %v7143 = vsel %vm6631, %v6375, %v6887
        %v7144 = vsel %vm6632, %v6376, %v6888
        %v7145 = vsel %vm6633, %v6377, %v6889
        %v7146 = vsel %vm6634, %v6378, %v6890
        %v7147 = vsel %vm6635, %v6379, %v6891
        %v7148 = vsel %vm6636, %v6380, %v6892
        %v7149 = vsel %vm6637, %v6381, %v6893
        %v7150 = vsel %vm6638, %v6382, %v6894
        %v7151 = vsel %vm6639, %v6383, %v6895
        %v7152 = vsel %vm6640, %v6384, %v6896
        %v7153 = vsel %vm6641, %v6385, %v6897
        %v7154 = vsel %vm6642, %v6386, %v6898
        %v7155 = vsel %vm6643, %v6387, %v6899
        %v7156 = vsel %vm6644, %v6388, %v6900
        %v7157 = vsel %vm6645, %v6389, %v6901
        %v7158 = vsel %vm6646, %v6390, %v6902
        %v7159 = vsel %vm6647, %v6391, %v6903
        %v7160 = vsel %vm6648, %v6392, %v6904
        %v7161 = vsel %vm6649, %v6393, %v6905
        %v7162 = vsel %vm6650, %v6394, %v6906
        %v7163 = vsel %vm6651, %v6395, %v6907
        %v7164 = vsel %vm6652, %v6396, %v6908
        %v7165 = vsel %vm6653, %v6397, %v6909
        %v7166 = vsel %vm6654, %v6398, %v6910
        %v7167 = vsel %vm6655, %v6399, %v6911
        %v7168 = vsel %vm6656, %v6400, %v6912
        %v7169 = vsel %vm6657, %v6401, %v6913
        %v7170 = vsel %vm6658, %v6402, %v6914
        %v7171 = vsel %vm6659, %v6403, %v6915
        %v7172 = vsel %vm6660, %v6404, %v6916
        %v7173 = vsel %vm6661, %v6405, %v6917
        %v7174 = vsel %vm6662, %v6406, %v6918
        %v7175 = vsel %vm6663, %v6407, %v6919
        %v7176 = vsel %vm6664, %v6408, %v6920
        %v7177 = vsel %vm6665, %v6409, %v6921
        %v7178 = vsel %vm6666, %v6410, %v6922
        %v7179 = vsel %vm6667, %v6411, %v6923
        %v7180 = vsel %vm6668, %v6412, %v6924
        %v7181 = vsel %vm6669, %v6413, %v6925
        %v7182 = vsel %vm6670, %v6414, %v6926
        %v7183 = vsel %vm6671, %v6415, %v6927
        %v7184 = vsel %vm6672, %v6416, %v6928
        %v7185 = vsel %vm6673, %v6417, %v6929
        %v7186 = vsel %vm6674, %v6418, %v6930
        %v7187 = vsel %vm6675, %v6419, %v6931
        %v7188 = vsel %vm6676, %v6420, %v6932
        %v7189 = vsel %vm6677, %v6421, %v6933
        %v7190 = vsel %vm6678, %v6422, %v6934
        %v7191 = vsel %vm6679, %v6423, %v6935
        %v7192 = vsel %vm6680, %v6424, %v6936
        %v7193 = vsel %vm6681, %v6425, %v6937
        %v7194 = vsel %vm6682, %v6426, %v6938
        %v7195 = vsel %vm6683, %v6427, %v6939
        %v7196 = vsel %vm6684, %v6428, %v6940
        %v7197 = vsel %vm6685, %v6429, %v6941
        %v7198 = vsel %vm6686, %v6430, %v6942
        %v7199 = vsel %vm6687, %v6431, %v6943
        %v7200 = vsel %vm6688, %v6432, %v6944
        %v7201 = vsel %vm6689, %v6433, %v6945
        %v7202 = vsel %vm6690, %v6434, %v6946
        %v7203 = vsel %vm6691, %v6435, %v6947
        %v7204 = vsel %vm6692, %v6436, %v6948
        %v7205 = vsel %vm6693, %v6437, %v6949
        %v7206 = vsel %vm6694, %v6438, %v6950
        %v7207 = vsel %vm6695, %v6439, %v6951
        %v7208 = vsel %vm6696, %v6440, %v6952
        %v7209 = vsel %vm6697, %v6441, %v6953
        %v7210 = vsel %vm6698, %v6442, %v6954
        %v7211 = vsel %vm6699, %v6443, %v6955
        %v7212 = vsel %vm6700, %v6444, %v6956
        %v7213 = vsel %vm6701, %v6445, %v6957
        %v7214 = vsel %vm6702, %v6446, %v6958
        %v7215 = vsel %vm6703, %v6447, %v6959
        %v7216 = vsel %vm6704, %v6448, %v6960
        %v7217 = vsel %vm6705, %v6449, %v6961
        %v7218 = vsel %vm6706, %v6450, %v6962
        %v7219 = vsel %vm6707, %v6451, %v6963
        %v7220 = vsel %vm6708, %v6452, %v6964
        %v7221 = vsel %vm6709, %v6453, %v6965
        %v7222 = vsel %vm6710, %v6454, %v6966
        %v7223 = vsel %vm6711, %v6455, %v6967
        %v7224 = vsel %vm6712, %v6456, %v6968
        %v7225 = vsel %vm6713, %v6457, %v6969
        %v7226 = vsel %vm6714, %v6458, %v6970
        %v7227 = vsel %vm6715, %v6459, %v6971
        %v7228 = vsel %vm6716, %v6460, %v6972
        %v7229 = vsel %vm6717, %v6461, %v6973
        %v7230 = vsel %vm6718, %v6462, %v6974
        %v7231 = vsel %vm6719, %v6463, %v6975
        %v7232 = vsel %vm6720, %v6464, %v6976
        %v7233 = vsel %vm6721, %v6465, %v6977
        %v7234 = vsel %vm6722, %v6466, %v6978
        %v7235 = vsel %vm6723, %v6467, %v6979
        %v7236 = vsel %vm6724, %v6468, %v6980
        %v7237 = vsel %vm6725, %v6469, %v6981
        %v7238 = vsel %vm6726, %v6470, %v6982
        %v7239 = vsel %vm6727, %v6471, %v6983
        %v7240 = vsel %vm6728, %v6472, %v6984
        %v7241 = vsel %vm6729, %v6473, %v6985
        %v7242 = vsel %vm6730, %v6474, %v6986
        %v7243 = vsel %vm6731, %v6475, %v6987
        %v7244 = vsel %vm6732, %v6476, %v6988
        %v7245 = vsel %vm6733, %v6477, %v6989
        %v7246 = vsel %vm6734, %v6478, %v6990
        %v7247 = vsel %vm6735, %v6479, %v6991
        %v7248 = vsel %vm6736, %v6480, %v6992
        %v7249 = vsel %vm6737, %v6481, %v6993
        %v7250 = vsel %vm6738, %v6482, %v6994
        %v7251 = vsel %vm6739, %v6483, %v6995
        %v7252 = vsel %vm6740, %v6484, %v6996
        %v7253 = vsel %vm6741, %v6485, %v6997
        %v7254 = vsel %vm6742, %v6486, %v6998
        %v7255 = vsel %vm6743, %v6487, %v6999
        %v7256 = vsel %vm6744, %v6488, %v7000
        %v7257 = vsel %vm6745, %v6489, %v7001
        %v7258 = vsel %vm6746, %v6490, %v7002
        %v7259 = vsel %vm6747, %v6491, %v7003
        %v7260 = vsel %vm6748, %v6492, %v7004
        %v7261 = vsel %vm6749, %v6493, %v7005
        %v7262 = vsel %vm6750, %v6494, %v7006
        %v7263 = vsel %vm6751, %v6495, %v7007
        %v7264 = vsel %vm6752, %v6496, %v7008
        %v7265 = vsel %vm6753, %v6497, %v7009
        %v7266 = vsel %vm6754, %v6498, %v7010
        %v7267 = vsel %vm6755, %v6499, %v7011
        %v7268 = vsel %vm6756, %v6500, %v7012
        %v7269 = vsel %vm6757, %v6501, %v7013
        %v7270 = vsel %vm6758, %v6502, %v7014
        %v7271 = vsel %vm6759, %v6503, %v7015
        %v7272 = vsel %vm6760, %v6504, %v7016
        %v7273 = vsel %vm6761, %v6505, %v7017
        %v7274 = vsel %vm6762, %v6506, %v7018
        %v7275 = vsel %vm6763, %v6507, %v7019
        %v7276 = vsel %vm6764, %v6508, %v7020
        %v7277 = vsel %vm6765, %v6509, %v7021
        %v7278 = vsel %vm6766, %v6510, %v7022
        %v7279 = vsel %vm6767, %v6511, %v7023
        %v7280 = vsel %vm6768, %v6512, %v7024
        %v7281 = vsel %vm6769, %v6513, %v7025
        %v7282 = vsel %vm6770, %v6514, %v7026
        %v7283 = vsel %vm6771, %v6515, %v7027
        %v7284 = vsel %vm6772, %v6516, %v7028
        %v7285 = vld [vmem:[%s10] sm:$0xff]
        %v7286 = vld [vmem:[%s10 + $0x8] sm:$0xff]
        %v7287 = vld [vmem:[%s10 + $0x10] sm:$0xff]
        %v7288 = vld [vmem:[%s10 + $0x18] sm:$0xff]
        %v7289 = vld [vmem:[%s10 + $0x20] sm:$0xff]
        %v7290 = vld [vmem:[%s10 + $0x28] sm:$0xff]
        %v7291 = vld [vmem:[%s10 + $0x30] sm:$0xff]
        %v7292 = vld [vmem:[%s10 + $0x38] sm:$0xff]
        %v7293 = vld [vmem:[%s11] sm:$0x1]
        %v7295 = vperm.slane %v7293, 0
        %vm7297 = vcmask 523264
        %v7299 = vsel %vm7297, %v7029, 0
        %v7302 = vsel %vm7297, %v7030, 0
        %v7305 = vsel %vm7297, %v7031, 0
        %v7308 = vsel %vm7297, %v7032, 0
        %v7311 = vsel %vm7297, %v7033, 0
        %v7314 = vsel %vm7297, %v7034, 0
        %v7317 = vsel %vm7297, %v7035, 0
        %v7320 = vsel %vm7297, %v7036, 0
        %v7323 = vsel %vm7297, %v7037, 0
        %v7326 = vsel %vm7297, %v7038, 0
        %v7329 = vsel %vm7297, %v7039, 0
        %v7332 = vsel %vm7297, %v7040, 0
        %v7335 = vsel %vm7297, %v7041, 0
        %v7338 = vsel %vm7297, %v7042, 0
        %v7341 = vsel %vm7297, %v7043, 0
        %v7344 = vsel %vm7297, %v7044, 0
        %v7347 = vsel %vm7297, %v7045, 0
        %v7350 = vsel %vm7297, %v7046, 0
        %v7353 = vsel %vm7297, %v7047, 0
        %v7356 = vsel %vm7297, %v7048, 0
        %v7359 = vsel %vm7297, %v7049, 0
        %v7362 = vsel %vm7297, %v7050, 0
        %v7365 = vsel %vm7297, %v7051, 0
        %v7368 = vsel %vm7297, %v7052, 0
        %v7371 = vsel %vm7297, %v7053, 0
        %v7374 = vsel %vm7297, %v7054, 0
        %v7377 = vsel %vm7297, %v7055, 0
        %v7380 = vsel %vm7297, %v7056, 0
        %v7383 = vsel %vm7297, %v7057, 0
        %v7386 = vsel %vm7297, %v7058, 0
        %v7389 = vsel %vm7297, %v7059, 0
        %v7392 = vsel %vm7297, %v7060, 0
        %v7395 = vsel %vm7297, %v7061, 0
        %v7398 = vsel %vm7297, %v7062, 0
        %v7401 = vsel %vm7297, %v7063, 0
        %v7404 = vsel %vm7297, %v7064, 0
        %v7407 = vsel %vm7297, %v7065, 0
        %v7410 = vsel %vm7297, %v7066, 0
        %v7413 = vsel %vm7297, %v7067, 0
        %v7416 = vsel %vm7297, %v7068, 0
        %v7419 = vsel %vm7297, %v7069, 0
        %v7422 = vsel %vm7297, %v7070, 0
        %v7425 = vsel %vm7297, %v7071, 0
        %v7428 = vsel %vm7297, %v7072, 0
        %v7431 = vsel %vm7297, %v7073, 0
        %v7434 = vsel %vm7297, %v7074, 0
        %v7437 = vsel %vm7297, %v7075, 0
        %v7440 = vsel %vm7297, %v7076, 0
        %v7443 = vsel %vm7297, %v7077, 0
        %v7446 = vsel %vm7297, %v7078, 0
        %v7449 = vsel %vm7297, %v7079, 0
        %v7452 = vsel %vm7297, %v7080, 0
        %v7455 = vsel %vm7297, %v7081, 0
        %v7458 = vsel %vm7297, %v7082, 0
        %v7461 = vsel %vm7297, %v7083, 0
        %v7464 = vsel %vm7297, %v7084, 0
        %v7467 = vsel %vm7297, %v7085, 0
        %v7470 = vsel %vm7297, %v7086, 0
        %v7473 = vsel %vm7297, %v7087, 0
        %v7476 = vsel %vm7297, %v7088, 0
        %v7479 = vsel %vm7297, %v7089, 0
        %v7482 = vsel %vm7297, %v7090, 0
        %v7485 = vsel %vm7297, %v7091, 0
        %v7488 = vsel %vm7297, %v7092, 0
        %v7491 = vsel %vm7297, %v7093, 0
        %v7494 = vsel %vm7297, %v7094, 0
        %v7497 = vsel %vm7297, %v7095, 0
        %v7500 = vsel %vm7297, %v7096, 0
        %v7503 = vsel %vm7297, %v7097, 0
        %v7506 = vsel %vm7297, %v7098, 0
        %v7509 = vsel %vm7297, %v7099, 0
        %v7512 = vsel %vm7297, %v7100, 0
        %v7515 = vsel %vm7297, %v7101, 0
        %v7518 = vsel %vm7297, %v7102, 0
        %v7521 = vsel %vm7297, %v7103, 0
        %v7524 = vsel %vm7297, %v7104, 0
        %v7527 = vsel %vm7297, %v7105, 0
        %v7530 = vsel %vm7297, %v7106, 0
        %v7533 = vsel %vm7297, %v7107, 0
        %v7536 = vsel %vm7297, %v7108, 0
        %v7539 = vsel %vm7297, %v7109, 0
        %v7542 = vsel %vm7297, %v7110, 0
        %v7545 = vsel %vm7297, %v7111, 0
        %v7548 = vsel %vm7297, %v7112, 0
        %v7551 = vsel %vm7297, %v7113, 0
        %v7554 = vsel %vm7297, %v7114, 0
        %v7557 = vsel %vm7297, %v7115, 0
        %v7560 = vsel %vm7297, %v7116, 0
        %v7563 = vsel %vm7297, %v7117, 0
        %v7566 = vsel %vm7297, %v7118, 0
        %v7569 = vsel %vm7297, %v7119, 0
        %v7572 = vsel %vm7297, %v7120, 0
        %v7575 = vsel %vm7297, %v7121, 0
        %v7578 = vsel %vm7297, %v7122, 0
        %v7581 = vsel %vm7297, %v7123, 0
        %v7584 = vsel %vm7297, %v7124, 0
        %v7587 = vsel %vm7297, %v7125, 0
        %v7590 = vsel %vm7297, %v7126, 0
        %v7593 = vsel %vm7297, %v7127, 0
        %v7596 = vsel %vm7297, %v7128, 0
        %v7599 = vsel %vm7297, %v7129, 0
        %v7602 = vsel %vm7297, %v7130, 0
        %v7605 = vsel %vm7297, %v7131, 0
        %v7608 = vsel %vm7297, %v7132, 0
        %v7611 = vsel %vm7297, %v7133, 0
        %v7614 = vsel %vm7297, %v7134, 0
        %v7617 = vsel %vm7297, %v7135, 0
        %v7620 = vsel %vm7297, %v7136, 0
        %v7623 = vsel %vm7297, %v7137, 0
        %v7626 = vsel %vm7297, %v7138, 0
        %v7629 = vsel %vm7297, %v7139, 0
        %v7632 = vsel %vm7297, %v7140, 0
        %v7635 = vsel %vm7297, %v7141, 0
        %v7638 = vsel %vm7297, %v7142, 0
        %v7641 = vsel %vm7297, %v7143, 0
        %v7644 = vsel %vm7297, %v7144, 0
        %v7647 = vsel %vm7297, %v7145, 0
        %v7650 = vsel %vm7297, %v7146, 0
        %v7653 = vsel %vm7297, %v7147, 0
        %v7656 = vsel %vm7297, %v7148, 0
        %v7659 = vsel %vm7297, %v7149, 0
        %v7662 = vsel %vm7297, %v7150, 0
        %v7665 = vsel %vm7297, %v7151, 0
        %v7668 = vsel %vm7297, %v7152, 0
        %v7671 = vsel %vm7297, %v7153, 0
        %v7674 = vsel %vm7297, %v7154, 0
        %v7677 = vsel %vm7297, %v7155, 0
        %v7680 = vsel %vm7297, %v7156, 0
        %v7683 = vsel %vm7297, %v7157, 0
        %v7686 = vsel %vm7297, %v7158, 0
        %v7689 = vsel %vm7297, %v7159, 0
        %v7692 = vsel %vm7297, %v7160, 0
        %v7695 = vsel %vm7297, %v7161, 0
        %v7698 = vsel %vm7297, %v7162, 0
        %v7701 = vsel %vm7297, %v7163, 0
        %v7704 = vsel %vm7297, %v7164, 0
        %v7707 = vsel %vm7297, %v7165, 0
        %v7710 = vsel %vm7297, %v7166, 0
        %v7713 = vsel %vm7297, %v7167, 0
        %v7716 = vsel %vm7297, %v7168, 0
        %v7719 = vsel %vm7297, %v7169, 0
        %v7722 = vsel %vm7297, %v7170, 0
        %v7725 = vsel %vm7297, %v7171, 0
        %v7728 = vsel %vm7297, %v7172, 0
        %v7731 = vsel %vm7297, %v7173, 0
        %v7734 = vsel %vm7297, %v7174, 0
        %v7737 = vsel %vm7297, %v7175, 0
        %v7740 = vsel %vm7297, %v7176, 0
        %v7743 = vsel %vm7297, %v7177, 0
        %v7746 = vsel %vm7297, %v7178, 0
        %v7749 = vsel %vm7297, %v7179, 0
        %v7752 = vsel %vm7297, %v7180, 0
        %v7755 = vsel %vm7297, %v7181, 0
        %v7758 = vsel %vm7297, %v7182, 0
        %v7761 = vsel %vm7297, %v7183, 0
        %v7764 = vsel %vm7297, %v7184, 0
        %v7767 = vsel %vm7297, %v7185, 0
        %v7770 = vsel %vm7297, %v7186, 0
        %v7773 = vsel %vm7297, %v7187, 0
        %v7776 = vsel %vm7297, %v7188, 0
        %v7779 = vsel %vm7297, %v7189, 0
        %v7782 = vsel %vm7297, %v7190, 0
        %v7785 = vsel %vm7297, %v7191, 0
        %v7788 = vsel %vm7297, %v7192, 0
        %v7791 = vsel %vm7297, %v7193, 0
        %v7794 = vsel %vm7297, %v7194, 0
        %v7797 = vsel %vm7297, %v7195, 0
        %v7800 = vsel %vm7297, %v7196, 0
        %v7803 = vsel %vm7297, %v7197, 0
        %v7806 = vsel %vm7297, %v7198, 0
        %v7809 = vsel %vm7297, %v7199, 0
        %v7812 = vsel %vm7297, %v7200, 0
        %v7815 = vsel %vm7297, %v7201, 0
        %v7818 = vsel %vm7297, %v7202, 0
        %v7821 = vsel %vm7297, %v7203, 0
        %v7824 = vsel %vm7297, %v7204, 0
        %v7827 = vsel %vm7297, %v7205, 0
        %v7830 = vsel %vm7297, %v7206, 0
        %v7833 = vsel %vm7297, %v7207, 0
        %v7836 = vsel %vm7297, %v7208, 0
        %v7839 = vsel %vm7297, %v7209, 0
        %v7842 = vsel %vm7297, %v7210, 0
        %v7845 = vsel %vm7297, %v7211, 0
        %v7848 = vsel %vm7297, %v7212, 0
        %v7851 = vsel %vm7297, %v7213, 0
        %v7854 = vsel %vm7297, %v7214, 0
        %v7857 = vsel %vm7297, %v7215, 0
        %v7860 = vsel %vm7297, %v7216, 0
        %v7863 = vsel %vm7297, %v7217, 0
        %v7866 = vsel %vm7297, %v7218, 0
        %v7869 = vsel %vm7297, %v7219, 0
        %v7872 = vsel %vm7297, %v7220, 0
        %v7875 = vsel %vm7297, %v7221, 0
        %v7878 = vsel %vm7297, %v7222, 0
        %v7881 = vsel %vm7297, %v7223, 0
        %v7884 = vsel %vm7297, %v7224, 0
        %v7887 = vsel %vm7297, %v7225, 0
        %v7890 = vsel %vm7297, %v7226, 0
        %v7893 = vsel %vm7297, %v7227, 0
        %v7896 = vsel %vm7297, %v7228, 0
        %v7899 = vsel %vm7297, %v7229, 0
        %v7902 = vsel %vm7297, %v7230, 0
        %v7905 = vsel %vm7297, %v7231, 0
        %v7908 = vsel %vm7297, %v7232, 0
        %v7911 = vsel %vm7297, %v7233, 0
        %v7914 = vsel %vm7297, %v7234, 0
        %v7917 = vsel %vm7297, %v7235, 0
        %v7920 = vsel %vm7297, %v7236, 0
        %v7923 = vsel %vm7297, %v7237, 0
        %v7926 = vsel %vm7297, %v7238, 0
        %v7929 = vsel %vm7297, %v7239, 0
        %v7932 = vsel %vm7297, %v7240, 0
        %v7935 = vsel %vm7297, %v7241, 0
        %v7938 = vsel %vm7297, %v7242, 0
        %v7941 = vsel %vm7297, %v7243, 0
        %v7944 = vsel %vm7297, %v7244, 0
        %v7947 = vsel %vm7297, %v7245, 0
        %v7950 = vsel %vm7297, %v7246, 0
        %v7953 = vsel %vm7297, %v7247, 0
        %v7956 = vsel %vm7297, %v7248, 0
        %v7959 = vsel %vm7297, %v7249, 0
        %v7962 = vsel %vm7297, %v7250, 0
        %v7965 = vsel %vm7297, %v7251, 0
        %v7968 = vsel %vm7297, %v7252, 0
        %v7971 = vsel %vm7297, %v7253, 0
        %v7974 = vsel %vm7297, %v7254, 0
        %v7977 = vsel %vm7297, %v7255, 0
        %v7980 = vsel %vm7297, %v7256, 0
        %v7983 = vsel %vm7297, %v7257, 0
        %v7986 = vsel %vm7297, %v7258, 0
        %v7989 = vsel %vm7297, %v7259, 0
        %v7992 = vsel %vm7297, %v7260, 0
        %v7995 = vsel %vm7297, %v7261, 0
        %v7998 = vsel %vm7297, %v7262, 0
        %v8001 = vsel %vm7297, %v7263, 0
        %v8004 = vsel %vm7297, %v7264, 0
        %v8007 = vsel %vm7297, %v7265, 0
        %v8010 = vsel %vm7297, %v7266, 0
        %v8013 = vsel %vm7297, %v7267, 0
        %v8016 = vsel %vm7297, %v7268, 0
        %v8019 = vsel %vm7297, %v7269, 0
        %v8022 = vsel %vm7297, %v7270, 0
        %v8025 = vsel %vm7297, %v7271, 0
        %v8028 = vsel %vm7297, %v7272, 0
        %v8031 = vsel %vm7297, %v7273, 0
        %v8034 = vsel %vm7297, %v7274, 0
        %v8037 = vsel %vm7297, %v7275, 0
        %v8040 = vsel %vm7297, %v7276, 0
        %v8043 = vsel %vm7297, %v7277, 0
        %v8046 = vsel %vm7297, %v7278, 0
        %v8049 = vsel %vm7297, %v7279, 0
        %v8052 = vsel %vm7297, %v7280, 0
        %v8055 = vsel %vm7297, %v7281, 0
        %v8058 = vsel %vm7297, %v7282, 0
        %v8061 = vsel %vm7297, %v7283, 0
        %v8064 = vsel %vm7297, %v7284, 0
        %8066 = vmatpush.msra.mxu0 0.0
        %8067 = vmatpush.msra.mxu0 0.0
        %8068 = vmatpush.msra.mxu0 0.0
        %8069 = vmatpush.msra.mxu0 0.0
        %8070 = vmatpush.msra.mxu0 0.0
        %8071 = vmatpush.msra.mxu0 0.0
        %8072 = vmatpush.msra.mxu0 0.0
        %8073 = vmatpush.msra.mxu0 0.0
        %8074 = vmatpush.msra.mxu0 %v7292
        %8075 = vmatpush.msra.mxu0 %v7291
        %8076 = vmatpush.msra.mxu0 %v7290
        %8077 = vmatpush.msra.mxu0 %v7289
        %8078 = vmatpush.msra.mxu0 %v7288
        %8079 = vmatpush.msra.mxu0 %v7287
        %8080 = vmatpush.msra.mxu0 %v7286
        %8081 = vmatpush.msra.mxu0 %v7285
        %8082 = vmatmul.f32.gmra.mxu0 %v7299
        %v8083 = vpop.f32.mrf.mxu0
        %v8084 = vadd.f32 %v7295, %v8083
        %8085 = vmatmul.f32.gmra.mxu0 %v7302
        %v8086 = vpop.f32.mrf.mxu0
        %v8087 = vadd.f32 %v7295, %v8086
        %8088 = vmatmul.f32.gmra.mxu0 %v7305
        %v8089 = vpop.f32.mrf.mxu0
        %v8090 = vadd.f32 %v7295, %v8089
        %8091 = vmatmul.f32.gmra.mxu0 %v7308
        %v8092 = vpop.f32.mrf.mxu0
        %v8093 = vadd.f32 %v7295, %v8092
        %8094 = vmatmul.f32.gmra.mxu0 %v7311
        %v8095 = vpop.f32.mrf.mxu0
        %v8096 = vadd.f32 %v7295, %v8095
        %8097 = vmatmul.f32.gmra.mxu0 %v7314
        %v8098 = vpop.f32.mrf.mxu0
        %v8099 = vadd.f32 %v7295, %v8098
        %8100 = vmatmul.f32.gmra.mxu0 %v7317
        %v8101 = vpop.f32.mrf.mxu0
        %v8102 = vadd.f32 %v7295, %v8101
        %8103 = vmatmul.f32.gmra.mxu0 %v7320
        %v8104 = vpop.f32.mrf.mxu0
        %v8105 = vadd.f32 %v7295, %v8104
        %8106 = vmatmul.f32.gmra.mxu0 %v7323
        %v8107 = vpop.f32.mrf.mxu0
        %v8108 = vadd.f32 %v7295, %v8107
        %8109 = vmatmul.f32.gmra.mxu0 %v7326
        %v8110 = vpop.f32.mrf.mxu0
        %v8111 = vadd.f32 %v7295, %v8110
        %8112 = vmatmul.f32.gmra.mxu0 %v7329
        %v8113 = vpop.f32.mrf.mxu0
        %v8114 = vadd.f32 %v7295, %v8113
        %8115 = vmatmul.f32.gmra.mxu0 %v7332
        %v8116 = vpop.f32.mrf.mxu0
        %v8117 = vadd.f32 %v7295, %v8116
        %8118 = vmatmul.f32.gmra.mxu0 %v7335
        %v8119 = vpop.f32.mrf.mxu0
        %v8120 = vadd.f32 %v7295, %v8119
        %8121 = vmatmul.f32.gmra.mxu0 %v7338
        %v8122 = vpop.f32.mrf.mxu0
        %v8123 = vadd.f32 %v7295, %v8122
        %8124 = vmatmul.f32.gmra.mxu0 %v7341
        %v8125 = vpop.f32.mrf.mxu0
        %v8126 = vadd.f32 %v7295, %v8125
        %8127 = vmatmul.f32.gmra.mxu0 %v7344
        %v8128 = vpop.f32.mrf.mxu0
        %v8129 = vadd.f32 %v7295, %v8128
        %8130 = vmatmul.f32.gmra.mxu0 %v7347
        %v8131 = vpop.f32.mrf.mxu0
        %v8132 = vadd.f32 %v7295, %v8131
        %8133 = vmatmul.f32.gmra.mxu0 %v7350
        %v8134 = vpop.f32.mrf.mxu0
        %v8135 = vadd.f32 %v7295, %v8134
        %8136 = vmatmul.f32.gmra.mxu0 %v7353
        %v8137 = vpop.f32.mrf.mxu0
        %v8138 = vadd.f32 %v7295, %v8137
        %8139 = vmatmul.f32.gmra.mxu0 %v7356
        %v8140 = vpop.f32.mrf.mxu0
        %v8141 = vadd.f32 %v7295, %v8140
        %8142 = vmatmul.f32.gmra.mxu0 %v7359
        %v8143 = vpop.f32.mrf.mxu0
        %v8144 = vadd.f32 %v7295, %v8143
        %8145 = vmatmul.f32.gmra.mxu0 %v7362
        %v8146 = vpop.f32.mrf.mxu0
        %v8147 = vadd.f32 %v7295, %v8146
        %8148 = vmatmul.f32.gmra.mxu0 %v7365
        %v8149 = vpop.f32.mrf.mxu0
        %v8150 = vadd.f32 %v7295, %v8149
        %8151 = vmatmul.f32.gmra.mxu0 %v7368
        %v8152 = vpop.f32.mrf.mxu0
        %v8153 = vadd.f32 %v7295, %v8152
        %8154 = vmatmul.f32.gmra.mxu0 %v7371
        %v8155 = vpop.f32.mrf.mxu0
        %v8156 = vadd.f32 %v7295, %v8155
        %8157 = vmatmul.f32.gmra.mxu0 %v7374
        %v8158 = vpop.f32.mrf.mxu0
        %v8159 = vadd.f32 %v7295, %v8158
        %8160 = vmatmul.f32.gmra.mxu0 %v7377
        %v8161 = vpop.f32.mrf.mxu0
        %v8162 = vadd.f32 %v7295, %v8161
        %8163 = vmatmul.f32.gmra.mxu0 %v7380
        %v8164 = vpop.f32.mrf.mxu0
        %v8165 = vadd.f32 %v7295, %v8164
        %8166 = vmatmul.f32.gmra.mxu0 %v7383
        %v8167 = vpop.f32.mrf.mxu0
        %v8168 = vadd.f32 %v7295, %v8167
        %8169 = vmatmul.f32.gmra.mxu0 %v7386
        %v8170 = vpop.f32.mrf.mxu0
        %v8171 = vadd.f32 %v7295, %v8170
        %8172 = vmatmul.f32.gmra.mxu0 %v7389
        %v8173 = vpop.f32.mrf.mxu0
        %v8174 = vadd.f32 %v7295, %v8173
        %8175 = vmatmul.f32.gmra.mxu0 %v7392
        %v8176 = vpop.f32.mrf.mxu0
        %v8177 = vadd.f32 %v7295, %v8176
        %8178 = vmatmul.f32.gmra.mxu0 %v7395
        %v8179 = vpop.f32.mrf.mxu0
        %v8180 = vadd.f32 %v7295, %v8179
        %8181 = vmatmul.f32.gmra.mxu0 %v7398
        %v8182 = vpop.f32.mrf.mxu0
        %v8183 = vadd.f32 %v7295, %v8182
        %8184 = vmatmul.f32.gmra.mxu0 %v7401
        %v8185 = vpop.f32.mrf.mxu0
        %v8186 = vadd.f32 %v7295, %v8185
        %8187 = vmatmul.f32.gmra.mxu0 %v7404
        %v8188 = vpop.f32.mrf.mxu0
        %v8189 = vadd.f32 %v7295, %v8188
        %8190 = vmatmul.f32.gmra.mxu0 %v7407
        %v8191 = vpop.f32.mrf.mxu0
        %v8192 = vadd.f32 %v7295, %v8191
        %8193 = vmatmul.f32.gmra.mxu0 %v7410
        %v8194 = vpop.f32.mrf.mxu0
        %v8195 = vadd.f32 %v7295, %v8194
        %8196 = vmatmul.f32.gmra.mxu0 %v7413
        %v8197 = vpop.f32.mrf.mxu0
        %v8198 = vadd.f32 %v7295, %v8197
        %8199 = vmatmul.f32.gmra.mxu0 %v7416
        %v8200 = vpop.f32.mrf.mxu0
        %v8201 = vadd.f32 %v7295, %v8200
        %8202 = vmatmul.f32.gmra.mxu0 %v7419
        %v8203 = vpop.f32.mrf.mxu0
        %v8204 = vadd.f32 %v7295, %v8203
        %8205 = vmatmul.f32.gmra.mxu0 %v7422
        %v8206 = vpop.f32.mrf.mxu0
        %v8207 = vadd.f32 %v7295, %v8206
        %8208 = vmatmul.f32.gmra.mxu0 %v7425
        %v8209 = vpop.f32.mrf.mxu0
        %v8210 = vadd.f32 %v7295, %v8209
        %8211 = vmatmul.f32.gmra.mxu0 %v7428
        %v8212 = vpop.f32.mrf.mxu0
        %v8213 = vadd.f32 %v7295, %v8212
        %8214 = vmatmul.f32.gmra.mxu0 %v7431
        %v8215 = vpop.f32.mrf.mxu0
        %v8216 = vadd.f32 %v7295, %v8215
        %8217 = vmatmul.f32.gmra.mxu0 %v7434
        %v8218 = vpop.f32.mrf.mxu0
        %v8219 = vadd.f32 %v7295, %v8218
        %8220 = vmatmul.f32.gmra.mxu0 %v7437
        %v8221 = vpop.f32.mrf.mxu0
        %v8222 = vadd.f32 %v7295, %v8221
        %8223 = vmatmul.f32.gmra.mxu0 %v7440
        %v8224 = vpop.f32.mrf.mxu0
        %v8225 = vadd.f32 %v7295, %v8224
        %8226 = vmatmul.f32.gmra.mxu0 %v7443
        %v8227 = vpop.f32.mrf.mxu0
        %v8228 = vadd.f32 %v7295, %v8227
        %8229 = vmatmul.f32.gmra.mxu0 %v7446
        %v8230 = vpop.f32.mrf.mxu0
        %v8231 = vadd.f32 %v7295, %v8230
        %8232 = vmatmul.f32.gmra.mxu0 %v7449
        %v8233 = vpop.f32.mrf.mxu0
        %v8234 = vadd.f32 %v7295, %v8233
        %8235 = vmatmul.f32.gmra.mxu0 %v7452
        %v8236 = vpop.f32.mrf.mxu0
        %v8237 = vadd.f32 %v7295, %v8236
        %8238 = vmatmul.f32.gmra.mxu0 %v7455
        %v8239 = vpop.f32.mrf.mxu0
        %v8240 = vadd.f32 %v7295, %v8239
        %8241 = vmatmul.f32.gmra.mxu0 %v7458
        %v8242 = vpop.f32.mrf.mxu0
        %v8243 = vadd.f32 %v7295, %v8242
        %8244 = vmatmul.f32.gmra.mxu0 %v7461
        %v8245 = vpop.f32.mrf.mxu0
        %v8246 = vadd.f32 %v7295, %v8245
        %8247 = vmatmul.f32.gmra.mxu0 %v7464
        %v8248 = vpop.f32.mrf.mxu0
        %v8249 = vadd.f32 %v7295, %v8248
        %8250 = vmatmul.f32.gmra.mxu0 %v7467
        %v8251 = vpop.f32.mrf.mxu0
        %v8252 = vadd.f32 %v7295, %v8251
        %8253 = vmatmul.f32.gmra.mxu0 %v7470
        %v8254 = vpop.f32.mrf.mxu0
        %v8255 = vadd.f32 %v7295, %v8254
        %8256 = vmatmul.f32.gmra.mxu0 %v7473
        %v8257 = vpop.f32.mrf.mxu0
        %v8258 = vadd.f32 %v7295, %v8257
        %8259 = vmatmul.f32.gmra.mxu0 %v7476
        %v8260 = vpop.f32.mrf.mxu0
        %v8261 = vadd.f32 %v7295, %v8260
        %8262 = vmatmul.f32.gmra.mxu0 %v7479
        %v8263 = vpop.f32.mrf.mxu0
        %v8264 = vadd.f32 %v7295, %v8263
        %8265 = vmatmul.f32.gmra.mxu0 %v7482
        %v8266 = vpop.f32.mrf.mxu0
        %v8267 = vadd.f32 %v7295, %v8266
        %8268 = vmatmul.f32.gmra.mxu0 %v7485
        %v8269 = vpop.f32.mrf.mxu0
        %v8270 = vadd.f32 %v7295, %v8269
        %8271 = vmatmul.f32.gmra.mxu0 %v7488
        %v8272 = vpop.f32.mrf.mxu0
        %v8273 = vadd.f32 %v7295, %v8272
        %8274 = vmatmul.f32.gmra.mxu0 %v7491
        %v8275 = vpop.f32.mrf.mxu0
        %v8276 = vadd.f32 %v7295, %v8275
        %8277 = vmatmul.f32.gmra.mxu0 %v7494
        %v8278 = vpop.f32.mrf.mxu0
        %v8279 = vadd.f32 %v7295, %v8278
        %8280 = vmatmul.f32.gmra.mxu0 %v7497
        %v8281 = vpop.f32.mrf.mxu0
        %v8282 = vadd.f32 %v7295, %v8281
        %8283 = vmatmul.f32.gmra.mxu0 %v7500
        %v8284 = vpop.f32.mrf.mxu0
        %v8285 = vadd.f32 %v7295, %v8284
        %8286 = vmatmul.f32.gmra.mxu0 %v7503
        %v8287 = vpop.f32.mrf.mxu0
        %v8288 = vadd.f32 %v7295, %v8287
        %8289 = vmatmul.f32.gmra.mxu0 %v7506
        %v8290 = vpop.f32.mrf.mxu0
        %v8291 = vadd.f32 %v7295, %v8290
        %8292 = vmatmul.f32.gmra.mxu0 %v7509
        %v8293 = vpop.f32.mrf.mxu0
        %v8294 = vadd.f32 %v7295, %v8293
        %8295 = vmatmul.f32.gmra.mxu0 %v7512
        %v8296 = vpop.f32.mrf.mxu0
        %v8297 = vadd.f32 %v7295, %v8296
        %8298 = vmatmul.f32.gmra.mxu0 %v7515
        %v8299 = vpop.f32.mrf.mxu0
        %v8300 = vadd.f32 %v7295, %v8299
        %8301 = vmatmul.f32.gmra.mxu0 %v7518
        %v8302 = vpop.f32.mrf.mxu0
        %v8303 = vadd.f32 %v7295, %v8302
        %8304 = vmatmul.f32.gmra.mxu0 %v7521
        %v8305 = vpop.f32.mrf.mxu0
        %v8306 = vadd.f32 %v7295, %v8305
        %8307 = vmatmul.f32.gmra.mxu0 %v7524
        %v8308 = vpop.f32.mrf.mxu0
        %v8309 = vadd.f32 %v7295, %v8308
        %8310 = vmatmul.f32.gmra.mxu0 %v7527
        %v8311 = vpop.f32.mrf.mxu0
        %v8312 = vadd.f32 %v7295, %v8311
        %8313 = vmatmul.f32.gmra.mxu0 %v7530
        %v8314 = vpop.f32.mrf.mxu0
        %v8315 = vadd.f32 %v7295, %v8314
        %8316 = vmatmul.f32.gmra.mxu0 %v7533
        %v8317 = vpop.f32.mrf.mxu0
        %v8318 = vadd.f32 %v7295, %v8317
        %8319 = vmatmul.f32.gmra.mxu0 %v7536
        %v8320 = vpop.f32.mrf.mxu0
        %v8321 = vadd.f32 %v7295, %v8320
        %8322 = vmatmul.f32.gmra.mxu0 %v7539
        %v8323 = vpop.f32.mrf.mxu0
        %v8324 = vadd.f32 %v7295, %v8323
        %8325 = vmatmul.f32.gmra.mxu0 %v7542
        %v8326 = vpop.f32.mrf.mxu0
        %v8327 = vadd.f32 %v7295, %v8326
        %8328 = vmatmul.f32.gmra.mxu0 %v7545
        %v8329 = vpop.f32.mrf.mxu0
        %v8330 = vadd.f32 %v7295, %v8329
        %8331 = vmatmul.f32.gmra.mxu0 %v7548
        %v8332 = vpop.f32.mrf.mxu0
        %v8333 = vadd.f32 %v7295, %v8332
        %8334 = vmatmul.f32.gmra.mxu0 %v7551
        %v8335 = vpop.f32.mrf.mxu0
        %v8336 = vadd.f32 %v7295, %v8335
        %8337 = vmatmul.f32.gmra.mxu0 %v7554
        %v8338 = vpop.f32.mrf.mxu0
        %v8339 = vadd.f32 %v7295, %v8338
        %8340 = vmatmul.f32.gmra.mxu0 %v7557
        %v8341 = vpop.f32.mrf.mxu0
        %v8342 = vadd.f32 %v7295, %v8341
        %8343 = vmatmul.f32.gmra.mxu0 %v7560
        %v8344 = vpop.f32.mrf.mxu0
        %v8345 = vadd.f32 %v7295, %v8344
        %8346 = vmatmul.f32.gmra.mxu0 %v7563
        %v8347 = vpop.f32.mrf.mxu0
        %v8348 = vadd.f32 %v7295, %v8347
        %8349 = vmatmul.f32.gmra.mxu0 %v7566
        %v8350 = vpop.f32.mrf.mxu0
        %v8351 = vadd.f32 %v7295, %v8350
        %8352 = vmatmul.f32.gmra.mxu0 %v7569
        %v8353 = vpop.f32.mrf.mxu0
        %v8354 = vadd.f32 %v7295, %v8353
        %8355 = vmatmul.f32.gmra.mxu0 %v7572
        %v8356 = vpop.f32.mrf.mxu0
        %v8357 = vadd.f32 %v7295, %v8356
        %8358 = vmatmul.f32.gmra.mxu0 %v7575
        %v8359 = vpop.f32.mrf.mxu0
        %v8360 = vadd.f32 %v7295, %v8359
        %8361 = vmatmul.f32.gmra.mxu0 %v7578
        %v8362 = vpop.f32.mrf.mxu0
        %v8363 = vadd.f32 %v7295, %v8362
        %8364 = vmatmul.f32.gmra.mxu0 %v7581
        %v8365 = vpop.f32.mrf.mxu0
        %v8366 = vadd.f32 %v7295, %v8365
        %8367 = vmatmul.f32.gmra.mxu0 %v7584
        %v8368 = vpop.f32.mrf.mxu0
        %v8369 = vadd.f32 %v7295, %v8368
        %8370 = vmatmul.f32.gmra.mxu0 %v7587
        %v8371 = vpop.f32.mrf.mxu0
        %v8372 = vadd.f32 %v7295, %v8371
        %8373 = vmatmul.f32.gmra.mxu0 %v7590
        %v8374 = vpop.f32.mrf.mxu0
        %v8375 = vadd.f32 %v7295, %v8374
        %8376 = vmatmul.f32.gmra.mxu0 %v7593
        %v8377 = vpop.f32.mrf.mxu0
        %v8378 = vadd.f32 %v7295, %v8377
        %8379 = vmatmul.f32.gmra.mxu0 %v7596
        %v8380 = vpop.f32.mrf.mxu0
        %v8381 = vadd.f32 %v7295, %v8380
        %8382 = vmatmul.f32.gmra.mxu0 %v7599
        %v8383 = vpop.f32.mrf.mxu0
        %v8384 = vadd.f32 %v7295, %v8383
        %8385 = vmatmul.f32.gmra.mxu0 %v7602
        %v8386 = vpop.f32.mrf.mxu0
        %v8387 = vadd.f32 %v7295, %v8386
        %8388 = vmatmul.f32.gmra.mxu0 %v7605
        %v8389 = vpop.f32.mrf.mxu0
        %v8390 = vadd.f32 %v7295, %v8389
        %8391 = vmatmul.f32.gmra.mxu0 %v7608
        %v8392 = vpop.f32.mrf.mxu0
        %v8393 = vadd.f32 %v7295, %v8392
        %8394 = vmatmul.f32.gmra.mxu0 %v7611
        %v8395 = vpop.f32.mrf.mxu0
        %v8396 = vadd.f32 %v7295, %v8395
        %8397 = vmatmul.f32.gmra.mxu0 %v7614
        %v8398 = vpop.f32.mrf.mxu0
        %v8399 = vadd.f32 %v7295, %v8398
        %8400 = vmatmul.f32.gmra.mxu0 %v7617
        %v8401 = vpop.f32.mrf.mxu0
        %v8402 = vadd.f32 %v7295, %v8401
        %8403 = vmatmul.f32.gmra.mxu0 %v7620
        %v8404 = vpop.f32.mrf.mxu0
        %v8405 = vadd.f32 %v7295, %v8404
        %8406 = vmatmul.f32.gmra.mxu0 %v7623
        %v8407 = vpop.f32.mrf.mxu0
        %v8408 = vadd.f32 %v7295, %v8407
        %8409 = vmatmul.f32.gmra.mxu0 %v7626
        %v8410 = vpop.f32.mrf.mxu0
        %v8411 = vadd.f32 %v7295, %v8410
        %8412 = vmatmul.f32.gmra.mxu0 %v7629
        %v8413 = vpop.f32.mrf.mxu0
        %v8414 = vadd.f32 %v7295, %v8413
        %8415 = vmatmul.f32.gmra.mxu0 %v7632
        %v8416 = vpop.f32.mrf.mxu0
        %v8417 = vadd.f32 %v7295, %v8416
        %8418 = vmatmul.f32.gmra.mxu0 %v7635
        %v8419 = vpop.f32.mrf.mxu0
        %v8420 = vadd.f32 %v7295, %v8419
        %8421 = vmatmul.f32.gmra.mxu0 %v7638
        %v8422 = vpop.f32.mrf.mxu0
        %v8423 = vadd.f32 %v7295, %v8422
        %8424 = vmatmul.f32.gmra.mxu0 %v7641
        %v8425 = vpop.f32.mrf.mxu0
        %v8426 = vadd.f32 %v7295, %v8425
        %8427 = vmatmul.f32.gmra.mxu0 %v7644
        %v8428 = vpop.f32.mrf.mxu0
        %v8429 = vadd.f32 %v7295, %v8428
        %8430 = vmatmul.f32.gmra.mxu0 %v7647
        %v8431 = vpop.f32.mrf.mxu0
        %v8432 = vadd.f32 %v7295, %v8431
        %8433 = vmatmul.f32.gmra.mxu0 %v7650
        %v8434 = vpop.f32.mrf.mxu0
        %v8435 = vadd.f32 %v7295, %v8434
        %8436 = vmatmul.f32.gmra.mxu0 %v7653
        %v8437 = vpop.f32.mrf.mxu0
        %v8438 = vadd.f32 %v7295, %v8437
        %8439 = vmatmul.f32.gmra.mxu0 %v7656
        %v8440 = vpop.f32.mrf.mxu0
        %v8441 = vadd.f32 %v7295, %v8440
        %8442 = vmatmul.f32.gmra.mxu0 %v7659
        %v8443 = vpop.f32.mrf.mxu0
        %v8444 = vadd.f32 %v7295, %v8443
        %8445 = vmatmul.f32.gmra.mxu0 %v7662
        %v8446 = vpop.f32.mrf.mxu0
        %v8447 = vadd.f32 %v7295, %v8446
        %8448 = vmatmul.f32.gmra.mxu0 %v7665
        %v8449 = vpop.f32.mrf.mxu0
        %v8450 = vadd.f32 %v7295, %v8449
        %8451 = vmatmul.f32.gmra.mxu0 %v7668
        %v8452 = vpop.f32.mrf.mxu0
        %v8453 = vadd.f32 %v7295, %v8452
        %8454 = vmatmul.f32.gmra.mxu0 %v7671
        %v8455 = vpop.f32.mrf.mxu0
        %v8456 = vadd.f32 %v7295, %v8455
        %8457 = vmatmul.f32.gmra.mxu0 %v7674
        %v8458 = vpop.f32.mrf.mxu0
        %v8459 = vadd.f32 %v7295, %v8458
        %8460 = vmatmul.f32.gmra.mxu0 %v7677
        %v8461 = vpop.f32.mrf.mxu0
        %v8462 = vadd.f32 %v7295, %v8461
        %8463 = vmatmul.f32.gmra.mxu0 %v7680
        %v8464 = vpop.f32.mrf.mxu0
        %v8465 = vadd.f32 %v7295, %v8464
        %8466 = vmatmul.f32.gmra.mxu0 %v7683
        %v8467 = vpop.f32.mrf.mxu0
        %v8468 = vadd.f32 %v7295, %v8467
        %8469 = vmatmul.f32.gmra.mxu0 %v7686
        %v8470 = vpop.f32.mrf.mxu0
        %v8471 = vadd.f32 %v7295, %v8470
        %8472 = vmatmul.f32.gmra.mxu0 %v7689
        %v8473 = vpop.f32.mrf.mxu0
        %v8474 = vadd.f32 %v7295, %v8473
        %8475 = vmatmul.f32.gmra.mxu0 %v7692
        %v8476 = vpop.f32.mrf.mxu0
        %v8477 = vadd.f32 %v7295, %v8476
        %8478 = vmatmul.f32.gmra.mxu0 %v7695
        %v8479 = vpop.f32.mrf.mxu0
        %v8480 = vadd.f32 %v7295, %v8479
        %8481 = vmatmul.f32.gmra.mxu0 %v7698
        %v8482 = vpop.f32.mrf.mxu0
        %v8483 = vadd.f32 %v7295, %v8482
        %8484 = vmatmul.f32.gmra.mxu0 %v7701
        %v8485 = vpop.f32.mrf.mxu0
        %v8486 = vadd.f32 %v7295, %v8485
        %8487 = vmatmul.f32.gmra.mxu0 %v7704
        %v8488 = vpop.f32.mrf.mxu0
        %v8489 = vadd.f32 %v7295, %v8488
        %8490 = vmatmul.f32.gmra.mxu0 %v7707
        %v8491 = vpop.f32.mrf.mxu0
        %v8492 = vadd.f32 %v7295, %v8491
        %8493 = vmatmul.f32.gmra.mxu0 %v7710
        %v8494 = vpop.f32.mrf.mxu0
        %v8495 = vadd.f32 %v7295, %v8494
        %8496 = vmatmul.f32.gmra.mxu0 %v7713
        %v8497 = vpop.f32.mrf.mxu0
        %v8498 = vadd.f32 %v7295, %v8497
        %8499 = vmatmul.f32.gmra.mxu0 %v7716
        %v8500 = vpop.f32.mrf.mxu0
        %v8501 = vadd.f32 %v7295, %v8500
        %8502 = vmatmul.f32.gmra.mxu0 %v7719
        %v8503 = vpop.f32.mrf.mxu0
        %v8504 = vadd.f32 %v7295, %v8503
        %8505 = vmatmul.f32.gmra.mxu0 %v7722
        %v8506 = vpop.f32.mrf.mxu0
        %v8507 = vadd.f32 %v7295, %v8506
        %8508 = vmatmul.f32.gmra.mxu0 %v7725
        %v8509 = vpop.f32.mrf.mxu0
        %v8510 = vadd.f32 %v7295, %v8509
        %8511 = vmatmul.f32.gmra.mxu0 %v7728
        %v8512 = vpop.f32.mrf.mxu0
        %v8513 = vadd.f32 %v7295, %v8512
        %8514 = vmatmul.f32.gmra.mxu0 %v7731
        %v8515 = vpop.f32.mrf.mxu0
        %v8516 = vadd.f32 %v7295, %v8515
        %8517 = vmatmul.f32.gmra.mxu0 %v7734
        %v8518 = vpop.f32.mrf.mxu0
        %v8519 = vadd.f32 %v7295, %v8518
        %8520 = vmatmul.f32.gmra.mxu0 %v7737
        %v8521 = vpop.f32.mrf.mxu0
        %v8522 = vadd.f32 %v7295, %v8521
        %8523 = vmatmul.f32.gmra.mxu0 %v7740
        %v8524 = vpop.f32.mrf.mxu0
        %v8525 = vadd.f32 %v7295, %v8524
        %8526 = vmatmul.f32.gmra.mxu0 %v7743
        %v8527 = vpop.f32.mrf.mxu0
        %v8528 = vadd.f32 %v7295, %v8527
        %8529 = vmatmul.f32.gmra.mxu0 %v7746
        %v8530 = vpop.f32.mrf.mxu0
        %v8531 = vadd.f32 %v7295, %v8530
        %8532 = vmatmul.f32.gmra.mxu0 %v7749
        %v8533 = vpop.f32.mrf.mxu0
        %v8534 = vadd.f32 %v7295, %v8533
        %8535 = vmatmul.f32.gmra.mxu0 %v7752
        %v8536 = vpop.f32.mrf.mxu0
        %v8537 = vadd.f32 %v7295, %v8536
        %8538 = vmatmul.f32.gmra.mxu0 %v7755
        %v8539 = vpop.f32.mrf.mxu0
        %v8540 = vadd.f32 %v7295, %v8539
        %8541 = vmatmul.f32.gmra.mxu0 %v7758
        %v8542 = vpop.f32.mrf.mxu0
        %v8543 = vadd.f32 %v7295, %v8542
        %8544 = vmatmul.f32.gmra.mxu0 %v7761
        %v8545 = vpop.f32.mrf.mxu0
        %v8546 = vadd.f32 %v7295, %v8545
        %8547 = vmatmul.f32.gmra.mxu0 %v7764
        %v8548 = vpop.f32.mrf.mxu0
        %v8549 = vadd.f32 %v7295, %v8548
        %8550 = vmatmul.f32.gmra.mxu0 %v7767
        %v8551 = vpop.f32.mrf.mxu0
        %v8552 = vadd.f32 %v7295, %v8551
        %8553 = vmatmul.f32.gmra.mxu0 %v7770
        %v8554 = vpop.f32.mrf.mxu0
        %v8555 = vadd.f32 %v7295, %v8554
        %8556 = vmatmul.f32.gmra.mxu0 %v7773
        %v8557 = vpop.f32.mrf.mxu0
        %v8558 = vadd.f32 %v7295, %v8557
        %8559 = vmatmul.f32.gmra.mxu0 %v7776
        %v8560 = vpop.f32.mrf.mxu0
        %v8561 = vadd.f32 %v7295, %v8560
        %8562 = vmatmul.f32.gmra.mxu0 %v7779
        %v8563 = vpop.f32.mrf.mxu0
        %v8564 = vadd.f32 %v7295, %v8563
        %8565 = vmatmul.f32.gmra.mxu0 %v7782
        %v8566 = vpop.f32.mrf.mxu0
        %v8567 = vadd.f32 %v7295, %v8566
        %8568 = vmatmul.f32.gmra.mxu0 %v7785
        %v8569 = vpop.f32.mrf.mxu0
        %v8570 = vadd.f32 %v7295, %v8569
        %8571 = vmatmul.f32.gmra.mxu0 %v7788
        %v8572 = vpop.f32.mrf.mxu0
        %v8573 = vadd.f32 %v7295, %v8572
        %8574 = vmatmul.f32.gmra.mxu0 %v7791
        %v8575 = vpop.f32.mrf.mxu0
        %v8576 = vadd.f32 %v7295, %v8575
        %8577 = vmatmul.f32.gmra.mxu0 %v7794
        %v8578 = vpop.f32.mrf.mxu0
        %v8579 = vadd.f32 %v7295, %v8578
        %8580 = vmatmul.f32.gmra.mxu0 %v7797
        %v8581 = vpop.f32.mrf.mxu0
        %v8582 = vadd.f32 %v7295, %v8581
        %8583 = vmatmul.f32.gmra.mxu0 %v7800
        %v8584 = vpop.f32.mrf.mxu0
        %v8585 = vadd.f32 %v7295, %v8584
        %8586 = vmatmul.f32.gmra.mxu0 %v7803
        %v8587 = vpop.f32.mrf.mxu0
        %v8588 = vadd.f32 %v7295, %v8587
        %8589 = vmatmul.f32.gmra.mxu0 %v7806
        %v8590 = vpop.f32.mrf.mxu0
        %v8591 = vadd.f32 %v7295, %v8590
        %8592 = vmatmul.f32.gmra.mxu0 %v7809
        %v8593 = vpop.f32.mrf.mxu0
        %v8594 = vadd.f32 %v7295, %v8593
        %8595 = vmatmul.f32.gmra.mxu0 %v7812
        %v8596 = vpop.f32.mrf.mxu0
        %v8597 = vadd.f32 %v7295, %v8596
        %8598 = vmatmul.f32.gmra.mxu0 %v7815
        %v8599 = vpop.f32.mrf.mxu0
        %v8600 = vadd.f32 %v7295, %v8599
        %8601 = vmatmul.f32.gmra.mxu0 %v7818
        %v8602 = vpop.f32.mrf.mxu0
        %v8603 = vadd.f32 %v7295, %v8602
        %8604 = vmatmul.f32.gmra.mxu0 %v7821
        %v8605 = vpop.f32.mrf.mxu0
        %v8606 = vadd.f32 %v7295, %v8605
        %8607 = vmatmul.f32.gmra.mxu0 %v7824
        %v8608 = vpop.f32.mrf.mxu0
        %v8609 = vadd.f32 %v7295, %v8608
        %8610 = vmatmul.f32.gmra.mxu0 %v7827
        %v8611 = vpop.f32.mrf.mxu0
        %v8612 = vadd.f32 %v7295, %v8611
        %8613 = vmatmul.f32.gmra.mxu0 %v7830
        %v8614 = vpop.f32.mrf.mxu0
        %v8615 = vadd.f32 %v7295, %v8614
        %8616 = vmatmul.f32.gmra.mxu0 %v7833
        %v8617 = vpop.f32.mrf.mxu0
        %v8618 = vadd.f32 %v7295, %v8617
        %8619 = vmatmul.f32.gmra.mxu0 %v7836
        %v8620 = vpop.f32.mrf.mxu0
        %v8621 = vadd.f32 %v7295, %v8620
        %8622 = vmatmul.f32.gmra.mxu0 %v7839
        %v8623 = vpop.f32.mrf.mxu0
        %v8624 = vadd.f32 %v7295, %v8623
        %8625 = vmatmul.f32.gmra.mxu0 %v7842
        %v8626 = vpop.f32.mrf.mxu0
        %v8627 = vadd.f32 %v7295, %v8626
        %8628 = vmatmul.f32.gmra.mxu0 %v7845
        %v8629 = vpop.f32.mrf.mxu0
        %v8630 = vadd.f32 %v7295, %v8629
        %8631 = vmatmul.f32.gmra.mxu0 %v7848
        %v8632 = vpop.f32.mrf.mxu0
        %v8633 = vadd.f32 %v7295, %v8632
        %8634 = vmatmul.f32.gmra.mxu0 %v7851
        %v8635 = vpop.f32.mrf.mxu0
        %v8636 = vadd.f32 %v7295, %v8635
        %8637 = vmatmul.f32.gmra.mxu0 %v7854
        %v8638 = vpop.f32.mrf.mxu0
        %v8639 = vadd.f32 %v7295, %v8638
        %8640 = vmatmul.f32.gmra.mxu0 %v7857
        %v8641 = vpop.f32.mrf.mxu0
        %v8642 = vadd.f32 %v7295, %v8641
        %8643 = vmatmul.f32.gmra.mxu0 %v7860
        %v8644 = vpop.f32.mrf.mxu0
        %v8645 = vadd.f32 %v7295, %v8644
        %8646 = vmatmul.f32.gmra.mxu0 %v7863
        %v8647 = vpop.f32.mrf.mxu0
        %v8648 = vadd.f32 %v7295, %v8647
        %8649 = vmatmul.f32.gmra.mxu0 %v7866
        %v8650 = vpop.f32.mrf.mxu0
        %v8651 = vadd.f32 %v7295, %v8650
        %8652 = vmatmul.f32.gmra.mxu0 %v7869
        %v8653 = vpop.f32.mrf.mxu0
        %v8654 = vadd.f32 %v7295, %v8653
        %8655 = vmatmul.f32.gmra.mxu0 %v7872
        %v8656 = vpop.f32.mrf.mxu0
        %v8657 = vadd.f32 %v7295, %v8656
        %8658 = vmatmul.f32.gmra.mxu0 %v7875
        %v8659 = vpop.f32.mrf.mxu0
        %v8660 = vadd.f32 %v7295, %v8659
        %8661 = vmatmul.f32.gmra.mxu0 %v7878
        %v8662 = vpop.f32.mrf.mxu0
        %v8663 = vadd.f32 %v7295, %v8662
        %8664 = vmatmul.f32.gmra.mxu0 %v7881
        %v8665 = vpop.f32.mrf.mxu0
        %v8666 = vadd.f32 %v7295, %v8665
        %8667 = vmatmul.f32.gmra.mxu0 %v7884
        %v8668 = vpop.f32.mrf.mxu0
        %v8669 = vadd.f32 %v7295, %v8668
        %8670 = vmatmul.f32.gmra.mxu0 %v7887
        %v8671 = vpop.f32.mrf.mxu0
        %v8672 = vadd.f32 %v7295, %v8671
        %8673 = vmatmul.f32.gmra.mxu0 %v7890
        %v8674 = vpop.f32.mrf.mxu0
        %v8675 = vadd.f32 %v7295, %v8674
        %8676 = vmatmul.f32.gmra.mxu0 %v7893
        %v8677 = vpop.f32.mrf.mxu0
        %v8678 = vadd.f32 %v7295, %v8677
        %8679 = vmatmul.f32.gmra.mxu0 %v7896
        %v8680 = vpop.f32.mrf.mxu0
        %v8681 = vadd.f32 %v7295, %v8680
        %8682 = vmatmul.f32.gmra.mxu0 %v7899
        %v8683 = vpop.f32.mrf.mxu0
        %v8684 = vadd.f32 %v7295, %v8683
        %8685 = vmatmul.f32.gmra.mxu0 %v7902
        %v8686 = vpop.f32.mrf.mxu0
        %v8687 = vadd.f32 %v7295, %v8686
        %8688 = vmatmul.f32.gmra.mxu0 %v7905
        %v8689 = vpop.f32.mrf.mxu0
        %v8690 = vadd.f32 %v7295, %v8689
        %8691 = vmatmul.f32.gmra.mxu0 %v7908
        %v8692 = vpop.f32.mrf.mxu0
        %v8693 = vadd.f32 %v7295, %v8692
        %8694 = vmatmul.f32.gmra.mxu0 %v7911
        %v8695 = vpop.f32.mrf.mxu0
        %v8696 = vadd.f32 %v7295, %v8695
        %8697 = vmatmul.f32.gmra.mxu0 %v7914
        %v8698 = vpop.f32.mrf.mxu0
        %v8699 = vadd.f32 %v7295, %v8698
        %8700 = vmatmul.f32.gmra.mxu0 %v7917
        %v8701 = vpop.f32.mrf.mxu0
        %v8702 = vadd.f32 %v7295, %v8701
        %8703 = vmatmul.f32.gmra.mxu0 %v7920
        %v8704 = vpop.f32.mrf.mxu0
        %v8705 = vadd.f32 %v7295, %v8704
        %8706 = vmatmul.f32.gmra.mxu0 %v7923
        %v8707 = vpop.f32.mrf.mxu0
        %v8708 = vadd.f32 %v7295, %v8707
        %8709 = vmatmul.f32.gmra.mxu0 %v7926
        %v8710 = vpop.f32.mrf.mxu0
        %v8711 = vadd.f32 %v7295, %v8710
        %8712 = vmatmul.f32.gmra.mxu0 %v7929
        %v8713 = vpop.f32.mrf.mxu0
        %v8714 = vadd.f32 %v7295, %v8713
        %8715 = vmatmul.f32.gmra.mxu0 %v7932
        %v8716 = vpop.f32.mrf.mxu0
        %v8717 = vadd.f32 %v7295, %v8716
        %8718 = vmatmul.f32.gmra.mxu0 %v7935
        %v8719 = vpop.f32.mrf.mxu0
        %v8720 = vadd.f32 %v7295, %v8719
        %8721 = vmatmul.f32.gmra.mxu0 %v7938
        %v8722 = vpop.f32.mrf.mxu0
        %v8723 = vadd.f32 %v7295, %v8722
        %8724 = vmatmul.f32.gmra.mxu0 %v7941
        %v8725 = vpop.f32.mrf.mxu0
        %v8726 = vadd.f32 %v7295, %v8725
        %8727 = vmatmul.f32.gmra.mxu0 %v7944
        %v8728 = vpop.f32.mrf.mxu0
        %v8729 = vadd.f32 %v7295, %v8728
        %8730 = vmatmul.f32.gmra.mxu0 %v7947
        %v8731 = vpop.f32.mrf.mxu0
        %v8732 = vadd.f32 %v7295, %v8731
        %8733 = vmatmul.f32.gmra.mxu0 %v7950
        %v8734 = vpop.f32.mrf.mxu0
        %v8735 = vadd.f32 %v7295, %v8734
        %8736 = vmatmul.f32.gmra.mxu0 %v7953
        %v8737 = vpop.f32.mrf.mxu0
        %v8738 = vadd.f32 %v7295, %v8737
        %8739 = vmatmul.f32.gmra.mxu0 %v7956
        %v8740 = vpop.f32.mrf.mxu0
        %v8741 = vadd.f32 %v7295, %v8740
        %8742 = vmatmul.f32.gmra.mxu0 %v7959
        %v8743 = vpop.f32.mrf.mxu0
        %v8744 = vadd.f32 %v7295, %v8743
        %8745 = vmatmul.f32.gmra.mxu0 %v7962
        %v8746 = vpop.f32.mrf.mxu0
        %v8747 = vadd.f32 %v7295, %v8746
        %8748 = vmatmul.f32.gmra.mxu0 %v7965
        %v8749 = vpop.f32.mrf.mxu0
        %v8750 = vadd.f32 %v7295, %v8749
        %8751 = vmatmul.f32.gmra.mxu0 %v7968
        %v8752 = vpop.f32.mrf.mxu0
        %v8753 = vadd.f32 %v7295, %v8752
        %8754 = vmatmul.f32.gmra.mxu0 %v7971
        %v8755 = vpop.f32.mrf.mxu0
        %v8756 = vadd.f32 %v7295, %v8755
        %8757 = vmatmul.f32.gmra.mxu0 %v7974
        %v8758 = vpop.f32.mrf.mxu0
        %v8759 = vadd.f32 %v7295, %v8758
        %8760 = vmatmul.f32.gmra.mxu0 %v7977
        %v8761 = vpop.f32.mrf.mxu0
        %v8762 = vadd.f32 %v7295, %v8761
        %8763 = vmatmul.f32.gmra.mxu0 %v7980
        %v8764 = vpop.f32.mrf.mxu0
        %v8765 = vadd.f32 %v7295, %v8764
        %8766 = vmatmul.f32.gmra.mxu0 %v7983
        %v8767 = vpop.f32.mrf.mxu0
        %v8768 = vadd.f32 %v7295, %v8767
        %8769 = vmatmul.f32.gmra.mxu0 %v7986
        %v8770 = vpop.f32.mrf.mxu0
        %v8771 = vadd.f32 %v7295, %v8770
        %8772 = vmatmul.f32.gmra.mxu0 %v7989
        %v8773 = vpop.f32.mrf.mxu0
        %v8774 = vadd.f32 %v7295, %v8773
        %8775 = vmatmul.f32.gmra.mxu0 %v7992
        %v8776 = vpop.f32.mrf.mxu0
        %v8777 = vadd.f32 %v7295, %v8776
        %8778 = vmatmul.f32.gmra.mxu0 %v7995
        %v8779 = vpop.f32.mrf.mxu0
        %v8780 = vadd.f32 %v7295, %v8779
        %8781 = vmatmul.f32.gmra.mxu0 %v7998
        %v8782 = vpop.f32.mrf.mxu0
        %v8783 = vadd.f32 %v7295, %v8782
        %8784 = vmatmul.f32.gmra.mxu0 %v8001
        %v8785 = vpop.f32.mrf.mxu0
        %v8786 = vadd.f32 %v7295, %v8785
        %8787 = vmatmul.f32.gmra.mxu0 %v8004
        %v8788 = vpop.f32.mrf.mxu0
        %v8789 = vadd.f32 %v7295, %v8788
        %8790 = vmatmul.f32.gmra.mxu0 %v8007
        %v8791 = vpop.f32.mrf.mxu0
        %v8792 = vadd.f32 %v7295, %v8791
        %8793 = vmatmul.f32.gmra.mxu0 %v8010
        %v8794 = vpop.f32.mrf.mxu0
        %v8795 = vadd.f32 %v7295, %v8794
        %8796 = vmatmul.f32.gmra.mxu0 %v8013
        %v8797 = vpop.f32.mrf.mxu0
        %v8798 = vadd.f32 %v7295, %v8797
        %8799 = vmatmul.f32.gmra.mxu0 %v8016
        %v8800 = vpop.f32.mrf.mxu0
        %v8801 = vadd.f32 %v7295, %v8800
        %8802 = vmatmul.f32.gmra.mxu0 %v8019
        %v8803 = vpop.f32.mrf.mxu0
        %v8804 = vadd.f32 %v7295, %v8803
        %8805 = vmatmul.f32.gmra.mxu0 %v8022
        %v8806 = vpop.f32.mrf.mxu0
        %v8807 = vadd.f32 %v7295, %v8806
        %8808 = vmatmul.f32.gmra.mxu0 %v8025
        %v8809 = vpop.f32.mrf.mxu0
        %v8810 = vadd.f32 %v7295, %v8809
        %8811 = vmatmul.f32.gmra.mxu0 %v8028
        %v8812 = vpop.f32.mrf.mxu0
        %v8813 = vadd.f32 %v7295, %v8812
        %8814 = vmatmul.f32.gmra.mxu0 %v8031
        %v8815 = vpop.f32.mrf.mxu0
        %v8816 = vadd.f32 %v7295, %v8815
        %8817 = vmatmul.f32.gmra.mxu0 %v8034
        %v8818 = vpop.f32.mrf.mxu0
        %v8819 = vadd.f32 %v7295, %v8818
        %8820 = vmatmul.f32.gmra.mxu0 %v8037
        %v8821 = vpop.f32.mrf.mxu0
        %v8822 = vadd.f32 %v7295, %v8821
        %8823 = vmatmul.f32.gmra.mxu0 %v8040
        %v8824 = vpop.f32.mrf.mxu0
        %v8825 = vadd.f32 %v7295, %v8824
        %8826 = vmatmul.f32.gmra.mxu0 %v8043
        %v8827 = vpop.f32.mrf.mxu0
        %v8828 = vadd.f32 %v7295, %v8827
        %8829 = vmatmul.f32.gmra.mxu0 %v8046
        %v8830 = vpop.f32.mrf.mxu0
        %v8831 = vadd.f32 %v7295, %v8830
        %8832 = vmatmul.f32.gmra.mxu0 %v8049
        %v8833 = vpop.f32.mrf.mxu0
        %v8834 = vadd.f32 %v7295, %v8833
        %8835 = vmatmul.f32.gmra.mxu0 %v8052
        %v8836 = vpop.f32.mrf.mxu0
        %v8837 = vadd.f32 %v7295, %v8836
        %8838 = vmatmul.f32.gmra.mxu0 %v8055
        %v8839 = vpop.f32.mrf.mxu0
        %v8840 = vadd.f32 %v7295, %v8839
        %8841 = vmatmul.f32.gmra.mxu0 %v8058
        %v8842 = vpop.f32.mrf.mxu0
        %v8843 = vadd.f32 %v7295, %v8842
        %8844 = vmatmul.f32.gmra.mxu0 %v8061
        %v8845 = vpop.f32.mrf.mxu0
        %v8846 = vadd.f32 %v7295, %v8845
        %8847 = vmatmul.f32.gmra.mxu0 %v8064
        %v8848 = vpop.f32.mrf.mxu0
        %v8849 = vadd.f32 %v7295, %v8848
        %8850 = vdwg.mxu0
        %vm8851 = vcmp.gt.f32.partialorder %v8084, 0.0
        %vm8852 = vcmp.gt.f32.partialorder %v8087, 0.0
        %vm8853 = vcmp.gt.f32.partialorder %v8090, 0.0
        %vm8854 = vcmp.gt.f32.partialorder %v8093, 0.0
        %vm8855 = vcmp.gt.f32.partialorder %v8096, 0.0
        %vm8856 = vcmp.gt.f32.partialorder %v8099, 0.0
        %vm8857 = vcmp.gt.f32.partialorder %v8102, 0.0
        %vm8858 = vcmp.gt.f32.partialorder %v8105, 0.0
        %vm8859 = vcmp.gt.f32.partialorder %v8108, 0.0
        %vm8860 = vcmp.gt.f32.partialorder %v8111, 0.0
        %vm8861 = vcmp.gt.f32.partialorder %v8114, 0.0
        %vm8862 = vcmp.gt.f32.partialorder %v8117, 0.0
        %vm8863 = vcmp.gt.f32.partialorder %v8120, 0.0
        %vm8864 = vcmp.gt.f32.partialorder %v8123, 0.0
        %vm8865 = vcmp.gt.f32.partialorder %v8126, 0.0
        %vm8866 = vcmp.gt.f32.partialorder %v8129, 0.0
        %vm8867 = vcmp.gt.f32.partialorder %v8132, 0.0
        %vm8868 = vcmp.gt.f32.partialorder %v8135, 0.0
        %vm8869 = vcmp.gt.f32.partialorder %v8138, 0.0
        %vm8870 = vcmp.gt.f32.partialorder %v8141, 0.0
        %vm8871 = vcmp.gt.f32.partialorder %v8144, 0.0
        %vm8872 = vcmp.gt.f32.partialorder %v8147, 0.0
        %vm8873 = vcmp.gt.f32.partialorder %v8150, 0.0
        %vm8874 = vcmp.gt.f32.partialorder %v8153, 0.0
        %vm8875 = vcmp.gt.f32.partialorder %v8156, 0.0
        %vm8876 = vcmp.gt.f32.partialorder %v8159, 0.0
        %vm8877 = vcmp.gt.f32.partialorder %v8162, 0.0
        %vm8878 = vcmp.gt.f32.partialorder %v8165, 0.0
        %vm8879 = vcmp.gt.f32.partialorder %v8168, 0.0
        %vm8880 = vcmp.gt.f32.partialorder %v8171, 0.0
        %vm8881 = vcmp.gt.f32.partialorder %v8174, 0.0
        %vm8882 = vcmp.gt.f32.partialorder %v8177, 0.0
        %vm8883 = vcmp.gt.f32.partialorder %v8180, 0.0
        %vm8884 = vcmp.gt.f32.partialorder %v8183, 0.0
        %vm8885 = vcmp.gt.f32.partialorder %v8186, 0.0
        %vm8886 = vcmp.gt.f32.partialorder %v8189, 0.0
        %vm8887 = vcmp.gt.f32.partialorder %v8192, 0.0
        %vm8888 = vcmp.gt.f32.partialorder %v8195, 0.0
        %vm8889 = vcmp.gt.f32.partialorder %v8198, 0.0
        %vm8890 = vcmp.gt.f32.partialorder %v8201, 0.0
        %vm8891 = vcmp.gt.f32.partialorder %v8204, 0.0
        %vm8892 = vcmp.gt.f32.partialorder %v8207, 0.0
        %vm8893 = vcmp.gt.f32.partialorder %v8210, 0.0
        %vm8894 = vcmp.gt.f32.partialorder %v8213, 0.0
        %vm8895 = vcmp.gt.f32.partialorder %v8216, 0.0
        %vm8896 = vcmp.gt.f32.partialorder %v8219, 0.0
        %vm8897 = vcmp.gt.f32.partialorder %v8222, 0.0
        %vm8898 = vcmp.gt.f32.partialorder %v8225, 0.0
        %vm8899 = vcmp.gt.f32.partialorder %v8228, 0.0
        %vm8900 = vcmp.gt.f32.partialorder %v8231, 0.0
        %vm8901 = vcmp.gt.f32.partialorder %v8234, 0.0
        %vm8902 = vcmp.gt.f32.partialorder %v8237, 0.0
        %vm8903 = vcmp.gt.f32.partialorder %v8240, 0.0
        %vm8904 = vcmp.gt.f32.partialorder %v8243, 0.0
        %vm8905 = vcmp.gt.f32.partialorder %v8246, 0.0
        %vm8906 = vcmp.gt.f32.partialorder %v8249, 0.0
        %vm8907 = vcmp.gt.f32.partialorder %v8252, 0.0
        %vm8908 = vcmp.gt.f32.partialorder %v8255, 0.0
        %vm8909 = vcmp.gt.f32.partialorder %v8258, 0.0
        %vm8910 = vcmp.gt.f32.partialorder %v8261, 0.0
        %vm8911 = vcmp.gt.f32.partialorder %v8264, 0.0
        %vm8912 = vcmp.gt.f32.partialorder %v8267, 0.0
        %vm8913 = vcmp.gt.f32.partialorder %v8270, 0.0
        %vm8914 = vcmp.gt.f32.partialorder %v8273, 0.0
        %vm8915 = vcmp.gt.f32.partialorder %v8276, 0.0
        %vm8916 = vcmp.gt.f32.partialorder %v8279, 0.0
        %vm8917 = vcmp.gt.f32.partialorder %v8282, 0.0
        %vm8918 = vcmp.gt.f32.partialorder %v8285, 0.0
        %vm8919 = vcmp.gt.f32.partialorder %v8288, 0.0
        %vm8920 = vcmp.gt.f32.partialorder %v8291, 0.0
        %vm8921 = vcmp.gt.f32.partialorder %v8294, 0.0
        %vm8922 = vcmp.gt.f32.partialorder %v8297, 0.0
        %vm8923 = vcmp.gt.f32.partialorder %v8300, 0.0
        %vm8924 = vcmp.gt.f32.partialorder %v8303, 0.0
        %vm8925 = vcmp.gt.f32.partialorder %v8306, 0.0
        %vm8926 = vcmp.gt.f32.partialorder %v8309, 0.0
        %vm8927 = vcmp.gt.f32.partialorder %v8312, 0.0
        %vm8928 = vcmp.gt.f32.partialorder %v8315, 0.0
        %vm8929 = vcmp.gt.f32.partialorder %v8318, 0.0
        %vm8930 = vcmp.gt.f32.partialorder %v8321, 0.0
        %vm8931 = vcmp.gt.f32.partialorder %v8324, 0.0
        %vm8932 = vcmp.gt.f32.partialorder %v8327, 0.0
        %vm8933 = vcmp.gt.f32.partialorder %v8330, 0.0
        %vm8934 = vcmp.gt.f32.partialorder %v8333, 0.0
        %vm8935 = vcmp.gt.f32.partialorder %v8336, 0.0
        %vm8936 = vcmp.gt.f32.partialorder %v8339, 0.0
        %vm8937 = vcmp.gt.f32.partialorder %v8342, 0.0
        %vm8938 = vcmp.gt.f32.partialorder %v8345, 0.0
        %vm8939 = vcmp.gt.f32.partialorder %v8348, 0.0
        %vm8940 = vcmp.gt.f32.partialorder %v8351, 0.0
        %vm8941 = vcmp.gt.f32.partialorder %v8354, 0.0
        %vm8942 = vcmp.gt.f32.partialorder %v8357, 0.0
        %vm8943 = vcmp.gt.f32.partialorder %v8360, 0.0
        %vm8944 = vcmp.gt.f32.partialorder %v8363, 0.0
        %vm8945 = vcmp.gt.f32.partialorder %v8366, 0.0
        %vm8946 = vcmp.gt.f32.partialorder %v8369, 0.0
        %vm8947 = vcmp.gt.f32.partialorder %v8372, 0.0
        %vm8948 = vcmp.gt.f32.partialorder %v8375, 0.0
        %vm8949 = vcmp.gt.f32.partialorder %v8378, 0.0
        %vm8950 = vcmp.gt.f32.partialorder %v8381, 0.0
        %vm8951 = vcmp.gt.f32.partialorder %v8384, 0.0
        %vm8952 = vcmp.gt.f32.partialorder %v8387, 0.0
        %vm8953 = vcmp.gt.f32.partialorder %v8390, 0.0
        %vm8954 = vcmp.gt.f32.partialorder %v8393, 0.0
        %vm8955 = vcmp.gt.f32.partialorder %v8396, 0.0
        %vm8956 = vcmp.gt.f32.partialorder %v8399, 0.0
        %vm8957 = vcmp.gt.f32.partialorder %v8402, 0.0
        %vm8958 = vcmp.gt.f32.partialorder %v8405, 0.0
        %vm8959 = vcmp.gt.f32.partialorder %v8408, 0.0
        %vm8960 = vcmp.gt.f32.partialorder %v8411, 0.0
        %vm8961 = vcmp.gt.f32.partialorder %v8414, 0.0
        %vm8962 = vcmp.gt.f32.partialorder %v8417, 0.0
        %vm8963 = vcmp.gt.f32.partialorder %v8420, 0.0
        %vm8964 = vcmp.gt.f32.partialorder %v8423, 0.0
        %vm8965 = vcmp.gt.f32.partialorder %v8426, 0.0
        %vm8966 = vcmp.gt.f32.partialorder %v8429, 0.0
        %vm8967 = vcmp.gt.f32.partialorder %v8432, 0.0
        %vm8968 = vcmp.gt.f32.partialorder %v8435, 0.0
        %vm8969 = vcmp.gt.f32.partialorder %v8438, 0.0
        %vm8970 = vcmp.gt.f32.partialorder %v8441, 0.0
        %vm8971 = vcmp.gt.f32.partialorder %v8444, 0.0
        %vm8972 = vcmp.gt.f32.partialorder %v8447, 0.0
        %vm8973 = vcmp.gt.f32.partialorder %v8450, 0.0
        %vm8974 = vcmp.gt.f32.partialorder %v8453, 0.0
        %vm8975 = vcmp.gt.f32.partialorder %v8456, 0.0
        %vm8976 = vcmp.gt.f32.partialorder %v8459, 0.0
        %vm8977 = vcmp.gt.f32.partialorder %v8462, 0.0
        %vm8978 = vcmp.gt.f32.partialorder %v8465, 0.0
        %vm8979 = vcmp.gt.f32.partialorder %v8468, 0.0
        %vm8980 = vcmp.gt.f32.partialorder %v8471, 0.0
        %vm8981 = vcmp.gt.f32.partialorder %v8474, 0.0
        %vm8982 = vcmp.gt.f32.partialorder %v8477, 0.0
        %vm8983 = vcmp.gt.f32.partialorder %v8480, 0.0
        %vm8984 = vcmp.gt.f32.partialorder %v8483, 0.0
        %vm8985 = vcmp.gt.f32.partialorder %v8486, 0.0
        %vm8986 = vcmp.gt.f32.partialorder %v8489, 0.0
        %vm8987 = vcmp.gt.f32.partialorder %v8492, 0.0
        %vm8988 = vcmp.gt.f32.partialorder %v8495, 0.0
        %vm8989 = vcmp.gt.f32.partialorder %v8498, 0.0
        %vm8990 = vcmp.gt.f32.partialorder %v8501, 0.0
        %vm8991 = vcmp.gt.f32.partialorder %v8504, 0.0
        %vm8992 = vcmp.gt.f32.partialorder %v8507, 0.0
        %vm8993 = vcmp.gt.f32.partialorder %v8510, 0.0
        %vm8994 = vcmp.gt.f32.partialorder %v8513, 0.0
        %vm8995 = vcmp.gt.f32.partialorder %v8516, 0.0
        %vm8996 = vcmp.gt.f32.partialorder %v8519, 0.0
        %vm8997 = vcmp.gt.f32.partialorder %v8522, 0.0
        %vm8998 = vcmp.gt.f32.partialorder %v8525, 0.0
        %vm8999 = vcmp.gt.f32.partialorder %v8528, 0.0
        %vm9000 = vcmp.gt.f32.partialorder %v8531, 0.0
        %vm9001 = vcmp.gt.f32.partialorder %v8534, 0.0
        %vm9002 = vcmp.gt.f32.partialorder %v8537, 0.0
        %vm9003 = vcmp.gt.f32.partialorder %v8540, 0.0
        %vm9004 = vcmp.gt.f32.partialorder %v8543, 0.0
        %vm9005 = vcmp.gt.f32.partialorder %v8546, 0.0
        %vm9006 = vcmp.gt.f32.partialorder %v8549, 0.0
        %vm9007 = vcmp.gt.f32.partialorder %v8552, 0.0
        %vm9008 = vcmp.gt.f32.partialorder %v8555, 0.0
        %vm9009 = vcmp.gt.f32.partialorder %v8558, 0.0
        %vm9010 = vcmp.gt.f32.partialorder %v8561, 0.0
        %vm9011 = vcmp.gt.f32.partialorder %v8564, 0.0
        %vm9012 = vcmp.gt.f32.partialorder %v8567, 0.0
        %vm9013 = vcmp.gt.f32.partialorder %v8570, 0.0
        %vm9014 = vcmp.gt.f32.partialorder %v8573, 0.0
        %vm9015 = vcmp.gt.f32.partialorder %v8576, 0.0
        %vm9016 = vcmp.gt.f32.partialorder %v8579, 0.0
        %vm9017 = vcmp.gt.f32.partialorder %v8582, 0.0
        %vm9018 = vcmp.gt.f32.partialorder %v8585, 0.0
        %vm9019 = vcmp.gt.f32.partialorder %v8588, 0.0
        %vm9020 = vcmp.gt.f32.partialorder %v8591, 0.0
        %vm9021 = vcmp.gt.f32.partialorder %v8594, 0.0
        %vm9022 = vcmp.gt.f32.partialorder %v8597, 0.0
        %vm9023 = vcmp.gt.f32.partialorder %v8600, 0.0
        %vm9024 = vcmp.gt.f32.partialorder %v8603, 0.0
        %vm9025 = vcmp.gt.f32.partialorder %v8606, 0.0
        %vm9026 = vcmp.gt.f32.partialorder %v8609, 0.0
        %vm9027 = vcmp.gt.f32.partialorder %v8612, 0.0
        %vm9028 = vcmp.gt.f32.partialorder %v8615, 0.0
        %vm9029 = vcmp.gt.f32.partialorder %v8618, 0.0
        %vm9030 = vcmp.gt.f32.partialorder %v8621, 0.0
        %vm9031 = vcmp.gt.f32.partialorder %v8624, 0.0
        %vm9032 = vcmp.gt.f32.partialorder %v8627, 0.0
        %vm9033 = vcmp.gt.f32.partialorder %v8630, 0.0
        %vm9034 = vcmp.gt.f32.partialorder %v8633, 0.0
        %vm9035 = vcmp.gt.f32.partialorder %v8636, 0.0
        %vm9036 = vcmp.gt.f32.partialorder %v8639, 0.0
        %vm9037 = vcmp.gt.f32.partialorder %v8642, 0.0
        %vm9038 = vcmp.gt.f32.partialorder %v8645, 0.0
        %vm9039 = vcmp.gt.f32.partialorder %v8648, 0.0
        %vm9040 = vcmp.gt.f32.partialorder %v8651, 0.0
        %vm9041 = vcmp.gt.f32.partialorder %v8654, 0.0
        %vm9042 = vcmp.gt.f32.partialorder %v8657, 0.0
        %vm9043 = vcmp.gt.f32.partialorder %v8660, 0.0
        %vm9044 = vcmp.gt.f32.partialorder %v8663, 0.0
        %vm9045 = vcmp.gt.f32.partialorder %v8666, 0.0
        %vm9046 = vcmp.gt.f32.partialorder %v8669, 0.0
        %vm9047 = vcmp.gt.f32.partialorder %v8672, 0.0
        %vm9048 = vcmp.gt.f32.partialorder %v8675, 0.0
        %vm9049 = vcmp.gt.f32.partialorder %v8678, 0.0
        %vm9050 = vcmp.gt.f32.partialorder %v8681, 0.0
        %vm9051 = vcmp.gt.f32.partialorder %v8684, 0.0
        %vm9052 = vcmp.gt.f32.partialorder %v8687, 0.0
        %vm9053 = vcmp.gt.f32.partialorder %v8690, 0.0
        %vm9054 = vcmp.gt.f32.partialorder %v8693, 0.0
        %vm9055 = vcmp.gt.f32.partialorder %v8696, 0.0
        %vm9056 = vcmp.gt.f32.partialorder %v8699, 0.0
        %vm9057 = vcmp.gt.f32.partialorder %v8702, 0.0
        %vm9058 = vcmp.gt.f32.partialorder %v8705, 0.0
        %vm9059 = vcmp.gt.f32.partialorder %v8708, 0.0
        %vm9060 = vcmp.gt.f32.partialorder %v8711, 0.0
        %vm9061 = vcmp.gt.f32.partialorder %v8714, 0.0
        %vm9062 = vcmp.gt.f32.partialorder %v8717, 0.0
        %vm9063 = vcmp.gt.f32.partialorder %v8720, 0.0
        %vm9064 = vcmp.gt.f32.partialorder %v8723, 0.0
        %vm9065 = vcmp.gt.f32.partialorder %v8726, 0.0
        %vm9066 = vcmp.gt.f32.partialorder %v8729, 0.0
        %vm9067 = vcmp.gt.f32.partialorder %v8732, 0.0
        %vm9068 = vcmp.gt.f32.partialorder %v8735, 0.0
        %vm9069 = vcmp.gt.f32.partialorder %v8738, 0.0
        %vm9070 = vcmp.gt.f32.partialorder %v8741, 0.0
        %vm9071 = vcmp.gt.f32.partialorder %v8744, 0.0
        %vm9072 = vcmp.gt.f32.partialorder %v8747, 0.0
        %vm9073 = vcmp.gt.f32.partialorder %v8750, 0.0
        %vm9074 = vcmp.gt.f32.partialorder %v8753, 0.0
        %vm9075 = vcmp.gt.f32.partialorder %v8756, 0.0
        %vm9076 = vcmp.gt.f32.partialorder %v8759, 0.0
        %vm9077 = vcmp.gt.f32.partialorder %v8762, 0.0
        %vm9078 = vcmp.gt.f32.partialorder %v8765, 0.0
        %vm9079 = vcmp.gt.f32.partialorder %v8768, 0.0
        %vm9080 = vcmp.gt.f32.partialorder %v8771, 0.0
        %vm9081 = vcmp.gt.f32.partialorder %v8774, 0.0
        %vm9082 = vcmp.gt.f32.partialorder %v8777, 0.0
        %vm9083 = vcmp.gt.f32.partialorder %v8780, 0.0
        %vm9084 = vcmp.gt.f32.partialorder %v8783, 0.0
        %vm9085 = vcmp.gt.f32.partialorder %v8786, 0.0
        %vm9086 = vcmp.gt.f32.partialorder %v8789, 0.0
        %vm9087 = vcmp.gt.f32.partialorder %v8792, 0.0
        %vm9088 = vcmp.gt.f32.partialorder %v8795, 0.0
        %vm9089 = vcmp.gt.f32.partialorder %v8798, 0.0
        %vm9090 = vcmp.gt.f32.partialorder %v8801, 0.0
        %vm9091 = vcmp.gt.f32.partialorder %v8804, 0.0
        %vm9092 = vcmp.gt.f32.partialorder %v8807, 0.0
        %vm9093 = vcmp.gt.f32.partialorder %v8810, 0.0
        %vm9094 = vcmp.gt.f32.partialorder %v8813, 0.0
        %vm9095 = vcmp.gt.f32.partialorder %v8816, 0.0
        %vm9096 = vcmp.gt.f32.partialorder %v8819, 0.0
        %vm9097 = vcmp.gt.f32.partialorder %v8822, 0.0
        %vm9098 = vcmp.gt.f32.partialorder %v8825, 0.0
        %vm9099 = vcmp.gt.f32.partialorder %v8828, 0.0
        %vm9100 = vcmp.gt.f32.partialorder %v8831, 0.0
        %vm9101 = vcmp.gt.f32.partialorder %v8834, 0.0
        %vm9102 = vcmp.gt.f32.partialorder %v8837, 0.0
        %vm9103 = vcmp.gt.f32.partialorder %v8840, 0.0
        %vm9104 = vcmp.gt.f32.partialorder %v8843, 0.0
        %vm9105 = vcmp.gt.f32.partialorder %v8846, 0.0
        %vm9106 = vcmp.gt.f32.partialorder %v8849, 0.0
        %v9107 = vmul.f32 %v8084, 0.01
        %v9108 = vmul.f32 %v8087, 0.01
        %v9109 = vmul.f32 %v8090, 0.01
        %v9110 = vmul.f32 %v8093, 0.01
        %v9111 = vmul.f32 %v8096, 0.01
        %v9112 = vmul.f32 %v8099, 0.01
        %v9113 = vmul.f32 %v8102, 0.01
        %v9114 = vmul.f32 %v8105, 0.01
        %v9115 = vmul.f32 %v8108, 0.01
        %v9116 = vmul.f32 %v8111, 0.01
        %v9117 = vmul.f32 %v8114, 0.01
        %v9118 = vmul.f32 %v8117, 0.01
        %v9119 = vmul.f32 %v8120, 0.01
        %v9120 = vmul.f32 %v8123, 0.01
        %v9121 = vmul.f32 %v8126, 0.01
        %v9122 = vmul.f32 %v8129, 0.01
        %v9123 = vmul.f32 %v8132, 0.01
        %v9124 = vmul.f32 %v8135, 0.01
        %v9125 = vmul.f32 %v8138, 0.01
        %v9126 = vmul.f32 %v8141, 0.01
        %v9127 = vmul.f32 %v8144, 0.01
        %v9128 = vmul.f32 %v8147, 0.01
        %v9129 = vmul.f32 %v8150, 0.01
        %v9130 = vmul.f32 %v8153, 0.01
        %v9131 = vmul.f32 %v8156, 0.01
        %v9132 = vmul.f32 %v8159, 0.01
        %v9133 = vmul.f32 %v8162, 0.01
        %v9134 = vmul.f32 %v8165, 0.01
        %v9135 = vmul.f32 %v8168, 0.01
        %v9136 = vmul.f32 %v8171, 0.01
        %v9137 = vmul.f32 %v8174, 0.01
        %v9138 = vmul.f32 %v8177, 0.01
        %v9139 = vmul.f32 %v8180, 0.01
        %v9140 = vmul.f32 %v8183, 0.01
        %v9141 = vmul.f32 %v8186, 0.01
        %v9142 = vmul.f32 %v8189, 0.01
        %v9143 = vmul.f32 %v8192, 0.01
        %v9144 = vmul.f32 %v8195, 0.01
        %v9145 = vmul.f32 %v8198, 0.01
        %v9146 = vmul.f32 %v8201, 0.01
        %v9147 = vmul.f32 %v8204, 0.01
        %v9148 = vmul.f32 %v8207, 0.01
        %v9149 = vmul.f32 %v8210, 0.01
        %v9150 = vmul.f32 %v8213, 0.01
        %v9151 = vmul.f32 %v8216, 0.01
        %v9152 = vmul.f32 %v8219, 0.01
        %v9153 = vmul.f32 %v8222, 0.01
        %v9154 = vmul.f32 %v8225, 0.01
        %v9155 = vmul.f32 %v8228, 0.01
        %v9156 = vmul.f32 %v8231, 0.01
        %v9157 = vmul.f32 %v8234, 0.01
        %v9158 = vmul.f32 %v8237, 0.01
        %v9159 = vmul.f32 %v8240, 0.01
        %v9160 = vmul.f32 %v8243, 0.01
        %v9161 = vmul.f32 %v8246, 0.01
        %v9162 = vmul.f32 %v8249, 0.01
        %v9163 = vmul.f32 %v8252, 0.01
        %v9164 = vmul.f32 %v8255, 0.01
        %v9165 = vmul.f32 %v8258, 0.01
        %v9166 = vmul.f32 %v8261, 0.01
        %v9167 = vmul.f32 %v8264, 0.01
        %v9168 = vmul.f32 %v8267, 0.01
        %v9169 = vmul.f32 %v8270, 0.01
        %v9170 = vmul.f32 %v8273, 0.01
        %v9171 = vmul.f32 %v8276, 0.01
        %v9172 = vmul.f32 %v8279, 0.01
        %v9173 = vmul.f32 %v8282, 0.01
        %v9174 = vmul.f32 %v8285, 0.01
        %v9175 = vmul.f32 %v8288, 0.01
        %v9176 = vmul.f32 %v8291, 0.01
        %v9177 = vmul.f32 %v8294, 0.01
        %v9178 = vmul.f32 %v8297, 0.01
        %v9179 = vmul.f32 %v8300, 0.01
        %v9180 = vmul.f32 %v8303, 0.01
        %v9181 = vmul.f32 %v8306, 0.01
        %v9182 = vmul.f32 %v8309, 0.01
        %v9183 = vmul.f32 %v8312, 0.01
        %v9184 = vmul.f32 %v8315, 0.01
        %v9185 = vmul.f32 %v8318, 0.01
        %v9186 = vmul.f32 %v8321, 0.01
        %v9187 = vmul.f32 %v8324, 0.01
        %v9188 = vmul.f32 %v8327, 0.01
        %v9189 = vmul.f32 %v8330, 0.01
        %v9190 = vmul.f32 %v8333, 0.01
        %v9191 = vmul.f32 %v8336, 0.01
        %v9192 = vmul.f32 %v8339, 0.01
        %v9193 = vmul.f32 %v8342, 0.01
        %v9194 = vmul.f32 %v8345, 0.01
        %v9195 = vmul.f32 %v8348, 0.01
        %v9196 = vmul.f32 %v8351, 0.01
        %v9197 = vmul.f32 %v8354, 0.01
        %v9198 = vmul.f32 %v8357, 0.01
        %v9199 = vmul.f32 %v8360, 0.01
        %v9200 = vmul.f32 %v8363, 0.01
        %v9201 = vmul.f32 %v8366, 0.01
        %v9202 = vmul.f32 %v8369, 0.01
        %v9203 = vmul.f32 %v8372, 0.01
        %v9204 = vmul.f32 %v8375, 0.01
        %v9205 = vmul.f32 %v8378, 0.01
        %v9206 = vmul.f32 %v8381, 0.01
        %v9207 = vmul.f32 %v8384, 0.01
        %v9208 = vmul.f32 %v8387, 0.01
        %v9209 = vmul.f32 %v8390, 0.01
        %v9210 = vmul.f32 %v8393, 0.01
        %v9211 = vmul.f32 %v8396, 0.01
        %v9212 = vmul.f32 %v8399, 0.01
        %v9213 = vmul.f32 %v8402, 0.01
        %v9214 = vmul.f32 %v8405, 0.01
        %v9215 = vmul.f32 %v8408, 0.01
        %v9216 = vmul.f32 %v8411, 0.01
        %v9217 = vmul.f32 %v8414, 0.01
        %v9218 = vmul.f32 %v8417, 0.01
        %v9219 = vmul.f32 %v8420, 0.01
        %v9220 = vmul.f32 %v8423, 0.01
        %v9221 = vmul.f32 %v8426, 0.01
        %v9222 = vmul.f32 %v8429, 0.01
        %v9223 = vmul.f32 %v8432, 0.01
        %v9224 = vmul.f32 %v8435, 0.01
        %v9225 = vmul.f32 %v8438, 0.01
        %v9226 = vmul.f32 %v8441, 0.01
        %v9227 = vmul.f32 %v8444, 0.01
        %v9228 = vmul.f32 %v8447, 0.01
        %v9229 = vmul.f32 %v8450, 0.01
        %v9230 = vmul.f32 %v8453, 0.01
        %v9231 = vmul.f32 %v8456, 0.01
        %v9232 = vmul.f32 %v8459, 0.01
        %v9233 = vmul.f32 %v8462, 0.01
        %v9234 = vmul.f32 %v8465, 0.01
        %v9235 = vmul.f32 %v8468, 0.01
        %v9236 = vmul.f32 %v8471, 0.01
        %v9237 = vmul.f32 %v8474, 0.01
        %v9238 = vmul.f32 %v8477, 0.01
        %v9239 = vmul.f32 %v8480, 0.01
        %v9240 = vmul.f32 %v8483, 0.01
        %v9241 = vmul.f32 %v8486, 0.01
        %v9242 = vmul.f32 %v8489, 0.01
        %v9243 = vmul.f32 %v8492, 0.01
        %v9244 = vmul.f32 %v8495, 0.01
        %v9245 = vmul.f32 %v8498, 0.01
        %v9246 = vmul.f32 %v8501, 0.01
        %v9247 = vmul.f32 %v8504, 0.01
        %v9248 = vmul.f32 %v8507, 0.01
        %v9249 = vmul.f32 %v8510, 0.01
        %v9250 = vmul.f32 %v8513, 0.01
        %v9251 = vmul.f32 %v8516, 0.01
        %v9252 = vmul.f32 %v8519, 0.01
        %v9253 = vmul.f32 %v8522, 0.01
        %v9254 = vmul.f32 %v8525, 0.01
        %v9255 = vmul.f32 %v8528, 0.01
        %v9256 = vmul.f32 %v8531, 0.01
        %v9257 = vmul.f32 %v8534, 0.01
        %v9258 = vmul.f32 %v8537, 0.01
        %v9259 = vmul.f32 %v8540, 0.01
        %v9260 = vmul.f32 %v8543, 0.01
        %v9261 = vmul.f32 %v8546, 0.01
        %v9262 = vmul.f32 %v8549, 0.01
        %v9263 = vmul.f32 %v8552, 0.01
        %v9264 = vmul.f32 %v8555, 0.01
        %v9265 = vmul.f32 %v8558, 0.01
        %v9266 = vmul.f32 %v8561, 0.01
        %v9267 = vmul.f32 %v8564, 0.01
        %v9268 = vmul.f32 %v8567, 0.01
        %v9269 = vmul.f32 %v8570, 0.01
        %v9270 = vmul.f32 %v8573, 0.01
        %v9271 = vmul.f32 %v8576, 0.01
        %v9272 = vmul.f32 %v8579, 0.01
        %v9273 = vmul.f32 %v8582, 0.01
        %v9274 = vmul.f32 %v8585, 0.01
        %v9275 = vmul.f32 %v8588, 0.01
        %v9276 = vmul.f32 %v8591, 0.01
        %v9277 = vmul.f32 %v8594, 0.01
        %v9278 = vmul.f32 %v8597, 0.01
        %v9279 = vmul.f32 %v8600, 0.01
        %v9280 = vmul.f32 %v8603, 0.01
        %v9281 = vmul.f32 %v8606, 0.01
        %v9282 = vmul.f32 %v8609, 0.01
        %v9283 = vmul.f32 %v8612, 0.01
        %v9284 = vmul.f32 %v8615, 0.01
        %v9285 = vmul.f32 %v8618, 0.01
        %v9286 = vmul.f32 %v8621, 0.01
        %v9287 = vmul.f32 %v8624, 0.01
        %v9288 = vmul.f32 %v8627, 0.01
        %v9289 = vmul.f32 %v8630, 0.01
        %v9290 = vmul.f32 %v8633, 0.01
        %v9291 = vmul.f32 %v8636, 0.01
        %v9292 = vmul.f32 %v8639, 0.01
        %v9293 = vmul.f32 %v8642, 0.01
        %v9294 = vmul.f32 %v8645, 0.01
        %v9295 = vmul.f32 %v8648, 0.01
        %v9296 = vmul.f32 %v8651, 0.01
        %v9297 = vmul.f32 %v8654, 0.01
        %v9298 = vmul.f32 %v8657, 0.01
        %v9299 = vmul.f32 %v8660, 0.01
        %v9300 = vmul.f32 %v8663, 0.01
        %v9301 = vmul.f32 %v8666, 0.01
        %v9302 = vmul.f32 %v8669, 0.01
        %v9303 = vmul.f32 %v8672, 0.01
        %v9304 = vmul.f32 %v8675, 0.01
        %v9305 = vmul.f32 %v8678, 0.01
        %v9306 = vmul.f32 %v8681, 0.01
        %v9307 = vmul.f32 %v8684, 0.01
        %v9308 = vmul.f32 %v8687, 0.01
        %v9309 = vmul.f32 %v8690, 0.01
        %v9310 = vmul.f32 %v8693, 0.01
        %v9311 = vmul.f32 %v8696, 0.01
        %v9312 = vmul.f32 %v8699, 0.01
        %v9313 = vmul.f32 %v8702, 0.01
        %v9314 = vmul.f32 %v8705, 0.01
        %v9315 = vmul.f32 %v8708, 0.01
        %v9316 = vmul.f32 %v8711, 0.01
        %v9317 = vmul.f32 %v8714, 0.01
        %v9318 = vmul.f32 %v8717, 0.01
        %v9319 = vmul.f32 %v8720, 0.01
        %v9320 = vmul.f32 %v8723, 0.01
        %v9321 = vmul.f32 %v8726, 0.01
        %v9322 = vmul.f32 %v8729, 0.01
        %v9323 = vmul.f32 %v8732, 0.01
        %v9324 = vmul.f32 %v8735, 0.01
        %v9325 = vmul.f32 %v8738, 0.01
        %v9326 = vmul.f32 %v8741, 0.01
        %v9327 = vmul.f32 %v8744, 0.01
        %v9328 = vmul.f32 %v8747, 0.01
        %v9329 = vmul.f32 %v8750, 0.01
        %v9330 = vmul.f32 %v8753, 0.01
        %v9331 = vmul.f32 %v8756, 0.01
        %v9332 = vmul.f32 %v8759, 0.01
        %v9333 = vmul.f32 %v8762, 0.01
        %v9334 = vmul.f32 %v8765, 0.01
        %v9335 = vmul.f32 %v8768, 0.01
        %v9336 = vmul.f32 %v8771, 0.01
        %v9337 = vmul.f32 %v8774, 0.01
        %v9338 = vmul.f32 %v8777, 0.01
        %v9339 = vmul.f32 %v8780, 0.01
        %v9340 = vmul.f32 %v8783, 0.01
        %v9341 = vmul.f32 %v8786, 0.01
        %v9342 = vmul.f32 %v8789, 0.01
        %v9343 = vmul.f32 %v8792, 0.01
        %v9344 = vmul.f32 %v8795, 0.01
        %v9345 = vmul.f32 %v8798, 0.01
        %v9346 = vmul.f32 %v8801, 0.01
        %v9347 = vmul.f32 %v8804, 0.01
        %v9348 = vmul.f32 %v8807, 0.01
        %v9349 = vmul.f32 %v8810, 0.01
        %v9350 = vmul.f32 %v8813, 0.01
        %v9351 = vmul.f32 %v8816, 0.01
        %v9352 = vmul.f32 %v8819, 0.01
        %v9353 = vmul.f32 %v8822, 0.01
        %v9354 = vmul.f32 %v8825, 0.01
        %v9355 = vmul.f32 %v8828, 0.01
        %v9356 = vmul.f32 %v8831, 0.01
        %v9357 = vmul.f32 %v8834, 0.01
        %v9358 = vmul.f32 %v8837, 0.01
        %v9359 = vmul.f32 %v8840, 0.01
        %v9360 = vmul.f32 %v8843, 0.01
        %v9361 = vmul.f32 %v8846, 0.01
        %v9362 = vmul.f32 %v8849, 0.01
        %v9363 = vsel %vm8851, %v8084, %v9107
        %v9364 = vsel %vm8852, %v8087, %v9108
        %v9365 = vsel %vm8853, %v8090, %v9109
        %v9366 = vsel %vm8854, %v8093, %v9110
        %v9367 = vsel %vm8855, %v8096, %v9111
        %v9368 = vsel %vm8856, %v8099, %v9112
        %v9369 = vsel %vm8857, %v8102, %v9113
        %v9370 = vsel %vm8858, %v8105, %v9114
        %v9371 = vsel %vm8859, %v8108, %v9115
        %v9372 = vsel %vm8860, %v8111, %v9116
        %v9373 = vsel %vm8861, %v8114, %v9117
        %v9374 = vsel %vm8862, %v8117, %v9118
        %v9375 = vsel %vm8863, %v8120, %v9119
        %v9376 = vsel %vm8864, %v8123, %v9120
        %v9377 = vsel %vm8865, %v8126, %v9121
        %v9378 = vsel %vm8866, %v8129, %v9122
        %v9379 = vsel %vm8867, %v8132, %v9123
        %v9380 = vsel %vm8868, %v8135, %v9124
        %v9381 = vsel %vm8869, %v8138, %v9125
        %v9382 = vsel %vm8870, %v8141, %v9126
        %v9383 = vsel %vm8871, %v8144, %v9127
        %v9384 = vsel %vm8872, %v8147, %v9128
        %v9385 = vsel %vm8873, %v8150, %v9129
        %v9386 = vsel %vm8874, %v8153, %v9130
        %v9387 = vsel %vm8875, %v8156, %v9131
        %v9388 = vsel %vm8876, %v8159, %v9132
        %v9389 = vsel %vm8877, %v8162, %v9133
        %v9390 = vsel %vm8878, %v8165, %v9134
        %v9391 = vsel %vm8879, %v8168, %v9135
        %v9392 = vsel %vm8880, %v8171, %v9136
        %v9393 = vsel %vm8881, %v8174, %v9137
        %v9394 = vsel %vm8882, %v8177, %v9138
        %v9395 = vsel %vm8883, %v8180, %v9139
        %v9396 = vsel %vm8884, %v8183, %v9140
        %v9397 = vsel %vm8885, %v8186, %v9141
        %v9398 = vsel %vm8886, %v8189, %v9142
        %v9399 = vsel %vm8887, %v8192, %v9143
        %v9400 = vsel %vm8888, %v8195, %v9144
        %v9401 = vsel %vm8889, %v8198, %v9145
        %v9402 = vsel %vm8890, %v8201, %v9146
        %v9403 = vsel %vm8891, %v8204, %v9147
        %v9404 = vsel %vm8892, %v8207, %v9148
        %v9405 = vsel %vm8893, %v8210, %v9149
        %v9406 = vsel %vm8894, %v8213, %v9150
        %v9407 = vsel %vm8895, %v8216, %v9151
        %v9408 = vsel %vm8896, %v8219, %v9152
        %v9409 = vsel %vm8897, %v8222, %v9153
        %v9410 = vsel %vm8898, %v8225, %v9154
        %v9411 = vsel %vm8899, %v8228, %v9155
        %v9412 = vsel %vm8900, %v8231, %v9156
        %v9413 = vsel %vm8901, %v8234, %v9157
        %v9414 = vsel %vm8902, %v8237, %v9158
        %v9415 = vsel %vm8903, %v8240, %v9159
        %v9416 = vsel %vm8904, %v8243, %v9160
        %v9417 = vsel %vm8905, %v8246, %v9161
        %v9418 = vsel %vm8906, %v8249, %v9162
        %v9419 = vsel %vm8907, %v8252, %v9163
        %v9420 = vsel %vm8908, %v8255, %v9164
        %v9421 = vsel %vm8909, %v8258, %v9165
        %v9422 = vsel %vm8910, %v8261, %v9166
        %v9423 = vsel %vm8911, %v8264, %v9167
        %v9424 = vsel %vm8912, %v8267, %v9168
        %v9425 = vsel %vm8913, %v8270, %v9169
        %v9426 = vsel %vm8914, %v8273, %v9170
        %v9427 = vsel %vm8915, %v8276, %v9171
        %v9428 = vsel %vm8916, %v8279, %v9172
        %v9429 = vsel %vm8917, %v8282, %v9173
        %v9430 = vsel %vm8918, %v8285, %v9174
        %v9431 = vsel %vm8919, %v8288, %v9175
        %v9432 = vsel %vm8920, %v8291, %v9176
        %v9433 = vsel %vm8921, %v8294, %v9177
        %v9434 = vsel %vm8922, %v8297, %v9178
        %v9435 = vsel %vm8923, %v8300, %v9179
        %v9436 = vsel %vm8924, %v8303, %v9180
        %v9437 = vsel %vm8925, %v8306, %v9181
        %v9438 = vsel %vm8926, %v8309, %v9182
        %v9439 = vsel %vm8927, %v8312, %v9183
        %v9440 = vsel %vm8928, %v8315, %v9184
        %v9441 = vsel %vm8929, %v8318, %v9185
        %v9442 = vsel %vm8930, %v8321, %v9186
        %v9443 = vsel %vm8931, %v8324, %v9187
        %v9444 = vsel %vm8932, %v8327, %v9188
        %v9445 = vsel %vm8933, %v8330, %v9189
        %v9446 = vsel %vm8934, %v8333, %v9190
        %v9447 = vsel %vm8935, %v8336, %v9191
        %v9448 = vsel %vm8936, %v8339, %v9192
        %v9449 = vsel %vm8937, %v8342, %v9193
        %v9450 = vsel %vm8938, %v8345, %v9194
        %v9451 = vsel %vm8939, %v8348, %v9195
        %v9452 = vsel %vm8940, %v8351, %v9196
        %v9453 = vsel %vm8941, %v8354, %v9197
        %v9454 = vsel %vm8942, %v8357, %v9198
        %v9455 = vsel %vm8943, %v8360, %v9199
        %v9456 = vsel %vm8944, %v8363, %v9200
        %v9457 = vsel %vm8945, %v8366, %v9201
        %v9458 = vsel %vm8946, %v8369, %v9202
        %v9459 = vsel %vm8947, %v8372, %v9203
        %v9460 = vsel %vm8948, %v8375, %v9204
        %v9461 = vsel %vm8949, %v8378, %v9205
        %v9462 = vsel %vm8950, %v8381, %v9206
        %v9463 = vsel %vm8951, %v8384, %v9207
        %v9464 = vsel %vm8952, %v8387, %v9208
        %v9465 = vsel %vm8953, %v8390, %v9209
        %v9466 = vsel %vm8954, %v8393, %v9210
        %v9467 = vsel %vm8955, %v8396, %v9211
        %v9468 = vsel %vm8956, %v8399, %v9212
        %v9469 = vsel %vm8957, %v8402, %v9213
        %v9470 = vsel %vm8958, %v8405, %v9214
        %v9471 = vsel %vm8959, %v8408, %v9215
        %v9472 = vsel %vm8960, %v8411, %v9216
        %v9473 = vsel %vm8961, %v8414, %v9217
        %v9474 = vsel %vm8962, %v8417, %v9218
        %v9475 = vsel %vm8963, %v8420, %v9219
        %v9476 = vsel %vm8964, %v8423, %v9220
        %v9477 = vsel %vm8965, %v8426, %v9221
        %v9478 = vsel %vm8966, %v8429, %v9222
        %v9479 = vsel %vm8967, %v8432, %v9223
        %v9480 = vsel %vm8968, %v8435, %v9224
        %v9481 = vsel %vm8969, %v8438, %v9225
        %v9482 = vsel %vm8970, %v8441, %v9226
        %v9483 = vsel %vm8971, %v8444, %v9227
        %v9484 = vsel %vm8972, %v8447, %v9228
        %v9485 = vsel %vm8973, %v8450, %v9229
        %v9486 = vsel %vm8974, %v8453, %v9230
        %v9487 = vsel %vm8975, %v8456, %v9231
        %v9488 = vsel %vm8976, %v8459, %v9232
        %v9489 = vsel %vm8977, %v8462, %v9233
        %v9490 = vsel %vm8978, %v8465, %v9234
        %v9491 = vsel %vm8979, %v8468, %v9235
        %v9492 = vsel %vm8980, %v8471, %v9236
        %v9493 = vsel %vm8981, %v8474, %v9237
        %v9494 = vsel %vm8982, %v8477, %v9238
        %v9495 = vsel %vm8983, %v8480, %v9239
        %v9496 = vsel %vm8984, %v8483, %v9240
        %v9497 = vsel %vm8985, %v8486, %v9241
        %v9498 = vsel %vm8986, %v8489, %v9242
        %v9499 = vsel %vm8987, %v8492, %v9243
        %v9500 = vsel %vm8988, %v8495, %v9244
        %v9501 = vsel %vm8989, %v8498, %v9245
        %v9502 = vsel %vm8990, %v8501, %v9246
        %v9503 = vsel %vm8991, %v8504, %v9247
        %v9504 = vsel %vm8992, %v8507, %v9248
        %v9505 = vsel %vm8993, %v8510, %v9249
        %v9506 = vsel %vm8994, %v8513, %v9250
        %v9507 = vsel %vm8995, %v8516, %v9251
        %v9508 = vsel %vm8996, %v8519, %v9252
        %v9509 = vsel %vm8997, %v8522, %v9253
        %v9510 = vsel %vm8998, %v8525, %v9254
        %v9511 = vsel %vm8999, %v8528, %v9255
        %v9512 = vsel %vm9000, %v8531, %v9256
        %v9513 = vsel %vm9001, %v8534, %v9257
        %v9514 = vsel %vm9002, %v8537, %v9258
        %v9515 = vsel %vm9003, %v8540, %v9259
        %v9516 = vsel %vm9004, %v8543, %v9260
        %v9517 = vsel %vm9005, %v8546, %v9261
        %v9518 = vsel %vm9006, %v8549, %v9262
        %v9519 = vsel %vm9007, %v8552, %v9263
        %v9520 = vsel %vm9008, %v8555, %v9264
        %v9521 = vsel %vm9009, %v8558, %v9265
        %v9522 = vsel %vm9010, %v8561, %v9266
        %v9523 = vsel %vm9011, %v8564, %v9267
        %v9524 = vsel %vm9012, %v8567, %v9268
        %v9525 = vsel %vm9013, %v8570, %v9269
        %v9526 = vsel %vm9014, %v8573, %v9270
        %v9527 = vsel %vm9015, %v8576, %v9271
        %v9528 = vsel %vm9016, %v8579, %v9272
        %v9529 = vsel %vm9017, %v8582, %v9273
        %v9530 = vsel %vm9018, %v8585, %v9274
        %v9531 = vsel %vm9019, %v8588, %v9275
        %v9532 = vsel %vm9020, %v8591, %v9276
        %v9533 = vsel %vm9021, %v8594, %v9277
        %v9534 = vsel %vm9022, %v8597, %v9278
        %v9535 = vsel %vm9023, %v8600, %v9279
        %v9536 = vsel %vm9024, %v8603, %v9280
        %v9537 = vsel %vm9025, %v8606, %v9281
        %v9538 = vsel %vm9026, %v8609, %v9282
        %v9539 = vsel %vm9027, %v8612, %v9283
        %v9540 = vsel %vm9028, %v8615, %v9284
        %v9541 = vsel %vm9029, %v8618, %v9285
        %v9542 = vsel %vm9030, %v8621, %v9286
        %v9543 = vsel %vm9031, %v8624, %v9287
        %v9544 = vsel %vm9032, %v8627, %v9288
        %v9545 = vsel %vm9033, %v8630, %v9289
        %v9546 = vsel %vm9034, %v8633, %v9290
        %v9547 = vsel %vm9035, %v8636, %v9291
        %v9548 = vsel %vm9036, %v8639, %v9292
        %v9549 = vsel %vm9037, %v8642, %v9293
        %v9550 = vsel %vm9038, %v8645, %v9294
        %v9551 = vsel %vm9039, %v8648, %v9295
        %v9552 = vsel %vm9040, %v8651, %v9296
        %v9553 = vsel %vm9041, %v8654, %v9297
        %v9554 = vsel %vm9042, %v8657, %v9298
        %v9555 = vsel %vm9043, %v8660, %v9299
        %v9556 = vsel %vm9044, %v8663, %v9300
        %v9557 = vsel %vm9045, %v8666, %v9301
        %v9558 = vsel %vm9046, %v8669, %v9302
        %v9559 = vsel %vm9047, %v8672, %v9303
        %v9560 = vsel %vm9048, %v8675, %v9304
        %v9561 = vsel %vm9049, %v8678, %v9305
        %v9562 = vsel %vm9050, %v8681, %v9306
        %v9563 = vsel %vm9051, %v8684, %v9307
        %v9564 = vsel %vm9052, %v8687, %v9308
        %v9565 = vsel %vm9053, %v8690, %v9309
        %v9566 = vsel %vm9054, %v8693, %v9310
        %v9567 = vsel %vm9055, %v8696, %v9311
        %v9568 = vsel %vm9056, %v8699, %v9312
        %v9569 = vsel %vm9057, %v8702, %v9313
        %v9570 = vsel %vm9058, %v8705, %v9314
        %v9571 = vsel %vm9059, %v8708, %v9315
        %v9572 = vsel %vm9060, %v8711, %v9316
        %v9573 = vsel %vm9061, %v8714, %v9317
        %v9574 = vsel %vm9062, %v8717, %v9318
        %v9575 = vsel %vm9063, %v8720, %v9319
        %v9576 = vsel %vm9064, %v8723, %v9320
        %v9577 = vsel %vm9065, %v8726, %v9321
        %v9578 = vsel %vm9066, %v8729, %v9322
        %v9579 = vsel %vm9067, %v8732, %v9323
        %v9580 = vsel %vm9068, %v8735, %v9324
        %v9581 = vsel %vm9069, %v8738, %v9325
        %v9582 = vsel %vm9070, %v8741, %v9326
        %v9583 = vsel %vm9071, %v8744, %v9327
        %v9584 = vsel %vm9072, %v8747, %v9328
        %v9585 = vsel %vm9073, %v8750, %v9329
        %v9586 = vsel %vm9074, %v8753, %v9330
        %v9587 = vsel %vm9075, %v8756, %v9331
        %v9588 = vsel %vm9076, %v8759, %v9332
        %v9589 = vsel %vm9077, %v8762, %v9333
        %v9590 = vsel %vm9078, %v8765, %v9334
        %v9591 = vsel %vm9079, %v8768, %v9335
        %v9592 = vsel %vm9080, %v8771, %v9336
        %v9593 = vsel %vm9081, %v8774, %v9337
        %v9594 = vsel %vm9082, %v8777, %v9338
        %v9595 = vsel %vm9083, %v8780, %v9339
        %v9596 = vsel %vm9084, %v8783, %v9340
        %v9597 = vsel %vm9085, %v8786, %v9341
        %v9598 = vsel %vm9086, %v8789, %v9342
        %v9599 = vsel %vm9087, %v8792, %v9343
        %v9600 = vsel %vm9088, %v8795, %v9344
        %v9601 = vsel %vm9089, %v8798, %v9345
        %v9602 = vsel %vm9090, %v8801, %v9346
        %v9603 = vsel %vm9091, %v8804, %v9347
        %v9604 = vsel %vm9092, %v8807, %v9348
        %v9605 = vsel %vm9093, %v8810, %v9349
        %v9606 = vsel %vm9094, %v8813, %v9350
        %v9607 = vsel %vm9095, %v8816, %v9351
        %v9608 = vsel %vm9096, %v8819, %v9352
        %v9609 = vsel %vm9097, %v8822, %v9353
        %v9610 = vsel %vm9098, %v8825, %v9354
        %v9611 = vsel %vm9099, %v8828, %v9355
        %v9612 = vsel %vm9100, %v8831, %v9356
        %v9613 = vsel %vm9101, %v8834, %v9357
        %v9614 = vsel %vm9102, %v8837, %v9358
        %v9615 = vsel %vm9103, %v8840, %v9359
        %v9616 = vsel %vm9104, %v8843, %v9360
        %v9617 = vsel %vm9105, %v8846, %v9361
        %v9618 = vsel %vm9106, %v8849, %v9362
        %v9619 = vld [vmem:[%s12] sm:$0xff]
        %v9620 = vld [vmem:[%s12 + $0x8] sm:$0xff]
        %v9621 = vld [vmem:[%s12 + $0x10] sm:$0xff]
        %v9622 = vld [vmem:[%s12 + $0x18] sm:$0xff]
        %v9623 = vld [vmem:[%s12 + $0x20] sm:$0xff]
        %v9624 = vld [vmem:[%s12 + $0x28] sm:$0xff]
        %v9625 = vld [vmem:[%s12 + $0x30] sm:$0xff]
        %v9626 = vld [vmem:[%s12 + $0x38] sm:$0xff]
        %v9627 = vld [vmem:[#allocation2] sm:$0x1]
        %v9629 = vperm.slane %v9627, 0
        %v9632 = vsel %vm7297, %v9363, 0
        %v9635 = vsel %vm7297, %v9364, 0
        %v9638 = vsel %vm7297, %v9365, 0
        %v9641 = vsel %vm7297, %v9366, 0
        %v9644 = vsel %vm7297, %v9367, 0
        %v9647 = vsel %vm7297, %v9368, 0
        %v9650 = vsel %vm7297, %v9369, 0
        %v9653 = vsel %vm7297, %v9370, 0
        %v9656 = vsel %vm7297, %v9371, 0
        %v9659 = vsel %vm7297, %v9372, 0
        %v9662 = vsel %vm7297, %v9373, 0
        %v9665 = vsel %vm7297, %v9374, 0
        %v9668 = vsel %vm7297, %v9375, 0
        %v9671 = vsel %vm7297, %v9376, 0
        %v9674 = vsel %vm7297, %v9377, 0
        %v9677 = vsel %vm7297, %v9378, 0
        %v9680 = vsel %vm7297, %v9379, 0
        %v9683 = vsel %vm7297, %v9380, 0
        %v9686 = vsel %vm7297, %v9381, 0
        %v9689 = vsel %vm7297, %v9382, 0
        %v9692 = vsel %vm7297, %v9383, 0
        %v9695 = vsel %vm7297, %v9384, 0
        %v9698 = vsel %vm7297, %v9385, 0
        %v9701 = vsel %vm7297, %v9386, 0
        %v9704 = vsel %vm7297, %v9387, 0
        %v9707 = vsel %vm7297, %v9388, 0
        %v9710 = vsel %vm7297, %v9389, 0
        %v9713 = vsel %vm7297, %v9390, 0
        %v9716 = vsel %vm7297, %v9391, 0
        %v9719 = vsel %vm7297, %v9392, 0
        %v9722 = vsel %vm7297, %v9393, 0
        %v9725 = vsel %vm7297, %v9394, 0
        %v9728 = vsel %vm7297, %v9395, 0
        %v9731 = vsel %vm7297, %v9396, 0
        %v9734 = vsel %vm7297, %v9397, 0
        %v9737 = vsel %vm7297, %v9398, 0
        %v9740 = vsel %vm7297, %v9399, 0
        %v9743 = vsel %vm7297, %v9400, 0
        %v9746 = vsel %vm7297, %v9401, 0
        %v9749 = vsel %vm7297, %v9402, 0
        %v9752 = vsel %vm7297, %v9403, 0
        %v9755 = vsel %vm7297, %v9404, 0
        %v9758 = vsel %vm7297, %v9405, 0
        %v9761 = vsel %vm7297, %v9406, 0
        %v9764 = vsel %vm7297, %v9407, 0
        %v9767 = vsel %vm7297, %v9408, 0
        %v9770 = vsel %vm7297, %v9409, 0
        %v9773 = vsel %vm7297, %v9410, 0
        %v9776 = vsel %vm7297, %v9411, 0
        %v9779 = vsel %vm7297, %v9412, 0
        %v9782 = vsel %vm7297, %v9413, 0
        %v9785 = vsel %vm7297, %v9414, 0
        %v9788 = vsel %vm7297, %v9415, 0
        %v9791 = vsel %vm7297, %v9416, 0
        %v9794 = vsel %vm7297, %v9417, 0
        %v9797 = vsel %vm7297, %v9418, 0
        %v9800 = vsel %vm7297, %v9419, 0
        %v9803 = vsel %vm7297, %v9420, 0
        %v9806 = vsel %vm7297, %v9421, 0
        %v9809 = vsel %vm7297, %v9422, 0
        %v9812 = vsel %vm7297, %v9423, 0
        %v9815 = vsel %vm7297, %v9424, 0
        %v9818 = vsel %vm7297, %v9425, 0
        %v9821 = vsel %vm7297, %v9426, 0
        %v9824 = vsel %vm7297, %v9427, 0
        %v9827 = vsel %vm7297, %v9428, 0
        %v9830 = vsel %vm7297, %v9429, 0
        %v9833 = vsel %vm7297, %v9430, 0
        %v9836 = vsel %vm7297, %v9431, 0
        %v9839 = vsel %vm7297, %v9432, 0
        %v9842 = vsel %vm7297, %v9433, 0
        %v9845 = vsel %vm7297, %v9434, 0
        %v9848 = vsel %vm7297, %v9435, 0
        %v9851 = vsel %vm7297, %v9436, 0
        %v9854 = vsel %vm7297, %v9437, 0
        %v9857 = vsel %vm7297, %v9438, 0
        %v9860 = vsel %vm7297, %v9439, 0
        %v9863 = vsel %vm7297, %v9440, 0
        %v9866 = vsel %vm7297, %v9441, 0
        %v9869 = vsel %vm7297, %v9442, 0
        %v9872 = vsel %vm7297, %v9443, 0
        %v9875 = vsel %vm7297, %v9444, 0
        %v9878 = vsel %vm7297, %v9445, 0
        %v9881 = vsel %vm7297, %v9446, 0
        %v9884 = vsel %vm7297, %v9447, 0
        %v9887 = vsel %vm7297, %v9448, 0
        %v9890 = vsel %vm7297, %v9449, 0
        %v9893 = vsel %vm7297, %v9450, 0
        %v9896 = vsel %vm7297, %v9451, 0
        %v9899 = vsel %vm7297, %v9452, 0
        %v9902 = vsel %vm7297, %v9453, 0
        %v9905 = vsel %vm7297, %v9454, 0
        %v9908 = vsel %vm7297, %v9455, 0
        %v9911 = vsel %vm7297, %v9456, 0
        %v9914 = vsel %vm7297, %v9457, 0
        %v9917 = vsel %vm7297, %v9458, 0
        %v9920 = vsel %vm7297, %v9459, 0
        %v9923 = vsel %vm7297, %v9460, 0
        %v9926 = vsel %vm7297, %v9461, 0
        %v9929 = vsel %vm7297, %v9462, 0
        %v9932 = vsel %vm7297, %v9463, 0
        %v9935 = vsel %vm7297, %v9464, 0
        %v9938 = vsel %vm7297, %v9465, 0
        %v9941 = vsel %vm7297, %v9466, 0
        %v9944 = vsel %vm7297, %v9467, 0
        %v9947 = vsel %vm7297, %v9468, 0
        %v9950 = vsel %vm7297, %v9469, 0
        %v9953 = vsel %vm7297, %v9470, 0
        %v9956 = vsel %vm7297, %v9471, 0
        %v9959 = vsel %vm7297, %v9472, 0
        %v9962 = vsel %vm7297, %v9473, 0
        %v9965 = vsel %vm7297, %v9474, 0
        %v9968 = vsel %vm7297, %v9475, 0
        %v9971 = vsel %vm7297, %v9476, 0
        %v9974 = vsel %vm7297, %v9477, 0
        %v9977 = vsel %vm7297, %v9478, 0
        %v9980 = vsel %vm7297, %v9479, 0
        %v9983 = vsel %vm7297, %v9480, 0
        %v9986 = vsel %vm7297, %v9481, 0
        %v9989 = vsel %vm7297, %v9482, 0
        %v9992 = vsel %vm7297, %v9483, 0
        %v9995 = vsel %vm7297, %v9484, 0
        %v9998 = vsel %vm7297, %v9485, 0
        %v10001 = vsel %vm7297, %v9486, 0
        %v10004 = vsel %vm7297, %v9487, 0
        %v10007 = vsel %vm7297, %v9488, 0
        %v10010 = vsel %vm7297, %v9489, 0
        %v10013 = vsel %vm7297, %v9490, 0
        %v10016 = vsel %vm7297, %v9491, 0
        %v10019 = vsel %vm7297, %v9492, 0
        %v10022 = vsel %vm7297, %v9493, 0
        %v10025 = vsel %vm7297, %v9494, 0
        %v10028 = vsel %vm7297, %v9495, 0
        %v10031 = vsel %vm7297, %v9496, 0
        %v10034 = vsel %vm7297, %v9497, 0
        %v10037 = vsel %vm7297, %v9498, 0
        %v10040 = vsel %vm7297, %v9499, 0
        %v10043 = vsel %vm7297, %v9500, 0
        %v10046 = vsel %vm7297, %v9501, 0
        %v10049 = vsel %vm7297, %v9502, 0
        %v10052 = vsel %vm7297, %v9503, 0
        %v10055 = vsel %vm7297, %v9504, 0
        %v10058 = vsel %vm7297, %v9505, 0
        %v10061 = vsel %vm7297, %v9506, 0
        %v10064 = vsel %vm7297, %v9507, 0
        %v10067 = vsel %vm7297, %v9508, 0
        %v10070 = vsel %vm7297, %v9509, 0
        %v10073 = vsel %vm7297, %v9510, 0
        %v10076 = vsel %vm7297, %v9511, 0
        %v10079 = vsel %vm7297, %v9512, 0
        %v10082 = vsel %vm7297, %v9513, 0
        %v10085 = vsel %vm7297, %v9514, 0
        %v10088 = vsel %vm7297, %v9515, 0
        %v10091 = vsel %vm7297, %v9516, 0
        %v10094 = vsel %vm7297, %v9517, 0
        %v10097 = vsel %vm7297, %v9518, 0
        %v10100 = vsel %vm7297, %v9519, 0
        %v10103 = vsel %vm7297, %v9520, 0
        %v10106 = vsel %vm7297, %v9521, 0
        %v10109 = vsel %vm7297, %v9522, 0
        %v10112 = vsel %vm7297, %v9523, 0
        %v10115 = vsel %vm7297, %v9524, 0
        %v10118 = vsel %vm7297, %v9525, 0
        %v10121 = vsel %vm7297, %v9526, 0
        %v10124 = vsel %vm7297, %v9527, 0
        %v10127 = vsel %vm7297, %v9528, 0
        %v10130 = vsel %vm7297, %v9529, 0
        %v10133 = vsel %vm7297, %v9530, 0
        %v10136 = vsel %vm7297, %v9531, 0
        %v10139 = vsel %vm7297, %v9532, 0
        %v10142 = vsel %vm7297, %v9533, 0
        %v10145 = vsel %vm7297, %v9534, 0
        %v10148 = vsel %vm7297, %v9535, 0
        %v10151 = vsel %vm7297, %v9536, 0
        %v10154 = vsel %vm7297, %v9537, 0
        %v10157 = vsel %vm7297, %v9538, 0
        %v10160 = vsel %vm7297, %v9539, 0
        %v10163 = vsel %vm7297, %v9540, 0
        %v10166 = vsel %vm7297, %v9541, 0
        %v10169 = vsel %vm7297, %v9542, 0
        %v10172 = vsel %vm7297, %v9543, 0
        %v10175 = vsel %vm7297, %v9544, 0
        %v10178 = vsel %vm7297, %v9545, 0
        %v10181 = vsel %vm7297, %v9546, 0
        %v10184 = vsel %vm7297, %v9547, 0
        %v10187 = vsel %vm7297, %v9548, 0
        %v10190 = vsel %vm7297, %v9549, 0
        %v10193 = vsel %vm7297, %v9550, 0
        %v10196 = vsel %vm7297, %v9551, 0
        %v10199 = vsel %vm7297, %v9552, 0
        %v10202 = vsel %vm7297, %v9553, 0
        %v10205 = vsel %vm7297, %v9554, 0
        %v10208 = vsel %vm7297, %v9555, 0
        %v10211 = vsel %vm7297, %v9556, 0
        %v10214 = vsel %vm7297, %v9557, 0
        %v10217 = vsel %vm7297, %v9558, 0
        %v10220 = vsel %vm7297, %v9559, 0
        %v10223 = vsel %vm7297, %v9560, 0
        %v10226 = vsel %vm7297, %v9561, 0
        %v10229 = vsel %vm7297, %v9562, 0
        %v10232 = vsel %vm7297, %v9563, 0
        %v10235 = vsel %vm7297, %v9564, 0
        %v10238 = vsel %vm7297, %v9565, 0
        %v10241 = vsel %vm7297, %v9566, 0
        %v10244 = vsel %vm7297, %v9567, 0
        %v10247 = vsel %vm7297, %v9568, 0
        %v10250 = vsel %vm7297, %v9569, 0
        %v10253 = vsel %vm7297, %v9570, 0
        %v10256 = vsel %vm7297, %v9571, 0
        %v10259 = vsel %vm7297, %v9572, 0
        %v10262 = vsel %vm7297, %v9573, 0
        %v10265 = vsel %vm7297, %v9574, 0
        %v10268 = vsel %vm7297, %v9575, 0
        %v10271 = vsel %vm7297, %v9576, 0
        %v10274 = vsel %vm7297, %v9577, 0
        %v10277 = vsel %vm7297, %v9578, 0
        %v10280 = vsel %vm7297, %v9579, 0
        %v10283 = vsel %vm7297, %v9580, 0
        %v10286 = vsel %vm7297, %v9581, 0
        %v10289 = vsel %vm7297, %v9582, 0
        %v10292 = vsel %vm7297, %v9583, 0
        %v10295 = vsel %vm7297, %v9584, 0
        %v10298 = vsel %vm7297, %v9585, 0
        %v10301 = vsel %vm7297, %v9586, 0
        %v10304 = vsel %vm7297, %v9587, 0
        %v10307 = vsel %vm7297, %v9588, 0
        %v10310 = vsel %vm7297, %v9589, 0
        %v10313 = vsel %vm7297, %v9590, 0
        %v10316 = vsel %vm7297, %v9591, 0
        %v10319 = vsel %vm7297, %v9592, 0
        %v10322 = vsel %vm7297, %v9593, 0
        %v10325 = vsel %vm7297, %v9594, 0
        %v10328 = vsel %vm7297, %v9595, 0
        %v10331 = vsel %vm7297, %v9596, 0
        %v10334 = vsel %vm7297, %v9597, 0
        %v10337 = vsel %vm7297, %v9598, 0
        %v10340 = vsel %vm7297, %v9599, 0
        %v10343 = vsel %vm7297, %v9600, 0
        %v10346 = vsel %vm7297, %v9601, 0
        %v10349 = vsel %vm7297, %v9602, 0
        %v10352 = vsel %vm7297, %v9603, 0
        %v10355 = vsel %vm7297, %v9604, 0
        %v10358 = vsel %vm7297, %v9605, 0
        %v10361 = vsel %vm7297, %v9606, 0
        %v10364 = vsel %vm7297, %v9607, 0
        %v10367 = vsel %vm7297, %v9608, 0
        %v10370 = vsel %vm7297, %v9609, 0
        %v10373 = vsel %vm7297, %v9610, 0
        %v10376 = vsel %vm7297, %v9611, 0
        %v10379 = vsel %vm7297, %v9612, 0
        %v10382 = vsel %vm7297, %v9613, 0
        %v10385 = vsel %vm7297, %v9614, 0
        %v10388 = vsel %vm7297, %v9615, 0
        %v10391 = vsel %vm7297, %v9616, 0
        %v10394 = vsel %vm7297, %v9617, 0
        %v10397 = vsel %vm7297, %v9618, 0
        %10399 = vmatpush.msra.mxu0 0.0
        %10400 = vmatpush.msra.mxu0 0.0
        %10401 = vmatpush.msra.mxu0 0.0
        %10402 = vmatpush.msra.mxu0 0.0
        %10403 = vmatpush.msra.mxu0 0.0
        %10404 = vmatpush.msra.mxu0 0.0
        %10405 = vmatpush.msra.mxu0 0.0
        %10406 = vmatpush.msra.mxu0 0.0
        %10407 = vmatpush.msra.mxu0 %v9626
        %10408 = vmatpush.msra.mxu0 %v9625
        %10409 = vmatpush.msra.mxu0 %v9624
        %10410 = vmatpush.msra.mxu0 %v9623
        %10411 = vmatpush.msra.mxu0 %v9622
        %10412 = vmatpush.msra.mxu0 %v9621
        %10413 = vmatpush.msra.mxu0 %v9620
        %10414 = vmatpush.msra.mxu0 %v9619
        %10415 = vmatmul.f32.gmra.mxu0 %v9632
        %v10416 = vpop.f32.mrf.mxu0
        %v10417 = vadd.f32 %v9629, %v10416
        %10418 = vmatmul.f32.gmra.mxu0 %v9635
        %v10419 = vpop.f32.mrf.mxu0
        %v10420 = vadd.f32 %v9629, %v10419
        %10421 = vmatmul.f32.gmra.mxu0 %v9638
        %v10422 = vpop.f32.mrf.mxu0
        %v10423 = vadd.f32 %v9629, %v10422
        %10424 = vmatmul.f32.gmra.mxu0 %v9641
        %v10425 = vpop.f32.mrf.mxu0
        %v10426 = vadd.f32 %v9629, %v10425
        %10427 = vmatmul.f32.gmra.mxu0 %v9644
        %v10428 = vpop.f32.mrf.mxu0
        %v10429 = vadd.f32 %v9629, %v10428
        %10430 = vmatmul.f32.gmra.mxu0 %v9647
        %v10431 = vpop.f32.mrf.mxu0
        %v10432 = vadd.f32 %v9629, %v10431
        %10433 = vmatmul.f32.gmra.mxu0 %v9650
        %v10434 = vpop.f32.mrf.mxu0
        %v10435 = vadd.f32 %v9629, %v10434
        %10436 = vmatmul.f32.gmra.mxu0 %v9653
        %v10437 = vpop.f32.mrf.mxu0
        %v10438 = vadd.f32 %v9629, %v10437
        %10439 = vmatmul.f32.gmra.mxu0 %v9656
        %v10440 = vpop.f32.mrf.mxu0
        %v10441 = vadd.f32 %v9629, %v10440
        %10442 = vmatmul.f32.gmra.mxu0 %v9659
        %v10443 = vpop.f32.mrf.mxu0
        %v10444 = vadd.f32 %v9629, %v10443
        %10445 = vmatmul.f32.gmra.mxu0 %v9662
        %v10446 = vpop.f32.mrf.mxu0
        %v10447 = vadd.f32 %v9629, %v10446
        %10448 = vmatmul.f32.gmra.mxu0 %v9665
        %v10449 = vpop.f32.mrf.mxu0
        %v10450 = vadd.f32 %v9629, %v10449
        %10451 = vmatmul.f32.gmra.mxu0 %v9668
        %v10452 = vpop.f32.mrf.mxu0
        %v10453 = vadd.f32 %v9629, %v10452
        %10454 = vmatmul.f32.gmra.mxu0 %v9671
        %v10455 = vpop.f32.mrf.mxu0
        %v10456 = vadd.f32 %v9629, %v10455
        %10457 = vmatmul.f32.gmra.mxu0 %v9674
        %v10458 = vpop.f32.mrf.mxu0
        %v10459 = vadd.f32 %v9629, %v10458
        %10460 = vmatmul.f32.gmra.mxu0 %v9677
        %v10461 = vpop.f32.mrf.mxu0
        %v10462 = vadd.f32 %v9629, %v10461
        %10463 = vmatmul.f32.gmra.mxu0 %v9680
        %v10464 = vpop.f32.mrf.mxu0
        %v10465 = vadd.f32 %v9629, %v10464
        %10466 = vmatmul.f32.gmra.mxu0 %v9683
        %v10467 = vpop.f32.mrf.mxu0
        %v10468 = vadd.f32 %v9629, %v10467
        %10469 = vmatmul.f32.gmra.mxu0 %v9686
        %v10470 = vpop.f32.mrf.mxu0
        %v10471 = vadd.f32 %v9629, %v10470
        %10472 = vmatmul.f32.gmra.mxu0 %v9689
        %v10473 = vpop.f32.mrf.mxu0
        %v10474 = vadd.f32 %v9629, %v10473
        %10475 = vmatmul.f32.gmra.mxu0 %v9692
        %v10476 = vpop.f32.mrf.mxu0
        %v10477 = vadd.f32 %v9629, %v10476
        %10478 = vmatmul.f32.gmra.mxu0 %v9695
        %v10479 = vpop.f32.mrf.mxu0
        %v10480 = vadd.f32 %v9629, %v10479
        %10481 = vmatmul.f32.gmra.mxu0 %v9698
        %v10482 = vpop.f32.mrf.mxu0
        %v10483 = vadd.f32 %v9629, %v10482
        %10484 = vmatmul.f32.gmra.mxu0 %v9701
        %v10485 = vpop.f32.mrf.mxu0
        %v10486 = vadd.f32 %v9629, %v10485
        %10487 = vmatmul.f32.gmra.mxu0 %v9704
        %v10488 = vpop.f32.mrf.mxu0
        %v10489 = vadd.f32 %v9629, %v10488
        %10490 = vmatmul.f32.gmra.mxu0 %v9707
        %v10491 = vpop.f32.mrf.mxu0
        %v10492 = vadd.f32 %v9629, %v10491
        %10493 = vmatmul.f32.gmra.mxu0 %v9710
        %v10494 = vpop.f32.mrf.mxu0
        %v10495 = vadd.f32 %v9629, %v10494
        %10496 = vmatmul.f32.gmra.mxu0 %v9713
        %v10497 = vpop.f32.mrf.mxu0
        %v10498 = vadd.f32 %v9629, %v10497
        %10499 = vmatmul.f32.gmra.mxu0 %v9716
        %v10500 = vpop.f32.mrf.mxu0
        %v10501 = vadd.f32 %v9629, %v10500
        %10502 = vmatmul.f32.gmra.mxu0 %v9719
        %v10503 = vpop.f32.mrf.mxu0
        %v10504 = vadd.f32 %v9629, %v10503
        %10505 = vmatmul.f32.gmra.mxu0 %v9722
        %v10506 = vpop.f32.mrf.mxu0
        %v10507 = vadd.f32 %v9629, %v10506
        %10508 = vmatmul.f32.gmra.mxu0 %v9725
        %v10509 = vpop.f32.mrf.mxu0
        %v10510 = vadd.f32 %v9629, %v10509
        %10511 = vmatmul.f32.gmra.mxu0 %v9728
        %v10512 = vpop.f32.mrf.mxu0
        %v10513 = vadd.f32 %v9629, %v10512
        %10514 = vmatmul.f32.gmra.mxu0 %v9731
        %v10515 = vpop.f32.mrf.mxu0
        %v10516 = vadd.f32 %v9629, %v10515
        %10517 = vmatmul.f32.gmra.mxu0 %v9734
        %v10518 = vpop.f32.mrf.mxu0
        %v10519 = vadd.f32 %v9629, %v10518
        %10520 = vmatmul.f32.gmra.mxu0 %v9737
        %v10521 = vpop.f32.mrf.mxu0
        %v10522 = vadd.f32 %v9629, %v10521
        %10523 = vmatmul.f32.gmra.mxu0 %v9740
        %v10524 = vpop.f32.mrf.mxu0
        %v10525 = vadd.f32 %v9629, %v10524
        %10526 = vmatmul.f32.gmra.mxu0 %v9743
        %v10527 = vpop.f32.mrf.mxu0
        %v10528 = vadd.f32 %v9629, %v10527
        %10529 = vmatmul.f32.gmra.mxu0 %v9746
        %v10530 = vpop.f32.mrf.mxu0
        %v10531 = vadd.f32 %v9629, %v10530
        %10532 = vmatmul.f32.gmra.mxu0 %v9749
        %v10533 = vpop.f32.mrf.mxu0
        %v10534 = vadd.f32 %v9629, %v10533
        %10535 = vmatmul.f32.gmra.mxu0 %v9752
        %v10536 = vpop.f32.mrf.mxu0
        %v10537 = vadd.f32 %v9629, %v10536
        %10538 = vmatmul.f32.gmra.mxu0 %v9755
        %v10539 = vpop.f32.mrf.mxu0
        %v10540 = vadd.f32 %v9629, %v10539
        %10541 = vmatmul.f32.gmra.mxu0 %v9758
        %v10542 = vpop.f32.mrf.mxu0
        %v10543 = vadd.f32 %v9629, %v10542
        %10544 = vmatmul.f32.gmra.mxu0 %v9761
        %v10545 = vpop.f32.mrf.mxu0
        %v10546 = vadd.f32 %v9629, %v10545
        %10547 = vmatmul.f32.gmra.mxu0 %v9764
        %v10548 = vpop.f32.mrf.mxu0
        %v10549 = vadd.f32 %v9629, %v10548
        %10550 = vmatmul.f32.gmra.mxu0 %v9767
        %v10551 = vpop.f32.mrf.mxu0
        %v10552 = vadd.f32 %v9629, %v10551
        %10553 = vmatmul.f32.gmra.mxu0 %v9770
        %v10554 = vpop.f32.mrf.mxu0
        %v10555 = vadd.f32 %v9629, %v10554
        %10556 = vmatmul.f32.gmra.mxu0 %v9773
        %v10557 = vpop.f32.mrf.mxu0
        %v10558 = vadd.f32 %v9629, %v10557
        %10559 = vmatmul.f32.gmra.mxu0 %v9776
        %v10560 = vpop.f32.mrf.mxu0
        %v10561 = vadd.f32 %v9629, %v10560
        %10562 = vmatmul.f32.gmra.mxu0 %v9779
        %v10563 = vpop.f32.mrf.mxu0
        %v10564 = vadd.f32 %v9629, %v10563
        %10565 = vmatmul.f32.gmra.mxu0 %v9782
        %v10566 = vpop.f32.mrf.mxu0
        %v10567 = vadd.f32 %v9629, %v10566
        %10568 = vmatmul.f32.gmra.mxu0 %v9785
        %v10569 = vpop.f32.mrf.mxu0
        %v10570 = vadd.f32 %v9629, %v10569
        %10571 = vmatmul.f32.gmra.mxu0 %v9788
        %v10572 = vpop.f32.mrf.mxu0
        %v10573 = vadd.f32 %v9629, %v10572
        %10574 = vmatmul.f32.gmra.mxu0 %v9791
        %v10575 = vpop.f32.mrf.mxu0
        %v10576 = vadd.f32 %v9629, %v10575
        %10577 = vmatmul.f32.gmra.mxu0 %v9794
        %v10578 = vpop.f32.mrf.mxu0
        %v10579 = vadd.f32 %v9629, %v10578
        %10580 = vmatmul.f32.gmra.mxu0 %v9797
        %v10581 = vpop.f32.mrf.mxu0
        %v10582 = vadd.f32 %v9629, %v10581
        %10583 = vmatmul.f32.gmra.mxu0 %v9800
        %v10584 = vpop.f32.mrf.mxu0
        %v10585 = vadd.f32 %v9629, %v10584
        %10586 = vmatmul.f32.gmra.mxu0 %v9803
        %v10587 = vpop.f32.mrf.mxu0
        %v10588 = vadd.f32 %v9629, %v10587
        %10589 = vmatmul.f32.gmra.mxu0 %v9806
        %v10590 = vpop.f32.mrf.mxu0
        %v10591 = vadd.f32 %v9629, %v10590
        %10592 = vmatmul.f32.gmra.mxu0 %v9809
        %v10593 = vpop.f32.mrf.mxu0
        %v10594 = vadd.f32 %v9629, %v10593
        %10595 = vmatmul.f32.gmra.mxu0 %v9812
        %v10596 = vpop.f32.mrf.mxu0
        %v10597 = vadd.f32 %v9629, %v10596
        %10598 = vmatmul.f32.gmra.mxu0 %v9815
        %v10599 = vpop.f32.mrf.mxu0
        %v10600 = vadd.f32 %v9629, %v10599
        %10601 = vmatmul.f32.gmra.mxu0 %v9818
        %v10602 = vpop.f32.mrf.mxu0
        %v10603 = vadd.f32 %v9629, %v10602
        %10604 = vmatmul.f32.gmra.mxu0 %v9821
        %v10605 = vpop.f32.mrf.mxu0
        %v10606 = vadd.f32 %v9629, %v10605
        %10607 = vmatmul.f32.gmra.mxu0 %v9824
        %v10608 = vpop.f32.mrf.mxu0
        %v10609 = vadd.f32 %v9629, %v10608
        %10610 = vmatmul.f32.gmra.mxu0 %v9827
        %v10611 = vpop.f32.mrf.mxu0
        %v10612 = vadd.f32 %v9629, %v10611
        %10613 = vmatmul.f32.gmra.mxu0 %v9830
        %v10614 = vpop.f32.mrf.mxu0
        %v10615 = vadd.f32 %v9629, %v10614
        %10616 = vmatmul.f32.gmra.mxu0 %v9833
        %v10617 = vpop.f32.mrf.mxu0
        %v10618 = vadd.f32 %v9629, %v10617
        %10619 = vmatmul.f32.gmra.mxu0 %v9836
        %v10620 = vpop.f32.mrf.mxu0
        %v10621 = vadd.f32 %v9629, %v10620
        %10622 = vmatmul.f32.gmra.mxu0 %v9839
        %v10623 = vpop.f32.mrf.mxu0
        %v10624 = vadd.f32 %v9629, %v10623
        %10625 = vmatmul.f32.gmra.mxu0 %v9842
        %v10626 = vpop.f32.mrf.mxu0
        %v10627 = vadd.f32 %v9629, %v10626
        %10628 = vmatmul.f32.gmra.mxu0 %v9845
        %v10629 = vpop.f32.mrf.mxu0
        %v10630 = vadd.f32 %v9629, %v10629
        %10631 = vmatmul.f32.gmra.mxu0 %v9848
        %v10632 = vpop.f32.mrf.mxu0
        %v10633 = vadd.f32 %v9629, %v10632
        %10634 = vmatmul.f32.gmra.mxu0 %v9851
        %v10635 = vpop.f32.mrf.mxu0
        %v10636 = vadd.f32 %v9629, %v10635
        %10637 = vmatmul.f32.gmra.mxu0 %v9854
        %v10638 = vpop.f32.mrf.mxu0
        %v10639 = vadd.f32 %v9629, %v10638
        %10640 = vmatmul.f32.gmra.mxu0 %v9857
        %v10641 = vpop.f32.mrf.mxu0
        %v10642 = vadd.f32 %v9629, %v10641
        %10643 = vmatmul.f32.gmra.mxu0 %v9860
        %v10644 = vpop.f32.mrf.mxu0
        %v10645 = vadd.f32 %v9629, %v10644
        %10646 = vmatmul.f32.gmra.mxu0 %v9863
        %v10647 = vpop.f32.mrf.mxu0
        %v10648 = vadd.f32 %v9629, %v10647
        %10649 = vmatmul.f32.gmra.mxu0 %v9866
        %v10650 = vpop.f32.mrf.mxu0
        %v10651 = vadd.f32 %v9629, %v10650
        %10652 = vmatmul.f32.gmra.mxu0 %v9869
        %v10653 = vpop.f32.mrf.mxu0
        %v10654 = vadd.f32 %v9629, %v10653
        %10655 = vmatmul.f32.gmra.mxu0 %v9872
        %v10656 = vpop.f32.mrf.mxu0
        %v10657 = vadd.f32 %v9629, %v10656
        %10658 = vmatmul.f32.gmra.mxu0 %v9875
        %v10659 = vpop.f32.mrf.mxu0
        %v10660 = vadd.f32 %v9629, %v10659
        %10661 = vmatmul.f32.gmra.mxu0 %v9878
        %v10662 = vpop.f32.mrf.mxu0
        %v10663 = vadd.f32 %v9629, %v10662
        %10664 = vmatmul.f32.gmra.mxu0 %v9881
        %v10665 = vpop.f32.mrf.mxu0
        %v10666 = vadd.f32 %v9629, %v10665
        %10667 = vmatmul.f32.gmra.mxu0 %v9884
        %v10668 = vpop.f32.mrf.mxu0
        %v10669 = vadd.f32 %v9629, %v10668
        %10670 = vmatmul.f32.gmra.mxu0 %v9887
        %v10671 = vpop.f32.mrf.mxu0
        %v10672 = vadd.f32 %v9629, %v10671
        %10673 = vmatmul.f32.gmra.mxu0 %v9890
        %v10674 = vpop.f32.mrf.mxu0
        %v10675 = vadd.f32 %v9629, %v10674
        %10676 = vmatmul.f32.gmra.mxu0 %v9893
        %v10677 = vpop.f32.mrf.mxu0
        %v10678 = vadd.f32 %v9629, %v10677
        %10679 = vmatmul.f32.gmra.mxu0 %v9896
        %v10680 = vpop.f32.mrf.mxu0
        %v10681 = vadd.f32 %v9629, %v10680
        %10682 = vmatmul.f32.gmra.mxu0 %v9899
        %v10683 = vpop.f32.mrf.mxu0
        %v10684 = vadd.f32 %v9629, %v10683
        %10685 = vmatmul.f32.gmra.mxu0 %v9902
        %v10686 = vpop.f32.mrf.mxu0
        %v10687 = vadd.f32 %v9629, %v10686
        %10688 = vmatmul.f32.gmra.mxu0 %v9905
        %v10689 = vpop.f32.mrf.mxu0
        %v10690 = vadd.f32 %v9629, %v10689
        %10691 = vmatmul.f32.gmra.mxu0 %v9908
        %v10692 = vpop.f32.mrf.mxu0
        %v10693 = vadd.f32 %v9629, %v10692
        %10694 = vmatmul.f32.gmra.mxu0 %v9911
        %v10695 = vpop.f32.mrf.mxu0
        %v10696 = vadd.f32 %v9629, %v10695
        %10697 = vmatmul.f32.gmra.mxu0 %v9914
        %v10698 = vpop.f32.mrf.mxu0
        %v10699 = vadd.f32 %v9629, %v10698
        %10700 = vmatmul.f32.gmra.mxu0 %v9917
        %v10701 = vpop.f32.mrf.mxu0
        %v10702 = vadd.f32 %v9629, %v10701
        %10703 = vmatmul.f32.gmra.mxu0 %v9920
        %v10704 = vpop.f32.mrf.mxu0
        %v10705 = vadd.f32 %v9629, %v10704
        %10706 = vmatmul.f32.gmra.mxu0 %v9923
        %v10707 = vpop.f32.mrf.mxu0
        %v10708 = vadd.f32 %v9629, %v10707
        %10709 = vmatmul.f32.gmra.mxu0 %v9926
        %v10710 = vpop.f32.mrf.mxu0
        %v10711 = vadd.f32 %v9629, %v10710
        %10712 = vmatmul.f32.gmra.mxu0 %v9929
        %v10713 = vpop.f32.mrf.mxu0
        %v10714 = vadd.f32 %v9629, %v10713
        %10715 = vmatmul.f32.gmra.mxu0 %v9932
        %v10716 = vpop.f32.mrf.mxu0
        %v10717 = vadd.f32 %v9629, %v10716
        %10718 = vmatmul.f32.gmra.mxu0 %v9935
        %v10719 = vpop.f32.mrf.mxu0
        %v10720 = vadd.f32 %v9629, %v10719
        %10721 = vmatmul.f32.gmra.mxu0 %v9938
        %v10722 = vpop.f32.mrf.mxu0
        %v10723 = vadd.f32 %v9629, %v10722
        %10724 = vmatmul.f32.gmra.mxu0 %v9941
        %v10725 = vpop.f32.mrf.mxu0
        %v10726 = vadd.f32 %v9629, %v10725
        %10727 = vmatmul.f32.gmra.mxu0 %v9944
        %v10728 = vpop.f32.mrf.mxu0
        %v10729 = vadd.f32 %v9629, %v10728
        %10730 = vmatmul.f32.gmra.mxu0 %v9947
        %v10731 = vpop.f32.mrf.mxu0
        %v10732 = vadd.f32 %v9629, %v10731
        %10733 = vmatmul.f32.gmra.mxu0 %v9950
        %v10734 = vpop.f32.mrf.mxu0
        %v10735 = vadd.f32 %v9629, %v10734
        %10736 = vmatmul.f32.gmra.mxu0 %v9953
        %v10737 = vpop.f32.mrf.mxu0
        %v10738 = vadd.f32 %v9629, %v10737
        %10739 = vmatmul.f32.gmra.mxu0 %v9956
        %v10740 = vpop.f32.mrf.mxu0
        %v10741 = vadd.f32 %v9629, %v10740
        %10742 = vmatmul.f32.gmra.mxu0 %v9959
        %v10743 = vpop.f32.mrf.mxu0
        %v10744 = vadd.f32 %v9629, %v10743
        %10745 = vmatmul.f32.gmra.mxu0 %v9962
        %v10746 = vpop.f32.mrf.mxu0
        %v10747 = vadd.f32 %v9629, %v10746
        %10748 = vmatmul.f32.gmra.mxu0 %v9965
        %v10749 = vpop.f32.mrf.mxu0
        %v10750 = vadd.f32 %v9629, %v10749
        %10751 = vmatmul.f32.gmra.mxu0 %v9968
        %v10752 = vpop.f32.mrf.mxu0
        %v10753 = vadd.f32 %v9629, %v10752
        %10754 = vmatmul.f32.gmra.mxu0 %v9971
        %v10755 = vpop.f32.mrf.mxu0
        %v10756 = vadd.f32 %v9629, %v10755
        %10757 = vmatmul.f32.gmra.mxu0 %v9974
        %v10758 = vpop.f32.mrf.mxu0
        %v10759 = vadd.f32 %v9629, %v10758
        %10760 = vmatmul.f32.gmra.mxu0 %v9977
        %v10761 = vpop.f32.mrf.mxu0
        %v10762 = vadd.f32 %v9629, %v10761
        %10763 = vmatmul.f32.gmra.mxu0 %v9980
        %v10764 = vpop.f32.mrf.mxu0
        %v10765 = vadd.f32 %v9629, %v10764
        %10766 = vmatmul.f32.gmra.mxu0 %v9983
        %v10767 = vpop.f32.mrf.mxu0
        %v10768 = vadd.f32 %v9629, %v10767
        %10769 = vmatmul.f32.gmra.mxu0 %v9986
        %v10770 = vpop.f32.mrf.mxu0
        %v10771 = vadd.f32 %v9629, %v10770
        %10772 = vmatmul.f32.gmra.mxu0 %v9989
        %v10773 = vpop.f32.mrf.mxu0
        %v10774 = vadd.f32 %v9629, %v10773
        %10775 = vmatmul.f32.gmra.mxu0 %v9992
        %v10776 = vpop.f32.mrf.mxu0
        %v10777 = vadd.f32 %v9629, %v10776
        %10778 = vmatmul.f32.gmra.mxu0 %v9995
        %v10779 = vpop.f32.mrf.mxu0
        %v10780 = vadd.f32 %v9629, %v10779
        %10781 = vmatmul.f32.gmra.mxu0 %v9998
        %v10782 = vpop.f32.mrf.mxu0
        %v10783 = vadd.f32 %v9629, %v10782
        %10784 = vmatmul.f32.gmra.mxu0 %v10001
        %v10785 = vpop.f32.mrf.mxu0
        %v10786 = vadd.f32 %v9629, %v10785
        %10787 = vmatmul.f32.gmra.mxu0 %v10004
        %v10788 = vpop.f32.mrf.mxu0
        %v10789 = vadd.f32 %v9629, %v10788
        %10790 = vmatmul.f32.gmra.mxu0 %v10007
        %v10791 = vpop.f32.mrf.mxu0
        %v10792 = vadd.f32 %v9629, %v10791
        %10793 = vmatmul.f32.gmra.mxu0 %v10010
        %v10794 = vpop.f32.mrf.mxu0
        %v10795 = vadd.f32 %v9629, %v10794
        %10796 = vmatmul.f32.gmra.mxu0 %v10013
        %v10797 = vpop.f32.mrf.mxu0
        %v10798 = vadd.f32 %v9629, %v10797
        %10799 = vmatmul.f32.gmra.mxu0 %v10016
        %v10800 = vpop.f32.mrf.mxu0
        %v10801 = vadd.f32 %v9629, %v10800
        %10802 = vmatmul.f32.gmra.mxu0 %v10019
        %v10803 = vpop.f32.mrf.mxu0
        %v10804 = vadd.f32 %v9629, %v10803
        %10805 = vmatmul.f32.gmra.mxu0 %v10022
        %v10806 = vpop.f32.mrf.mxu0
        %v10807 = vadd.f32 %v9629, %v10806
        %10808 = vmatmul.f32.gmra.mxu0 %v10025
        %v10809 = vpop.f32.mrf.mxu0
        %v10810 = vadd.f32 %v9629, %v10809
        %10811 = vmatmul.f32.gmra.mxu0 %v10028
        %v10812 = vpop.f32.mrf.mxu0
        %v10813 = vadd.f32 %v9629, %v10812
        %10814 = vmatmul.f32.gmra.mxu0 %v10031
        %v10815 = vpop.f32.mrf.mxu0
        %v10816 = vadd.f32 %v9629, %v10815
        %10817 = vmatmul.f32.gmra.mxu0 %v10034
        %v10818 = vpop.f32.mrf.mxu0
        %v10819 = vadd.f32 %v9629, %v10818
        %10820 = vmatmul.f32.gmra.mxu0 %v10037
        %v10821 = vpop.f32.mrf.mxu0
        %v10822 = vadd.f32 %v9629, %v10821
        %10823 = vmatmul.f32.gmra.mxu0 %v10040
        %v10824 = vpop.f32.mrf.mxu0
        %v10825 = vadd.f32 %v9629, %v10824
        %10826 = vmatmul.f32.gmra.mxu0 %v10043
        %v10827 = vpop.f32.mrf.mxu0
        %v10828 = vadd.f32 %v9629, %v10827
        %10829 = vmatmul.f32.gmra.mxu0 %v10046
        %v10830 = vpop.f32.mrf.mxu0
        %v10831 = vadd.f32 %v9629, %v10830
        %10832 = vmatmul.f32.gmra.mxu0 %v10049
        %v10833 = vpop.f32.mrf.mxu0
        %v10834 = vadd.f32 %v9629, %v10833
        %10835 = vmatmul.f32.gmra.mxu0 %v10052
        %v10836 = vpop.f32.mrf.mxu0
        %v10837 = vadd.f32 %v9629, %v10836
        %10838 = vmatmul.f32.gmra.mxu0 %v10055
        %v10839 = vpop.f32.mrf.mxu0
        %v10840 = vadd.f32 %v9629, %v10839
        %10841 = vmatmul.f32.gmra.mxu0 %v10058
        %v10842 = vpop.f32.mrf.mxu0
        %v10843 = vadd.f32 %v9629, %v10842
        %10844 = vmatmul.f32.gmra.mxu0 %v10061
        %v10845 = vpop.f32.mrf.mxu0
        %v10846 = vadd.f32 %v9629, %v10845
        %10847 = vmatmul.f32.gmra.mxu0 %v10064
        %v10848 = vpop.f32.mrf.mxu0
        %v10849 = vadd.f32 %v9629, %v10848
        %10850 = vmatmul.f32.gmra.mxu0 %v10067
        %v10851 = vpop.f32.mrf.mxu0
        %v10852 = vadd.f32 %v9629, %v10851
        %10853 = vmatmul.f32.gmra.mxu0 %v10070
        %v10854 = vpop.f32.mrf.mxu0
        %v10855 = vadd.f32 %v9629, %v10854
        %10856 = vmatmul.f32.gmra.mxu0 %v10073
        %v10857 = vpop.f32.mrf.mxu0
        %v10858 = vadd.f32 %v9629, %v10857
        %10859 = vmatmul.f32.gmra.mxu0 %v10076
        %v10860 = vpop.f32.mrf.mxu0
        %v10861 = vadd.f32 %v9629, %v10860
        %10862 = vmatmul.f32.gmra.mxu0 %v10079
        %v10863 = vpop.f32.mrf.mxu0
        %v10864 = vadd.f32 %v9629, %v10863
        %10865 = vmatmul.f32.gmra.mxu0 %v10082
        %v10866 = vpop.f32.mrf.mxu0
        %v10867 = vadd.f32 %v9629, %v10866
        %10868 = vmatmul.f32.gmra.mxu0 %v10085
        %v10869 = vpop.f32.mrf.mxu0
        %v10870 = vadd.f32 %v9629, %v10869
        %10871 = vmatmul.f32.gmra.mxu0 %v10088
        %v10872 = vpop.f32.mrf.mxu0
        %v10873 = vadd.f32 %v9629, %v10872
        %10874 = vmatmul.f32.gmra.mxu0 %v10091
        %v10875 = vpop.f32.mrf.mxu0
        %v10876 = vadd.f32 %v9629, %v10875
        %10877 = vmatmul.f32.gmra.mxu0 %v10094
        %v10878 = vpop.f32.mrf.mxu0
        %v10879 = vadd.f32 %v9629, %v10878
        %10880 = vmatmul.f32.gmra.mxu0 %v10097
        %v10881 = vpop.f32.mrf.mxu0
        %v10882 = vadd.f32 %v9629, %v10881
        %10883 = vmatmul.f32.gmra.mxu0 %v10100
        %v10884 = vpop.f32.mrf.mxu0
        %v10885 = vadd.f32 %v9629, %v10884
        %10886 = vmatmul.f32.gmra.mxu0 %v10103
        %v10887 = vpop.f32.mrf.mxu0
        %v10888 = vadd.f32 %v9629, %v10887
        %10889 = vmatmul.f32.gmra.mxu0 %v10106
        %v10890 = vpop.f32.mrf.mxu0
        %v10891 = vadd.f32 %v9629, %v10890
        %10892 = vmatmul.f32.gmra.mxu0 %v10109
        %v10893 = vpop.f32.mrf.mxu0
        %v10894 = vadd.f32 %v9629, %v10893
        %10895 = vmatmul.f32.gmra.mxu0 %v10112
        %v10896 = vpop.f32.mrf.mxu0
        %v10897 = vadd.f32 %v9629, %v10896
        %10898 = vmatmul.f32.gmra.mxu0 %v10115
        %v10899 = vpop.f32.mrf.mxu0
        %v10900 = vadd.f32 %v9629, %v10899
        %10901 = vmatmul.f32.gmra.mxu0 %v10118
        %v10902 = vpop.f32.mrf.mxu0
        %v10903 = vadd.f32 %v9629, %v10902
        %10904 = vmatmul.f32.gmra.mxu0 %v10121
        %v10905 = vpop.f32.mrf.mxu0
        %v10906 = vadd.f32 %v9629, %v10905
        %10907 = vmatmul.f32.gmra.mxu0 %v10124
        %v10908 = vpop.f32.mrf.mxu0
        %v10909 = vadd.f32 %v9629, %v10908
        %10910 = vmatmul.f32.gmra.mxu0 %v10127
        %v10911 = vpop.f32.mrf.mxu0
        %v10912 = vadd.f32 %v9629, %v10911
        %10913 = vmatmul.f32.gmra.mxu0 %v10130
        %v10914 = vpop.f32.mrf.mxu0
        %v10915 = vadd.f32 %v9629, %v10914
        %10916 = vmatmul.f32.gmra.mxu0 %v10133
        %v10917 = vpop.f32.mrf.mxu0
        %v10918 = vadd.f32 %v9629, %v10917
        %10919 = vmatmul.f32.gmra.mxu0 %v10136
        %v10920 = vpop.f32.mrf.mxu0
        %v10921 = vadd.f32 %v9629, %v10920
        %10922 = vmatmul.f32.gmra.mxu0 %v10139
        %v10923 = vpop.f32.mrf.mxu0
        %v10924 = vadd.f32 %v9629, %v10923
        %10925 = vmatmul.f32.gmra.mxu0 %v10142
        %v10926 = vpop.f32.mrf.mxu0
        %v10927 = vadd.f32 %v9629, %v10926
        %10928 = vmatmul.f32.gmra.mxu0 %v10145
        %v10929 = vpop.f32.mrf.mxu0
        %v10930 = vadd.f32 %v9629, %v10929
        %10931 = vmatmul.f32.gmra.mxu0 %v10148
        %v10932 = vpop.f32.mrf.mxu0
        %v10933 = vadd.f32 %v9629, %v10932
        %10934 = vmatmul.f32.gmra.mxu0 %v10151
        %v10935 = vpop.f32.mrf.mxu0
        %v10936 = vadd.f32 %v9629, %v10935
        %10937 = vmatmul.f32.gmra.mxu0 %v10154
        %v10938 = vpop.f32.mrf.mxu0
        %v10939 = vadd.f32 %v9629, %v10938
        %10940 = vmatmul.f32.gmra.mxu0 %v10157
        %v10941 = vpop.f32.mrf.mxu0
        %v10942 = vadd.f32 %v9629, %v10941
        %10943 = vmatmul.f32.gmra.mxu0 %v10160
        %v10944 = vpop.f32.mrf.mxu0
        %v10945 = vadd.f32 %v9629, %v10944
        %10946 = vmatmul.f32.gmra.mxu0 %v10163
        %v10947 = vpop.f32.mrf.mxu0
        %v10948 = vadd.f32 %v9629, %v10947
        %10949 = vmatmul.f32.gmra.mxu0 %v10166
        %v10950 = vpop.f32.mrf.mxu0
        %v10951 = vadd.f32 %v9629, %v10950
        %10952 = vmatmul.f32.gmra.mxu0 %v10169
        %v10953 = vpop.f32.mrf.mxu0
        %v10954 = vadd.f32 %v9629, %v10953
        %10955 = vmatmul.f32.gmra.mxu0 %v10172
        %v10956 = vpop.f32.mrf.mxu0
        %v10957 = vadd.f32 %v9629, %v10956
        %10958 = vmatmul.f32.gmra.mxu0 %v10175
        %v10959 = vpop.f32.mrf.mxu0
        %v10960 = vadd.f32 %v9629, %v10959
        %10961 = vmatmul.f32.gmra.mxu0 %v10178
        %v10962 = vpop.f32.mrf.mxu0
        %v10963 = vadd.f32 %v9629, %v10962
        %10964 = vmatmul.f32.gmra.mxu0 %v10181
        %v10965 = vpop.f32.mrf.mxu0
        %v10966 = vadd.f32 %v9629, %v10965
        %10967 = vmatmul.f32.gmra.mxu0 %v10184
        %v10968 = vpop.f32.mrf.mxu0
        %v10969 = vadd.f32 %v9629, %v10968
        %10970 = vmatmul.f32.gmra.mxu0 %v10187
        %v10971 = vpop.f32.mrf.mxu0
        %v10972 = vadd.f32 %v9629, %v10971
        %10973 = vmatmul.f32.gmra.mxu0 %v10190
        %v10974 = vpop.f32.mrf.mxu0
        %v10975 = vadd.f32 %v9629, %v10974
        %10976 = vmatmul.f32.gmra.mxu0 %v10193
        %v10977 = vpop.f32.mrf.mxu0
        %v10978 = vadd.f32 %v9629, %v10977
        %10979 = vmatmul.f32.gmra.mxu0 %v10196
        %v10980 = vpop.f32.mrf.mxu0
        %v10981 = vadd.f32 %v9629, %v10980
        %10982 = vmatmul.f32.gmra.mxu0 %v10199
        %v10983 = vpop.f32.mrf.mxu0
        %v10984 = vadd.f32 %v9629, %v10983
        %10985 = vmatmul.f32.gmra.mxu0 %v10202
        %v10986 = vpop.f32.mrf.mxu0
        %v10987 = vadd.f32 %v9629, %v10986
        %10988 = vmatmul.f32.gmra.mxu0 %v10205
        %v10989 = vpop.f32.mrf.mxu0
        %v10990 = vadd.f32 %v9629, %v10989
        %10991 = vmatmul.f32.gmra.mxu0 %v10208
        %v10992 = vpop.f32.mrf.mxu0
        %v10993 = vadd.f32 %v9629, %v10992
        %10994 = vmatmul.f32.gmra.mxu0 %v10211
        %v10995 = vpop.f32.mrf.mxu0
        %v10996 = vadd.f32 %v9629, %v10995
        %10997 = vmatmul.f32.gmra.mxu0 %v10214
        %v10998 = vpop.f32.mrf.mxu0
        %v10999 = vadd.f32 %v9629, %v10998
        %11000 = vmatmul.f32.gmra.mxu0 %v10217
        %v11001 = vpop.f32.mrf.mxu0
        %v11002 = vadd.f32 %v9629, %v11001
        %11003 = vmatmul.f32.gmra.mxu0 %v10220
        %v11004 = vpop.f32.mrf.mxu0
        %v11005 = vadd.f32 %v9629, %v11004
        %11006 = vmatmul.f32.gmra.mxu0 %v10223
        %v11007 = vpop.f32.mrf.mxu0
        %v11008 = vadd.f32 %v9629, %v11007
        %11009 = vmatmul.f32.gmra.mxu0 %v10226
        %v11010 = vpop.f32.mrf.mxu0
        %v11011 = vadd.f32 %v9629, %v11010
        %11012 = vmatmul.f32.gmra.mxu0 %v10229
        %v11013 = vpop.f32.mrf.mxu0
        %v11014 = vadd.f32 %v9629, %v11013
        %11015 = vmatmul.f32.gmra.mxu0 %v10232
        %v11016 = vpop.f32.mrf.mxu0
        %v11017 = vadd.f32 %v9629, %v11016
        %11018 = vmatmul.f32.gmra.mxu0 %v10235
        %v11019 = vpop.f32.mrf.mxu0
        %v11020 = vadd.f32 %v9629, %v11019
        %11021 = vmatmul.f32.gmra.mxu0 %v10238
        %v11022 = vpop.f32.mrf.mxu0
        %v11023 = vadd.f32 %v9629, %v11022
        %11024 = vmatmul.f32.gmra.mxu0 %v10241
        %v11025 = vpop.f32.mrf.mxu0
        %v11026 = vadd.f32 %v9629, %v11025
        %11027 = vmatmul.f32.gmra.mxu0 %v10244
        %v11028 = vpop.f32.mrf.mxu0
        %v11029 = vadd.f32 %v9629, %v11028
        %11030 = vmatmul.f32.gmra.mxu0 %v10247
        %v11031 = vpop.f32.mrf.mxu0
        %v11032 = vadd.f32 %v9629, %v11031
        %11033 = vmatmul.f32.gmra.mxu0 %v10250
        %v11034 = vpop.f32.mrf.mxu0
        %v11035 = vadd.f32 %v9629, %v11034
        %11036 = vmatmul.f32.gmra.mxu0 %v10253
        %v11037 = vpop.f32.mrf.mxu0
        %v11038 = vadd.f32 %v9629, %v11037
        %11039 = vmatmul.f32.gmra.mxu0 %v10256
        %v11040 = vpop.f32.mrf.mxu0
        %v11041 = vadd.f32 %v9629, %v11040
        %11042 = vmatmul.f32.gmra.mxu0 %v10259
        %v11043 = vpop.f32.mrf.mxu0
        %v11044 = vadd.f32 %v9629, %v11043
        %11045 = vmatmul.f32.gmra.mxu0 %v10262
        %v11046 = vpop.f32.mrf.mxu0
        %v11047 = vadd.f32 %v9629, %v11046
        %11048 = vmatmul.f32.gmra.mxu0 %v10265
        %v11049 = vpop.f32.mrf.mxu0
        %v11050 = vadd.f32 %v9629, %v11049
        %11051 = vmatmul.f32.gmra.mxu0 %v10268
        %v11052 = vpop.f32.mrf.mxu0
        %v11053 = vadd.f32 %v9629, %v11052
        %11054 = vmatmul.f32.gmra.mxu0 %v10271
        %v11055 = vpop.f32.mrf.mxu0
        %v11056 = vadd.f32 %v9629, %v11055
        %11057 = vmatmul.f32.gmra.mxu0 %v10274
        %v11058 = vpop.f32.mrf.mxu0
        %v11059 = vadd.f32 %v9629, %v11058
        %11060 = vmatmul.f32.gmra.mxu0 %v10277
        %v11061 = vpop.f32.mrf.mxu0
        %v11062 = vadd.f32 %v9629, %v11061
        %11063 = vmatmul.f32.gmra.mxu0 %v10280
        %v11064 = vpop.f32.mrf.mxu0
        %v11065 = vadd.f32 %v9629, %v11064
        %11066 = vmatmul.f32.gmra.mxu0 %v10283
        %v11067 = vpop.f32.mrf.mxu0
        %v11068 = vadd.f32 %v9629, %v11067
        %11069 = vmatmul.f32.gmra.mxu0 %v10286
        %v11070 = vpop.f32.mrf.mxu0
        %v11071 = vadd.f32 %v9629, %v11070
        %11072 = vmatmul.f32.gmra.mxu0 %v10289
        %v11073 = vpop.f32.mrf.mxu0
        %v11074 = vadd.f32 %v9629, %v11073
        %11075 = vmatmul.f32.gmra.mxu0 %v10292
        %v11076 = vpop.f32.mrf.mxu0
        %v11077 = vadd.f32 %v9629, %v11076
        %11078 = vmatmul.f32.gmra.mxu0 %v10295
        %v11079 = vpop.f32.mrf.mxu0
        %v11080 = vadd.f32 %v9629, %v11079
        %11081 = vmatmul.f32.gmra.mxu0 %v10298
        %v11082 = vpop.f32.mrf.mxu0
        %v11083 = vadd.f32 %v9629, %v11082
        %11084 = vmatmul.f32.gmra.mxu0 %v10301
        %v11085 = vpop.f32.mrf.mxu0
        %v11086 = vadd.f32 %v9629, %v11085
        %11087 = vmatmul.f32.gmra.mxu0 %v10304
        %v11088 = vpop.f32.mrf.mxu0
        %v11089 = vadd.f32 %v9629, %v11088
        %11090 = vmatmul.f32.gmra.mxu0 %v10307
        %v11091 = vpop.f32.mrf.mxu0
        %v11092 = vadd.f32 %v9629, %v11091
        %11093 = vmatmul.f32.gmra.mxu0 %v10310
        %v11094 = vpop.f32.mrf.mxu0
        %v11095 = vadd.f32 %v9629, %v11094
        %11096 = vmatmul.f32.gmra.mxu0 %v10313
        %v11097 = vpop.f32.mrf.mxu0
        %v11098 = vadd.f32 %v9629, %v11097
        %11099 = vmatmul.f32.gmra.mxu0 %v10316
        %v11100 = vpop.f32.mrf.mxu0
        %v11101 = vadd.f32 %v9629, %v11100
        %11102 = vmatmul.f32.gmra.mxu0 %v10319
        %v11103 = vpop.f32.mrf.mxu0
        %v11104 = vadd.f32 %v9629, %v11103
        %11105 = vmatmul.f32.gmra.mxu0 %v10322
        %v11106 = vpop.f32.mrf.mxu0
        %v11107 = vadd.f32 %v9629, %v11106
        %11108 = vmatmul.f32.gmra.mxu0 %v10325
        %v11109 = vpop.f32.mrf.mxu0
        %v11110 = vadd.f32 %v9629, %v11109
        %11111 = vmatmul.f32.gmra.mxu0 %v10328
        %v11112 = vpop.f32.mrf.mxu0
        %v11113 = vadd.f32 %v9629, %v11112
        %11114 = vmatmul.f32.gmra.mxu0 %v10331
        %v11115 = vpop.f32.mrf.mxu0
        %v11116 = vadd.f32 %v9629, %v11115
        %11117 = vmatmul.f32.gmra.mxu0 %v10334
        %v11118 = vpop.f32.mrf.mxu0
        %v11119 = vadd.f32 %v9629, %v11118
        %11120 = vmatmul.f32.gmra.mxu0 %v10337
        %v11121 = vpop.f32.mrf.mxu0
        %v11122 = vadd.f32 %v9629, %v11121
        %11123 = vmatmul.f32.gmra.mxu0 %v10340
        %v11124 = vpop.f32.mrf.mxu0
        %v11125 = vadd.f32 %v9629, %v11124
        %11126 = vmatmul.f32.gmra.mxu0 %v10343
        %v11127 = vpop.f32.mrf.mxu0
        %v11128 = vadd.f32 %v9629, %v11127
        %11129 = vmatmul.f32.gmra.mxu0 %v10346
        %v11130 = vpop.f32.mrf.mxu0
        %v11131 = vadd.f32 %v9629, %v11130
        %11132 = vmatmul.f32.gmra.mxu0 %v10349
        %v11133 = vpop.f32.mrf.mxu0
        %v11134 = vadd.f32 %v9629, %v11133
        %11135 = vmatmul.f32.gmra.mxu0 %v10352
        %v11136 = vpop.f32.mrf.mxu0
        %v11137 = vadd.f32 %v9629, %v11136
        %11138 = vmatmul.f32.gmra.mxu0 %v10355
        %v11139 = vpop.f32.mrf.mxu0
        %v11140 = vadd.f32 %v9629, %v11139
        %11141 = vmatmul.f32.gmra.mxu0 %v10358
        %v11142 = vpop.f32.mrf.mxu0
        %v11143 = vadd.f32 %v9629, %v11142
        %11144 = vmatmul.f32.gmra.mxu0 %v10361
        %v11145 = vpop.f32.mrf.mxu0
        %v11146 = vadd.f32 %v9629, %v11145
        %11147 = vmatmul.f32.gmra.mxu0 %v10364
        %v11148 = vpop.f32.mrf.mxu0
        %v11149 = vadd.f32 %v9629, %v11148
        %11150 = vmatmul.f32.gmra.mxu0 %v10367
        %v11151 = vpop.f32.mrf.mxu0
        %v11152 = vadd.f32 %v9629, %v11151
        %11153 = vmatmul.f32.gmra.mxu0 %v10370
        %v11154 = vpop.f32.mrf.mxu0
        %v11155 = vadd.f32 %v9629, %v11154
        %11156 = vmatmul.f32.gmra.mxu0 %v10373
        %v11157 = vpop.f32.mrf.mxu0
        %v11158 = vadd.f32 %v9629, %v11157
        %11159 = vmatmul.f32.gmra.mxu0 %v10376
        %v11160 = vpop.f32.mrf.mxu0
        %v11161 = vadd.f32 %v9629, %v11160
        %11162 = vmatmul.f32.gmra.mxu0 %v10379
        %v11163 = vpop.f32.mrf.mxu0
        %v11164 = vadd.f32 %v9629, %v11163
        %11165 = vmatmul.f32.gmra.mxu0 %v10382
        %v11166 = vpop.f32.mrf.mxu0
        %v11167 = vadd.f32 %v9629, %v11166
        %11168 = vmatmul.f32.gmra.mxu0 %v10385
        %v11169 = vpop.f32.mrf.mxu0
        %v11170 = vadd.f32 %v9629, %v11169
        %11171 = vmatmul.f32.gmra.mxu0 %v10388
        %v11172 = vpop.f32.mrf.mxu0
        %v11173 = vadd.f32 %v9629, %v11172
        %11174 = vmatmul.f32.gmra.mxu0 %v10391
        %v11175 = vpop.f32.mrf.mxu0
        %v11176 = vadd.f32 %v9629, %v11175
        %11177 = vmatmul.f32.gmra.mxu0 %v10394
        %v11178 = vpop.f32.mrf.mxu0
        %v11179 = vadd.f32 %v9629, %v11178
        %11180 = vmatmul.f32.gmra.mxu0 %v10397
        %v11181 = vpop.f32.mrf.mxu0
        %v11182 = vadd.f32 %v9629, %v11181
        %11183 = vdwg.mxu0
        %11312 = vset.pattern.permute.xlu0 0
        %11313 = vperm.xlu0 %11312, %v10417
        %v11314 = vpop.permute.xlu0 %11313
        %11315 = vset.pattern.permute.xlu0 0
        %11316 = vperm.xlu0 %11315, %v10420
        %v11317 = vpop.permute.xlu0 %11316
        %11318 = vset.pattern.permute.xlu0 0
        %11319 = vperm.xlu0 %11318, %v10423
        %v11320 = vpop.permute.xlu0 %11319
        %11321 = vset.pattern.permute.xlu0 0
        %11322 = vperm.xlu0 %11321, %v10426
        %v11323 = vpop.permute.xlu0 %11322
        %11324 = vset.pattern.permute.xlu0 0
        %11325 = vperm.xlu0 %11324, %v10429
        %v11326 = vpop.permute.xlu0 %11325
        %11327 = vset.pattern.permute.xlu0 0
        %11328 = vperm.xlu0 %11327, %v10432
        %v11329 = vpop.permute.xlu0 %11328
        %11330 = vset.pattern.permute.xlu0 0
        %11331 = vperm.xlu0 %11330, %v10435
        %v11332 = vpop.permute.xlu0 %11331
        %11333 = vset.pattern.permute.xlu0 0
        %11334 = vperm.xlu0 %11333, %v10438
        %v11335 = vpop.permute.xlu0 %11334
        %11336 = vset.pattern.permute.xlu0 0
        %11337 = vperm.xlu0 %11336, %v10441
        %v11338 = vpop.permute.xlu0 %11337
        %11339 = vset.pattern.permute.xlu0 0
        %11340 = vperm.xlu0 %11339, %v10444
        %v11341 = vpop.permute.xlu0 %11340
        %11342 = vset.pattern.permute.xlu0 0
        %11343 = vperm.xlu0 %11342, %v10447
        %v11344 = vpop.permute.xlu0 %11343
        %11345 = vset.pattern.permute.xlu0 0
        %11346 = vperm.xlu0 %11345, %v10450
        %v11347 = vpop.permute.xlu0 %11346
        %11348 = vset.pattern.permute.xlu0 0
        %11349 = vperm.xlu0 %11348, %v10453
        %v11350 = vpop.permute.xlu0 %11349
        %11351 = vset.pattern.permute.xlu0 0
        %11352 = vperm.xlu0 %11351, %v10456
        %v11353 = vpop.permute.xlu0 %11352
        %11354 = vset.pattern.permute.xlu0 0
        %11355 = vperm.xlu0 %11354, %v10459
        %v11356 = vpop.permute.xlu0 %11355
        %11357 = vset.pattern.permute.xlu0 0
        %11358 = vperm.xlu0 %11357, %v10462
        %v11359 = vpop.permute.xlu0 %11358
        %11360 = vset.pattern.permute.xlu0 0
        %11361 = vperm.xlu0 %11360, %v10465
        %v11362 = vpop.permute.xlu0 %11361
        %11363 = vset.pattern.permute.xlu0 0
        %11364 = vperm.xlu0 %11363, %v10468
        %v11365 = vpop.permute.xlu0 %11364
        %11366 = vset.pattern.permute.xlu0 0
        %11367 = vperm.xlu0 %11366, %v10471
        %v11368 = vpop.permute.xlu0 %11367
        %11369 = vset.pattern.permute.xlu0 0
        %11370 = vperm.xlu0 %11369, %v10474
        %v11371 = vpop.permute.xlu0 %11370
        %11372 = vset.pattern.permute.xlu0 0
        %11373 = vperm.xlu0 %11372, %v10477
        %v11374 = vpop.permute.xlu0 %11373
        %11375 = vset.pattern.permute.xlu0 0
        %11376 = vperm.xlu0 %11375, %v10480
        %v11377 = vpop.permute.xlu0 %11376
        %11378 = vset.pattern.permute.xlu0 0
        %11379 = vperm.xlu0 %11378, %v10483
        %v11380 = vpop.permute.xlu0 %11379
        %11381 = vset.pattern.permute.xlu0 0
        %11382 = vperm.xlu0 %11381, %v10486
        %v11383 = vpop.permute.xlu0 %11382
        %11384 = vset.pattern.permute.xlu0 0
        %11385 = vperm.xlu0 %11384, %v10489
        %v11386 = vpop.permute.xlu0 %11385
        %11387 = vset.pattern.permute.xlu0 0
        %11388 = vperm.xlu0 %11387, %v10492
        %v11389 = vpop.permute.xlu0 %11388
        %11390 = vset.pattern.permute.xlu0 0
        %11391 = vperm.xlu0 %11390, %v10495
        %v11392 = vpop.permute.xlu0 %11391
        %11393 = vset.pattern.permute.xlu0 0
        %11394 = vperm.xlu0 %11393, %v10498
        %v11395 = vpop.permute.xlu0 %11394
        %11396 = vset.pattern.permute.xlu0 0
        %11397 = vperm.xlu0 %11396, %v10501
        %v11398 = vpop.permute.xlu0 %11397
        %11399 = vset.pattern.permute.xlu0 0
        %11400 = vperm.xlu0 %11399, %v10504
        %v11401 = vpop.permute.xlu0 %11400
        %11402 = vset.pattern.permute.xlu0 0
        %11403 = vperm.xlu0 %11402, %v10507
        %v11404 = vpop.permute.xlu0 %11403
        %11405 = vset.pattern.permute.xlu0 0
        %11406 = vperm.xlu0 %11405, %v10510
        %v11407 = vpop.permute.xlu0 %11406
        %11408 = vset.pattern.permute.xlu0 0
        %11409 = vperm.xlu0 %11408, %v10513
        %v11410 = vpop.permute.xlu0 %11409
        %11411 = vset.pattern.permute.xlu0 0
        %11412 = vperm.xlu0 %11411, %v10516
        %v11413 = vpop.permute.xlu0 %11412
        %11414 = vset.pattern.permute.xlu0 0
        %11415 = vperm.xlu0 %11414, %v10519
        %v11416 = vpop.permute.xlu0 %11415
        %11417 = vset.pattern.permute.xlu0 0
        %11418 = vperm.xlu0 %11417, %v10522
        %v11419 = vpop.permute.xlu0 %11418
        %11420 = vset.pattern.permute.xlu0 0
        %11421 = vperm.xlu0 %11420, %v10525
        %v11422 = vpop.permute.xlu0 %11421
        %11423 = vset.pattern.permute.xlu0 0
        %11424 = vperm.xlu0 %11423, %v10528
        %v11425 = vpop.permute.xlu0 %11424
        %11426 = vset.pattern.permute.xlu0 0
        %11427 = vperm.xlu0 %11426, %v10531
        %v11428 = vpop.permute.xlu0 %11427
        %11429 = vset.pattern.permute.xlu0 0
        %11430 = vperm.xlu0 %11429, %v10534
        %v11431 = vpop.permute.xlu0 %11430
        %11432 = vset.pattern.permute.xlu0 0
        %11433 = vperm.xlu0 %11432, %v10537
        %v11434 = vpop.permute.xlu0 %11433
        %11435 = vset.pattern.permute.xlu0 0
        %11436 = vperm.xlu0 %11435, %v10540
        %v11437 = vpop.permute.xlu0 %11436
        %11438 = vset.pattern.permute.xlu0 0
        %11439 = vperm.xlu0 %11438, %v10543
        %v11440 = vpop.permute.xlu0 %11439
        %11441 = vset.pattern.permute.xlu0 0
        %11442 = vperm.xlu0 %11441, %v10546
        %v11443 = vpop.permute.xlu0 %11442
        %11444 = vset.pattern.permute.xlu0 0
        %11445 = vperm.xlu0 %11444, %v10549
        %v11446 = vpop.permute.xlu0 %11445
        %11447 = vset.pattern.permute.xlu0 0
        %11448 = vperm.xlu0 %11447, %v10552
        %v11449 = vpop.permute.xlu0 %11448
        %11450 = vset.pattern.permute.xlu0 0
        %11451 = vperm.xlu0 %11450, %v10555
        %v11452 = vpop.permute.xlu0 %11451
        %11453 = vset.pattern.permute.xlu0 0
        %11454 = vperm.xlu0 %11453, %v10558
        %v11455 = vpop.permute.xlu0 %11454
        %11456 = vset.pattern.permute.xlu0 0
        %11457 = vperm.xlu0 %11456, %v10561
        %v11458 = vpop.permute.xlu0 %11457
        %11459 = vset.pattern.permute.xlu0 0
        %11460 = vperm.xlu0 %11459, %v10564
        %v11461 = vpop.permute.xlu0 %11460
        %11462 = vset.pattern.permute.xlu0 0
        %11463 = vperm.xlu0 %11462, %v10567
        %v11464 = vpop.permute.xlu0 %11463
        %11465 = vset.pattern.permute.xlu0 0
        %11466 = vperm.xlu0 %11465, %v10570
        %v11467 = vpop.permute.xlu0 %11466
        %11468 = vset.pattern.permute.xlu0 0
        %11469 = vperm.xlu0 %11468, %v10573
        %v11470 = vpop.permute.xlu0 %11469
        %11471 = vset.pattern.permute.xlu0 0
        %11472 = vperm.xlu0 %11471, %v10576
        %v11473 = vpop.permute.xlu0 %11472
        %11474 = vset.pattern.permute.xlu0 0
        %11475 = vperm.xlu0 %11474, %v10579
        %v11476 = vpop.permute.xlu0 %11475
        %11477 = vset.pattern.permute.xlu0 0
        %11478 = vperm.xlu0 %11477, %v10582
        %v11479 = vpop.permute.xlu0 %11478
        %11480 = vset.pattern.permute.xlu0 0
        %11481 = vperm.xlu0 %11480, %v10585
        %v11482 = vpop.permute.xlu0 %11481
        %11483 = vset.pattern.permute.xlu0 0
        %11484 = vperm.xlu0 %11483, %v10588
        %v11485 = vpop.permute.xlu0 %11484
        %11486 = vset.pattern.permute.xlu0 0
        %11487 = vperm.xlu0 %11486, %v10591
        %v11488 = vpop.permute.xlu0 %11487
        %11489 = vset.pattern.permute.xlu0 0
        %11490 = vperm.xlu0 %11489, %v10594
        %v11491 = vpop.permute.xlu0 %11490
        %11492 = vset.pattern.permute.xlu0 0
        %11493 = vperm.xlu0 %11492, %v10597
        %v11494 = vpop.permute.xlu0 %11493
        %11495 = vset.pattern.permute.xlu0 0
        %11496 = vperm.xlu0 %11495, %v10600
        %v11497 = vpop.permute.xlu0 %11496
        %11498 = vset.pattern.permute.xlu0 0
        %11499 = vperm.xlu0 %11498, %v10603
        %v11500 = vpop.permute.xlu0 %11499
        %11501 = vset.pattern.permute.xlu0 0
        %11502 = vperm.xlu0 %11501, %v10606
        %v11503 = vpop.permute.xlu0 %11502
        %11504 = vset.pattern.permute.xlu0 0
        %11505 = vperm.xlu0 %11504, %v10609
        %v11506 = vpop.permute.xlu0 %11505
        %11507 = vset.pattern.permute.xlu0 0
        %11508 = vperm.xlu0 %11507, %v10612
        %v11509 = vpop.permute.xlu0 %11508
        %11510 = vset.pattern.permute.xlu0 0
        %11511 = vperm.xlu0 %11510, %v10615
        %v11512 = vpop.permute.xlu0 %11511
        %11513 = vset.pattern.permute.xlu0 0
        %11514 = vperm.xlu0 %11513, %v10618
        %v11515 = vpop.permute.xlu0 %11514
        %11516 = vset.pattern.permute.xlu0 0
        %11517 = vperm.xlu0 %11516, %v10621
        %v11518 = vpop.permute.xlu0 %11517
        %11519 = vset.pattern.permute.xlu0 0
        %11520 = vperm.xlu0 %11519, %v10624
        %v11521 = vpop.permute.xlu0 %11520
        %11522 = vset.pattern.permute.xlu0 0
        %11523 = vperm.xlu0 %11522, %v10627
        %v11524 = vpop.permute.xlu0 %11523
        %11525 = vset.pattern.permute.xlu0 0
        %11526 = vperm.xlu0 %11525, %v10630
        %v11527 = vpop.permute.xlu0 %11526
        %11528 = vset.pattern.permute.xlu0 0
        %11529 = vperm.xlu0 %11528, %v10633
        %v11530 = vpop.permute.xlu0 %11529
        %11531 = vset.pattern.permute.xlu0 0
        %11532 = vperm.xlu0 %11531, %v10636
        %v11533 = vpop.permute.xlu0 %11532
        %11534 = vset.pattern.permute.xlu0 0
        %11535 = vperm.xlu0 %11534, %v10639
        %v11536 = vpop.permute.xlu0 %11535
        %11537 = vset.pattern.permute.xlu0 0
        %11538 = vperm.xlu0 %11537, %v10642
        %v11539 = vpop.permute.xlu0 %11538
        %11540 = vset.pattern.permute.xlu0 0
        %11541 = vperm.xlu0 %11540, %v10645
        %v11542 = vpop.permute.xlu0 %11541
        %11543 = vset.pattern.permute.xlu0 0
        %11544 = vperm.xlu0 %11543, %v10648
        %v11545 = vpop.permute.xlu0 %11544
        %11546 = vset.pattern.permute.xlu0 0
        %11547 = vperm.xlu0 %11546, %v10651
        %v11548 = vpop.permute.xlu0 %11547
        %11549 = vset.pattern.permute.xlu0 0
        %11550 = vperm.xlu0 %11549, %v10654
        %v11551 = vpop.permute.xlu0 %11550
        %11552 = vset.pattern.permute.xlu0 0
        %11553 = vperm.xlu0 %11552, %v10657
        %v11554 = vpop.permute.xlu0 %11553
        %11555 = vset.pattern.permute.xlu0 0
        %11556 = vperm.xlu0 %11555, %v10660
        %v11557 = vpop.permute.xlu0 %11556
        %11558 = vset.pattern.permute.xlu0 0
        %11559 = vperm.xlu0 %11558, %v10663
        %v11560 = vpop.permute.xlu0 %11559
        %11561 = vset.pattern.permute.xlu0 0
        %11562 = vperm.xlu0 %11561, %v10666
        %v11563 = vpop.permute.xlu0 %11562
        %11564 = vset.pattern.permute.xlu0 0
        %11565 = vperm.xlu0 %11564, %v10669
        %v11566 = vpop.permute.xlu0 %11565
        %11567 = vset.pattern.permute.xlu0 0
        %11568 = vperm.xlu0 %11567, %v10672
        %v11569 = vpop.permute.xlu0 %11568
        %11570 = vset.pattern.permute.xlu0 0
        %11571 = vperm.xlu0 %11570, %v10675
        %v11572 = vpop.permute.xlu0 %11571
        %11573 = vset.pattern.permute.xlu0 0
        %11574 = vperm.xlu0 %11573, %v10678
        %v11575 = vpop.permute.xlu0 %11574
        %11576 = vset.pattern.permute.xlu0 0
        %11577 = vperm.xlu0 %11576, %v10681
        %v11578 = vpop.permute.xlu0 %11577
        %11579 = vset.pattern.permute.xlu0 0
        %11580 = vperm.xlu0 %11579, %v10684
        %v11581 = vpop.permute.xlu0 %11580
        %11582 = vset.pattern.permute.xlu0 0
        %11583 = vperm.xlu0 %11582, %v10687
        %v11584 = vpop.permute.xlu0 %11583
        %11585 = vset.pattern.permute.xlu0 0
        %11586 = vperm.xlu0 %11585, %v10690
        %v11587 = vpop.permute.xlu0 %11586
        %11588 = vset.pattern.permute.xlu0 0
        %11589 = vperm.xlu0 %11588, %v10693
        %v11590 = vpop.permute.xlu0 %11589
        %11591 = vset.pattern.permute.xlu0 0
        %11592 = vperm.xlu0 %11591, %v10696
        %v11593 = vpop.permute.xlu0 %11592
        %11594 = vset.pattern.permute.xlu0 0
        %11595 = vperm.xlu0 %11594, %v10699
        %v11596 = vpop.permute.xlu0 %11595
        %11597 = vset.pattern.permute.xlu0 0
        %11598 = vperm.xlu0 %11597, %v10702
        %v11599 = vpop.permute.xlu0 %11598
        %11600 = vset.pattern.permute.xlu0 0
        %11601 = vperm.xlu0 %11600, %v10705
        %v11602 = vpop.permute.xlu0 %11601
        %11603 = vset.pattern.permute.xlu0 0
        %11604 = vperm.xlu0 %11603, %v10708
        %v11605 = vpop.permute.xlu0 %11604
        %11606 = vset.pattern.permute.xlu0 0
        %11607 = vperm.xlu0 %11606, %v10711
        %v11608 = vpop.permute.xlu0 %11607
        %11609 = vset.pattern.permute.xlu0 0
        %11610 = vperm.xlu0 %11609, %v10714
        %v11611 = vpop.permute.xlu0 %11610
        %11612 = vset.pattern.permute.xlu0 0
        %11613 = vperm.xlu0 %11612, %v10717
        %v11614 = vpop.permute.xlu0 %11613
        %11615 = vset.pattern.permute.xlu0 0
        %11616 = vperm.xlu0 %11615, %v10720
        %v11617 = vpop.permute.xlu0 %11616
        %11618 = vset.pattern.permute.xlu0 0
        %11619 = vperm.xlu0 %11618, %v10723
        %v11620 = vpop.permute.xlu0 %11619
        %11621 = vset.pattern.permute.xlu0 0
        %11622 = vperm.xlu0 %11621, %v10726
        %v11623 = vpop.permute.xlu0 %11622
        %11624 = vset.pattern.permute.xlu0 0
        %11625 = vperm.xlu0 %11624, %v10729
        %v11626 = vpop.permute.xlu0 %11625
        %11627 = vset.pattern.permute.xlu0 0
        %11628 = vperm.xlu0 %11627, %v10732
        %v11629 = vpop.permute.xlu0 %11628
        %11630 = vset.pattern.permute.xlu0 0
        %11631 = vperm.xlu0 %11630, %v10735
        %v11632 = vpop.permute.xlu0 %11631
        %11633 = vset.pattern.permute.xlu0 0
        %11634 = vperm.xlu0 %11633, %v10738
        %v11635 = vpop.permute.xlu0 %11634
        %11636 = vset.pattern.permute.xlu0 0
        %11637 = vperm.xlu0 %11636, %v10741
        %v11638 = vpop.permute.xlu0 %11637
        %11639 = vset.pattern.permute.xlu0 0
        %11640 = vperm.xlu0 %11639, %v10744
        %v11641 = vpop.permute.xlu0 %11640
        %11642 = vset.pattern.permute.xlu0 0
        %11643 = vperm.xlu0 %11642, %v10747
        %v11644 = vpop.permute.xlu0 %11643
        %11645 = vset.pattern.permute.xlu0 0
        %11646 = vperm.xlu0 %11645, %v10750
        %v11647 = vpop.permute.xlu0 %11646
        %11648 = vset.pattern.permute.xlu0 0
        %11649 = vperm.xlu0 %11648, %v10753
        %v11650 = vpop.permute.xlu0 %11649
        %11651 = vset.pattern.permute.xlu0 0
        %11652 = vperm.xlu0 %11651, %v10756
        %v11653 = vpop.permute.xlu0 %11652
        %11654 = vset.pattern.permute.xlu0 0
        %11655 = vperm.xlu0 %11654, %v10759
        %v11656 = vpop.permute.xlu0 %11655
        %11657 = vset.pattern.permute.xlu0 0
        %11658 = vperm.xlu0 %11657, %v10762
        %v11659 = vpop.permute.xlu0 %11658
        %11660 = vset.pattern.permute.xlu0 0
        %11661 = vperm.xlu0 %11660, %v10765
        %v11662 = vpop.permute.xlu0 %11661
        %11663 = vset.pattern.permute.xlu0 0
        %11664 = vperm.xlu0 %11663, %v10768
        %v11665 = vpop.permute.xlu0 %11664
        %11666 = vset.pattern.permute.xlu0 0
        %11667 = vperm.xlu0 %11666, %v10771
        %v11668 = vpop.permute.xlu0 %11667
        %11669 = vset.pattern.permute.xlu0 0
        %11670 = vperm.xlu0 %11669, %v10774
        %v11671 = vpop.permute.xlu0 %11670
        %11672 = vset.pattern.permute.xlu0 0
        %11673 = vperm.xlu0 %11672, %v10777
        %v11674 = vpop.permute.xlu0 %11673
        %11675 = vset.pattern.permute.xlu0 0
        %11676 = vperm.xlu0 %11675, %v10780
        %v11677 = vpop.permute.xlu0 %11676
        %11678 = vset.pattern.permute.xlu0 0
        %11679 = vperm.xlu0 %11678, %v10783
        %v11680 = vpop.permute.xlu0 %11679
        %11681 = vset.pattern.permute.xlu0 0
        %11682 = vperm.xlu0 %11681, %v10786
        %v11683 = vpop.permute.xlu0 %11682
        %11684 = vset.pattern.permute.xlu0 0
        %11685 = vperm.xlu0 %11684, %v10789
        %v11686 = vpop.permute.xlu0 %11685
        %11687 = vset.pattern.permute.xlu0 0
        %11688 = vperm.xlu0 %11687, %v10792
        %v11689 = vpop.permute.xlu0 %11688
        %11690 = vset.pattern.permute.xlu0 0
        %11691 = vperm.xlu0 %11690, %v10795
        %v11692 = vpop.permute.xlu0 %11691
        %11693 = vset.pattern.permute.xlu0 0
        %11694 = vperm.xlu0 %11693, %v10798
        %v11695 = vpop.permute.xlu0 %11694
        %v11696 = vlaneseq
        %v11697 = vand.u32 %v11696, 127
        %v11698 = vperm.slane %v11314, %v11697
        %v11699 = vadd.s32 %v11697, 4294967288
        %v11700 = vperm.slane %v11317, %v11699
        %vm11701 = vcmask 130112
        %v11702 = vsel %vm11701, %v11700, %v11698
        %v11703 = vadd.s32 %v11697, 4294967280
        %v11704 = vperm.slane %v11320, %v11703
        %vm11705 = vcmask 195712
        %v11706 = vsel %vm11705, %v11704, %v11702
        %v11707 = vadd.s32 %v11697, 4294967272
        %v11708 = vperm.slane %v11323, %v11707
        %vm11709 = vcmask 261312
        %v11710 = vsel %vm11709, %v11708, %v11706
        %v11711 = vadd.s32 %v11697, 4294967264
        %v11712 = vperm.slane %v11326, %v11711
        %vm11713 = vcmask 326912
        %v11714 = vsel %vm11713, %v11712, %v11710
        %v11715 = vadd.s32 %v11697, 4294967256
        %v11716 = vperm.slane %v11329, %v11715
        %vm11717 = vcmask 392512
        %v11718 = vsel %vm11717, %v11716, %v11714
        %v11719 = vadd.s32 %v11697, 4294967248
        %v11720 = vperm.slane %v11332, %v11719
        %vm11721 = vcmask 458112
        %v11722 = vsel %vm11721, %v11720, %v11718
        %v11723 = vadd.s32 %v11697, 4294967240
        %v11724 = vperm.slane %v11335, %v11723
        %vm11725 = vcmask 523712
        %v11726 = vsel %vm11725, %v11724, %v11722
        %v11727 = vadd.s32 %v11697, 4294967232
        %v11728 = vperm.slane %v11338, %v11727
        %vm11729 = vcmask 589312
        %v11730 = vsel %vm11729, %v11728, %v11726
        %v11731 = vadd.s32 %v11697, 4294967224
        %v11732 = vperm.slane %v11341, %v11731
        %vm11733 = vcmask 654912
        %v11734 = vsel %vm11733, %v11732, %v11730
        %v11735 = vadd.s32 %v11697, 4294967216
        %v11736 = vperm.slane %v11344, %v11735
        %vm11737 = vcmask 720512
        %v11738 = vsel %vm11737, %v11736, %v11734
        %v11739 = vadd.s32 %v11697, 4294967208
        %v11740 = vperm.slane %v11347, %v11739
        %vm11741 = vcmask 786112
        %v11742 = vsel %vm11741, %v11740, %v11738
        %v11743 = vadd.s32 %v11697, 4294967200
        %v11744 = vperm.slane %v11350, %v11743
        %vm11745 = vcmask 851712
        %v11746 = vsel %vm11745, %v11744, %v11742
        %v11747 = vadd.s32 %v11697, 4294967192
        %v11748 = vperm.slane %v11353, %v11747
        %vm11749 = vcmask 917312
        %v11750 = vsel %vm11749, %v11748, %v11746
        %v11751 = vadd.s32 %v11697, 4294967184
        %v11752 = vperm.slane %v11356, %v11751
        %vm11753 = vcmask 982912
        %v11754 = vsel %vm11753, %v11752, %v11750
        %v11755 = vadd.s32 %v11697, 4294967176
        %v11756 = vperm.slane %v11359, %v11755
        %vm11757 = vcmask 1048512
        %v11758 = vsel %vm11757, %v11756, %v11754
        %v11759 = vperm.slane %v11362, %v11697
        %v11760 = vperm.slane %v11365, %v11699
        %v11761 = vsel %vm11701, %v11760, %v11759
        %v11762 = vperm.slane %v11368, %v11703
        %v11763 = vsel %vm11705, %v11762, %v11761
        %v11764 = vperm.slane %v11371, %v11707
        %v11765 = vsel %vm11709, %v11764, %v11763
        %v11766 = vperm.slane %v11374, %v11711
        %v11767 = vsel %vm11713, %v11766, %v11765
        %v11768 = vperm.slane %v11377, %v11715
        %v11769 = vsel %vm11717, %v11768, %v11767
        %v11770 = vperm.slane %v11380, %v11719
        %v11771 = vsel %vm11721, %v11770, %v11769
        %v11772 = vperm.slane %v11383, %v11723
        %v11773 = vsel %vm11725, %v11772, %v11771
        %v11774 = vperm.slane %v11386, %v11727
        %v11775 = vsel %vm11729, %v11774, %v11773
        %v11776 = vperm.slane %v11389, %v11731
        %v11777 = vsel %vm11733, %v11776, %v11775
        %v11778 = vperm.slane %v11392, %v11735
        %v11779 = vsel %vm11737, %v11778, %v11777
        %v11780 = vperm.slane %v11395, %v11739
        %v11781 = vsel %vm11741, %v11780, %v11779
        %v11782 = vperm.slane %v11398, %v11743
        %v11783 = vsel %vm11745, %v11782, %v11781
        %v11784 = vperm.slane %v11401, %v11747
        %v11785 = vsel %vm11749, %v11784, %v11783
        %v11786 = vperm.slane %v11404, %v11751
        %v11787 = vsel %vm11753, %v11786, %v11785
        %v11788 = vperm.slane %v11407, %v11755
        %v11789 = vsel %vm11757, %v11788, %v11787
        %v11790 = vperm.slane %v11410, %v11697
        %v11791 = vperm.slane %v11413, %v11699
        %v11792 = vsel %vm11701, %v11791, %v11790
        %v11793 = vperm.slane %v11416, %v11703
        %v11794 = vsel %vm11705, %v11793, %v11792
        %v11795 = vperm.slane %v11419, %v11707
        %v11796 = vsel %vm11709, %v11795, %v11794
        %v11797 = vperm.slane %v11422, %v11711
        %v11798 = vsel %vm11713, %v11797, %v11796
        %v11799 = vperm.slane %v11425, %v11715
        %v11800 = vsel %vm11717, %v11799, %v11798
        %v11801 = vperm.slane %v11428, %v11719
        %v11802 = vsel %vm11721, %v11801, %v11800
        %v11803 = vperm.slane %v11431, %v11723
        %v11804 = vsel %vm11725, %v11803, %v11802
        %v11805 = vperm.slane %v11434, %v11727
        %v11806 = vsel %vm11729, %v11805, %v11804
        %v11807 = vperm.slane %v11437, %v11731
        %v11808 = vsel %vm11733, %v11807, %v11806
        %v11809 = vperm.slane %v11440, %v11735
        %v11810 = vsel %vm11737, %v11809, %v11808
        %v11811 = vperm.slane %v11443, %v11739
        %v11812 = vsel %vm11741, %v11811, %v11810
        %v11813 = vperm.slane %v11446, %v11743
        %v11814 = vsel %vm11745, %v11813, %v11812
        %v11815 = vperm.slane %v11449, %v11747
        %v11816 = vsel %vm11749, %v11815, %v11814
        %v11817 = vperm.slane %v11452, %v11751
        %v11818 = vsel %vm11753, %v11817, %v11816
        %v11819 = vperm.slane %v11455, %v11755
        %v11820 = vsel %vm11757, %v11819, %v11818
        %v11821 = vperm.slane %v11458, %v11697
        %v11822 = vperm.slane %v11461, %v11699
        %v11823 = vsel %vm11701, %v11822, %v11821
        %v11824 = vperm.slane %v11464, %v11703
        %v11825 = vsel %vm11705, %v11824, %v11823
        %v11826 = vperm.slane %v11467, %v11707
        %v11827 = vsel %vm11709, %v11826, %v11825
        %v11828 = vperm.slane %v11470, %v11711
        %v11829 = vsel %vm11713, %v11828, %v11827
        %v11830 = vperm.slane %v11473, %v11715
        %v11831 = vsel %vm11717, %v11830, %v11829
        %v11832 = vperm.slane %v11476, %v11719
        %v11833 = vsel %vm11721, %v11832, %v11831
        %v11834 = vperm.slane %v11479, %v11723
        %v11835 = vsel %vm11725, %v11834, %v11833
        %v11836 = vperm.slane %v11482, %v11727
        %v11837 = vsel %vm11729, %v11836, %v11835
        %v11838 = vperm.slane %v11485, %v11731
        %v11839 = vsel %vm11733, %v11838, %v11837
        %v11840 = vperm.slane %v11488, %v11735
        %v11841 = vsel %vm11737, %v11840, %v11839
        %v11842 = vperm.slane %v11491, %v11739
        %v11843 = vsel %vm11741, %v11842, %v11841
        %v11844 = vperm.slane %v11494, %v11743
        %v11845 = vsel %vm11745, %v11844, %v11843
        %v11846 = vperm.slane %v11497, %v11747
        %v11847 = vsel %vm11749, %v11846, %v11845
        %v11848 = vperm.slane %v11500, %v11751
        %v11849 = vsel %vm11753, %v11848, %v11847
        %v11850 = vperm.slane %v11503, %v11755
        %v11851 = vsel %vm11757, %v11850, %v11849
        %v11852 = vperm.slane %v11506, %v11697
        %v11853 = vperm.slane %v11509, %v11699
        %v11854 = vsel %vm11701, %v11853, %v11852
        %v11855 = vperm.slane %v11512, %v11703
        %v11856 = vsel %vm11705, %v11855, %v11854
        %v11857 = vperm.slane %v11515, %v11707
        %v11858 = vsel %vm11709, %v11857, %v11856
        %v11859 = vperm.slane %v11518, %v11711
        %v11860 = vsel %vm11713, %v11859, %v11858
        %v11861 = vperm.slane %v11521, %v11715
        %v11862 = vsel %vm11717, %v11861, %v11860
        %v11863 = vperm.slane %v11524, %v11719
        %v11864 = vsel %vm11721, %v11863, %v11862
        %v11865 = vperm.slane %v11527, %v11723
        %v11866 = vsel %vm11725, %v11865, %v11864
        %v11867 = vperm.slane %v11530, %v11727
        %v11868 = vsel %vm11729, %v11867, %v11866
        %v11869 = vperm.slane %v11533, %v11731
        %v11870 = vsel %vm11733, %v11869, %v11868
        %v11871 = vperm.slane %v11536, %v11735
        %v11872 = vsel %vm11737, %v11871, %v11870
        %v11873 = vperm.slane %v11539, %v11739
        %v11874 = vsel %vm11741, %v11873, %v11872
        %v11875 = vperm.slane %v11542, %v11743
        %v11876 = vsel %vm11745, %v11875, %v11874
        %v11877 = vperm.slane %v11545, %v11747
        %v11878 = vsel %vm11749, %v11877, %v11876
        %v11879 = vperm.slane %v11548, %v11751
        %v11880 = vsel %vm11753, %v11879, %v11878
        %v11881 = vperm.slane %v11551, %v11755
        %v11882 = vsel %vm11757, %v11881, %v11880
        %v11883 = vperm.slane %v11554, %v11697
        %v11884 = vperm.slane %v11557, %v11699
        %v11885 = vsel %vm11701, %v11884, %v11883
        %v11886 = vperm.slane %v11560, %v11703
        %v11887 = vsel %vm11705, %v11886, %v11885
        %v11888 = vperm.slane %v11563, %v11707
        %v11889 = vsel %vm11709, %v11888, %v11887
        %v11890 = vperm.slane %v11566, %v11711
        %v11891 = vsel %vm11713, %v11890, %v11889
        %v11892 = vperm.slane %v11569, %v11715
        %v11893 = vsel %vm11717, %v11892, %v11891
        %v11894 = vperm.slane %v11572, %v11719
        %v11895 = vsel %vm11721, %v11894, %v11893
        %v11896 = vperm.slane %v11575, %v11723
        %v11897 = vsel %vm11725, %v11896, %v11895
        %v11898 = vperm.slane %v11578, %v11727
        %v11899 = vsel %vm11729, %v11898, %v11897
        %v11900 = vperm.slane %v11581, %v11731
        %v11901 = vsel %vm11733, %v11900, %v11899
        %v11902 = vperm.slane %v11584, %v11735
        %v11903 = vsel %vm11737, %v11902, %v11901
        %v11904 = vperm.slane %v11587, %v11739
        %v11905 = vsel %vm11741, %v11904, %v11903
        %v11906 = vperm.slane %v11590, %v11743
        %v11907 = vsel %vm11745, %v11906, %v11905
        %v11908 = vperm.slane %v11593, %v11747
        %v11909 = vsel %vm11749, %v11908, %v11907
        %v11910 = vperm.slane %v11596, %v11751
        %v11911 = vsel %vm11753, %v11910, %v11909
        %v11912 = vperm.slane %v11599, %v11755
        %v11913 = vsel %vm11757, %v11912, %v11911
        %v11914 = vperm.slane %v11602, %v11697
        %v11915 = vperm.slane %v11605, %v11699
        %v11916 = vsel %vm11701, %v11915, %v11914
        %v11917 = vperm.slane %v11608, %v11703
        %v11918 = vsel %vm11705, %v11917, %v11916
        %v11919 = vperm.slane %v11611, %v11707
        %v11920 = vsel %vm11709, %v11919, %v11918
        %v11921 = vperm.slane %v11614, %v11711
        %v11922 = vsel %vm11713, %v11921, %v11920
        %v11923 = vperm.slane %v11617, %v11715
        %v11924 = vsel %vm11717, %v11923, %v11922
        %v11925 = vperm.slane %v11620, %v11719
        %v11926 = vsel %vm11721, %v11925, %v11924
        %v11927 = vperm.slane %v11623, %v11723
        %v11928 = vsel %vm11725, %v11927, %v11926
        %v11929 = vperm.slane %v11626, %v11727
        %v11930 = vsel %vm11729, %v11929, %v11928
        %v11931 = vperm.slane %v11629, %v11731
        %v11932 = vsel %vm11733, %v11931, %v11930
        %v11933 = vperm.slane %v11632, %v11735
        %v11934 = vsel %vm11737, %v11933, %v11932
        %v11935 = vperm.slane %v11635, %v11739
        %v11936 = vsel %vm11741, %v11935, %v11934
        %v11937 = vperm.slane %v11638, %v11743
        %v11938 = vsel %vm11745, %v11937, %v11936
        %v11939 = vperm.slane %v11641, %v11747
        %v11940 = vsel %vm11749, %v11939, %v11938
        %v11941 = vperm.slane %v11644, %v11751
        %v11942 = vsel %vm11753, %v11941, %v11940
        %v11943 = vperm.slane %v11647, %v11755
        %v11944 = vsel %vm11757, %v11943, %v11942
        %v11945 = vperm.slane %v11650, %v11697
        %v11946 = vperm.slane %v11653, %v11699
        %v11947 = vsel %vm11701, %v11946, %v11945
        %v11948 = vperm.slane %v11656, %v11703
        %v11949 = vsel %vm11705, %v11948, %v11947
        %v11950 = vperm.slane %v11659, %v11707
        %v11951 = vsel %vm11709, %v11950, %v11949
        %v11952 = vperm.slane %v11662, %v11711
        %v11953 = vsel %vm11713, %v11952, %v11951
        %v11954 = vperm.slane %v11665, %v11715
        %v11955 = vsel %vm11717, %v11954, %v11953
        %v11956 = vperm.slane %v11668, %v11719
        %v11957 = vsel %vm11721, %v11956, %v11955
        %v11958 = vperm.slane %v11671, %v11723
        %v11959 = vsel %vm11725, %v11958, %v11957
        %v11960 = vperm.slane %v11674, %v11727
        %v11961 = vsel %vm11729, %v11960, %v11959
        %v11962 = vperm.slane %v11677, %v11731
        %v11963 = vsel %vm11733, %v11962, %v11961
        %v11964 = vperm.slane %v11680, %v11735
        %v11965 = vsel %vm11737, %v11964, %v11963
        %v11966 = vperm.slane %v11683, %v11739
        %v11967 = vsel %vm11741, %v11966, %v11965
        %v11968 = vperm.slane %v11686, %v11743
        %v11969 = vsel %vm11745, %v11968, %v11967
        %v11970 = vperm.slane %v11689, %v11747
        %v11971 = vsel %vm11749, %v11970, %v11969
        %v11972 = vperm.slane %v11692, %v11751
        %v11973 = vsel %vm11753, %v11972, %v11971
        %v11974 = vperm.slane %v11695, %v11755
        %v11975 = vsel %vm11757, %v11974, %v11973
        %vm11976 = vcmask 1041409
        %v11977 = vsel %vm11976, %v11789, %v11758
        %vm11978 = vcmask 1042434
        %v11979 = vsel %vm11978, %v11820, %v11977
        %vm11980 = vcmask 1043459
        %v11981 = vsel %vm11980, %v11851, %v11979
        %vm11982 = vcmask 1044484
        %v11983 = vsel %vm11982, %v11882, %v11981
        %vm11984 = vcmask 1045509
        %v11985 = vsel %vm11984, %v11913, %v11983
        %vm11986 = vcmask 1046534
        %v11987 = vsel %vm11986, %v11944, %v11985
        %vm11988 = vcmask 1047559
        %v11989 = vsel %vm11988, %v11975, %v11987
        %11991 = vst [vmem:[%s501] sm:$0xff] %v11989
        %12120 = vset.pattern.permute.xlu0 0
        %12121 = vperm.xlu0 %12120, %v10801
        %v12122 = vpop.permute.xlu0 %12121
        %12123 = vset.pattern.permute.xlu0 0
        %12124 = vperm.xlu0 %12123, %v10804
        %v12125 = vpop.permute.xlu0 %12124
        %12126 = vset.pattern.permute.xlu0 0
        %12127 = vperm.xlu0 %12126, %v10807
        %v12128 = vpop.permute.xlu0 %12127
        %12129 = vset.pattern.permute.xlu0 0
        %12130 = vperm.xlu0 %12129, %v10810
        %v12131 = vpop.permute.xlu0 %12130
        %12132 = vset.pattern.permute.xlu0 0
        %12133 = vperm.xlu0 %12132, %v10813
        %v12134 = vpop.permute.xlu0 %12133
        %12135 = vset.pattern.permute.xlu0 0
        %12136 = vperm.xlu0 %12135, %v10816
        %v12137 = vpop.permute.xlu0 %12136
        %12138 = vset.pattern.permute.xlu0 0
        %12139 = vperm.xlu0 %12138, %v10819
        %v12140 = vpop.permute.xlu0 %12139
        %12141 = vset.pattern.permute.xlu0 0
        %12142 = vperm.xlu0 %12141, %v10822
        %v12143 = vpop.permute.xlu0 %12142
        %12144 = vset.pattern.permute.xlu0 0
        %12145 = vperm.xlu0 %12144, %v10825
        %v12146 = vpop.permute.xlu0 %12145
        %12147 = vset.pattern.permute.xlu0 0
        %12148 = vperm.xlu0 %12147, %v10828
        %v12149 = vpop.permute.xlu0 %12148
        %12150 = vset.pattern.permute.xlu0 0
        %12151 = vperm.xlu0 %12150, %v10831
        %v12152 = vpop.permute.xlu0 %12151
        %12153 = vset.pattern.permute.xlu0 0
        %12154 = vperm.xlu0 %12153, %v10834
        %v12155 = vpop.permute.xlu0 %12154
        %12156 = vset.pattern.permute.xlu0 0
        %12157 = vperm.xlu0 %12156, %v10837
        %v12158 = vpop.permute.xlu0 %12157
        %12159 = vset.pattern.permute.xlu0 0
        %12160 = vperm.xlu0 %12159, %v10840
        %v12161 = vpop.permute.xlu0 %12160
        %12162 = vset.pattern.permute.xlu0 0
        %12163 = vperm.xlu0 %12162, %v10843
        %v12164 = vpop.permute.xlu0 %12163
        %12165 = vset.pattern.permute.xlu0 0
        %12166 = vperm.xlu0 %12165, %v10846
        %v12167 = vpop.permute.xlu0 %12166
        %12168 = vset.pattern.permute.xlu0 0
        %12169 = vperm.xlu0 %12168, %v10849
        %v12170 = vpop.permute.xlu0 %12169
        %12171 = vset.pattern.permute.xlu0 0
        %12172 = vperm.xlu0 %12171, %v10852
        %v12173 = vpop.permute.xlu0 %12172
        %12174 = vset.pattern.permute.xlu0 0
        %12175 = vperm.xlu0 %12174, %v10855
        %v12176 = vpop.permute.xlu0 %12175
        %12177 = vset.pattern.permute.xlu0 0
        %12178 = vperm.xlu0 %12177, %v10858
        %v12179 = vpop.permute.xlu0 %12178
        %12180 = vset.pattern.permute.xlu0 0
        %12181 = vperm.xlu0 %12180, %v10861
        %v12182 = vpop.permute.xlu0 %12181
        %12183 = vset.pattern.permute.xlu0 0
        %12184 = vperm.xlu0 %12183, %v10864
        %v12185 = vpop.permute.xlu0 %12184
        %12186 = vset.pattern.permute.xlu0 0
        %12187 = vperm.xlu0 %12186, %v10867
        %v12188 = vpop.permute.xlu0 %12187
        %12189 = vset.pattern.permute.xlu0 0
        %12190 = vperm.xlu0 %12189, %v10870
        %v12191 = vpop.permute.xlu0 %12190
        %12192 = vset.pattern.permute.xlu0 0
        %12193 = vperm.xlu0 %12192, %v10873
        %v12194 = vpop.permute.xlu0 %12193
        %12195 = vset.pattern.permute.xlu0 0
        %12196 = vperm.xlu0 %12195, %v10876
        %v12197 = vpop.permute.xlu0 %12196
        %12198 = vset.pattern.permute.xlu0 0
        %12199 = vperm.xlu0 %12198, %v10879
        %v12200 = vpop.permute.xlu0 %12199
        %12201 = vset.pattern.permute.xlu0 0
        %12202 = vperm.xlu0 %12201, %v10882
        %v12203 = vpop.permute.xlu0 %12202
        %12204 = vset.pattern.permute.xlu0 0
        %12205 = vperm.xlu0 %12204, %v10885
        %v12206 = vpop.permute.xlu0 %12205
        %12207 = vset.pattern.permute.xlu0 0
        %12208 = vperm.xlu0 %12207, %v10888
        %v12209 = vpop.permute.xlu0 %12208
        %12210 = vset.pattern.permute.xlu0 0
        %12211 = vperm.xlu0 %12210, %v10891
        %v12212 = vpop.permute.xlu0 %12211
        %12213 = vset.pattern.permute.xlu0 0
        %12214 = vperm.xlu0 %12213, %v10894
        %v12215 = vpop.permute.xlu0 %12214
        %12216 = vset.pattern.permute.xlu0 0
        %12217 = vperm.xlu0 %12216, %v10897
        %v12218 = vpop.permute.xlu0 %12217
        %12219 = vset.pattern.permute.xlu0 0
        %12220 = vperm.xlu0 %12219, %v10900
        %v12221 = vpop.permute.xlu0 %12220
        %12222 = vset.pattern.permute.xlu0 0
        %12223 = vperm.xlu0 %12222, %v10903
        %v12224 = vpop.permute.xlu0 %12223
        %12225 = vset.pattern.permute.xlu0 0
        %12226 = vperm.xlu0 %12225, %v10906
        %v12227 = vpop.permute.xlu0 %12226
        %12228 = vset.pattern.permute.xlu0 0
        %12229 = vperm.xlu0 %12228, %v10909
        %v12230 = vpop.permute.xlu0 %12229
        %12231 = vset.pattern.permute.xlu0 0
        %12232 = vperm.xlu0 %12231, %v10912
        %v12233 = vpop.permute.xlu0 %12232
        %12234 = vset.pattern.permute.xlu0 0
        %12235 = vperm.xlu0 %12234, %v10915
        %v12236 = vpop.permute.xlu0 %12235
        %12237 = vset.pattern.permute.xlu0 0
        %12238 = vperm.xlu0 %12237, %v10918
        %v12239 = vpop.permute.xlu0 %12238
        %12240 = vset.pattern.permute.xlu0 0
        %12241 = vperm.xlu0 %12240, %v10921
        %v12242 = vpop.permute.xlu0 %12241
        %12243 = vset.pattern.permute.xlu0 0
        %12244 = vperm.xlu0 %12243, %v10924
        %v12245 = vpop.permute.xlu0 %12244
        %12246 = vset.pattern.permute.xlu0 0
        %12247 = vperm.xlu0 %12246, %v10927
        %v12248 = vpop.permute.xlu0 %12247
        %12249 = vset.pattern.permute.xlu0 0
        %12250 = vperm.xlu0 %12249, %v10930
        %v12251 = vpop.permute.xlu0 %12250
        %12252 = vset.pattern.permute.xlu0 0
        %12253 = vperm.xlu0 %12252, %v10933
        %v12254 = vpop.permute.xlu0 %12253
        %12255 = vset.pattern.permute.xlu0 0
        %12256 = vperm.xlu0 %12255, %v10936
        %v12257 = vpop.permute.xlu0 %12256
        %12258 = vset.pattern.permute.xlu0 0
        %12259 = vperm.xlu0 %12258, %v10939
        %v12260 = vpop.permute.xlu0 %12259
        %12261 = vset.pattern.permute.xlu0 0
        %12262 = vperm.xlu0 %12261, %v10942
        %v12263 = vpop.permute.xlu0 %12262
        %12264 = vset.pattern.permute.xlu0 0
        %12265 = vperm.xlu0 %12264, %v10945
        %v12266 = vpop.permute.xlu0 %12265
        %12267 = vset.pattern.permute.xlu0 0
        %12268 = vperm.xlu0 %12267, %v10948
        %v12269 = vpop.permute.xlu0 %12268
        %12270 = vset.pattern.permute.xlu0 0
        %12271 = vperm.xlu0 %12270, %v10951
        %v12272 = vpop.permute.xlu0 %12271
        %12273 = vset.pattern.permute.xlu0 0
        %12274 = vperm.xlu0 %12273, %v10954
        %v12275 = vpop.permute.xlu0 %12274
        %12276 = vset.pattern.permute.xlu0 0
        %12277 = vperm.xlu0 %12276, %v10957
        %v12278 = vpop.permute.xlu0 %12277
        %12279 = vset.pattern.permute.xlu0 0
        %12280 = vperm.xlu0 %12279, %v10960
        %v12281 = vpop.permute.xlu0 %12280
        %12282 = vset.pattern.permute.xlu0 0
        %12283 = vperm.xlu0 %12282, %v10963
        %v12284 = vpop.permute.xlu0 %12283
        %12285 = vset.pattern.permute.xlu0 0
        %12286 = vperm.xlu0 %12285, %v10966
        %v12287 = vpop.permute.xlu0 %12286
        %12288 = vset.pattern.permute.xlu0 0
        %12289 = vperm.xlu0 %12288, %v10969
        %v12290 = vpop.permute.xlu0 %12289
        %12291 = vset.pattern.permute.xlu0 0
        %12292 = vperm.xlu0 %12291, %v10972
        %v12293 = vpop.permute.xlu0 %12292
        %12294 = vset.pattern.permute.xlu0 0
        %12295 = vperm.xlu0 %12294, %v10975
        %v12296 = vpop.permute.xlu0 %12295
        %12297 = vset.pattern.permute.xlu0 0
        %12298 = vperm.xlu0 %12297, %v10978
        %v12299 = vpop.permute.xlu0 %12298
        %12300 = vset.pattern.permute.xlu0 0
        %12301 = vperm.xlu0 %12300, %v10981
        %v12302 = vpop.permute.xlu0 %12301
        %12303 = vset.pattern.permute.xlu0 0
        %12304 = vperm.xlu0 %12303, %v10984
        %v12305 = vpop.permute.xlu0 %12304
        %12306 = vset.pattern.permute.xlu0 0
        %12307 = vperm.xlu0 %12306, %v10987
        %v12308 = vpop.permute.xlu0 %12307
        %12309 = vset.pattern.permute.xlu0 0
        %12310 = vperm.xlu0 %12309, %v10990
        %v12311 = vpop.permute.xlu0 %12310
        %12312 = vset.pattern.permute.xlu0 0
        %12313 = vperm.xlu0 %12312, %v10993
        %v12314 = vpop.permute.xlu0 %12313
        %12315 = vset.pattern.permute.xlu0 0
        %12316 = vperm.xlu0 %12315, %v10996
        %v12317 = vpop.permute.xlu0 %12316
        %12318 = vset.pattern.permute.xlu0 0
        %12319 = vperm.xlu0 %12318, %v10999
        %v12320 = vpop.permute.xlu0 %12319
        %12321 = vset.pattern.permute.xlu0 0
        %12322 = vperm.xlu0 %12321, %v11002
        %v12323 = vpop.permute.xlu0 %12322
        %12324 = vset.pattern.permute.xlu0 0
        %12325 = vperm.xlu0 %12324, %v11005
        %v12326 = vpop.permute.xlu0 %12325
        %12327 = vset.pattern.permute.xlu0 0
        %12328 = vperm.xlu0 %12327, %v11008
        %v12329 = vpop.permute.xlu0 %12328
        %12330 = vset.pattern.permute.xlu0 0
        %12331 = vperm.xlu0 %12330, %v11011
        %v12332 = vpop.permute.xlu0 %12331
        %12333 = vset.pattern.permute.xlu0 0
        %12334 = vperm.xlu0 %12333, %v11014
        %v12335 = vpop.permute.xlu0 %12334
        %12336 = vset.pattern.permute.xlu0 0
        %12337 = vperm.xlu0 %12336, %v11017
        %v12338 = vpop.permute.xlu0 %12337
        %12339 = vset.pattern.permute.xlu0 0
        %12340 = vperm.xlu0 %12339, %v11020
        %v12341 = vpop.permute.xlu0 %12340
        %12342 = vset.pattern.permute.xlu0 0
        %12343 = vperm.xlu0 %12342, %v11023
        %v12344 = vpop.permute.xlu0 %12343
        %12345 = vset.pattern.permute.xlu0 0
        %12346 = vperm.xlu0 %12345, %v11026
        %v12347 = vpop.permute.xlu0 %12346
        %12348 = vset.pattern.permute.xlu0 0
        %12349 = vperm.xlu0 %12348, %v11029
        %v12350 = vpop.permute.xlu0 %12349
        %12351 = vset.pattern.permute.xlu0 0
        %12352 = vperm.xlu0 %12351, %v11032
        %v12353 = vpop.permute.xlu0 %12352
        %12354 = vset.pattern.permute.xlu0 0
        %12355 = vperm.xlu0 %12354, %v11035
        %v12356 = vpop.permute.xlu0 %12355
        %12357 = vset.pattern.permute.xlu0 0
        %12358 = vperm.xlu0 %12357, %v11038
        %v12359 = vpop.permute.xlu0 %12358
        %12360 = vset.pattern.permute.xlu0 0
        %12361 = vperm.xlu0 %12360, %v11041
        %v12362 = vpop.permute.xlu0 %12361
        %12363 = vset.pattern.permute.xlu0 0
        %12364 = vperm.xlu0 %12363, %v11044
        %v12365 = vpop.permute.xlu0 %12364
        %12366 = vset.pattern.permute.xlu0 0
        %12367 = vperm.xlu0 %12366, %v11047
        %v12368 = vpop.permute.xlu0 %12367
        %12369 = vset.pattern.permute.xlu0 0
        %12370 = vperm.xlu0 %12369, %v11050
        %v12371 = vpop.permute.xlu0 %12370
        %12372 = vset.pattern.permute.xlu0 0
        %12373 = vperm.xlu0 %12372, %v11053
        %v12374 = vpop.permute.xlu0 %12373
        %12375 = vset.pattern.permute.xlu0 0
        %12376 = vperm.xlu0 %12375, %v11056
        %v12377 = vpop.permute.xlu0 %12376
        %12378 = vset.pattern.permute.xlu0 0
        %12379 = vperm.xlu0 %12378, %v11059
        %v12380 = vpop.permute.xlu0 %12379
        %12381 = vset.pattern.permute.xlu0 0
        %12382 = vperm.xlu0 %12381, %v11062
        %v12383 = vpop.permute.xlu0 %12382
        %12384 = vset.pattern.permute.xlu0 0
        %12385 = vperm.xlu0 %12384, %v11065
        %v12386 = vpop.permute.xlu0 %12385
        %12387 = vset.pattern.permute.xlu0 0
        %12388 = vperm.xlu0 %12387, %v11068
        %v12389 = vpop.permute.xlu0 %12388
        %12390 = vset.pattern.permute.xlu0 0
        %12391 = vperm.xlu0 %12390, %v11071
        %v12392 = vpop.permute.xlu0 %12391
        %12393 = vset.pattern.permute.xlu0 0
        %12394 = vperm.xlu0 %12393, %v11074
        %v12395 = vpop.permute.xlu0 %12394
        %12396 = vset.pattern.permute.xlu0 0
        %12397 = vperm.xlu0 %12396, %v11077
        %v12398 = vpop.permute.xlu0 %12397
        %12399 = vset.pattern.permute.xlu0 0
        %12400 = vperm.xlu0 %12399, %v11080
        %v12401 = vpop.permute.xlu0 %12400
        %12402 = vset.pattern.permute.xlu0 0
        %12403 = vperm.xlu0 %12402, %v11083
        %v12404 = vpop.permute.xlu0 %12403
        %12405 = vset.pattern.permute.xlu0 0
        %12406 = vperm.xlu0 %12405, %v11086
        %v12407 = vpop.permute.xlu0 %12406
        %12408 = vset.pattern.permute.xlu0 0
        %12409 = vperm.xlu0 %12408, %v11089
        %v12410 = vpop.permute.xlu0 %12409
        %12411 = vset.pattern.permute.xlu0 0
        %12412 = vperm.xlu0 %12411, %v11092
        %v12413 = vpop.permute.xlu0 %12412
        %12414 = vset.pattern.permute.xlu0 0
        %12415 = vperm.xlu0 %12414, %v11095
        %v12416 = vpop.permute.xlu0 %12415
        %12417 = vset.pattern.permute.xlu0 0
        %12418 = vperm.xlu0 %12417, %v11098
        %v12419 = vpop.permute.xlu0 %12418
        %12420 = vset.pattern.permute.xlu0 0
        %12421 = vperm.xlu0 %12420, %v11101
        %v12422 = vpop.permute.xlu0 %12421
        %12423 = vset.pattern.permute.xlu0 0
        %12424 = vperm.xlu0 %12423, %v11104
        %v12425 = vpop.permute.xlu0 %12424
        %12426 = vset.pattern.permute.xlu0 0
        %12427 = vperm.xlu0 %12426, %v11107
        %v12428 = vpop.permute.xlu0 %12427
        %12429 = vset.pattern.permute.xlu0 0
        %12430 = vperm.xlu0 %12429, %v11110
        %v12431 = vpop.permute.xlu0 %12430
        %12432 = vset.pattern.permute.xlu0 0
        %12433 = vperm.xlu0 %12432, %v11113
        %v12434 = vpop.permute.xlu0 %12433
        %12435 = vset.pattern.permute.xlu0 0
        %12436 = vperm.xlu0 %12435, %v11116
        %v12437 = vpop.permute.xlu0 %12436
        %12438 = vset.pattern.permute.xlu0 0
        %12439 = vperm.xlu0 %12438, %v11119
        %v12440 = vpop.permute.xlu0 %12439
        %12441 = vset.pattern.permute.xlu0 0
        %12442 = vperm.xlu0 %12441, %v11122
        %v12443 = vpop.permute.xlu0 %12442
        %12444 = vset.pattern.permute.xlu0 0
        %12445 = vperm.xlu0 %12444, %v11125
        %v12446 = vpop.permute.xlu0 %12445
        %12447 = vset.pattern.permute.xlu0 0
        %12448 = vperm.xlu0 %12447, %v11128
        %v12449 = vpop.permute.xlu0 %12448
        %12450 = vset.pattern.permute.xlu0 0
        %12451 = vperm.xlu0 %12450, %v11131
        %v12452 = vpop.permute.xlu0 %12451
        %12453 = vset.pattern.permute.xlu0 0
        %12454 = vperm.xlu0 %12453, %v11134
        %v12455 = vpop.permute.xlu0 %12454
        %12456 = vset.pattern.permute.xlu0 0
        %12457 = vperm.xlu0 %12456, %v11137
        %v12458 = vpop.permute.xlu0 %12457
        %12459 = vset.pattern.permute.xlu0 0
        %12460 = vperm.xlu0 %12459, %v11140
        %v12461 = vpop.permute.xlu0 %12460
        %12462 = vset.pattern.permute.xlu0 0
        %12463 = vperm.xlu0 %12462, %v11143
        %v12464 = vpop.permute.xlu0 %12463
        %12465 = vset.pattern.permute.xlu0 0
        %12466 = vperm.xlu0 %12465, %v11146
        %v12467 = vpop.permute.xlu0 %12466
        %12468 = vset.pattern.permute.xlu0 0
        %12469 = vperm.xlu0 %12468, %v11149
        %v12470 = vpop.permute.xlu0 %12469
        %12471 = vset.pattern.permute.xlu0 0
        %12472 = vperm.xlu0 %12471, %v11152
        %v12473 = vpop.permute.xlu0 %12472
        %12474 = vset.pattern.permute.xlu0 0
        %12475 = vperm.xlu0 %12474, %v11155
        %v12476 = vpop.permute.xlu0 %12475
        %12477 = vset.pattern.permute.xlu0 0
        %12478 = vperm.xlu0 %12477, %v11158
        %v12479 = vpop.permute.xlu0 %12478
        %12480 = vset.pattern.permute.xlu0 0
        %12481 = vperm.xlu0 %12480, %v11161
        %v12482 = vpop.permute.xlu0 %12481
        %12483 = vset.pattern.permute.xlu0 0
        %12484 = vperm.xlu0 %12483, %v11164
        %v12485 = vpop.permute.xlu0 %12484
        %12486 = vset.pattern.permute.xlu0 0
        %12487 = vperm.xlu0 %12486, %v11167
        %v12488 = vpop.permute.xlu0 %12487
        %12489 = vset.pattern.permute.xlu0 0
        %12490 = vperm.xlu0 %12489, %v11170
        %v12491 = vpop.permute.xlu0 %12490
        %12492 = vset.pattern.permute.xlu0 0
        %12493 = vperm.xlu0 %12492, %v11173
        %v12494 = vpop.permute.xlu0 %12493
        %12495 = vset.pattern.permute.xlu0 0
        %12496 = vperm.xlu0 %12495, %v11176
        %v12497 = vpop.permute.xlu0 %12496
        %12498 = vset.pattern.permute.xlu0 0
        %12499 = vperm.xlu0 %12498, %v11179
        %v12500 = vpop.permute.xlu0 %12499
        %12501 = vset.pattern.permute.xlu0 0
        %12502 = vperm.xlu0 %12501, %v11182
        %v12503 = vpop.permute.xlu0 %12502
        %v12504 = vperm.slane %v12122, %v11697
        %v12505 = vperm.slane %v12125, %v11699
        %v12506 = vsel %vm11701, %v12505, %v12504
        %v12507 = vperm.slane %v12128, %v11703
        %v12508 = vsel %vm11705, %v12507, %v12506
        %v12509 = vperm.slane %v12131, %v11707
        %v12510 = vsel %vm11709, %v12509, %v12508
        %v12511 = vperm.slane %v12134, %v11711
        %v12512 = vsel %vm11713, %v12511, %v12510
        %v12513 = vperm.slane %v12137, %v11715
        %v12514 = vsel %vm11717, %v12513, %v12512
        %v12515 = vperm.slane %v12140, %v11719
        %v12516 = vsel %vm11721, %v12515, %v12514
        %v12517 = vperm.slane %v12143, %v11723
        %v12518 = vsel %vm11725, %v12517, %v12516
        %v12519 = vperm.slane %v12146, %v11727
        %v12520 = vsel %vm11729, %v12519, %v12518
        %v12521 = vperm.slane %v12149, %v11731
        %v12522 = vsel %vm11733, %v12521, %v12520
        %v12523 = vperm.slane %v12152, %v11735
        %v12524 = vsel %vm11737, %v12523, %v12522
        %v12525 = vperm.slane %v12155, %v11739
        %v12526 = vsel %vm11741, %v12525, %v12524
        %v12527 = vperm.slane %v12158, %v11743
        %v12528 = vsel %vm11745, %v12527, %v12526
        %v12529 = vperm.slane %v12161, %v11747
        %v12530 = vsel %vm11749, %v12529, %v12528
        %v12531 = vperm.slane %v12164, %v11751
        %v12532 = vsel %vm11753, %v12531, %v12530
        %v12533 = vperm.slane %v12167, %v11755
        %v12534 = vsel %vm11757, %v12533, %v12532
        %v12535 = vperm.slane %v12170, %v11697
        %v12536 = vperm.slane %v12173, %v11699
        %v12537 = vsel %vm11701, %v12536, %v12535
        %v12538 = vperm.slane %v12176, %v11703
        %v12539 = vsel %vm11705, %v12538, %v12537
        %v12540 = vperm.slane %v12179, %v11707
        %v12541 = vsel %vm11709, %v12540, %v12539
        %v12542 = vperm.slane %v12182, %v11711
        %v12543 = vsel %vm11713, %v12542, %v12541
        %v12544 = vperm.slane %v12185, %v11715
        %v12545 = vsel %vm11717, %v12544, %v12543
        %v12546 = vperm.slane %v12188, %v11719
        %v12547 = vsel %vm11721, %v12546, %v12545
        %v12548 = vperm.slane %v12191, %v11723
        %v12549 = vsel %vm11725, %v12548, %v12547
        %v12550 = vperm.slane %v12194, %v11727
        %v12551 = vsel %vm11729, %v12550, %v12549
        %v12552 = vperm.slane %v12197, %v11731
        %v12553 = vsel %vm11733, %v12552, %v12551
        %v12554 = vperm.slane %v12200, %v11735
        %v12555 = vsel %vm11737, %v12554, %v12553
        %v12556 = vperm.slane %v12203, %v11739
        %v12557 = vsel %vm11741, %v12556, %v12555
        %v12558 = vperm.slane %v12206, %v11743
        %v12559 = vsel %vm11745, %v12558, %v12557
        %v12560 = vperm.slane %v12209, %v11747
        %v12561 = vsel %vm11749, %v12560, %v12559
        %v12562 = vperm.slane %v12212, %v11751
        %v12563 = vsel %vm11753, %v12562, %v12561
        %v12564 = vperm.slane %v12215, %v11755
        %v12565 = vsel %vm11757, %v12564, %v12563
        %v12566 = vperm.slane %v12218, %v11697
        %v12567 = vperm.slane %v12221, %v11699
        %v12568 = vsel %vm11701, %v12567, %v12566
        %v12569 = vperm.slane %v12224, %v11703
        %v12570 = vsel %vm11705, %v12569, %v12568
        %v12571 = vperm.slane %v12227, %v11707
        %v12572 = vsel %vm11709, %v12571, %v12570
        %v12573 = vperm.slane %v12230, %v11711
        %v12574 = vsel %vm11713, %v12573, %v12572
        %v12575 = vperm.slane %v12233, %v11715
        %v12576 = vsel %vm11717, %v12575, %v12574
        %v12577 = vperm.slane %v12236, %v11719
        %v12578 = vsel %vm11721, %v12577, %v12576
        %v12579 = vperm.slane %v12239, %v11723
        %v12580 = vsel %vm11725, %v12579, %v12578
        %v12581 = vperm.slane %v12242, %v11727
        %v12582 = vsel %vm11729, %v12581, %v12580
        %v12583 = vperm.slane %v12245, %v11731
        %v12584 = vsel %vm11733, %v12583, %v12582
        %v12585 = vperm.slane %v12248, %v11735
        %v12586 = vsel %vm11737, %v12585, %v12584
        %v12587 = vperm.slane %v12251, %v11739
        %v12588 = vsel %vm11741, %v12587, %v12586
        %v12589 = vperm.slane %v12254, %v11743
        %v12590 = vsel %vm11745, %v12589, %v12588
        %v12591 = vperm.slane %v12257, %v11747
        %v12592 = vsel %vm11749, %v12591, %v12590
        %v12593 = vperm.slane %v12260, %v11751
        %v12594 = vsel %vm11753, %v12593, %v12592
        %v12595 = vperm.slane %v12263, %v11755
        %v12596 = vsel %vm11757, %v12595, %v12594
        %v12597 = vperm.slane %v12266, %v11697
        %v12598 = vperm.slane %v12269, %v11699
        %v12599 = vsel %vm11701, %v12598, %v12597
        %v12600 = vperm.slane %v12272, %v11703
        %v12601 = vsel %vm11705, %v12600, %v12599
        %v12602 = vperm.slane %v12275, %v11707
        %v12603 = vsel %vm11709, %v12602, %v12601
        %v12604 = vperm.slane %v12278, %v11711
        %v12605 = vsel %vm11713, %v12604, %v12603
        %v12606 = vperm.slane %v12281, %v11715
        %v12607 = vsel %vm11717, %v12606, %v12605
        %v12608 = vperm.slane %v12284, %v11719
        %v12609 = vsel %vm11721, %v12608, %v12607
        %v12610 = vperm.slane %v12287, %v11723
        %v12611 = vsel %vm11725, %v12610, %v12609
        %v12612 = vperm.slane %v12290, %v11727
        %v12613 = vsel %vm11729, %v12612, %v12611
        %v12614 = vperm.slane %v12293, %v11731
        %v12615 = vsel %vm11733, %v12614, %v12613
        %v12616 = vperm.slane %v12296, %v11735
        %v12617 = vsel %vm11737, %v12616, %v12615
        %v12618 = vperm.slane %v12299, %v11739
        %v12619 = vsel %vm11741, %v12618, %v12617
        %v12620 = vperm.slane %v12302, %v11743
        %v12621 = vsel %vm11745, %v12620, %v12619
        %v12622 = vperm.slane %v12305, %v11747
        %v12623 = vsel %vm11749, %v12622, %v12621
        %v12624 = vperm.slane %v12308, %v11751
        %v12625 = vsel %vm11753, %v12624, %v12623
        %v12626 = vperm.slane %v12311, %v11755
        %v12627 = vsel %vm11757, %v12626, %v12625
        %v12628 = vperm.slane %v12314, %v11697
        %v12629 = vperm.slane %v12317, %v11699
        %v12630 = vsel %vm11701, %v12629, %v12628
        %v12631 = vperm.slane %v12320, %v11703
        %v12632 = vsel %vm11705, %v12631, %v12630
        %v12633 = vperm.slane %v12323, %v11707
        %v12634 = vsel %vm11709, %v12633, %v12632
        %v12635 = vperm.slane %v12326, %v11711
        %v12636 = vsel %vm11713, %v12635, %v12634
        %v12637 = vperm.slane %v12329, %v11715
        %v12638 = vsel %vm11717, %v12637, %v12636
        %v12639 = vperm.slane %v12332, %v11719
        %v12640 = vsel %vm11721, %v12639, %v12638
        %v12641 = vperm.slane %v12335, %v11723
        %v12642 = vsel %vm11725, %v12641, %v12640
        %v12643 = vperm.slane %v12338, %v11727
        %v12644 = vsel %vm11729, %v12643, %v12642
        %v12645 = vperm.slane %v12341, %v11731
        %v12646 = vsel %vm11733, %v12645, %v12644
        %v12647 = vperm.slane %v12344, %v11735
        %v12648 = vsel %vm11737, %v12647, %v12646
        %v12649 = vperm.slane %v12347, %v11739
        %v12650 = vsel %vm11741, %v12649, %v12648
        %v12651 = vperm.slane %v12350, %v11743
        %v12652 = vsel %vm11745, %v12651, %v12650
        %v12653 = vperm.slane %v12353, %v11747
        %v12654 = vsel %vm11749, %v12653, %v12652
        %v12655 = vperm.slane %v12356, %v11751
        %v12656 = vsel %vm11753, %v12655, %v12654
        %v12657 = vperm.slane %v12359, %v11755
        %v12658 = vsel %vm11757, %v12657, %v12656
        %v12659 = vperm.slane %v12362, %v11697
        %v12660 = vperm.slane %v12365, %v11699
        %v12661 = vsel %vm11701, %v12660, %v12659
        %v12662 = vperm.slane %v12368, %v11703
        %v12663 = vsel %vm11705, %v12662, %v12661
        %v12664 = vperm.slane %v12371, %v11707
        %v12665 = vsel %vm11709, %v12664, %v12663
        %v12666 = vperm.slane %v12374, %v11711
        %v12667 = vsel %vm11713, %v12666, %v12665
        %v12668 = vperm.slane %v12377, %v11715
        %v12669 = vsel %vm11717, %v12668, %v12667
        %v12670 = vperm.slane %v12380, %v11719
        %v12671 = vsel %vm11721, %v12670, %v12669
        %v12672 = vperm.slane %v12383, %v11723
        %v12673 = vsel %vm11725, %v12672, %v12671
        %v12674 = vperm.slane %v12386, %v11727
        %v12675 = vsel %vm11729, %v12674, %v12673
        %v12676 = vperm.slane %v12389, %v11731
        %v12677 = vsel %vm11733, %v12676, %v12675
        %v12678 = vperm.slane %v12392, %v11735
        %v12679 = vsel %vm11737, %v12678, %v12677
        %v12680 = vperm.slane %v12395, %v11739
        %v12681 = vsel %vm11741, %v12680, %v12679
        %v12682 = vperm.slane %v12398, %v11743
        %v12683 = vsel %vm11745, %v12682, %v12681
        %v12684 = vperm.slane %v12401, %v11747
        %v12685 = vsel %vm11749, %v12684, %v12683
        %v12686 = vperm.slane %v12404, %v11751
        %v12687 = vsel %vm11753, %v12686, %v12685
        %v12688 = vperm.slane %v12407, %v11755
        %v12689 = vsel %vm11757, %v12688, %v12687
        %v12690 = vperm.slane %v12410, %v11697
        %v12691 = vperm.slane %v12413, %v11699
        %v12692 = vsel %vm11701, %v12691, %v12690
        %v12693 = vperm.slane %v12416, %v11703
        %v12694 = vsel %vm11705, %v12693, %v12692
        %v12695 = vperm.slane %v12419, %v11707
        %v12696 = vsel %vm11709, %v12695, %v12694
        %v12697 = vperm.slane %v12422, %v11711
        %v12698 = vsel %vm11713, %v12697, %v12696
        %v12699 = vperm.slane %v12425, %v11715
        %v12700 = vsel %vm11717, %v12699, %v12698
        %v12701 = vperm.slane %v12428, %v11719
        %v12702 = vsel %vm11721, %v12701, %v12700
        %v12703 = vperm.slane %v12431, %v11723
        %v12704 = vsel %vm11725, %v12703, %v12702
        %v12705 = vperm.slane %v12434, %v11727
        %v12706 = vsel %vm11729, %v12705, %v12704
        %v12707 = vperm.slane %v12437, %v11731
        %v12708 = vsel %vm11733, %v12707, %v12706
        %v12709 = vperm.slane %v12440, %v11735
        %v12710 = vsel %vm11737, %v12709, %v12708
        %v12711 = vperm.slane %v12443, %v11739
        %v12712 = vsel %vm11741, %v12711, %v12710
        %v12713 = vperm.slane %v12446, %v11743
        %v12714 = vsel %vm11745, %v12713, %v12712
        %v12715 = vperm.slane %v12449, %v11747
        %v12716 = vsel %vm11749, %v12715, %v12714
        %v12717 = vperm.slane %v12452, %v11751
        %v12718 = vsel %vm11753, %v12717, %v12716
        %v12719 = vperm.slane %v12455, %v11755
        %v12720 = vsel %vm11757, %v12719, %v12718
        %v12721 = vperm.slane %v12458, %v11697
        %v12722 = vperm.slane %v12461, %v11699
        %v12723 = vsel %vm11701, %v12722, %v12721
        %v12724 = vperm.slane %v12464, %v11703
        %v12725 = vsel %vm11705, %v12724, %v12723
        %v12726 = vperm.slane %v12467, %v11707
        %v12727 = vsel %vm11709, %v12726, %v12725
        %v12728 = vperm.slane %v12470, %v11711
        %v12729 = vsel %vm11713, %v12728, %v12727
        %v12730 = vperm.slane %v12473, %v11715
        %v12731 = vsel %vm11717, %v12730, %v12729
        %v12732 = vperm.slane %v12476, %v11719
        %v12733 = vsel %vm11721, %v12732, %v12731
        %v12734 = vperm.slane %v12479, %v11723
        %v12735 = vsel %vm11725, %v12734, %v12733
        %v12736 = vperm.slane %v12482, %v11727
        %v12737 = vsel %vm11729, %v12736, %v12735
        %v12738 = vperm.slane %v12485, %v11731
        %v12739 = vsel %vm11733, %v12738, %v12737
        %v12740 = vperm.slane %v12488, %v11735
        %v12741 = vsel %vm11737, %v12740, %v12739
        %v12742 = vperm.slane %v12491, %v11739
        %v12743 = vsel %vm11741, %v12742, %v12741
        %v12744 = vperm.slane %v12494, %v11743
        %v12745 = vsel %vm11745, %v12744, %v12743
        %v12746 = vperm.slane %v12497, %v11747
        %v12747 = vsel %vm11749, %v12746, %v12745
        %v12748 = vperm.slane %v12500, %v11751
        %v12749 = vsel %vm11753, %v12748, %v12747
        %v12750 = vperm.slane %v12503, %v11755
        %v12751 = vsel %vm11757, %v12750, %v12749
        %v12752 = vsel %vm11976, %v12565, %v12534
        %v12753 = vsel %vm11978, %v12596, %v12752
        %v12754 = vsel %vm11980, %v12627, %v12753
        %v12755 = vsel %vm11982, %v12658, %v12754
        %v12756 = vsel %vm11984, %v12689, %v12755
        %v12757 = vsel %vm11986, %v12720, %v12756
        %v12758 = vsel %vm11988, %v12751, %v12757
        %12760 = vst [vmem:[%s494] sm:$0xff] %v12758
        %s12761 = sand.u32 %s342, 1
        %s12762 = scalar_lea.sflag [#allocation4], %s12761
        %s12763 = sand.u32 %s342, 1
        %s12764 = smul.addr %s12763, 8
        %s12765 = scalar_lea.vmem [#allocation3], %s12764
        %s12766 = sand.u32 %s368, 1
        %s12767 = scalar_lea.sflag [#allocation6], %s12766
        %s12768 = sand.u32 %s368, 1
        %s12769 = smul.addr %s12768, 8
        %s12770 = scalar_lea.vmem [#allocation5], %s12769
        // Predicated region
        $region77: #{tpu_custom_call.1} parent=75 // pred_check
          %p12771 = pneg %p352
        $region78: #{tpu_custom_call.1} parent=75 // pred_check_branch
          %12773 = sbr.rel (%p12771) target = $region80
        $region79: #{tpu_custom_call.1} parent=75 // pred_region
          %12775 = vsyncadd %s12762, 0
          %s12776 = smul.addr %s35, 8
          %s12777 = scalar_lea.hbm %s14, %s12776
          %s12779 = sshll.u32 %s12765, 4
          %s12780 = int_to_ptr.vmem [resolvable:$true] %s12779
          %s12781 = sshll.u32 %s12777, 4
          %s12782 = int_to_ptr.hbm [resolvable:$true] %s12781
          %12784 = dma.vmem_to_hbm [thread:$0]  %s12780, 128, %s12782, %s12762
        $region80: #{tpu_custom_call.1} parent=75 // pred_fallthru
          _
        // Predicated region
        $region81: #{tpu_custom_call.1} parent=75 // pred_check
          %p12785 = pneg %p378
        $region82: #{tpu_custom_call.1} parent=75 // pred_check_branch
          %12787 = sbr.rel (%p12785) target = $region84
        $region83: #{tpu_custom_call.1} parent=75 // pred_region
          %12789 = vsyncadd %s12767, 0
          %s12790 = smul.addr %s35, 8
          %s12791 = scalar_lea.hbm %s15, %s12790
          %s12793 = sshll.u32 %s12770, 4
          %s12794 = int_to_ptr.vmem [resolvable:$true] %s12793
          %s12795 = sshll.u32 %s12791, 4
          %s12796 = int_to_ptr.hbm [resolvable:$true] %s12795
          %12798 = dma.vmem_to_hbm [thread:$0]  %s12794, 128, %s12796, %s12767
        $region84: #{tpu_custom_call.1} parent=75 // pred_fallthru
          _
      $region76: #{tpu_custom_call.1} parent=5 // pred_fallthru
        _
      %p12799 = scmp.le.s32.totalorder 2, %s30
      // Predicated region
      $region85: #{tpu_custom_call.1} parent=5 // pred_check
        %p12800 = pneg %p12799
      $region86: #{tpu_custom_call.1} parent=5 // pred_check_branch
        %12802 = sbr.rel (%p12800) target = $region88
      $region87: #{tpu_custom_call.1} parent=5 // pred_region
        %s12803 = ssub.s32 %s30, 2
        // Predicated region
        $region89: #{tpu_custom_call.1} parent=87 // pred_check
          %p12804 = pneg %p358
        $region90: #{tpu_custom_call.1} parent=87 // pred_check_branch
          %12806 = sbr.rel (%p12804) target = $region92
        $region91: #{tpu_custom_call.1} parent=87 // pred_region
          %s12807 = sand.u32 %s343, 1
          %s12808 = scalar_lea.sflag [#allocation4], %s12807
          %s12809 = sand.u32 %s343, 1
          %s12810 = smul.addr %s12809, 8
          %s12811 = scalar_lea.vmem [#allocation3], %s12810
          %12813 = dma.done %s12808, 128
        $region92: #{tpu_custom_call.1} parent=87 // pred_fallthru
          _
        // Predicated region
        $region93: #{tpu_custom_call.1} parent=87 // pred_check
          %p12814 = pneg %p384
        $region94: #{tpu_custom_call.1} parent=87 // pred_check_branch
          %12816 = sbr.rel (%p12814) target = $region96
        $region95: #{tpu_custom_call.1} parent=87 // pred_region
          %s12817 = sand.u32 %s369, 1
          %s12818 = scalar_lea.sflag [#allocation6], %s12817
          %s12819 = sand.u32 %s369, 1
          %s12820 = smul.addr %s12819, 8
          %s12821 = scalar_lea.vmem [#allocation5], %s12820
          %12823 = dma.done %s12818, 128
        $region96: #{tpu_custom_call.1} parent=87 // pred_fallthru
          _
      $region88: #{tpu_custom_call.1} parent=5 // pred_fallthru
        _
    $region6: #{tpu_custom_call.1} parent=1 // loop_footer
      %s34 = sadd.s32 1, %s30
    $region7: #{tpu_custom_call.1} parent=1 // loop_footer_branch
      %29 = sbr.rel target = $region3
    $region8: #{tpu_custom_call.1} parent=1 // loop_exit
      _
    %12824 = vsyncpa [#allocation4], 1
    %s12825 = scalar_lea.sflag [#allocation4], 1
    %12826 = vsyncpa %s12825, 1
    %12827 = vsyncpa [#allocation6], 1
    %s12828 = scalar_lea.sflag [#allocation6], 1
    %12829 = vsyncpa %s12828, 1

</llo_original>
